<compile_context>
chip_gen: v5e
topology: v5e:2x2
jax: 0.10.0
libtpu: 0.0.40
codegen_flags: <defaults>
</compile_context>

<pallas_src>
import math

import jax
import jax.numpy as jnp
import numpy as np
from jax import lax
from jax.experimental import pallas as pl
from jax.experimental.pallas import tpu as pltpu

LANES = 128   # vreg lane count
SUB = 8       # sublane rows per inner sub-tile (8 x 128 = 1024 nodes)


def _density_kernel(zt_ref, x0_ref, a_ref, b_ref, out_ref):
    # zt_ref : (D, S, 128) VMEM  - node axis split onto (sublane-row, lane)
    # x0_ref : (C*L*D,)    SMEM  - flow centers, flattened row-major
    # a_ref  : (C*L,)      SMEM  - alpha = softplus(alpha')
    # b_ref  : (C*L,)      SMEM  - beta  = -alpha + softplus(beta')
    # out_ref: (C, S, 128) VMEM  - log_q, lane-dense per class
    d_lat, s_blk, _ = zt_ref.shape
    c_cls = out_ref.shape[0]
    n_layers = a_ref.shape[0] // c_cls

    dm1 = float(d_lat - 1)
    neg_half_d_log2pi = -0.5 * float(d_lat) * math.log(2.0 * math.pi)

    nsub = s_blk // SUB

    def process_subtile(off):
        for c in range(c_cls):                       # static unroll over mixture elements
            # re-load the z sub-tile per class: cheap VMEM loads, short live ranges
            x = [zt_ref[dd, pl.ds(off, SUB), :] for dd in range(d_lat)]
            p1 = jnp.ones((SUB, LANES), jnp.float32)
            p2 = jnp.ones((SUB, LANES), jnp.float32)
            for l in range(n_layers):                # static unroll over radial-flow layers
                idx = c * n_layers + l
                alpha = a_ref[idx]                   # SMEM scalars
                beta = b_ref[idx]

                # diff and squared radius: plain VPU accumulation over D
                diff = [x[dd] - x0_ref[idx * d_lat + dd] for dd in range(d_lat)]
                r2 = diff[0] * diff[0]
                for dd in range(1, d_lat):
                    r2 = r2 + diff[dd] * diff[dd]
                r = jnp.sqrt(r2)                                     # EUP
                ar = alpha + r
                h0 = pl.reciprocal(ar, approx=True)                  # EUP vrcp
                h = h0 * (2.0 - ar * h0)                             # one Newton step -> ~exact 1/(alpha+r)
                bh = beta * h

                # radial transform update
                x = [x[dd] + bh * diff[dd] for dd in range(d_lat)]

                # Jacobian factors accumulated as products (VPU), logged once per class.
                # Identity: bh - beta*h^2*r == alpha*beta*h^2 (exact for h = 1/(alpha+r)).
                p1 = p1 * (1.0 + bh)
                p2 = p2 * (1.0 + (alpha * beta) * (h * h))

            # squared norm of the flowed sample
            s2 = x[0] * x[0]
            for dd in range(1, d_lat):
                s2 = s2 + x[dd] * x[dd]

            log_det = dm1 * jnp.log(p1) + jnp.log(p2)
            log_p = neg_half_d_log2pi - 0.5 * s2 + log_det
            # eval-mode: NaN -> -inf  (module applies this when not training)
            log_p = jnp.where(jnp.isnan(log_p), -jnp.inf, log_p)
            out_ref[c, pl.ds(off, SUB), :] = log_p.astype(out_ref.dtype)

    if nsub == 1:
        process_subtile(0)
    else:
        def body(si, carry):
            process_subtile(pl.multiple_of(si * SUB, SUB))
            return carry
        lax.fori_loop(0, nsub, body, 0,
                      unroll=2 if nsub % 2 == 0 else 1)


def density_forward(z, x0, alpha_prime, beta_prime, *, max_block_rows=64):
    """z: [N, D] f32 -> log_q: [N, C] f32 (eval-mode Density.forward)."""
    n, d = z.shape
    c_cls, n_layers = alpha_prime.shape
    assert x0.shape == (c_cls * n_layers, d)

    # Flow scalars precomputed once in XLA (hoisted out of the kernel), flat SMEM layout.
    alpha = jax.nn.softplus(alpha_prime.astype(jnp.float32)).reshape(-1)          # (C*L,)
    beta = (-alpha + jax.nn.softplus(beta_prime.astype(jnp.float32)).reshape(-1))  # (C*L,)
    x0_flat = x0.astype(jnp.float32).reshape(-1)                                   # (C*L*D,)

    # Node axis -> (sublane-row, lane): pad N to a multiple of SUB*128, then to a
    # multiple of the per-grid-step block so the grid divides evenly.
    r_rows = -(-n // LANES)
    r_pad = -(-r_rows // SUB) * SUB
    block_rows = min(r_pad, max_block_rows)          # rows per grid step (multiple of SUB)
    r_pad = -(-r_pad // block_rows) * block_rows
    n_pad = r_pad * LANES

    # NOTE: this transpose+pad is one extra HBM pass over z; if the producer can
    # emit z already in [D, N] (or (D, R, 128)) layout it should be removed
    # (matters most on bandwidth-poor v5e).
    z_pad = jnp.pad(z.astype(jnp.float32), ((0, n_pad - n), (0, 0)))
    zt3 = z_pad.T.reshape(d, r_pad, LANES)

    grid = (r_pad // block_rows,)
    out3 = pl.pallas_call(
        _density_kernel,
        out_shape=jax.ShapeDtypeStruct((c_cls, r_pad, LANES), jnp.float32),
        grid_spec=pltpu.PrefetchScalarGridSpec(
            num_scalar_prefetch=0,
            grid=grid,
            in_specs=[
                pl.BlockSpec((d, block_rows, LANES), lambda i: (0, i, 0)),   # z tile
                pl.BlockSpec(memory_space=pltpu.MemorySpace.SMEM),           # x0 (flat)
                pl.BlockSpec(memory_space=pltpu.MemorySpace.SMEM),           # alpha
                pl.BlockSpec(memory_space=pltpu.MemorySpace.SMEM),           # beta
            ],
            out_specs=pl.BlockSpec((c_cls, block_rows, LANES), lambda i: (0, i, 0)),
        ),
        compiler_params=pltpu.CompilerParams(
            dimension_semantics=("parallel",),
        ),
    )(zt3, x0_flat, alpha, beta)

    # back to the module's [N, C] layout, dropping padded nodes
    return out3.reshape(c_cls, n_pad)[:, :n].T


def density_reference(z, x0, alpha_prime, beta_prime):
    """Pure-JAX reference of Density.forward (radial-flow branch, eval mode)."""
    c_cls, n_layers = alpha_prime.shape
    n, d = z.shape
    cols = []
    for c in range(c_cls):
        x = z
        log_det = jnp.zeros((n,), jnp.float32)
        for l in range(n_layers):
            alpha = jax.nn.softplus(alpha_prime[c, l])
            beta = -alpha + jax.nn.softplus(beta_prime[c, l])
            diff = x - x0[c * n_layers + l]
            r = jnp.sqrt(jnp.sum(diff * diff, axis=-1))
            h = 1.0 / (alpha + r)
            bh = beta * h
            x = x + bh[:, None] * diff
            log_det = log_det + (d - 1) * jnp.log1p(bh) + jnp.log1p(bh - beta * h * h * r)
        log_p = -0.5 * d * math.log(2.0 * math.pi) - 0.5 * jnp.sum(x * x, axis=-1) + log_det
        cols.append(log_p)
    out = jnp.stack(cols, axis=-1)
    return jnp.where(jnp.isnan(out), -jnp.inf, out)


if __name__ == "__main__":
    # Small, module-consistent shapes: N nodes, latent dim D, C mixture elements,
    # L radial-flow layers (the module default).
    N, D, C, L = 256, 16, 4, 6

    key = jax.random.PRNGKey(0)
    k_z, k_x0, k_a, k_b = jax.random.split(key, 4)

    z = jax.random.normal(k_z, (N, D), dtype=jnp.float32)

    # Deterministic param init mirroring pyro Radial.reset_parameters:
    # uniform(-stdv, stdv) with stdv = 1/sqrt(D).
    stdv = 1.0 / math.sqrt(D)
    x0 = jax.random.uniform(k_x0, (C * L, D), minval=-stdv, maxval=stdv, dtype=jnp.float32)
    alpha_prime = jax.random.uniform(k_a, (C, L), minval=-stdv, maxval=stdv, dtype=jnp.float32)
    beta_prime = jax.random.uniform(k_b, (C, L), minval=-stdv, maxval=stdv, dtype=jnp.float32)

    out = density_forward(z, x0, alpha_prime, beta_prime)
    out = jax.block_until_ready(out)

    ref = jax.block_until_ready(density_reference(z, x0, alpha_prime, beta_prime))
    np.testing.assert_allclose(np.asarray(out), np.asarray(ref), rtol=1e-3, atol=1e-3)

    print("KERNEL_OK")
</pallas_src>

<mosaic_0001>
module attributes {stable_mosaic.version = 11 : i64} {
  func.func @_density_kernel(%arg0: i32, %arg1: memref<16x8x128xf32, #tpu.memory_space<vmem>>, %arg2: memref<384xf32, #tpu.memory_space<smem>>, %arg3: memref<24xf32, #tpu.memory_space<smem>>, %arg4: memref<24xf32, #tpu.memory_space<smem>>, %arg5: memref<4x8x128xf32, #tpu.memory_space<vmem>>) attributes {dimension_semantics = [#tpu.dimension_semantics<parallel>], iteration_bounds = array<i64: 1>, scalar_prefetch = 0 : i64, scratch_operands = 0 : i64, tpu.core_type = #tpu.core_type<tc>, window_params = [{transform_indices = @transform_0, window_bounds = array<i64: 16, 8, 128>}, {transform_indices = @transform_1, window_bounds = array<i64: 384>}, {transform_indices = @transform_2, window_bounds = array<i64: 24>}, {transform_indices = @transform_3, window_bounds = array<i64: 24>}, {transform_indices = @transform_4, window_bounds = array<i64: 4, 8, 128>}]} {
    %c0 = arith.constant 0 : index
    %c0_0 = arith.constant 0 : index
    %c0_1 = arith.constant 0 : index
    %0 = vector.load %arg1[%c0, %c0_0, %c0_1] : memref<16x8x128xf32, #tpu.memory_space<vmem>>, vector<1x8x128xf32>
    %1 = vector.shape_cast %0 : vector<1x8x128xf32> to vector<8x128xf32>
    %c1 = arith.constant 1 : index
    %c0_2 = arith.constant 0 : index
    %c0_3 = arith.constant 0 : index
    %2 = vector.load %arg1[%c1, %c0_2, %c0_3] : memref<16x8x128xf32, #tpu.memory_space<vmem>>, vector<1x8x128xf32>
    %3 = vector.shape_cast %2 : vector<1x8x128xf32> to vector<8x128xf32>
    %c2 = arith.constant 2 : index
    %c0_4 = arith.constant 0 : index
    %c0_5 = arith.constant 0 : index
    %4 = vector.load %arg1[%c2, %c0_4, %c0_5] : memref<16x8x128xf32, #tpu.memory_space<vmem>>, vector<1x8x128xf32>
    %5 = vector.shape_cast %4 : vector<1x8x128xf32> to vector<8x128xf32>
    %c3 = arith.constant 3 : index
    %c0_6 = arith.constant 0 : index
    %c0_7 = arith.constant 0 : index
    %6 = vector.load %arg1[%c3, %c0_6, %c0_7] : memref<16x8x128xf32, #tpu.memory_space<vmem>>, vector<1x8x128xf32>
    %7 = vector.shape_cast %6 : vector<1x8x128xf32> to vector<8x128xf32>
    %c4 = arith.constant 4 : index
    %c0_8 = arith.constant 0 : index
    %c0_9 = arith.constant 0 : index
    %8 = vector.load %arg1[%c4, %c0_8, %c0_9] : memref<16x8x128xf32, #tpu.memory_space<vmem>>, vector<1x8x128xf32>
    %9 = vector.shape_cast %8 : vector<1x8x128xf32> to vector<8x128xf32>
    %c5 = arith.constant 5 : index
    %c0_10 = arith.constant 0 : index
    %c0_11 = arith.constant 0 : index
    %10 = vector.load %arg1[%c5, %c0_10, %c0_11] : memref<16x8x128xf32, #tpu.memory_space<vmem>>, vector<1x8x128xf32>
    %11 = vector.shape_cast %10 : vector<1x8x128xf32> to vector<8x128xf32>
    %c6 = arith.constant 6 : index
    %c0_12 = arith.constant 0 : index
    %c0_13 = arith.constant 0 : index
    %12 = vector.load %arg1[%c6, %c0_12, %c0_13] : memref<16x8x128xf32, #tpu.memory_space<vmem>>, vector<1x8x128xf32>
    %13 = vector.shape_cast %12 : vector<1x8x128xf32> to vector<8x128xf32>
    %c7 = arith.constant 7 : index
    %c0_14 = arith.constant 0 : index
    %c0_15 = arith.constant 0 : index
    %14 = vector.load %arg1[%c7, %c0_14, %c0_15] : memref<16x8x128xf32, #tpu.memory_space<vmem>>, vector<1x8x128xf32>
    %15 = vector.shape_cast %14 : vector<1x8x128xf32> to vector<8x128xf32>
    %c8 = arith.constant 8 : index
    %c0_16 = arith.constant 0 : index
    %c0_17 = arith.constant 0 : index
    %16 = vector.load %arg1[%c8, %c0_16, %c0_17] : memref<16x8x128xf32, #tpu.memory_space<vmem>>, vector<1x8x128xf32>
    %17 = vector.shape_cast %16 : vector<1x8x128xf32> to vector<8x128xf32>
    %c9 = arith.constant 9 : index
    %c0_18 = arith.constant 0 : index
    %c0_19 = arith.constant 0 : index
    %18 = vector.load %arg1[%c9, %c0_18, %c0_19] : memref<16x8x128xf32, #tpu.memory_space<vmem>>, vector<1x8x128xf32>
    %19 = vector.shape_cast %18 : vector<1x8x128xf32> to vector<8x128xf32>
    %c10 = arith.constant 10 : index
    %c0_20 = arith.constant 0 : index
    %c0_21 = arith.constant 0 : index
    %20 = vector.load %arg1[%c10, %c0_20, %c0_21] : memref<16x8x128xf32, #tpu.memory_space<vmem>>, vector<1x8x128xf32>
    %21 = vector.shape_cast %20 : vector<1x8x128xf32> to vector<8x128xf32>
    %c11 = arith.constant 11 : index
    %c0_22 = arith.constant 0 : index
    %c0_23 = arith.constant 0 : index
    %22 = vector.load %arg1[%c11, %c0_22, %c0_23] : memref<16x8x128xf32, #tpu.memory_space<vmem>>, vector<1x8x128xf32>
    %23 = vector.shape_cast %22 : vector<1x8x128xf32> to vector<8x128xf32>
    %c12 = arith.constant 12 : index
    %c0_24 = arith.constant 0 : index
    %c0_25 = arith.constant 0 : index
    %24 = vector.load %arg1[%c12, %c0_24, %c0_25] : memref<16x8x128xf32, #tpu.memory_space<vmem>>, vector<1x8x128xf32>
    %25 = vector.shape_cast %24 : vector<1x8x128xf32> to vector<8x128xf32>
    %c13 = arith.constant 13 : index
    %c0_26 = arith.constant 0 : index
    %c0_27 = arith.constant 0 : index
    %26 = vector.load %arg1[%c13, %c0_26, %c0_27] : memref<16x8x128xf32, #tpu.memory_space<vmem>>, vector<1x8x128xf32>
    %27 = vector.shape_cast %26 : vector<1x8x128xf32> to vector<8x128xf32>
    %c14 = arith.constant 14 : index
    %c0_28 = arith.constant 0 : index
    %c0_29 = arith.constant 0 : index
    %28 = vector.load %arg1[%c14, %c0_28, %c0_29] : memref<16x8x128xf32, #tpu.memory_space<vmem>>, vector<1x8x128xf32>
    %29 = vector.shape_cast %28 : vector<1x8x128xf32> to vector<8x128xf32>
    %c15 = arith.constant 15 : index
    %c0_30 = arith.constant 0 : index
    %c0_31 = arith.constant 0 : index
    %30 = vector.load %arg1[%c15, %c0_30, %c0_31] : memref<16x8x128xf32, #tpu.memory_space<vmem>>, vector<1x8x128xf32>
    %31 = vector.shape_cast %30 : vector<1x8x128xf32> to vector<8x128xf32>
    %cst = arith.constant 1.000000e+00 : f32
    %32 = vector.broadcast %cst : f32 to vector<8x128xf32>
    %cst_32 = arith.constant 1.000000e+00 : f32
    %33 = vector.broadcast %cst_32 : f32 to vector<8x128xf32>
    %c0_33 = arith.constant 0 : index
    %34 = memref.load %arg3[%c0_33] : memref<24xf32, #tpu.memory_space<smem>>
    %c0_34 = arith.constant 0 : index
    %35 = memref.load %arg4[%c0_34] : memref<24xf32, #tpu.memory_space<smem>>
    %c0_35 = arith.constant 0 : index
    %36 = memref.load %arg2[%c0_35] : memref<384xf32, #tpu.memory_space<smem>>
    %37 = vector.broadcast %36 : f32 to vector<8x128xf32>
    %38 = arith.subf %1, %37 : vector<8x128xf32>
    %c1_36 = arith.constant 1 : index
    %39 = memref.load %arg2[%c1_36] : memref<384xf32, #tpu.memory_space<smem>>
    %40 = vector.broadcast %39 : f32 to vector<8x128xf32>
    %41 = arith.subf %3, %40 : vector<8x128xf32>
    %c2_37 = arith.constant 2 : index
    %42 = memref.load %arg2[%c2_37] : memref<384xf32, #tpu.memory_space<smem>>
    %43 = vector.broadcast %42 : f32 to vector<8x128xf32>
    %44 = arith.subf %5, %43 : vector<8x128xf32>
    %c3_38 = arith.constant 3 : index
    %45 = memref.load %arg2[%c3_38] : memref<384xf32, #tpu.memory_space<smem>>
    %46 = vector.broadcast %45 : f32 to vector<8x128xf32>
    %47 = arith.subf %7, %46 : vector<8x128xf32>
    %c4_39 = arith.constant 4 : index
    %48 = memref.load %arg2[%c4_39] : memref<384xf32, #tpu.memory_space<smem>>
    %49 = vector.broadcast %48 : f32 to vector<8x128xf32>
    %50 = arith.subf %9, %49 : vector<8x128xf32>
    %c5_40 = arith.constant 5 : index
    %51 = memref.load %arg2[%c5_40] : memref<384xf32, #tpu.memory_space<smem>>
    %52 = vector.broadcast %51 : f32 to vector<8x128xf32>
    %53 = arith.subf %11, %52 : vector<8x128xf32>
    %c6_41 = arith.constant 6 : index
    %54 = memref.load %arg2[%c6_41] : memref<384xf32, #tpu.memory_space<smem>>
    %55 = vector.broadcast %54 : f32 to vector<8x128xf32>
    %56 = arith.subf %13, %55 : vector<8x128xf32>
    %c7_42 = arith.constant 7 : index
    %57 = memref.load %arg2[%c7_42] : memref<384xf32, #tpu.memory_space<smem>>
    %58 = vector.broadcast %57 : f32 to vector<8x128xf32>
    %59 = arith.subf %15, %58 : vector<8x128xf32>
    %c8_43 = arith.constant 8 : index
    %60 = memref.load %arg2[%c8_43] : memref<384xf32, #tpu.memory_space<smem>>
    %61 = vector.broadcast %60 : f32 to vector<8x128xf32>
    %62 = arith.subf %17, %61 : vector<8x128xf32>
    %c9_44 = arith.constant 9 : index
    %63 = memref.load %arg2[%c9_44] : memref<384xf32, #tpu.memory_space<smem>>
    %64 = vector.broadcast %63 : f32 to vector<8x128xf32>
    %65 = arith.subf %19, %64 : vector<8x128xf32>
    %c10_45 = arith.constant 10 : index
    %66 = memref.load %arg2[%c10_45] : memref<384xf32, #tpu.memory_space<smem>>
    %67 = vector.broadcast %66 : f32 to vector<8x128xf32>
    %68 = arith.subf %21, %67 : vector<8x128xf32>
    %c11_46 = arith.constant 11 : index
    %69 = memref.load %arg2[%c11_46] : memref<384xf32, #tpu.memory_space<smem>>
    %70 = vector.broadcast %69 : f32 to vector<8x128xf32>
    %71 = arith.subf %23, %70 : vector<8x128xf32>
    %c12_47 = arith.constant 12 : index
    %72 = memref.load %arg2[%c12_47] : memref<384xf32, #tpu.memory_space<smem>>
    %73 = vector.broadcast %72 : f32 to vector<8x128xf32>
    %74 = arith.subf %25, %73 : vector<8x128xf32>
    %c13_48 = arith.constant 13 : index
    %75 = memref.load %arg2[%c13_48] : memref<384xf32, #tpu.memory_space<smem>>
    %76 = vector.broadcast %75 : f32 to vector<8x128xf32>
    %77 = arith.subf %27, %76 : vector<8x128xf32>
    %c14_49 = arith.constant 14 : index
    %78 = memref.load %arg2[%c14_49] : memref<384xf32, #tpu.memory_space<smem>>
    %79 = vector.broadcast %78 : f32 to vector<8x128xf32>
    %80 = arith.subf %29, %79 : vector<8x128xf32>
    %c15_50 = arith.constant 15 : index
    %81 = memref.load %arg2[%c15_50] : memref<384xf32, #tpu.memory_space<smem>>
    %82 = vector.broadcast %81 : f32 to vector<8x128xf32>
    %83 = arith.subf %31, %82 : vector<8x128xf32>
    %84 = arith.mulf %38, %38 : vector<8x128xf32>
    %85 = arith.mulf %41, %41 : vector<8x128xf32>
    %86 = arith.addf %84, %85 : vector<8x128xf32>
    %87 = arith.mulf %44, %44 : vector<8x128xf32>
    %88 = arith.addf %86, %87 : vector<8x128xf32>
    %89 = arith.mulf %47, %47 : vector<8x128xf32>
    %90 = arith.addf %88, %89 : vector<8x128xf32>
    %91 = arith.mulf %50, %50 : vector<8x128xf32>
    %92 = arith.addf %90, %91 : vector<8x128xf32>
    %93 = arith.mulf %53, %53 : vector<8x128xf32>
    %94 = arith.addf %92, %93 : vector<8x128xf32>
    %95 = arith.mulf %56, %56 : vector<8x128xf32>
    %96 = arith.addf %94, %95 : vector<8x128xf32>
    %97 = arith.mulf %59, %59 : vector<8x128xf32>
    %98 = arith.addf %96, %97 : vector<8x128xf32>
    %99 = arith.mulf %62, %62 : vector<8x128xf32>
    %100 = arith.addf %98, %99 : vector<8x128xf32>
    %101 = arith.mulf %65, %65 : vector<8x128xf32>
    %102 = arith.addf %100, %101 : vector<8x128xf32>
    %103 = arith.mulf %68, %68 : vector<8x128xf32>
    %104 = arith.addf %102, %103 : vector<8x128xf32>
    %105 = arith.mulf %71, %71 : vector<8x128xf32>
    %106 = arith.addf %104, %105 : vector<8x128xf32>
    %107 = arith.mulf %74, %74 : vector<8x128xf32>
    %108 = arith.addf %106, %107 : vector<8x128xf32>
    %109 = arith.mulf %77, %77 : vector<8x128xf32>
    %110 = arith.addf %108, %109 : vector<8x128xf32>
    %111 = arith.mulf %80, %80 : vector<8x128xf32>
    %112 = arith.addf %110, %111 : vector<8x128xf32>
    %113 = arith.mulf %83, %83 : vector<8x128xf32>
    %114 = arith.addf %112, %113 : vector<8x128xf32>
    %115 = math.sqrt %114 : vector<8x128xf32>
    %116 = vector.broadcast %34 : f32 to vector<8x128xf32>
    %117 = arith.addf %116, %115 : vector<8x128xf32>
    %118 = tpu.reciprocal %117 {approx = true} : vector<8x128xf32> -> vector<8x128xf32>
    %119 = arith.mulf %117, %118 : vector<8x128xf32>
    %cst_51 = arith.constant 2.000000e+00 : f32
    %120 = vector.broadcast %cst_51 : f32 to vector<8x128xf32>
    %121 = arith.subf %120, %119 : vector<8x128xf32>
    %122 = arith.mulf %118, %121 : vector<8x128xf32>
    %123 = vector.broadcast %35 : f32 to vector<8x128xf32>
    %124 = arith.mulf %123, %122 : vector<8x128xf32>
    %125 = arith.mulf %124, %38 : vector<8x128xf32>
    %126 = arith.addf %1, %125 : vector<8x128xf32>
    %127 = arith.mulf %124, %41 : vector<8x128xf32>
    %128 = arith.addf %3, %127 : vector<8x128xf32>
    %129 = arith.mulf %124, %44 : vector<8x128xf32>
    %130 = arith.addf %5, %129 : vector<8x128xf32>
    %131 = arith.mulf %124, %47 : vector<8x128xf32>
    %132 = arith.addf %7, %131 : vector<8x128xf32>
    %133 = arith.mulf %124, %50 : vector<8x128xf32>
    %134 = arith.addf %9, %133 : vector<8x128xf32>
    %135 = arith.mulf %124, %53 : vector<8x128xf32>
    %136 = arith.addf %11, %135 : vector<8x128xf32>
    %137 = arith.mulf %124, %56 : vector<8x128xf32>
    %138 = arith.addf %13, %137 : vector<8x128xf32>
    %139 = arith.mulf %124, %59 : vector<8x128xf32>
    %140 = arith.addf %15, %139 : vector<8x128xf32>
    %141 = arith.mulf %124, %62 : vector<8x128xf32>
    %142 = arith.addf %17, %141 : vector<8x128xf32>
    %143 = arith.mulf %124, %65 : vector<8x128xf32>
    %144 = arith.addf %19, %143 : vector<8x128xf32>
    %145 = arith.mulf %124, %68 : vector<8x128xf32>
    %146 = arith.addf %21, %145 : vector<8x128xf32>
    %147 = arith.mulf %124, %71 : vector<8x128xf32>
    %148 = arith.addf %23, %147 : vector<8x128xf32>
    %149 = arith.mulf %124, %74 : vector<8x128xf32>
    %150 = arith.addf %25, %149 : vector<8x128xf32>
    %151 = arith.mulf %124, %77 : vector<8x128xf32>
    %152 = arith.addf %27, %151 : vector<8x128xf32>
    %153 = arith.mulf %124, %80 : vector<8x128xf32>
    %154 = arith.addf %29, %153 : vector<8x128xf32>
    %155 = arith.mulf %124, %83 : vector<8x128xf32>
    %156 = arith.addf %31, %155 : vector<8x128xf32>
    %cst_52 = arith.constant 1.000000e+00 : f32
    %157 = vector.broadcast %cst_52 : f32 to vector<8x128xf32>
    %158 = arith.addf %157, %124 : vector<8x128xf32>
    %159 = arith.mulf %32, %158 : vector<8x128xf32>
    %160 = arith.mulf %34, %35 : f32
    %161 = arith.mulf %122, %122 : vector<8x128xf32>
    %162 = vector.broadcast %160 : f32 to vector<8x128xf32>
    %163 = arith.mulf %162, %161 : vector<8x128xf32>
    %cst_53 = arith.constant 1.000000e+00 : f32
    %164 = vector.broadcast %cst_53 : f32 to vector<8x128xf32>
    %165 = arith.addf %164, %163 : vector<8x128xf32>
    %166 = arith.mulf %33, %165 : vector<8x128xf32>
    %c1_54 = arith.constant 1 : index
    %167 = memref.load %arg3[%c1_54] : memref<24xf32, #tpu.memory_space<smem>>
    %c1_55 = arith.constant 1 : index
    %168 = memref.load %arg4[%c1_55] : memref<24xf32, #tpu.memory_space<smem>>
    %c16 = arith.constant 16 : index
    %169 = memref.load %arg2[%c16] : memref<384xf32, #tpu.memory_space<smem>>
    %170 = vector.broadcast %169 : f32 to vector<8x128xf32>
    %171 = arith.subf %126, %170 : vector<8x128xf32>
    %c17 = arith.constant 17 : index
    %172 = memref.load %arg2[%c17] : memref<384xf32, #tpu.memory_space<smem>>
    %173 = vector.broadcast %172 : f32 to vector<8x128xf32>
    %174 = arith.subf %128, %173 : vector<8x128xf32>
    %c18 = arith.constant 18 : index
    %175 = memref.load %arg2[%c18] : memref<384xf32, #tpu.memory_space<smem>>
    %176 = vector.broadcast %175 : f32 to vector<8x128xf32>
    %177 = arith.subf %130, %176 : vector<8x128xf32>
    %c19 = arith.constant 19 : index
    %178 = memref.load %arg2[%c19] : memref<384xf32, #tpu.memory_space<smem>>
    %179 = vector.broadcast %178 : f32 to vector<8x128xf32>
    %180 = arith.subf %132, %179 : vector<8x128xf32>
    %c20 = arith.constant 20 : index
    %181 = memref.load %arg2[%c20] : memref<384xf32, #tpu.memory_space<smem>>
    %182 = vector.broadcast %181 : f32 to vector<8x128xf32>
    %183 = arith.subf %134, %182 : vector<8x128xf32>
    %c21 = arith.constant 21 : index
    %184 = memref.load %arg2[%c21] : memref<384xf32, #tpu.memory_space<smem>>
    %185 = vector.broadcast %184 : f32 to vector<8x128xf32>
    %186 = arith.subf %136, %185 : vector<8x128xf32>
    %c22 = arith.constant 22 : index
    %187 = memref.load %arg2[%c22] : memref<384xf32, #tpu.memory_space<smem>>
    %188 = vector.broadcast %187 : f32 to vector<8x128xf32>
    %189 = arith.subf %138, %188 : vector<8x128xf32>
    %c23 = arith.constant 23 : index
    %190 = memref.load %arg2[%c23] : memref<384xf32, #tpu.memory_space<smem>>
    %191 = vector.broadcast %190 : f32 to vector<8x128xf32>
    %192 = arith.subf %140, %191 : vector<8x128xf32>
    %c24 = arith.constant 24 : index
    %193 = memref.load %arg2[%c24] : memref<384xf32, #tpu.memory_space<smem>>
    %194 = vector.broadcast %193 : f32 to vector<8x128xf32>
    %195 = arith.subf %142, %194 : vector<8x128xf32>
    %c25 = arith.constant 25 : index
    %196 = memref.load %arg2[%c25] : memref<384xf32, #tpu.memory_space<smem>>
    %197 = vector.broadcast %196 : f32 to vector<8x128xf32>
    %198 = arith.subf %144, %197 : vector<8x128xf32>
    %c26 = arith.constant 26 : index
    %199 = memref.load %arg2[%c26] : memref<384xf32, #tpu.memory_space<smem>>
    %200 = vector.broadcast %199 : f32 to vector<8x128xf32>
    %201 = arith.subf %146, %200 : vector<8x128xf32>
    %c27 = arith.constant 27 : index
    %202 = memref.load %arg2[%c27] : memref<384xf32, #tpu.memory_space<smem>>
    %203 = vector.broadcast %202 : f32 to vector<8x128xf32>
    %204 = arith.subf %148, %203 : vector<8x128xf32>
    %c28 = arith.constant 28 : index
    %205 = memref.load %arg2[%c28] : memref<384xf32, #tpu.memory_space<smem>>
    %206 = vector.broadcast %205 : f32 to vector<8x128xf32>
    %207 = arith.subf %150, %206 : vector<8x128xf32>
    %c29 = arith.constant 29 : index
    %208 = memref.load %arg2[%c29] : memref<384xf32, #tpu.memory_space<smem>>
    %209 = vector.broadcast %208 : f32 to vector<8x128xf32>
    %210 = arith.subf %152, %209 : vector<8x128xf32>
    %c30 = arith.constant 30 : index
    %211 = memref.load %arg2[%c30] : memref<384xf32, #tpu.memory_space<smem>>
    %212 = vector.broadcast %211 : f32 to vector<8x128xf32>
    %213 = arith.subf %154, %212 : vector<8x128xf32>
    %c31 = arith.constant 31 : index
    %214 = memref.load %arg2[%c31] : memref<384xf32, #tpu.memory_space<smem>>
    %215 = vector.broadcast %214 : f32 to vector<8x128xf32>
    %216 = arith.subf %156, %215 : vector<8x128xf32>
    %217 = arith.mulf %171, %171 : vector<8x128xf32>
    %218 = arith.mulf %174, %174 : vector<8x128xf32>
    %219 = arith.addf %217, %218 : vector<8x128xf32>
    %220 = arith.mulf %177, %177 : vector<8x128xf32>
    %221 = arith.addf %219, %220 : vector<8x128xf32>
    %222 = arith.mulf %180, %180 : vector<8x128xf32>
    %223 = arith.addf %221, %222 : vector<8x128xf32>
    %224 = arith.mulf %183, %183 : vector<8x128xf32>
    %225 = arith.addf %223, %224 : vector<8x128xf32>
    %226 = arith.mulf %186, %186 : vector<8x128xf32>
    %227 = arith.addf %225, %226 : vector<8x128xf32>
    %228 = arith.mulf %189, %189 : vector<8x128xf32>
    %229 = arith.addf %227, %228 : vector<8x128xf32>
    %230 = arith.mulf %192, %192 : vector<8x128xf32>
    %231 = arith.addf %229, %230 : vector<8x128xf32>
    %232 = arith.mulf %195, %195 : vector<8x128xf32>
    %233 = arith.addf %231, %232 : vector<8x128xf32>
    %234 = arith.mulf %198, %198 : vector<8x128xf32>
    %235 = arith.addf %233, %234 : vector<8x128xf32>
    %236 = arith.mulf %201, %201 : vector<8x128xf32>
    %237 = arith.addf %235, %236 : vector<8x128xf32>
    %238 = arith.mulf %204, %204 : vector<8x128xf32>
    %239 = arith.addf %237, %238 : vector<8x128xf32>
    %240 = arith.mulf %207, %207 : vector<8x128xf32>
    %241 = arith.addf %239, %240 : vector<8x128xf32>
    %242 = arith.mulf %210, %210 : vector<8x128xf32>
    %243 = arith.addf %241, %242 : vector<8x128xf32>
    %244 = arith.mulf %213, %213 : vector<8x128xf32>
    %245 = arith.addf %243, %244 : vector<8x128xf32>
    %246 = arith.mulf %216, %216 : vector<8x128xf32>
    %247 = arith.addf %245, %246 : vector<8x128xf32>
    %248 = math.sqrt %247 : vector<8x128xf32>
    %249 = vector.broadcast %167 : f32 to vector<8x128xf32>
    %250 = arith.addf %249, %248 : vector<8x128xf32>
    %251 = tpu.reciprocal %250 {approx = true} : vector<8x128xf32> -> vector<8x128xf32>
    %252 = arith.mulf %250, %251 : vector<8x128xf32>
    %cst_56 = arith.constant 2.000000e+00 : f32
    %253 = vector.broadcast %cst_56 : f32 to vector<8x128xf32>
    %254 = arith.subf %253, %252 : vector<8x128xf32>
    %255 = arith.mulf %251, %254 : vector<8x128xf32>
    %256 = vector.broadcast %168 : f32 to vector<8x128xf32>
    %257 = arith.mulf %256, %255 : vector<8x128xf32>
    %258 = arith.mulf %257, %171 : vector<8x128xf32>
    %259 = arith.addf %126, %258 : vector<8x128xf32>
    %260 = arith.mulf %257, %174 : vector<8x128xf32>
    %261 = arith.addf %128, %260 : vector<8x128xf32>
    %262 = arith.mulf %257, %177 : vector<8x128xf32>
    %263 = arith.addf %130, %262 : vector<8x128xf32>
    %264 = arith.mulf %257, %180 : vector<8x128xf32>
    %265 = arith.addf %132, %264 : vector<8x128xf32>
    %266 = arith.mulf %257, %183 : vector<8x128xf32>
    %267 = arith.addf %134, %266 : vector<8x128xf32>
    %268 = arith.mulf %257, %186 : vector<8x128xf32>
    %269 = arith.addf %136, %268 : vector<8x128xf32>
    %270 = arith.mulf %257, %189 : vector<8x128xf32>
    %271 = arith.addf %138, %270 : vector<8x128xf32>
    %272 = arith.mulf %257, %192 : vector<8x128xf32>
    %273 = arith.addf %140, %272 : vector<8x128xf32>
    %274 = arith.mulf %257, %195 : vector<8x128xf32>
    %275 = arith.addf %142, %274 : vector<8x128xf32>
    %276 = arith.mulf %257, %198 : vector<8x128xf32>
    %277 = arith.addf %144, %276 : vector<8x128xf32>
    %278 = arith.mulf %257, %201 : vector<8x128xf32>
    %279 = arith.addf %146, %278 : vector<8x128xf32>
    %280 = arith.mulf %257, %204 : vector<8x128xf32>
    %281 = arith.addf %148, %280 : vector<8x128xf32>
    %282 = arith.mulf %257, %207 : vector<8x128xf32>
    %283 = arith.addf %150, %282 : vector<8x128xf32>
    %284 = arith.mulf %257, %210 : vector<8x128xf32>
    %285 = arith.addf %152, %284 : vector<8x128xf32>
    %286 = arith.mulf %257, %213 : vector<8x128xf32>
    %287 = arith.addf %154, %286 : vector<8x128xf32>
    %288 = arith.mulf %257, %216 : vector<8x128xf32>
    %289 = arith.addf %156, %288 : vector<8x128xf32>
    %cst_57 = arith.constant 1.000000e+00 : f32
    %290 = vector.broadcast %cst_57 : f32 to vector<8x128xf32>
    %291 = arith.addf %290, %257 : vector<8x128xf32>
    %292 = arith.mulf %159, %291 : vector<8x128xf32>
    %293 = arith.mulf %167, %168 : f32
    %294 = arith.mulf %255, %255 : vector<8x128xf32>
    %295 = vector.broadcast %293 : f32 to vector<8x128xf32>
    %296 = arith.mulf %295, %294 : vector<8x128xf32>
    %cst_58 = arith.constant 1.000000e+00 : f32
    %297 = vector.broadcast %cst_58 : f32 to vector<8x128xf32>
    %298 = arith.addf %297, %296 : vector<8x128xf32>
    %299 = arith.mulf %166, %298 : vector<8x128xf32>
    %c2_59 = arith.constant 2 : index
    %300 = memref.load %arg3[%c2_59] : memref<24xf32, #tpu.memory_space<smem>>
    %c2_60 = arith.constant 2 : index
    %301 = memref.load %arg4[%c2_60] : memref<24xf32, #tpu.memory_space<smem>>
    %c32 = arith.constant 32 : index
    %302 = memref.load %arg2[%c32] : memref<384xf32, #tpu.memory_space<smem>>
    %303 = vector.broadcast %302 : f32 to vector<8x128xf32>
    %304 = arith.subf %259, %303 : vector<8x128xf32>
    %c33 = arith.constant 33 : index
    %305 = memref.load %arg2[%c33] : memref<384xf32, #tpu.memory_space<smem>>
    %306 = vector.broadcast %305 : f32 to vector<8x128xf32>
    %307 = arith.subf %261, %306 : vector<8x128xf32>
    %c34 = arith.constant 34 : index
    %308 = memref.load %arg2[%c34] : memref<384xf32, #tpu.memory_space<smem>>
    %309 = vector.broadcast %308 : f32 to vector<8x128xf32>
    %310 = arith.subf %263, %309 : vector<8x128xf32>
    %c35 = arith.constant 35 : index
    %311 = memref.load %arg2[%c35] : memref<384xf32, #tpu.memory_space<smem>>
    %312 = vector.broadcast %311 : f32 to vector<8x128xf32>
    %313 = arith.subf %265, %312 : vector<8x128xf32>
    %c36 = arith.constant 36 : index
    %314 = memref.load %arg2[%c36] : memref<384xf32, #tpu.memory_space<smem>>
    %315 = vector.broadcast %314 : f32 to vector<8x128xf32>
    %316 = arith.subf %267, %315 : vector<8x128xf32>
    %c37 = arith.constant 37 : index
    %317 = memref.load %arg2[%c37] : memref<384xf32, #tpu.memory_space<smem>>
    %318 = vector.broadcast %317 : f32 to vector<8x128xf32>
    %319 = arith.subf %269, %318 : vector<8x128xf32>
    %c38 = arith.constant 38 : index
    %320 = memref.load %arg2[%c38] : memref<384xf32, #tpu.memory_space<smem>>
    %321 = vector.broadcast %320 : f32 to vector<8x128xf32>
    %322 = arith.subf %271, %321 : vector<8x128xf32>
    %c39 = arith.constant 39 : index
    %323 = memref.load %arg2[%c39] : memref<384xf32, #tpu.memory_space<smem>>
    %324 = vector.broadcast %323 : f32 to vector<8x128xf32>
    %325 = arith.subf %273, %324 : vector<8x128xf32>
    %c40 = arith.constant 40 : index
    %326 = memref.load %arg2[%c40] : memref<384xf32, #tpu.memory_space<smem>>
    %327 = vector.broadcast %326 : f32 to vector<8x128xf32>
    %328 = arith.subf %275, %327 : vector<8x128xf32>
    %c41 = arith.constant 41 : index
    %329 = memref.load %arg2[%c41] : memref<384xf32, #tpu.memory_space<smem>>
    %330 = vector.broadcast %329 : f32 to vector<8x128xf32>
    %331 = arith.subf %277, %330 : vector<8x128xf32>
    %c42 = arith.constant 42 : index
    %332 = memref.load %arg2[%c42] : memref<384xf32, #tpu.memory_space<smem>>
    %333 = vector.broadcast %332 : f32 to vector<8x128xf32>
    %334 = arith.subf %279, %333 : vector<8x128xf32>
    %c43 = arith.constant 43 : index
    %335 = memref.load %arg2[%c43] : memref<384xf32, #tpu.memory_space<smem>>
    %336 = vector.broadcast %335 : f32 to vector<8x128xf32>
    %337 = arith.subf %281, %336 : vector<8x128xf32>
    %c44 = arith.constant 44 : index
    %338 = memref.load %arg2[%c44] : memref<384xf32, #tpu.memory_space<smem>>
    %339 = vector.broadcast %338 : f32 to vector<8x128xf32>
    %340 = arith.subf %283, %339 : vector<8x128xf32>
    %c45 = arith.constant 45 : index
    %341 = memref.load %arg2[%c45] : memref<384xf32, #tpu.memory_space<smem>>
    %342 = vector.broadcast %341 : f32 to vector<8x128xf32>
    %343 = arith.subf %285, %342 : vector<8x128xf32>
    %c46 = arith.constant 46 : index
    %344 = memref.load %arg2[%c46] : memref<384xf32, #tpu.memory_space<smem>>
    %345 = vector.broadcast %344 : f32 to vector<8x128xf32>
    %346 = arith.subf %287, %345 : vector<8x128xf32>
    %c47 = arith.constant 47 : index
    %347 = memref.load %arg2[%c47] : memref<384xf32, #tpu.memory_space<smem>>
    %348 = vector.broadcast %347 : f32 to vector<8x128xf32>
    %349 = arith.subf %289, %348 : vector<8x128xf32>
    %350 = arith.mulf %304, %304 : vector<8x128xf32>
    %351 = arith.mulf %307, %307 : vector<8x128xf32>
    %352 = arith.addf %350, %351 : vector<8x128xf32>
    %353 = arith.mulf %310, %310 : vector<8x128xf32>
    %354 = arith.addf %352, %353 : vector<8x128xf32>
    %355 = arith.mulf %313, %313 : vector<8x128xf32>
    %356 = arith.addf %354, %355 : vector<8x128xf32>
    %357 = arith.mulf %316, %316 : vector<8x128xf32>
    %358 = arith.addf %356, %357 : vector<8x128xf32>
    %359 = arith.mulf %319, %319 : vector<8x128xf32>
    %360 = arith.addf %358, %359 : vector<8x128xf32>
    %361 = arith.mulf %322, %322 : vector<8x128xf32>
    %362 = arith.addf %360, %361 : vector<8x128xf32>
    %363 = arith.mulf %325, %325 : vector<8x128xf32>
    %364 = arith.addf %362, %363 : vector<8x128xf32>
    %365 = arith.mulf %328, %328 : vector<8x128xf32>
    %366 = arith.addf %364, %365 : vector<8x128xf32>
    %367 = arith.mulf %331, %331 : vector<8x128xf32>
    %368 = arith.addf %366, %367 : vector<8x128xf32>
    %369 = arith.mulf %334, %334 : vector<8x128xf32>
    %370 = arith.addf %368, %369 : vector<8x128xf32>
    %371 = arith.mulf %337, %337 : vector<8x128xf32>
    %372 = arith.addf %370, %371 : vector<8x128xf32>
    %373 = arith.mulf %340, %340 : vector<8x128xf32>
    %374 = arith.addf %372, %373 : vector<8x128xf32>
    %375 = arith.mulf %343, %343 : vector<8x128xf32>
    %376 = arith.addf %374, %375 : vector<8x128xf32>
    %377 = arith.mulf %346, %346 : vector<8x128xf32>
    %378 = arith.addf %376, %377 : vector<8x128xf32>
    %379 = arith.mulf %349, %349 : vector<8x128xf32>
    %380 = arith.addf %378, %379 : vector<8x128xf32>
    %381 = math.sqrt %380 : vector<8x128xf32>
    %382 = vector.broadcast %300 : f32 to vector<8x128xf32>
    %383 = arith.addf %382, %381 : vector<8x128xf32>
    %384 = tpu.reciprocal %383 {approx = true} : vector<8x128xf32> -> vector<8x128xf32>
    %385 = arith.mulf %383, %384 : vector<8x128xf32>
    %cst_61 = arith.constant 2.000000e+00 : f32
    %386 = vector.broadcast %cst_61 : f32 to vector<8x128xf32>
    %387 = arith.subf %386, %385 : vector<8x128xf32>
    %388 = arith.mulf %384, %387 : vector<8x128xf32>
    %389 = vector.broadcast %301 : f32 to vector<8x128xf32>
    %390 = arith.mulf %389, %388 : vector<8x128xf32>
    %391 = arith.mulf %390, %304 : vector<8x128xf32>
    %392 = arith.addf %259, %391 : vector<8x128xf32>
    %393 = arith.mulf %390, %307 : vector<8x128xf32>
    %394 = arith.addf %261, %393 : vector<8x128xf32>
    %395 = arith.mulf %390, %310 : vector<8x128xf32>
    %396 = arith.addf %263, %395 : vector<8x128xf32>
    %397 = arith.mulf %390, %313 : vector<8x128xf32>
    %398 = arith.addf %265, %397 : vector<8x128xf32>
    %399 = arith.mulf %390, %316 : vector<8x128xf32>
    %400 = arith.addf %267, %399 : vector<8x128xf32>
    %401 = arith.mulf %390, %319 : vector<8x128xf32>
    %402 = arith.addf %269, %401 : vector<8x128xf32>
    %403 = arith.mulf %390, %322 : vector<8x128xf32>
    %404 = arith.addf %271, %403 : vector<8x128xf32>
    %405 = arith.mulf %390, %325 : vector<8x128xf32>
    %406 = arith.addf %273, %405 : vector<8x128xf32>
    %407 = arith.mulf %390, %328 : vector<8x128xf32>
    %408 = arith.addf %275, %407 : vector<8x128xf32>
    %409 = arith.mulf %390, %331 : vector<8x128xf32>
    %410 = arith.addf %277, %409 : vector<8x128xf32>
    %411 = arith.mulf %390, %334 : vector<8x128xf32>
    %412 = arith.addf %279, %411 : vector<8x128xf32>
    %413 = arith.mulf %390, %337 : vector<8x128xf32>
    %414 = arith.addf %281, %413 : vector<8x128xf32>
    %415 = arith.mulf %390, %340 : vector<8x128xf32>
    %416 = arith.addf %283, %415 : vector<8x128xf32>
    %417 = arith.mulf %390, %343 : vector<8x128xf32>
    %418 = arith.addf %285, %417 : vector<8x128xf32>
    %419 = arith.mulf %390, %346 : vector<8x128xf32>
    %420 = arith.addf %287, %419 : vector<8x128xf32>
    %421 = arith.mulf %390, %349 : vector<8x128xf32>
    %422 = arith.addf %289, %421 : vector<8x128xf32>
    %cst_62 = arith.constant 1.000000e+00 : f32
    %423 = vector.broadcast %cst_62 : f32 to vector<8x128xf32>
    %424 = arith.addf %423, %390 : vector<8x128xf32>
    %425 = arith.mulf %292, %424 : vector<8x128xf32>
    %426 = arith.mulf %300, %301 : f32
    %427 = arith.mulf %388, %388 : vector<8x128xf32>
    %428 = vector.broadcast %426 : f32 to vector<8x128xf32>
    %429 = arith.mulf %428, %427 : vector<8x128xf32>
    %cst_63 = arith.constant 1.000000e+00 : f32
    %430 = vector.broadcast %cst_63 : f32 to vector<8x128xf32>
    %431 = arith.addf %430, %429 : vector<8x128xf32>
    %432 = arith.mulf %299, %431 : vector<8x128xf32>
    %c3_64 = arith.constant 3 : index
    %433 = memref.load %arg3[%c3_64] : memref<24xf32, #tpu.memory_space<smem>>
    %c3_65 = arith.constant 3 : index
    %434 = memref.load %arg4[%c3_65] : memref<24xf32, #tpu.memory_space<smem>>
    %c48 = arith.constant 48 : index
    %435 = memref.load %arg2[%c48] : memref<384xf32, #tpu.memory_space<smem>>
    %436 = vector.broadcast %435 : f32 to vector<8x128xf32>
    %437 = arith.subf %392, %436 : vector<8x128xf32>
    %c49 = arith.constant 49 : index
    %438 = memref.load %arg2[%c49] : memref<384xf32, #tpu.memory_space<smem>>
    %439 = vector.broadcast %438 : f32 to vector<8x128xf32>
    %440 = arith.subf %394, %439 : vector<8x128xf32>
    %c50 = arith.constant 50 : index
    %441 = memref.load %arg2[%c50] : memref<384xf32, #tpu.memory_space<smem>>
    %442 = vector.broadcast %441 : f32 to vector<8x128xf32>
    %443 = arith.subf %396, %442 : vector<8x128xf32>
    %c51 = arith.constant 51 : index
    %444 = memref.load %arg2[%c51] : memref<384xf32, #tpu.memory_space<smem>>
    %445 = vector.broadcast %444 : f32 to vector<8x128xf32>
    %446 = arith.subf %398, %445 : vector<8x128xf32>
    %c52 = arith.constant 52 : index
    %447 = memref.load %arg2[%c52] : memref<384xf32, #tpu.memory_space<smem>>
    %448 = vector.broadcast %447 : f32 to vector<8x128xf32>
    %449 = arith.subf %400, %448 : vector<8x128xf32>
    %c53 = arith.constant 53 : index
    %450 = memref.load %arg2[%c53] : memref<384xf32, #tpu.memory_space<smem>>
    %451 = vector.broadcast %450 : f32 to vector<8x128xf32>
    %452 = arith.subf %402, %451 : vector<8x128xf32>
    %c54 = arith.constant 54 : index
    %453 = memref.load %arg2[%c54] : memref<384xf32, #tpu.memory_space<smem>>
    %454 = vector.broadcast %453 : f32 to vector<8x128xf32>
    %455 = arith.subf %404, %454 : vector<8x128xf32>
    %c55 = arith.constant 55 : index
    %456 = memref.load %arg2[%c55] : memref<384xf32, #tpu.memory_space<smem>>
    %457 = vector.broadcast %456 : f32 to vector<8x128xf32>
    %458 = arith.subf %406, %457 : vector<8x128xf32>
    %c56 = arith.constant 56 : index
    %459 = memref.load %arg2[%c56] : memref<384xf32, #tpu.memory_space<smem>>
    %460 = vector.broadcast %459 : f32 to vector<8x128xf32>
    %461 = arith.subf %408, %460 : vector<8x128xf32>
    %c57 = arith.constant 57 : index
    %462 = memref.load %arg2[%c57] : memref<384xf32, #tpu.memory_space<smem>>
    %463 = vector.broadcast %462 : f32 to vector<8x128xf32>
    %464 = arith.subf %410, %463 : vector<8x128xf32>
    %c58 = arith.constant 58 : index
    %465 = memref.load %arg2[%c58] : memref<384xf32, #tpu.memory_space<smem>>
    %466 = vector.broadcast %465 : f32 to vector<8x128xf32>
    %467 = arith.subf %412, %466 : vector<8x128xf32>
    %c59 = arith.constant 59 : index
    %468 = memref.load %arg2[%c59] : memref<384xf32, #tpu.memory_space<smem>>
    %469 = vector.broadcast %468 : f32 to vector<8x128xf32>
    %470 = arith.subf %414, %469 : vector<8x128xf32>
    %c60 = arith.constant 60 : index
    %471 = memref.load %arg2[%c60] : memref<384xf32, #tpu.memory_space<smem>>
    %472 = vector.broadcast %471 : f32 to vector<8x128xf32>
    %473 = arith.subf %416, %472 : vector<8x128xf32>
    %c61 = arith.constant 61 : index
    %474 = memref.load %arg2[%c61] : memref<384xf32, #tpu.memory_space<smem>>
    %475 = vector.broadcast %474 : f32 to vector<8x128xf32>
    %476 = arith.subf %418, %475 : vector<8x128xf32>
    %c62 = arith.constant 62 : index
    %477 = memref.load %arg2[%c62] : memref<384xf32, #tpu.memory_space<smem>>
    %478 = vector.broadcast %477 : f32 to vector<8x128xf32>
    %479 = arith.subf %420, %478 : vector<8x128xf32>
    %c63 = arith.constant 63 : index
    %480 = memref.load %arg2[%c63] : memref<384xf32, #tpu.memory_space<smem>>
    %481 = vector.broadcast %480 : f32 to vector<8x128xf32>
    %482 = arith.subf %422, %481 : vector<8x128xf32>
    %483 = arith.mulf %437, %437 : vector<8x128xf32>
    %484 = arith.mulf %440, %440 : vector<8x128xf32>
    %485 = arith.addf %483, %484 : vector<8x128xf32>
    %486 = arith.mulf %443, %443 : vector<8x128xf32>
    %487 = arith.addf %485, %486 : vector<8x128xf32>
    %488 = arith.mulf %446, %446 : vector<8x128xf32>
    %489 = arith.addf %487, %488 : vector<8x128xf32>
    %490 = arith.mulf %449, %449 : vector<8x128xf32>
    %491 = arith.addf %489, %490 : vector<8x128xf32>
    %492 = arith.mulf %452, %452 : vector<8x128xf32>
    %493 = arith.addf %491, %492 : vector<8x128xf32>
    %494 = arith.mulf %455, %455 : vector<8x128xf32>
    %495 = arith.addf %493, %494 : vector<8x128xf32>
    %496 = arith.mulf %458, %458 : vector<8x128xf32>
    %497 = arith.addf %495, %496 : vector<8x128xf32>
    %498 = arith.mulf %461, %461 : vector<8x128xf32>
    %499 = arith.addf %497, %498 : vector<8x128xf32>
    %500 = arith.mulf %464, %464 : vector<8x128xf32>
    %501 = arith.addf %499, %500 : vector<8x128xf32>
    %502 = arith.mulf %467, %467 : vector<8x128xf32>
    %503 = arith.addf %501, %502 : vector<8x128xf32>
    %504 = arith.mulf %470, %470 : vector<8x128xf32>
    %505 = arith.addf %503, %504 : vector<8x128xf32>
    %506 = arith.mulf %473, %473 : vector<8x128xf32>
    %507 = arith.addf %505, %506 : vector<8x128xf32>
    %508 = arith.mulf %476, %476 : vector<8x128xf32>
    %509 = arith.addf %507, %508 : vector<8x128xf32>
    %510 = arith.mulf %479, %479 : vector<8x128xf32>
    %511 = arith.addf %509, %510 : vector<8x128xf32>
    %512 = arith.mulf %482, %482 : vector<8x128xf32>
    %513 = arith.addf %511, %512 : vector<8x128xf32>
    %514 = math.sqrt %513 : vector<8x128xf32>
    %515 = vector.broadcast %433 : f32 to vector<8x128xf32>
    %516 = arith.addf %515, %514 : vector<8x128xf32>
    %517 = tpu.reciprocal %516 {approx = true} : vector<8x128xf32> -> vector<8x128xf32>
    %518 = arith.mulf %516, %517 : vector<8x128xf32>
    %cst_66 = arith.constant 2.000000e+00 : f32
    %519 = vector.broadcast %cst_66 : f32 to vector<8x128xf32>
    %520 = arith.subf %519, %518 : vector<8x128xf32>
    %521 = arith.mulf %517, %520 : vector<8x128xf32>
    %522 = vector.broadcast %434 : f32 to vector<8x128xf32>
    %523 = arith.mulf %522, %521 : vector<8x128xf32>
    %524 = arith.mulf %523, %437 : vector<8x128xf32>
    %525 = arith.addf %392, %524 : vector<8x128xf32>
    %526 = arith.mulf %523, %440 : vector<8x128xf32>
    %527 = arith.addf %394, %526 : vector<8x128xf32>
    %528 = arith.mulf %523, %443 : vector<8x128xf32>
    %529 = arith.addf %396, %528 : vector<8x128xf32>
    %530 = arith.mulf %523, %446 : vector<8x128xf32>
    %531 = arith.addf %398, %530 : vector<8x128xf32>
    %532 = arith.mulf %523, %449 : vector<8x128xf32>
    %533 = arith.addf %400, %532 : vector<8x128xf32>
    %534 = arith.mulf %523, %452 : vector<8x128xf32>
    %535 = arith.addf %402, %534 : vector<8x128xf32>
    %536 = arith.mulf %523, %455 : vector<8x128xf32>
    %537 = arith.addf %404, %536 : vector<8x128xf32>
    %538 = arith.mulf %523, %458 : vector<8x128xf32>
    %539 = arith.addf %406, %538 : vector<8x128xf32>
    %540 = arith.mulf %523, %461 : vector<8x128xf32>
    %541 = arith.addf %408, %540 : vector<8x128xf32>
    %542 = arith.mulf %523, %464 : vector<8x128xf32>
    %543 = arith.addf %410, %542 : vector<8x128xf32>
    %544 = arith.mulf %523, %467 : vector<8x128xf32>
    %545 = arith.addf %412, %544 : vector<8x128xf32>
    %546 = arith.mulf %523, %470 : vector<8x128xf32>
    %547 = arith.addf %414, %546 : vector<8x128xf32>
    %548 = arith.mulf %523, %473 : vector<8x128xf32>
    %549 = arith.addf %416, %548 : vector<8x128xf32>
    %550 = arith.mulf %523, %476 : vector<8x128xf32>
    %551 = arith.addf %418, %550 : vector<8x128xf32>
    %552 = arith.mulf %523, %479 : vector<8x128xf32>
    %553 = arith.addf %420, %552 : vector<8x128xf32>
    %554 = arith.mulf %523, %482 : vector<8x128xf32>
    %555 = arith.addf %422, %554 : vector<8x128xf32>
    %cst_67 = arith.constant 1.000000e+00 : f32
    %556 = vector.broadcast %cst_67 : f32 to vector<8x128xf32>
    %557 = arith.addf %556, %523 : vector<8x128xf32>
    %558 = arith.mulf %425, %557 : vector<8x128xf32>
    %559 = arith.mulf %433, %434 : f32
    %560 = arith.mulf %521, %521 : vector<8x128xf32>
    %561 = vector.broadcast %559 : f32 to vector<8x128xf32>
    %562 = arith.mulf %561, %560 : vector<8x128xf32>
    %cst_68 = arith.constant 1.000000e+00 : f32
    %563 = vector.broadcast %cst_68 : f32 to vector<8x128xf32>
    %564 = arith.addf %563, %562 : vector<8x128xf32>
    %565 = arith.mulf %432, %564 : vector<8x128xf32>
    %c4_69 = arith.constant 4 : index
    %566 = memref.load %arg3[%c4_69] : memref<24xf32, #tpu.memory_space<smem>>
    %c4_70 = arith.constant 4 : index
    %567 = memref.load %arg4[%c4_70] : memref<24xf32, #tpu.memory_space<smem>>
    %c64 = arith.constant 64 : index
    %568 = memref.load %arg2[%c64] : memref<384xf32, #tpu.memory_space<smem>>
    %569 = vector.broadcast %568 : f32 to vector<8x128xf32>
    %570 = arith.subf %525, %569 : vector<8x128xf32>
    %c65 = arith.constant 65 : index
    %571 = memref.load %arg2[%c65] : memref<384xf32, #tpu.memory_space<smem>>
    %572 = vector.broadcast %571 : f32 to vector<8x128xf32>
    %573 = arith.subf %527, %572 : vector<8x128xf32>
    %c66 = arith.constant 66 : index
    %574 = memref.load %arg2[%c66] : memref<384xf32, #tpu.memory_space<smem>>
    %575 = vector.broadcast %574 : f32 to vector<8x128xf32>
    %576 = arith.subf %529, %575 : vector<8x128xf32>
    %c67 = arith.constant 67 : index
    %577 = memref.load %arg2[%c67] : memref<384xf32, #tpu.memory_space<smem>>
    %578 = vector.broadcast %577 : f32 to vector<8x128xf32>
    %579 = arith.subf %531, %578 : vector<8x128xf32>
    %c68 = arith.constant 68 : index
    %580 = memref.load %arg2[%c68] : memref<384xf32, #tpu.memory_space<smem>>
    %581 = vector.broadcast %580 : f32 to vector<8x128xf32>
    %582 = arith.subf %533, %581 : vector<8x128xf32>
    %c69 = arith.constant 69 : index
    %583 = memref.load %arg2[%c69] : memref<384xf32, #tpu.memory_space<smem>>
    %584 = vector.broadcast %583 : f32 to vector<8x128xf32>
    %585 = arith.subf %535, %584 : vector<8x128xf32>
    %c70 = arith.constant 70 : index
    %586 = memref.load %arg2[%c70] : memref<384xf32, #tpu.memory_space<smem>>
    %587 = vector.broadcast %586 : f32 to vector<8x128xf32>
    %588 = arith.subf %537, %587 : vector<8x128xf32>
    %c71 = arith.constant 71 : index
    %589 = memref.load %arg2[%c71] : memref<384xf32, #tpu.memory_space<smem>>
    %590 = vector.broadcast %589 : f32 to vector<8x128xf32>
    %591 = arith.subf %539, %590 : vector<8x128xf32>
    %c72 = arith.constant 72 : index
    %592 = memref.load %arg2[%c72] : memref<384xf32, #tpu.memory_space<smem>>
    %593 = vector.broadcast %592 : f32 to vector<8x128xf32>
    %594 = arith.subf %541, %593 : vector<8x128xf32>
    %c73 = arith.constant 73 : index
    %595 = memref.load %arg2[%c73] : memref<384xf32, #tpu.memory_space<smem>>
    %596 = vector.broadcast %595 : f32 to vector<8x128xf32>
    %597 = arith.subf %543, %596 : vector<8x128xf32>
    %c74 = arith.constant 74 : index
    %598 = memref.load %arg2[%c74] : memref<384xf32, #tpu.memory_space<smem>>
    %599 = vector.broadcast %598 : f32 to vector<8x128xf32>
    %600 = arith.subf %545, %599 : vector<8x128xf32>
    %c75 = arith.constant 75 : index
    %601 = memref.load %arg2[%c75] : memref<384xf32, #tpu.memory_space<smem>>
    %602 = vector.broadcast %601 : f32 to vector<8x128xf32>
    %603 = arith.subf %547, %602 : vector<8x128xf32>
    %c76 = arith.constant 76 : index
    %604 = memref.load %arg2[%c76] : memref<384xf32, #tpu.memory_space<smem>>
    %605 = vector.broadcast %604 : f32 to vector<8x128xf32>
    %606 = arith.subf %549, %605 : vector<8x128xf32>
    %c77 = arith.constant 77 : index
    %607 = memref.load %arg2[%c77] : memref<384xf32, #tpu.memory_space<smem>>
    %608 = vector.broadcast %607 : f32 to vector<8x128xf32>
    %609 = arith.subf %551, %608 : vector<8x128xf32>
    %c78 = arith.constant 78 : index
    %610 = memref.load %arg2[%c78] : memref<384xf32, #tpu.memory_space<smem>>
    %611 = vector.broadcast %610 : f32 to vector<8x128xf32>
    %612 = arith.subf %553, %611 : vector<8x128xf32>
    %c79 = arith.constant 79 : index
    %613 = memref.load %arg2[%c79] : memref<384xf32, #tpu.memory_space<smem>>
    %614 = vector.broadcast %613 : f32 to vector<8x128xf32>
    %615 = arith.subf %555, %614 : vector<8x128xf32>
    %616 = arith.mulf %570, %570 : vector<8x128xf32>
    %617 = arith.mulf %573, %573 : vector<8x128xf32>
    %618 = arith.addf %616, %617 : vector<8x128xf32>
    %619 = arith.mulf %576, %576 : vector<8x128xf32>
    %620 = arith.addf %618, %619 : vector<8x128xf32>
    %621 = arith.mulf %579, %579 : vector<8x128xf32>
    %622 = arith.addf %620, %621 : vector<8x128xf32>
    %623 = arith.mulf %582, %582 : vector<8x128xf32>
    %624 = arith.addf %622, %623 : vector<8x128xf32>
    %625 = arith.mulf %585, %585 : vector<8x128xf32>
    %626 = arith.addf %624, %625 : vector<8x128xf32>
    %627 = arith.mulf %588, %588 : vector<8x128xf32>
    %628 = arith.addf %626, %627 : vector<8x128xf32>
    %629 = arith.mulf %591, %591 : vector<8x128xf32>
    %630 = arith.addf %628, %629 : vector<8x128xf32>
    %631 = arith.mulf %594, %594 : vector<8x128xf32>
    %632 = arith.addf %630, %631 : vector<8x128xf32>
    %633 = arith.mulf %597, %597 : vector<8x128xf32>
    %634 = arith.addf %632, %633 : vector<8x128xf32>
    %635 = arith.mulf %600, %600 : vector<8x128xf32>
    %636 = arith.addf %634, %635 : vector<8x128xf32>
    %637 = arith.mulf %603, %603 : vector<8x128xf32>
    %638 = arith.addf %636, %637 : vector<8x128xf32>
    %639 = arith.mulf %606, %606 : vector<8x128xf32>
    %640 = arith.addf %638, %639 : vector<8x128xf32>
    %641 = arith.mulf %609, %609 : vector<8x128xf32>
    %642 = arith.addf %640, %641 : vector<8x128xf32>
    %643 = arith.mulf %612, %612 : vector<8x128xf32>
    %644 = arith.addf %642, %643 : vector<8x128xf32>
    %645 = arith.mulf %615, %615 : vector<8x128xf32>
    %646 = arith.addf %644, %645 : vector<8x128xf32>
    %647 = math.sqrt %646 : vector<8x128xf32>
    %648 = vector.broadcast %566 : f32 to vector<8x128xf32>
    %649 = arith.addf %648, %647 : vector<8x128xf32>
    %650 = tpu.reciprocal %649 {approx = true} : vector<8x128xf32> -> vector<8x128xf32>
    %651 = arith.mulf %649, %650 : vector<8x128xf32>
    %cst_71 = arith.constant 2.000000e+00 : f32
    %652 = vector.broadcast %cst_71 : f32 to vector<8x128xf32>
    %653 = arith.subf %652, %651 : vector<8x128xf32>
    %654 = arith.mulf %650, %653 : vector<8x128xf32>
    %655 = vector.broadcast %567 : f32 to vector<8x128xf32>
    %656 = arith.mulf %655, %654 : vector<8x128xf32>
    %657 = arith.mulf %656, %570 : vector<8x128xf32>
    %658 = arith.addf %525, %657 : vector<8x128xf32>
    %659 = arith.mulf %656, %573 : vector<8x128xf32>
    %660 = arith.addf %527, %659 : vector<8x128xf32>
    %661 = arith.mulf %656, %576 : vector<8x128xf32>
    %662 = arith.addf %529, %661 : vector<8x128xf32>
    %663 = arith.mulf %656, %579 : vector<8x128xf32>
    %664 = arith.addf %531, %663 : vector<8x128xf32>
    %665 = arith.mulf %656, %582 : vector<8x128xf32>
    %666 = arith.addf %533, %665 : vector<8x128xf32>
    %667 = arith.mulf %656, %585 : vector<8x128xf32>
    %668 = arith.addf %535, %667 : vector<8x128xf32>
    %669 = arith.mulf %656, %588 : vector<8x128xf32>
    %670 = arith.addf %537, %669 : vector<8x128xf32>
    %671 = arith.mulf %656, %591 : vector<8x128xf32>
    %672 = arith.addf %539, %671 : vector<8x128xf32>
    %673 = arith.mulf %656, %594 : vector<8x128xf32>
    %674 = arith.addf %541, %673 : vector<8x128xf32>
    %675 = arith.mulf %656, %597 : vector<8x128xf32>
    %676 = arith.addf %543, %675 : vector<8x128xf32>
    %677 = arith.mulf %656, %600 : vector<8x128xf32>
    %678 = arith.addf %545, %677 : vector<8x128xf32>
    %679 = arith.mulf %656, %603 : vector<8x128xf32>
    %680 = arith.addf %547, %679 : vector<8x128xf32>
    %681 = arith.mulf %656, %606 : vector<8x128xf32>
    %682 = arith.addf %549, %681 : vector<8x128xf32>
    %683 = arith.mulf %656, %609 : vector<8x128xf32>
    %684 = arith.addf %551, %683 : vector<8x128xf32>
    %685 = arith.mulf %656, %612 : vector<8x128xf32>
    %686 = arith.addf %553, %685 : vector<8x128xf32>
    %687 = arith.mulf %656, %615 : vector<8x128xf32>
    %688 = arith.addf %555, %687 : vector<8x128xf32>
    %cst_72 = arith.constant 1.000000e+00 : f32
    %689 = vector.broadcast %cst_72 : f32 to vector<8x128xf32>
    %690 = arith.addf %689, %656 : vector<8x128xf32>
    %691 = arith.mulf %558, %690 : vector<8x128xf32>
    %692 = arith.mulf %566, %567 : f32
    %693 = arith.mulf %654, %654 : vector<8x128xf32>
    %694 = vector.broadcast %692 : f32 to vector<8x128xf32>
    %695 = arith.mulf %694, %693 : vector<8x128xf32>
    %cst_73 = arith.constant 1.000000e+00 : f32
    %696 = vector.broadcast %cst_73 : f32 to vector<8x128xf32>
    %697 = arith.addf %696, %695 : vector<8x128xf32>
    %698 = arith.mulf %565, %697 : vector<8x128xf32>
    %c5_74 = arith.constant 5 : index
    %699 = memref.load %arg3[%c5_74] : memref<24xf32, #tpu.memory_space<smem>>
    %c5_75 = arith.constant 5 : index
    %700 = memref.load %arg4[%c5_75] : memref<24xf32, #tpu.memory_space<smem>>
    %c80 = arith.constant 80 : index
    %701 = memref.load %arg2[%c80] : memref<384xf32, #tpu.memory_space<smem>>
    %702 = vector.broadcast %701 : f32 to vector<8x128xf32>
    %703 = arith.subf %658, %702 : vector<8x128xf32>
    %c81 = arith.constant 81 : index
    %704 = memref.load %arg2[%c81] : memref<384xf32, #tpu.memory_space<smem>>
    %705 = vector.broadcast %704 : f32 to vector<8x128xf32>
    %706 = arith.subf %660, %705 : vector<8x128xf32>
    %c82 = arith.constant 82 : index
    %707 = memref.load %arg2[%c82] : memref<384xf32, #tpu.memory_space<smem>>
    %708 = vector.broadcast %707 : f32 to vector<8x128xf32>
    %709 = arith.subf %662, %708 : vector<8x128xf32>
    %c83 = arith.constant 83 : index
    %710 = memref.load %arg2[%c83] : memref<384xf32, #tpu.memory_space<smem>>
    %711 = vector.broadcast %710 : f32 to vector<8x128xf32>
    %712 = arith.subf %664, %711 : vector<8x128xf32>
    %c84 = arith.constant 84 : index
    %713 = memref.load %arg2[%c84] : memref<384xf32, #tpu.memory_space<smem>>
    %714 = vector.broadcast %713 : f32 to vector<8x128xf32>
    %715 = arith.subf %666, %714 : vector<8x128xf32>
    %c85 = arith.constant 85 : index
    %716 = memref.load %arg2[%c85] : memref<384xf32, #tpu.memory_space<smem>>
    %717 = vector.broadcast %716 : f32 to vector<8x128xf32>
    %718 = arith.subf %668, %717 : vector<8x128xf32>
    %c86 = arith.constant 86 : index
    %719 = memref.load %arg2[%c86] : memref<384xf32, #tpu.memory_space<smem>>
    %720 = vector.broadcast %719 : f32 to vector<8x128xf32>
    %721 = arith.subf %670, %720 : vector<8x128xf32>
    %c87 = arith.constant 87 : index
    %722 = memref.load %arg2[%c87] : memref<384xf32, #tpu.memory_space<smem>>
    %723 = vector.broadcast %722 : f32 to vector<8x128xf32>
    %724 = arith.subf %672, %723 : vector<8x128xf32>
    %c88 = arith.constant 88 : index
    %725 = memref.load %arg2[%c88] : memref<384xf32, #tpu.memory_space<smem>>
    %726 = vector.broadcast %725 : f32 to vector<8x128xf32>
    %727 = arith.subf %674, %726 : vector<8x128xf32>
    %c89 = arith.constant 89 : index
    %728 = memref.load %arg2[%c89] : memref<384xf32, #tpu.memory_space<smem>>
    %729 = vector.broadcast %728 : f32 to vector<8x128xf32>
    %730 = arith.subf %676, %729 : vector<8x128xf32>
    %c90 = arith.constant 90 : index
    %731 = memref.load %arg2[%c90] : memref<384xf32, #tpu.memory_space<smem>>
    %732 = vector.broadcast %731 : f32 to vector<8x128xf32>
    %733 = arith.subf %678, %732 : vector<8x128xf32>
    %c91 = arith.constant 91 : index
    %734 = memref.load %arg2[%c91] : memref<384xf32, #tpu.memory_space<smem>>
    %735 = vector.broadcast %734 : f32 to vector<8x128xf32>
    %736 = arith.subf %680, %735 : vector<8x128xf32>
    %c92 = arith.constant 92 : index
    %737 = memref.load %arg2[%c92] : memref<384xf32, #tpu.memory_space<smem>>
    %738 = vector.broadcast %737 : f32 to vector<8x128xf32>
    %739 = arith.subf %682, %738 : vector<8x128xf32>
    %c93 = arith.constant 93 : index
    %740 = memref.load %arg2[%c93] : memref<384xf32, #tpu.memory_space<smem>>
    %741 = vector.broadcast %740 : f32 to vector<8x128xf32>
    %742 = arith.subf %684, %741 : vector<8x128xf32>
    %c94 = arith.constant 94 : index
    %743 = memref.load %arg2[%c94] : memref<384xf32, #tpu.memory_space<smem>>
    %744 = vector.broadcast %743 : f32 to vector<8x128xf32>
    %745 = arith.subf %686, %744 : vector<8x128xf32>
    %c95 = arith.constant 95 : index
    %746 = memref.load %arg2[%c95] : memref<384xf32, #tpu.memory_space<smem>>
    %747 = vector.broadcast %746 : f32 to vector<8x128xf32>
    %748 = arith.subf %688, %747 : vector<8x128xf32>
    %749 = arith.mulf %703, %703 : vector<8x128xf32>
    %750 = arith.mulf %706, %706 : vector<8x128xf32>
    %751 = arith.addf %749, %750 : vector<8x128xf32>
    %752 = arith.mulf %709, %709 : vector<8x128xf32>
    %753 = arith.addf %751, %752 : vector<8x128xf32>
    %754 = arith.mulf %712, %712 : vector<8x128xf32>
    %755 = arith.addf %753, %754 : vector<8x128xf32>
    %756 = arith.mulf %715, %715 : vector<8x128xf32>
    %757 = arith.addf %755, %756 : vector<8x128xf32>
    %758 = arith.mulf %718, %718 : vector<8x128xf32>
    %759 = arith.addf %757, %758 : vector<8x128xf32>
    %760 = arith.mulf %721, %721 : vector<8x128xf32>
    %761 = arith.addf %759, %760 : vector<8x128xf32>
    %762 = arith.mulf %724, %724 : vector<8x128xf32>
    %763 = arith.addf %761, %762 : vector<8x128xf32>
    %764 = arith.mulf %727, %727 : vector<8x128xf32>
    %765 = arith.addf %763, %764 : vector<8x128xf32>
    %766 = arith.mulf %730, %730 : vector<8x128xf32>
    %767 = arith.addf %765, %766 : vector<8x128xf32>
    %768 = arith.mulf %733, %733 : vector<8x128xf32>
    %769 = arith.addf %767, %768 : vector<8x128xf32>
    %770 = arith.mulf %736, %736 : vector<8x128xf32>
    %771 = arith.addf %769, %770 : vector<8x128xf32>
    %772 = arith.mulf %739, %739 : vector<8x128xf32>
    %773 = arith.addf %771, %772 : vector<8x128xf32>
    %774 = arith.mulf %742, %742 : vector<8x128xf32>
    %775 = arith.addf %773, %774 : vector<8x128xf32>
    %776 = arith.mulf %745, %745 : vector<8x128xf32>
    %777 = arith.addf %775, %776 : vector<8x128xf32>
    %778 = arith.mulf %748, %748 : vector<8x128xf32>
    %779 = arith.addf %777, %778 : vector<8x128xf32>
    %780 = math.sqrt %779 : vector<8x128xf32>
    %781 = vector.broadcast %699 : f32 to vector<8x128xf32>
    %782 = arith.addf %781, %780 : vector<8x128xf32>
    %783 = tpu.reciprocal %782 {approx = true} : vector<8x128xf32> -> vector<8x128xf32>
    %784 = arith.mulf %782, %783 : vector<8x128xf32>
    %cst_76 = arith.constant 2.000000e+00 : f32
    %785 = vector.broadcast %cst_76 : f32 to vector<8x128xf32>
    %786 = arith.subf %785, %784 : vector<8x128xf32>
    %787 = arith.mulf %783, %786 : vector<8x128xf32>
    %788 = vector.broadcast %700 : f32 to vector<8x128xf32>
    %789 = arith.mulf %788, %787 : vector<8x128xf32>
    %790 = arith.mulf %789, %703 : vector<8x128xf32>
    %791 = arith.addf %658, %790 : vector<8x128xf32>
    %792 = arith.mulf %789, %706 : vector<8x128xf32>
    %793 = arith.addf %660, %792 : vector<8x128xf32>
    %794 = arith.mulf %789, %709 : vector<8x128xf32>
    %795 = arith.addf %662, %794 : vector<8x128xf32>
    %796 = arith.mulf %789, %712 : vector<8x128xf32>
    %797 = arith.addf %664, %796 : vector<8x128xf32>
    %798 = arith.mulf %789, %715 : vector<8x128xf32>
    %799 = arith.addf %666, %798 : vector<8x128xf32>
    %800 = arith.mulf %789, %718 : vector<8x128xf32>
    %801 = arith.addf %668, %800 : vector<8x128xf32>
    %802 = arith.mulf %789, %721 : vector<8x128xf32>
    %803 = arith.addf %670, %802 : vector<8x128xf32>
    %804 = arith.mulf %789, %724 : vector<8x128xf32>
    %805 = arith.addf %672, %804 : vector<8x128xf32>
    %806 = arith.mulf %789, %727 : vector<8x128xf32>
    %807 = arith.addf %674, %806 : vector<8x128xf32>
    %808 = arith.mulf %789, %730 : vector<8x128xf32>
    %809 = arith.addf %676, %808 : vector<8x128xf32>
    %810 = arith.mulf %789, %733 : vector<8x128xf32>
    %811 = arith.addf %678, %810 : vector<8x128xf32>
    %812 = arith.mulf %789, %736 : vector<8x128xf32>
    %813 = arith.addf %680, %812 : vector<8x128xf32>
    %814 = arith.mulf %789, %739 : vector<8x128xf32>
    %815 = arith.addf %682, %814 : vector<8x128xf32>
    %816 = arith.mulf %789, %742 : vector<8x128xf32>
    %817 = arith.addf %684, %816 : vector<8x128xf32>
    %818 = arith.mulf %789, %745 : vector<8x128xf32>
    %819 = arith.addf %686, %818 : vector<8x128xf32>
    %820 = arith.mulf %789, %748 : vector<8x128xf32>
    %821 = arith.addf %688, %820 : vector<8x128xf32>
    %cst_77 = arith.constant 1.000000e+00 : f32
    %822 = vector.broadcast %cst_77 : f32 to vector<8x128xf32>
    %823 = arith.addf %822, %789 : vector<8x128xf32>
    %824 = arith.mulf %691, %823 : vector<8x128xf32>
    %825 = arith.mulf %699, %700 : f32
    %826 = arith.mulf %787, %787 : vector<8x128xf32>
    %827 = vector.broadcast %825 : f32 to vector<8x128xf32>
    %828 = arith.mulf %827, %826 : vector<8x128xf32>
    %cst_78 = arith.constant 1.000000e+00 : f32
    %829 = vector.broadcast %cst_78 : f32 to vector<8x128xf32>
    %830 = arith.addf %829, %828 : vector<8x128xf32>
    %831 = arith.mulf %698, %830 : vector<8x128xf32>
    %832 = arith.mulf %791, %791 : vector<8x128xf32>
    %833 = arith.mulf %793, %793 : vector<8x128xf32>
    %834 = arith.addf %832, %833 : vector<8x128xf32>
    %835 = arith.mulf %795, %795 : vector<8x128xf32>
    %836 = arith.addf %834, %835 : vector<8x128xf32>
    %837 = arith.mulf %797, %797 : vector<8x128xf32>
    %838 = arith.addf %836, %837 : vector<8x128xf32>
    %839 = arith.mulf %799, %799 : vector<8x128xf32>
    %840 = arith.addf %838, %839 : vector<8x128xf32>
    %841 = arith.mulf %801, %801 : vector<8x128xf32>
    %842 = arith.addf %840, %841 : vector<8x128xf32>
    %843 = arith.mulf %803, %803 : vector<8x128xf32>
    %844 = arith.addf %842, %843 : vector<8x128xf32>
    %845 = arith.mulf %805, %805 : vector<8x128xf32>
    %846 = arith.addf %844, %845 : vector<8x128xf32>
    %847 = arith.mulf %807, %807 : vector<8x128xf32>
    %848 = arith.addf %846, %847 : vector<8x128xf32>
    %849 = arith.mulf %809, %809 : vector<8x128xf32>
    %850 = arith.addf %848, %849 : vector<8x128xf32>
    %851 = arith.mulf %811, %811 : vector<8x128xf32>
    %852 = arith.addf %850, %851 : vector<8x128xf32>
    %853 = arith.mulf %813, %813 : vector<8x128xf32>
    %854 = arith.addf %852, %853 : vector<8x128xf32>
    %855 = arith.mulf %815, %815 : vector<8x128xf32>
    %856 = arith.addf %854, %855 : vector<8x128xf32>
    %857 = arith.mulf %817, %817 : vector<8x128xf32>
    %858 = arith.addf %856, %857 : vector<8x128xf32>
    %859 = arith.mulf %819, %819 : vector<8x128xf32>
    %860 = arith.addf %858, %859 : vector<8x128xf32>
    %861 = arith.mulf %821, %821 : vector<8x128xf32>
    %862 = arith.addf %860, %861 : vector<8x128xf32>
    %863 = math.log %824 : vector<8x128xf32>
    %cst_79 = arith.constant 1.500000e+01 : f32
    %864 = vector.broadcast %cst_79 : f32 to vector<8x128xf32>
    %865 = arith.mulf %864, %863 : vector<8x128xf32>
    %866 = math.log %831 : vector<8x128xf32>
    %867 = arith.addf %865, %866 : vector<8x128xf32>
    %cst_80 = arith.constant 5.000000e-01 : f32
    %868 = vector.broadcast %cst_80 : f32 to vector<8x128xf32>
    %869 = arith.mulf %868, %862 : vector<8x128xf32>
    %cst_81 = arith.constant -14.7030163 : f32
    %870 = vector.broadcast %cst_81 : f32 to vector<8x128xf32>
    %871 = arith.subf %870, %869 : vector<8x128xf32>
    %872 = arith.addf %871, %867 : vector<8x128xf32>
    %873 = arith.cmpf one, %872, %872 : vector<8x128xf32>
    %cst_82 = arith.constant 0xFF800000 : f32
    %874 = vector.broadcast %cst_82 : f32 to vector<8x128xf32>
    %875 = arith.select %873, %874, %872 : vector<8x128xi1>, vector<8x128xf32>
    %c0_83 = arith.constant 0 : index
    %c0_84 = arith.constant 0 : index
    %c0_85 = arith.constant 0 : index
    %876 = vector.load %arg5[%c0_83, %c0_84, %c0_85] : memref<4x8x128xf32, #tpu.memory_space<vmem>>, vector<1x8x128xf32>
    %877 = vector.shape_cast %876 : vector<1x8x128xf32> to vector<8x128xf32>
    %878 = vector.shape_cast %875 : vector<8x128xf32> to vector<1x8x128xf32>
    tpu.vector_store %arg5[%c0_83, %c0_84, %c0_85], %878 {strides = array<i32>} : memref<4x8x128xf32, #tpu.memory_space<vmem>>, vector<1x8x128xf32>,
    %c0_86 = arith.constant 0 : index
    %c0_87 = arith.constant 0 : index
    %c0_88 = arith.constant 0 : index
    %879 = vector.load %arg1[%c0_86, %c0_87, %c0_88] : memref<16x8x128xf32, #tpu.memory_space<vmem>>, vector<1x8x128xf32>
    %880 = vector.shape_cast %879 : vector<1x8x128xf32> to vector<8x128xf32>
    %c1_89 = arith.constant 1 : index
    %c0_90 = arith.constant 0 : index
    %c0_91 = arith.constant 0 : index
    %881 = vector.load %arg1[%c1_89, %c0_90, %c0_91] : memref<16x8x128xf32, #tpu.memory_space<vmem>>, vector<1x8x128xf32>
    %882 = vector.shape_cast %881 : vector<1x8x128xf32> to vector<8x128xf32>
    %c2_92 = arith.constant 2 : index
    %c0_93 = arith.constant 0 : index
    %c0_94 = arith.constant 0 : index
    %883 = vector.load %arg1[%c2_92, %c0_93, %c0_94] : memref<16x8x128xf32, #tpu.memory_space<vmem>>, vector<1x8x128xf32>
    %884 = vector.shape_cast %883 : vector<1x8x128xf32> to vector<8x128xf32>
    %c3_95 = arith.constant 3 : index
    %c0_96 = arith.constant 0 : index
    %c0_97 = arith.constant 0 : index
    %885 = vector.load %arg1[%c3_95, %c0_96, %c0_97] : memref<16x8x128xf32, #tpu.memory_space<vmem>>, vector<1x8x128xf32>
    %886 = vector.shape_cast %885 : vector<1x8x128xf32> to vector<8x128xf32>
    %c4_98 = arith.constant 4 : index
    %c0_99 = arith.constant 0 : index
    %c0_100 = arith.constant 0 : index
    %887 = vector.load %arg1[%c4_98, %c0_99, %c0_100] : memref<16x8x128xf32, #tpu.memory_space<vmem>>, vector<1x8x128xf32>
    %888 = vector.shape_cast %887 : vector<1x8x128xf32> to vector<8x128xf32>
    %c5_101 = arith.constant 5 : index
    %c0_102 = arith.constant 0 : index
    %c0_103 = arith.constant 0 : index
    %889 = vector.load %arg1[%c5_101, %c0_102, %c0_103] : memref<16x8x128xf32, #tpu.memory_space<vmem>>, vector<1x8x128xf32>
    %890 = vector.shape_cast %889 : vector<1x8x128xf32> to vector<8x128xf32>
    %c6_104 = arith.constant 6 : index
    %c0_105 = arith.constant 0 : index
    %c0_106 = arith.constant 0 : index
    %891 = vector.load %arg1[%c6_104, %c0_105, %c0_106] : memref<16x8x128xf32, #tpu.memory_space<vmem>>, vector<1x8x128xf32>
    %892 = vector.shape_cast %891 : vector<1x8x128xf32> to vector<8x128xf32>
    %c7_107 = arith.constant 7 : index
    %c0_108 = arith.constant 0 : index
    %c0_109 = arith.constant 0 : index
    %893 = vector.load %arg1[%c7_107, %c0_108, %c0_109] : memref<16x8x128xf32, #tpu.memory_space<vmem>>, vector<1x8x128xf32>
    %894 = vector.shape_cast %893 : vector<1x8x128xf32> to vector<8x128xf32>
    %c8_110 = arith.constant 8 : index
    %c0_111 = arith.constant 0 : index
    %c0_112 = arith.constant 0 : index
    %895 = vector.load %arg1[%c8_110, %c0_111, %c0_112] : memref<16x8x128xf32, #tpu.memory_space<vmem>>, vector<1x8x128xf32>
    %896 = vector.shape_cast %895 : vector<1x8x128xf32> to vector<8x128xf32>
    %c9_113 = arith.constant 9 : index
    %c0_114 = arith.constant 0 : index
    %c0_115 = arith.constant 0 : index
    %897 = vector.load %arg1[%c9_113, %c0_114, %c0_115] : memref<16x8x128xf32, #tpu.memory_space<vmem>>, vector<1x8x128xf32>
    %898 = vector.shape_cast %897 : vector<1x8x128xf32> to vector<8x128xf32>
    %c10_116 = arith.constant 10 : index
    %c0_117 = arith.constant 0 : index
    %c0_118 = arith.constant 0 : index
    %899 = vector.load %arg1[%c10_116, %c0_117, %c0_118] : memref<16x8x128xf32, #tpu.memory_space<vmem>>, vector<1x8x128xf32>
    %900 = vector.shape_cast %899 : vector<1x8x128xf32> to vector<8x128xf32>
    %c11_119 = arith.constant 11 : index
    %c0_120 = arith.constant 0 : index
    %c0_121 = arith.constant 0 : index
    %901 = vector.load %arg1[%c11_119, %c0_120, %c0_121] : memref<16x8x128xf32, #tpu.memory_space<vmem>>, vector<1x8x128xf32>
    %902 = vector.shape_cast %901 : vector<1x8x128xf32> to vector<8x128xf32>
    %c12_122 = arith.constant 12 : index
    %c0_123 = arith.constant 0 : index
    %c0_124 = arith.constant 0 : index
    %903 = vector.load %arg1[%c12_122, %c0_123, %c0_124] : memref<16x8x128xf32, #tpu.memory_space<vmem>>, vector<1x8x128xf32>
    %904 = vector.shape_cast %903 : vector<1x8x128xf32> to vector<8x128xf32>
    %c13_125 = arith.constant 13 : index
    %c0_126 = arith.constant 0 : index
    %c0_127 = arith.constant 0 : index
    %905 = vector.load %arg1[%c13_125, %c0_126, %c0_127] : memref<16x8x128xf32, #tpu.memory_space<vmem>>, vector<1x8x128xf32>
    %906 = vector.shape_cast %905 : vector<1x8x128xf32> to vector<8x128xf32>
    %c14_128 = arith.constant 14 : index
    %c0_129 = arith.constant 0 : index
    %c0_130 = arith.constant 0 : index
    %907 = vector.load %arg1[%c14_128, %c0_129, %c0_130] : memref<16x8x128xf32, #tpu.memory_space<vmem>>, vector<1x8x128xf32>
    %908 = vector.shape_cast %907 : vector<1x8x128xf32> to vector<8x128xf32>
    %c15_131 = arith.constant 15 : index
    %c0_132 = arith.constant 0 : index
    %c0_133 = arith.constant 0 : index
    %909 = vector.load %arg1[%c15_131, %c0_132, %c0_133] : memref<16x8x128xf32, #tpu.memory_space<vmem>>, vector<1x8x128xf32>
    %910 = vector.shape_cast %909 : vector<1x8x128xf32> to vector<8x128xf32>
    %cst_134 = arith.constant 1.000000e+00 : f32
    %911 = vector.broadcast %cst_134 : f32 to vector<8x128xf32>
    %cst_135 = arith.constant 1.000000e+00 : f32
    %912 = vector.broadcast %cst_135 : f32 to vector<8x128xf32>
    %c6_136 = arith.constant 6 : index
    %913 = memref.load %arg3[%c6_136] : memref<24xf32, #tpu.memory_space<smem>>
    %c6_137 = arith.constant 6 : index
    %914 = memref.load %arg4[%c6_137] : memref<24xf32, #tpu.memory_space<smem>>
    %c96 = arith.constant 96 : index
    %915 = memref.load %arg2[%c96] : memref<384xf32, #tpu.memory_space<smem>>
    %916 = vector.broadcast %915 : f32 to vector<8x128xf32>
    %917 = arith.subf %880, %916 : vector<8x128xf32>
    %c97 = arith.constant 97 : index
    %918 = memref.load %arg2[%c97] : memref<384xf32, #tpu.memory_space<smem>>
    %919 = vector.broadcast %918 : f32 to vector<8x128xf32>
    %920 = arith.subf %882, %919 : vector<8x128xf32>
    %c98 = arith.constant 98 : index
    %921 = memref.load %arg2[%c98] : memref<384xf32, #tpu.memory_space<smem>>
    %922 = vector.broadcast %921 : f32 to vector<8x128xf32>
    %923 = arith.subf %884, %922 : vector<8x128xf32>
    %c99 = arith.constant 99 : index
    %924 = memref.load %arg2[%c99] : memref<384xf32, #tpu.memory_space<smem>>
    %925 = vector.broadcast %924 : f32 to vector<8x128xf32>
    %926 = arith.subf %886, %925 : vector<8x128xf32>
    %c100 = arith.constant 100 : index
    %927 = memref.load %arg2[%c100] : memref<384xf32, #tpu.memory_space<smem>>
    %928 = vector.broadcast %927 : f32 to vector<8x128xf32>
    %929 = arith.subf %888, %928 : vector<8x128xf32>
    %c101 = arith.constant 101 : index
    %930 = memref.load %arg2[%c101] : memref<384xf32, #tpu.memory_space<smem>>
    %931 = vector.broadcast %930 : f32 to vector<8x128xf32>
    %932 = arith.subf %890, %931 : vector<8x128xf32>
    %c102 = arith.constant 102 : index
    %933 = memref.load %arg2[%c102] : memref<384xf32, #tpu.memory_space<smem>>
    %934 = vector.broadcast %933 : f32 to vector<8x128xf32>
    %935 = arith.subf %892, %934 : vector<8x128xf32>
    %c103 = arith.constant 103 : index
    %936 = memref.load %arg2[%c103] : memref<384xf32, #tpu.memory_space<smem>>
    %937 = vector.broadcast %936 : f32 to vector<8x128xf32>
    %938 = arith.subf %894, %937 : vector<8x128xf32>
    %c104 = arith.constant 104 : index
    %939 = memref.load %arg2[%c104] : memref<384xf32, #tpu.memory_space<smem>>
    %940 = vector.broadcast %939 : f32 to vector<8x128xf32>
    %941 = arith.subf %896, %940 : vector<8x128xf32>
    %c105 = arith.constant 105 : index
    %942 = memref.load %arg2[%c105] : memref<384xf32, #tpu.memory_space<smem>>
    %943 = vector.broadcast %942 : f32 to vector<8x128xf32>
    %944 = arith.subf %898, %943 : vector<8x128xf32>
    %c106 = arith.constant 106 : index
    %945 = memref.load %arg2[%c106] : memref<384xf32, #tpu.memory_space<smem>>
    %946 = vector.broadcast %945 : f32 to vector<8x128xf32>
    %947 = arith.subf %900, %946 : vector<8x128xf32>
    %c107 = arith.constant 107 : index
    %948 = memref.load %arg2[%c107] : memref<384xf32, #tpu.memory_space<smem>>
    %949 = vector.broadcast %948 : f32 to vector<8x128xf32>
    %950 = arith.subf %902, %949 : vector<8x128xf32>
    %c108 = arith.constant 108 : index
    %951 = memref.load %arg2[%c108] : memref<384xf32, #tpu.memory_space<smem>>
    %952 = vector.broadcast %951 : f32 to vector<8x128xf32>
    %953 = arith.subf %904, %952 : vector<8x128xf32>
    %c109 = arith.constant 109 : index
    %954 = memref.load %arg2[%c109] : memref<384xf32, #tpu.memory_space<smem>>
    %955 = vector.broadcast %954 : f32 to vector<8x128xf32>
    %956 = arith.subf %906, %955 : vector<8x128xf32>
    %c110 = arith.constant 110 : index
    %957 = memref.load %arg2[%c110] : memref<384xf32, #tpu.memory_space<smem>>
    %958 = vector.broadcast %957 : f32 to vector<8x128xf32>
    %959 = arith.subf %908, %958 : vector<8x128xf32>
    %c111 = arith.constant 111 : index
    %960 = memref.load %arg2[%c111] : memref<384xf32, #tpu.memory_space<smem>>
    %961 = vector.broadcast %960 : f32 to vector<8x128xf32>
    %962 = arith.subf %910, %961 : vector<8x128xf32>
    %963 = arith.mulf %917, %917 : vector<8x128xf32>
    %964 = arith.mulf %920, %920 : vector<8x128xf32>
    %965 = arith.addf %963, %964 : vector<8x128xf32>
    %966 = arith.mulf %923, %923 : vector<8x128xf32>
    %967 = arith.addf %965, %966 : vector<8x128xf32>
    %968 = arith.mulf %926, %926 : vector<8x128xf32>
    %969 = arith.addf %967, %968 : vector<8x128xf32>
    %970 = arith.mulf %929, %929 : vector<8x128xf32>
    %971 = arith.addf %969, %970 : vector<8x128xf32>
    %972 = arith.mulf %932, %932 : vector<8x128xf32>
    %973 = arith.addf %971, %972 : vector<8x128xf32>
    %974 = arith.mulf %935, %935 : vector<8x128xf32>
    %975 = arith.addf %973, %974 : vector<8x128xf32>
    %976 = arith.mulf %938, %938 : vector<8x128xf32>
    %977 = arith.addf %975, %976 : vector<8x128xf32>
    %978 = arith.mulf %941, %941 : vector<8x128xf32>
    %979 = arith.addf %977, %978 : vector<8x128xf32>
    %980 = arith.mulf %944, %944 : vector<8x128xf32>
    %981 = arith.addf %979, %980 : vector<8x128xf32>
    %982 = arith.mulf %947, %947 : vector<8x128xf32>
    %983 = arith.addf %981, %982 : vector<8x128xf32>
    %984 = arith.mulf %950, %950 : vector<8x128xf32>
    %985 = arith.addf %983, %984 : vector<8x128xf32>
    %986 = arith.mulf %953, %953 : vector<8x128xf32>
    %987 = arith.addf %985, %986 : vector<8x128xf32>
    %988 = arith.mulf %956, %956 : vector<8x128xf32>
    %989 = arith.addf %987, %988 : vector<8x128xf32>
    %990 = arith.mulf %959, %959 : vector<8x128xf32>
    %991 = arith.addf %989, %990 : vector<8x128xf32>
    %992 = arith.mulf %962, %962 : vector<8x128xf32>
    %993 = arith.addf %991, %992 : vector<8x128xf32>
    %994 = math.sqrt %993 : vector<8x128xf32>
    %995 = vector.broadcast %913 : f32 to vector<8x128xf32>
    %996 = arith.addf %995, %994 : vector<8x128xf32>
    %997 = tpu.reciprocal %996 {approx = true} : vector<8x128xf32> -> vector<8x128xf32>
    %998 = arith.mulf %996, %997 : vector<8x128xf32>
    %cst_138 = arith.constant 2.000000e+00 : f32
    %999 = vector.broadcast %cst_138 : f32 to vector<8x128xf32>
    %1000 = arith.subf %999, %998 : vector<8x128xf32>
    %1001 = arith.mulf %997, %1000 : vector<8x128xf32>
    %1002 = vector.broadcast %914 : f32 to vector<8x128xf32>
    %1003 = arith.mulf %1002, %1001 : vector<8x128xf32>
    %1004 = arith.mulf %1003, %917 : vector<8x128xf32>
    %1005 = arith.addf %880, %1004 : vector<8x128xf32>
    %1006 = arith.mulf %1003, %920 : vector<8x128xf32>
    %1007 = arith.addf %882, %1006 : vector<8x128xf32>
    %1008 = arith.mulf %1003, %923 : vector<8x128xf32>
    %1009 = arith.addf %884, %1008 : vector<8x128xf32>
    %1010 = arith.mulf %1003, %926 : vector<8x128xf32>
    %1011 = arith.addf %886, %1010 : vector<8x128xf32>
    %1012 = arith.mulf %1003, %929 : vector<8x128xf32>
    %1013 = arith.addf %888, %1012 : vector<8x128xf32>
    %1014 = arith.mulf %1003, %932 : vector<8x128xf32>
    %1015 = arith.addf %890, %1014 : vector<8x128xf32>
    %1016 = arith.mulf %1003, %935 : vector<8x128xf32>
    %1017 = arith.addf %892, %1016 : vector<8x128xf32>
    %1018 = arith.mulf %1003, %938 : vector<8x128xf32>
    %1019 = arith.addf %894, %1018 : vector<8x128xf32>
    %1020 = arith.mulf %1003, %941 : vector<8x128xf32>
    %1021 = arith.addf %896, %1020 : vector<8x128xf32>
    %1022 = arith.mulf %1003, %944 : vector<8x128xf32>
    %1023 = arith.addf %898, %1022 : vector<8x128xf32>
    %1024 = arith.mulf %1003, %947 : vector<8x128xf32>
    %1025 = arith.addf %900, %1024 : vector<8x128xf32>
    %1026 = arith.mulf %1003, %950 : vector<8x128xf32>
    %1027 = arith.addf %902, %1026 : vector<8x128xf32>
    %1028 = arith.mulf %1003, %953 : vector<8x128xf32>
    %1029 = arith.addf %904, %1028 : vector<8x128xf32>
    %1030 = arith.mulf %1003, %956 : vector<8x128xf32>
    %1031 = arith.addf %906, %1030 : vector<8x128xf32>
    %1032 = arith.mulf %1003, %959 : vector<8x128xf32>
    %1033 = arith.addf %908, %1032 : vector<8x128xf32>
    %1034 = arith.mulf %1003, %962 : vector<8x128xf32>
    %1035 = arith.addf %910, %1034 : vector<8x128xf32>
    %cst_139 = arith.constant 1.000000e+00 : f32
    %1036 = vector.broadcast %cst_139 : f32 to vector<8x128xf32>
    %1037 = arith.addf %1036, %1003 : vector<8x128xf32>
    %1038 = arith.mulf %911, %1037 : vector<8x128xf32>
    %1039 = arith.mulf %913, %914 : f32
    %1040 = arith.mulf %1001, %1001 : vector<8x128xf32>
    %1041 = vector.broadcast %1039 : f32 to vector<8x128xf32>
    %1042 = arith.mulf %1041, %1040 : vector<8x128xf32>
    %cst_140 = arith.constant 1.000000e+00 : f32
    %1043 = vector.broadcast %cst_140 : f32 to vector<8x128xf32>
    %1044 = arith.addf %1043, %1042 : vector<8x128xf32>
    %1045 = arith.mulf %912, %1044 : vector<8x128xf32>
    %c7_141 = arith.constant 7 : index
    %1046 = memref.load %arg3[%c7_141] : memref<24xf32, #tpu.memory_space<smem>>
    %c7_142 = arith.constant 7 : index
    %1047 = memref.load %arg4[%c7_142] : memref<24xf32, #tpu.memory_space<smem>>
    %c112 = arith.constant 112 : index
    %1048 = memref.load %arg2[%c112] : memref<384xf32, #tpu.memory_space<smem>>
    %1049 = vector.broadcast %1048 : f32 to vector<8x128xf32>
    %1050 = arith.subf %1005, %1049 : vector<8x128xf32>
    %c113 = arith.constant 113 : index
    %1051 = memref.load %arg2[%c113] : memref<384xf32, #tpu.memory_space<smem>>
    %1052 = vector.broadcast %1051 : f32 to vector<8x128xf32>
    %1053 = arith.subf %1007, %1052 : vector<8x128xf32>
    %c114 = arith.constant 114 : index
    %1054 = memref.load %arg2[%c114] : memref<384xf32, #tpu.memory_space<smem>>
    %1055 = vector.broadcast %1054 : f32 to vector<8x128xf32>
    %1056 = arith.subf %1009, %1055 : vector<8x128xf32>
    %c115 = arith.constant 115 : index
    %1057 = memref.load %arg2[%c115] : memref<384xf32, #tpu.memory_space<smem>>
    %1058 = vector.broadcast %1057 : f32 to vector<8x128xf32>
    %1059 = arith.subf %1011, %1058 : vector<8x128xf32>
    %c116 = arith.constant 116 : index
    %1060 = memref.load %arg2[%c116] : memref<384xf32, #tpu.memory_space<smem>>
    %1061 = vector.broadcast %1060 : f32 to vector<8x128xf32>
    %1062 = arith.subf %1013, %1061 : vector<8x128xf32>
    %c117 = arith.constant 117 : index
    %1063 = memref.load %arg2[%c117] : memref<384xf32, #tpu.memory_space<smem>>
    %1064 = vector.broadcast %1063 : f32 to vector<8x128xf32>
    %1065 = arith.subf %1015, %1064 : vector<8x128xf32>
    %c118 = arith.constant 118 : index
    %1066 = memref.load %arg2[%c118] : memref<384xf32, #tpu.memory_space<smem>>
    %1067 = vector.broadcast %1066 : f32 to vector<8x128xf32>
    %1068 = arith.subf %1017, %1067 : vector<8x128xf32>
    %c119 = arith.constant 119 : index
    %1069 = memref.load %arg2[%c119] : memref<384xf32, #tpu.memory_space<smem>>
    %1070 = vector.broadcast %1069 : f32 to vector<8x128xf32>
    %1071 = arith.subf %1019, %1070 : vector<8x128xf32>
    %c120 = arith.constant 120 : index
    %1072 = memref.load %arg2[%c120] : memref<384xf32, #tpu.memory_space<smem>>
    %1073 = vector.broadcast %1072 : f32 to vector<8x128xf32>
    %1074 = arith.subf %1021, %1073 : vector<8x128xf32>
    %c121 = arith.constant 121 : index
    %1075 = memref.load %arg2[%c121] : memref<384xf32, #tpu.memory_space<smem>>
    %1076 = vector.broadcast %1075 : f32 to vector<8x128xf32>
    %1077 = arith.subf %1023, %1076 : vector<8x128xf32>
    %c122 = arith.constant 122 : index
    %1078 = memref.load %arg2[%c122] : memref<384xf32, #tpu.memory_space<smem>>
    %1079 = vector.broadcast %1078 : f32 to vector<8x128xf32>
    %1080 = arith.subf %1025, %1079 : vector<8x128xf32>
    %c123 = arith.constant 123 : index
    %1081 = memref.load %arg2[%c123] : memref<384xf32, #tpu.memory_space<smem>>
    %1082 = vector.broadcast %1081 : f32 to vector<8x128xf32>
    %1083 = arith.subf %1027, %1082 : vector<8x128xf32>
    %c124 = arith.constant 124 : index
    %1084 = memref.load %arg2[%c124] : memref<384xf32, #tpu.memory_space<smem>>
    %1085 = vector.broadcast %1084 : f32 to vector<8x128xf32>
    %1086 = arith.subf %1029, %1085 : vector<8x128xf32>
    %c125 = arith.constant 125 : index
    %1087 = memref.load %arg2[%c125] : memref<384xf32, #tpu.memory_space<smem>>
    %1088 = vector.broadcast %1087 : f32 to vector<8x128xf32>
    %1089 = arith.subf %1031, %1088 : vector<8x128xf32>
    %c126 = arith.constant 126 : index
    %1090 = memref.load %arg2[%c126] : memref<384xf32, #tpu.memory_space<smem>>
    %1091 = vector.broadcast %1090 : f32 to vector<8x128xf32>
    %1092 = arith.subf %1033, %1091 : vector<8x128xf32>
    %c127 = arith.constant 127 : index
    %1093 = memref.load %arg2[%c127] : memref<384xf32, #tpu.memory_space<smem>>
    %1094 = vector.broadcast %1093 : f32 to vector<8x128xf32>
    %1095 = arith.subf %1035, %1094 : vector<8x128xf32>
    %1096 = arith.mulf %1050, %1050 : vector<8x128xf32>
    %1097 = arith.mulf %1053, %1053 : vector<8x128xf32>
    %1098 = arith.addf %1096, %1097 : vector<8x128xf32>
    %1099 = arith.mulf %1056, %1056 : vector<8x128xf32>
    %1100 = arith.addf %1098, %1099 : vector<8x128xf32>
    %1101 = arith.mulf %1059, %1059 : vector<8x128xf32>
    %1102 = arith.addf %1100, %1101 : vector<8x128xf32>
    %1103 = arith.mulf %1062, %1062 : vector<8x128xf32>
    %1104 = arith.addf %1102, %1103 : vector<8x128xf32>
    %1105 = arith.mulf %1065, %1065 : vector<8x128xf32>
    %1106 = arith.addf %1104, %1105 : vector<8x128xf32>
    %1107 = arith.mulf %1068, %1068 : vector<8x128xf32>
    %1108 = arith.addf %1106, %1107 : vector<8x128xf32>
    %1109 = arith.mulf %1071, %1071 : vector<8x128xf32>
    %1110 = arith.addf %1108, %1109 : vector<8x128xf32>
    %1111 = arith.mulf %1074, %1074 : vector<8x128xf32>
    %1112 = arith.addf %1110, %1111 : vector<8x128xf32>
    %1113 = arith.mulf %1077, %1077 : vector<8x128xf32>
    %1114 = arith.addf %1112, %1113 : vector<8x128xf32>
    %1115 = arith.mulf %1080, %1080 : vector<8x128xf32>
    %1116 = arith.addf %1114, %1115 : vector<8x128xf32>
    %1117 = arith.mulf %1083, %1083 : vector<8x128xf32>
    %1118 = arith.addf %1116, %1117 : vector<8x128xf32>
    %1119 = arith.mulf %1086, %1086 : vector<8x128xf32>
    %1120 = arith.addf %1118, %1119 : vector<8x128xf32>
    %1121 = arith.mulf %1089, %1089 : vector<8x128xf32>
    %1122 = arith.addf %1120, %1121 : vector<8x128xf32>
    %1123 = arith.mulf %1092, %1092 : vector<8x128xf32>
    %1124 = arith.addf %1122, %1123 : vector<8x128xf32>
    %1125 = arith.mulf %1095, %1095 : vector<8x128xf32>
    %1126 = arith.addf %1124, %1125 : vector<8x128xf32>
    %1127 = math.sqrt %1126 : vector<8x128xf32>
    %1128 = vector.broadcast %1046 : f32 to vector<8x128xf32>
    %1129 = arith.addf %1128, %1127 : vector<8x128xf32>
    %1130 = tpu.reciprocal %1129 {approx = true} : vector<8x128xf32> -> vector<8x128xf32>
    %1131 = arith.mulf %1129, %1130 : vector<8x128xf32>
    %cst_143 = arith.constant 2.000000e+00 : f32
    %1132 = vector.broadcast %cst_143 : f32 to vector<8x128xf32>
    %1133 = arith.subf %1132, %1131 : vector<8x128xf32>
    %1134 = arith.mulf %1130, %1133 : vector<8x128xf32>
    %1135 = vector.broadcast %1047 : f32 to vector<8x128xf32>
    %1136 = arith.mulf %1135, %1134 : vector<8x128xf32>
    %1137 = arith.mulf %1136, %1050 : vector<8x128xf32>
    %1138 = arith.addf %1005, %1137 : vector<8x128xf32>
    %1139 = arith.mulf %1136, %1053 : vector<8x128xf32>
    %1140 = arith.addf %1007, %1139 : vector<8x128xf32>
    %1141 = arith.mulf %1136, %1056 : vector<8x128xf32>
    %1142 = arith.addf %1009, %1141 : vector<8x128xf32>
    %1143 = arith.mulf %1136, %1059 : vector<8x128xf32>
    %1144 = arith.addf %1011, %1143 : vector<8x128xf32>
    %1145 = arith.mulf %1136, %1062 : vector<8x128xf32>
    %1146 = arith.addf %1013, %1145 : vector<8x128xf32>
    %1147 = arith.mulf %1136, %1065 : vector<8x128xf32>
    %1148 = arith.addf %1015, %1147 : vector<8x128xf32>
    %1149 = arith.mulf %1136, %1068 : vector<8x128xf32>
    %1150 = arith.addf %1017, %1149 : vector<8x128xf32>
    %1151 = arith.mulf %1136, %1071 : vector<8x128xf32>
    %1152 = arith.addf %1019, %1151 : vector<8x128xf32>
    %1153 = arith.mulf %1136, %1074 : vector<8x128xf32>
    %1154 = arith.addf %1021, %1153 : vector<8x128xf32>
    %1155 = arith.mulf %1136, %1077 : vector<8x128xf32>
    %1156 = arith.addf %1023, %1155 : vector<8x128xf32>
    %1157 = arith.mulf %1136, %1080 : vector<8x128xf32>
    %1158 = arith.addf %1025, %1157 : vector<8x128xf32>
    %1159 = arith.mulf %1136, %1083 : vector<8x128xf32>
    %1160 = arith.addf %1027, %1159 : vector<8x128xf32>
    %1161 = arith.mulf %1136, %1086 : vector<8x128xf32>
    %1162 = arith.addf %1029, %1161 : vector<8x128xf32>
    %1163 = arith.mulf %1136, %1089 : vector<8x128xf32>
    %1164 = arith.addf %1031, %1163 : vector<8x128xf32>
    %1165 = arith.mulf %1136, %1092 : vector<8x128xf32>
    %1166 = arith.addf %1033, %1165 : vector<8x128xf32>
    %1167 = arith.mulf %1136, %1095 : vector<8x128xf32>
    %1168 = arith.addf %1035, %1167 : vector<8x128xf32>
    %cst_144 = arith.constant 1.000000e+00 : f32
    %1169 = vector.broadcast %cst_144 : f32 to vector<8x128xf32>
    %1170 = arith.addf %1169, %1136 : vector<8x128xf32>
    %1171 = arith.mulf %1038, %1170 : vector<8x128xf32>
    %1172 = arith.mulf %1046, %1047 : f32
    %1173 = arith.mulf %1134, %1134 : vector<8x128xf32>
    %1174 = vector.broadcast %1172 : f32 to vector<8x128xf32>
    %1175 = arith.mulf %1174, %1173 : vector<8x128xf32>
    %cst_145 = arith.constant 1.000000e+00 : f32
    %1176 = vector.broadcast %cst_145 : f32 to vector<8x128xf32>
    %1177 = arith.addf %1176, %1175 : vector<8x128xf32>
    %1178 = arith.mulf %1045, %1177 : vector<8x128xf32>
    %c8_146 = arith.constant 8 : index
    %1179 = memref.load %arg3[%c8_146] : memref<24xf32, #tpu.memory_space<smem>>
    %c8_147 = arith.constant 8 : index
    %1180 = memref.load %arg4[%c8_147] : memref<24xf32, #tpu.memory_space<smem>>
    %c128 = arith.constant 128 : index
    %1181 = memref.load %arg2[%c128] : memref<384xf32, #tpu.memory_space<smem>>
    %1182 = vector.broadcast %1181 : f32 to vector<8x128xf32>
    %1183 = arith.subf %1138, %1182 : vector<8x128xf32>
    %c129 = arith.constant 129 : index
    %1184 = memref.load %arg2[%c129] : memref<384xf32, #tpu.memory_space<smem>>
    %1185 = vector.broadcast %1184 : f32 to vector<8x128xf32>
    %1186 = arith.subf %1140, %1185 : vector<8x128xf32>
    %c130 = arith.constant 130 : index
    %1187 = memref.load %arg2[%c130] : memref<384xf32, #tpu.memory_space<smem>>
    %1188 = vector.broadcast %1187 : f32 to vector<8x128xf32>
    %1189 = arith.subf %1142, %1188 : vector<8x128xf32>
    %c131 = arith.constant 131 : index
    %1190 = memref.load %arg2[%c131] : memref<384xf32, #tpu.memory_space<smem>>
    %1191 = vector.broadcast %1190 : f32 to vector<8x128xf32>
    %1192 = arith.subf %1144, %1191 : vector<8x128xf32>
    %c132 = arith.constant 132 : index
    %1193 = memref.load %arg2[%c132] : memref<384xf32, #tpu.memory_space<smem>>
    %1194 = vector.broadcast %1193 : f32 to vector<8x128xf32>
    %1195 = arith.subf %1146, %1194 : vector<8x128xf32>
    %c133 = arith.constant 133 : index
    %1196 = memref.load %arg2[%c133] : memref<384xf32, #tpu.memory_space<smem>>
    %1197 = vector.broadcast %1196 : f32 to vector<8x128xf32>
    %1198 = arith.subf %1148, %1197 : vector<8x128xf32>
    %c134 = arith.constant 134 : index
    %1199 = memref.load %arg2[%c134] : memref<384xf32, #tpu.memory_space<smem>>
    %1200 = vector.broadcast %1199 : f32 to vector<8x128xf32>
    %1201 = arith.subf %1150, %1200 : vector<8x128xf32>
    %c135 = arith.constant 135 : index
    %1202 = memref.load %arg2[%c135] : memref<384xf32, #tpu.memory_space<smem>>
    %1203 = vector.broadcast %1202 : f32 to vector<8x128xf32>
    %1204 = arith.subf %1152, %1203 : vector<8x128xf32>
    %c136 = arith.constant 136 : index
    %1205 = memref.load %arg2[%c136] : memref<384xf32, #tpu.memory_space<smem>>
    %1206 = vector.broadcast %1205 : f32 to vector<8x128xf32>
    %1207 = arith.subf %1154, %1206 : vector<8x128xf32>
    %c137 = arith.constant 137 : index
    %1208 = memref.load %arg2[%c137] : memref<384xf32, #tpu.memory_space<smem>>
    %1209 = vector.broadcast %1208 : f32 to vector<8x128xf32>
    %1210 = arith.subf %1156, %1209 : vector<8x128xf32>
    %c138 = arith.constant 138 : index
    %1211 = memref.load %arg2[%c138] : memref<384xf32, #tpu.memory_space<smem>>
    %1212 = vector.broadcast %1211 : f32 to vector<8x128xf32>
    %1213 = arith.subf %1158, %1212 : vector<8x128xf32>
    %c139 = arith.constant 139 : index
    %1214 = memref.load %arg2[%c139] : memref<384xf32, #tpu.memory_space<smem>>
    %1215 = vector.broadcast %1214 : f32 to vector<8x128xf32>
    %1216 = arith.subf %1160, %1215 : vector<8x128xf32>
    %c140 = arith.constant 140 : index
    %1217 = memref.load %arg2[%c140] : memref<384xf32, #tpu.memory_space<smem>>
    %1218 = vector.broadcast %1217 : f32 to vector<8x128xf32>
    %1219 = arith.subf %1162, %1218 : vector<8x128xf32>
    %c141 = arith.constant 141 : index
    %1220 = memref.load %arg2[%c141] : memref<384xf32, #tpu.memory_space<smem>>
    %1221 = vector.broadcast %1220 : f32 to vector<8x128xf32>
    %1222 = arith.subf %1164, %1221 : vector<8x128xf32>
    %c142 = arith.constant 142 : index
    %1223 = memref.load %arg2[%c142] : memref<384xf32, #tpu.memory_space<smem>>
    %1224 = vector.broadcast %1223 : f32 to vector<8x128xf32>
    %1225 = arith.subf %1166, %1224 : vector<8x128xf32>
    %c143 = arith.constant 143 : index
    %1226 = memref.load %arg2[%c143] : memref<384xf32, #tpu.memory_space<smem>>
    %1227 = vector.broadcast %1226 : f32 to vector<8x128xf32>
    %1228 = arith.subf %1168, %1227 : vector<8x128xf32>
    %1229 = arith.mulf %1183, %1183 : vector<8x128xf32>
    %1230 = arith.mulf %1186, %1186 : vector<8x128xf32>
    %1231 = arith.addf %1229, %1230 : vector<8x128xf32>
    %1232 = arith.mulf %1189, %1189 : vector<8x128xf32>
    %1233 = arith.addf %1231, %1232 : vector<8x128xf32>
    %1234 = arith.mulf %1192, %1192 : vector<8x128xf32>
    %1235 = arith.addf %1233, %1234 : vector<8x128xf32>
    %1236 = arith.mulf %1195, %1195 : vector<8x128xf32>
    %1237 = arith.addf %1235, %1236 : vector<8x128xf32>
    %1238 = arith.mulf %1198, %1198 : vector<8x128xf32>
    %1239 = arith.addf %1237, %1238 : vector<8x128xf32>
    %1240 = arith.mulf %1201, %1201 : vector<8x128xf32>
    %1241 = arith.addf %1239, %1240 : vector<8x128xf32>
    %1242 = arith.mulf %1204, %1204 : vector<8x128xf32>
    %1243 = arith.addf %1241, %1242 : vector<8x128xf32>
    %1244 = arith.mulf %1207, %1207 : vector<8x128xf32>
    %1245 = arith.addf %1243, %1244 : vector<8x128xf32>
    %1246 = arith.mulf %1210, %1210 : vector<8x128xf32>
    %1247 = arith.addf %1245, %1246 : vector<8x128xf32>
    %1248 = arith.mulf %1213, %1213 : vector<8x128xf32>
    %1249 = arith.addf %1247, %1248 : vector<8x128xf32>
    %1250 = arith.mulf %1216, %1216 : vector<8x128xf32>
    %1251 = arith.addf %1249, %1250 : vector<8x128xf32>
    %1252 = arith.mulf %1219, %1219 : vector<8x128xf32>
    %1253 = arith.addf %1251, %1252 : vector<8x128xf32>
    %1254 = arith.mulf %1222, %1222 : vector<8x128xf32>
    %1255 = arith.addf %1253, %1254 : vector<8x128xf32>
    %1256 = arith.mulf %1225, %1225 : vector<8x128xf32>
    %1257 = arith.addf %1255, %1256 : vector<8x128xf32>
    %1258 = arith.mulf %1228, %1228 : vector<8x128xf32>
    %1259 = arith.addf %1257, %1258 : vector<8x128xf32>
    %1260 = math.sqrt %1259 : vector<8x128xf32>
    %1261 = vector.broadcast %1179 : f32 to vector<8x128xf32>
    %1262 = arith.addf %1261, %1260 : vector<8x128xf32>
    %1263 = tpu.reciprocal %1262 {approx = true} : vector<8x128xf32> -> vector<8x128xf32>
    %1264 = arith.mulf %1262, %1263 : vector<8x128xf32>
    %cst_148 = arith.constant 2.000000e+00 : f32
    %1265 = vector.broadcast %cst_148 : f32 to vector<8x128xf32>
    %1266 = arith.subf %1265, %1264 : vector<8x128xf32>
    %1267 = arith.mulf %1263, %1266 : vector<8x128xf32>
    %1268 = vector.broadcast %1180 : f32 to vector<8x128xf32>
    %1269 = arith.mulf %1268, %1267 : vector<8x128xf32>
    %1270 = arith.mulf %1269, %1183 : vector<8x128xf32>
    %1271 = arith.addf %1138, %1270 : vector<8x128xf32>
    %1272 = arith.mulf %1269, %1186 : vector<8x128xf32>
    %1273 = arith.addf %1140, %1272 : vector<8x128xf32>
    %1274 = arith.mulf %1269, %1189 : vector<8x128xf32>
    %1275 = arith.addf %1142, %1274 : vector<8x128xf32>
    %1276 = arith.mulf %1269, %1192 : vector<8x128xf32>
    %1277 = arith.addf %1144, %1276 : vector<8x128xf32>
    %1278 = arith.mulf %1269, %1195 : vector<8x128xf32>
    %1279 = arith.addf %1146, %1278 : vector<8x128xf32>
    %1280 = arith.mulf %1269, %1198 : vector<8x128xf32>
    %1281 = arith.addf %1148, %1280 : vector<8x128xf32>
    %1282 = arith.mulf %1269, %1201 : vector<8x128xf32>
    %1283 = arith.addf %1150, %1282 : vector<8x128xf32>
    %1284 = arith.mulf %1269, %1204 : vector<8x128xf32>
    %1285 = arith.addf %1152, %1284 : vector<8x128xf32>
    %1286 = arith.mulf %1269, %1207 : vector<8x128xf32>
    %1287 = arith.addf %1154, %1286 : vector<8x128xf32>
    %1288 = arith.mulf %1269, %1210 : vector<8x128xf32>
    %1289 = arith.addf %1156, %1288 : vector<8x128xf32>
    %1290 = arith.mulf %1269, %1213 : vector<8x128xf32>
    %1291 = arith.addf %1158, %1290 : vector<8x128xf32>
    %1292 = arith.mulf %1269, %1216 : vector<8x128xf32>
    %1293 = arith.addf %1160, %1292 : vector<8x128xf32>
    %1294 = arith.mulf %1269, %1219 : vector<8x128xf32>
    %1295 = arith.addf %1162, %1294 : vector<8x128xf32>
    %1296 = arith.mulf %1269, %1222 : vector<8x128xf32>
    %1297 = arith.addf %1164, %1296 : vector<8x128xf32>
    %1298 = arith.mulf %1269, %1225 : vector<8x128xf32>
    %1299 = arith.addf %1166, %1298 : vector<8x128xf32>
    %1300 = arith.mulf %1269, %1228 : vector<8x128xf32>
    %1301 = arith.addf %1168, %1300 : vector<8x128xf32>
    %cst_149 = arith.constant 1.000000e+00 : f32
    %1302 = vector.broadcast %cst_149 : f32 to vector<8x128xf32>
    %1303 = arith.addf %1302, %1269 : vector<8x128xf32>
    %1304 = arith.mulf %1171, %1303 : vector<8x128xf32>
    %1305 = arith.mulf %1179, %1180 : f32
    %1306 = arith.mulf %1267, %1267 : vector<8x128xf32>
    %1307 = vector.broadcast %1305 : f32 to vector<8x128xf32>
    %1308 = arith.mulf %1307, %1306 : vector<8x128xf32>
    %cst_150 = arith.constant 1.000000e+00 : f32
    %1309 = vector.broadcast %cst_150 : f32 to vector<8x128xf32>
    %1310 = arith.addf %1309, %1308 : vector<8x128xf32>
    %1311 = arith.mulf %1178, %1310 : vector<8x128xf32>
    %c9_151 = arith.constant 9 : index
    %1312 = memref.load %arg3[%c9_151] : memref<24xf32, #tpu.memory_space<smem>>
    %c9_152 = arith.constant 9 : index
    %1313 = memref.load %arg4[%c9_152] : memref<24xf32, #tpu.memory_space<smem>>
    %c144 = arith.constant 144 : index
    %1314 = memref.load %arg2[%c144] : memref<384xf32, #tpu.memory_space<smem>>
    %1315 = vector.broadcast %1314 : f32 to vector<8x128xf32>
    %1316 = arith.subf %1271, %1315 : vector<8x128xf32>
    %c145 = arith.constant 145 : index
    %1317 = memref.load %arg2[%c145] : memref<384xf32, #tpu.memory_space<smem>>
    %1318 = vector.broadcast %1317 : f32 to vector<8x128xf32>
    %1319 = arith.subf %1273, %1318 : vector<8x128xf32>
    %c146 = arith.constant 146 : index
    %1320 = memref.load %arg2[%c146] : memref<384xf32, #tpu.memory_space<smem>>
    %1321 = vector.broadcast %1320 : f32 to vector<8x128xf32>
    %1322 = arith.subf %1275, %1321 : vector<8x128xf32>
    %c147 = arith.constant 147 : index
    %1323 = memref.load %arg2[%c147] : memref<384xf32, #tpu.memory_space<smem>>
    %1324 = vector.broadcast %1323 : f32 to vector<8x128xf32>
    %1325 = arith.subf %1277, %1324 : vector<8x128xf32>
    %c148 = arith.constant 148 : index
    %1326 = memref.load %arg2[%c148] : memref<384xf32, #tpu.memory_space<smem>>
    %1327 = vector.broadcast %1326 : f32 to vector<8x128xf32>
    %1328 = arith.subf %1279, %1327 : vector<8x128xf32>
    %c149 = arith.constant 149 : index
    %1329 = memref.load %arg2[%c149] : memref<384xf32, #tpu.memory_space<smem>>
    %1330 = vector.broadcast %1329 : f32 to vector<8x128xf32>
    %1331 = arith.subf %1281, %1330 : vector<8x128xf32>
    %c150 = arith.constant 150 : index
    %1332 = memref.load %arg2[%c150] : memref<384xf32, #tpu.memory_space<smem>>
    %1333 = vector.broadcast %1332 : f32 to vector<8x128xf32>
    %1334 = arith.subf %1283, %1333 : vector<8x128xf32>
    %c151 = arith.constant 151 : index
    %1335 = memref.load %arg2[%c151] : memref<384xf32, #tpu.memory_space<smem>>
    %1336 = vector.broadcast %1335 : f32 to vector<8x128xf32>
    %1337 = arith.subf %1285, %1336 : vector<8x128xf32>
    %c152 = arith.constant 152 : index
    %1338 = memref.load %arg2[%c152] : memref<384xf32, #tpu.memory_space<smem>>
    %1339 = vector.broadcast %1338 : f32 to vector<8x128xf32>
    %1340 = arith.subf %1287, %1339 : vector<8x128xf32>
    %c153 = arith.constant 153 : index
    %1341 = memref.load %arg2[%c153] : memref<384xf32, #tpu.memory_space<smem>>
    %1342 = vector.broadcast %1341 : f32 to vector<8x128xf32>
    %1343 = arith.subf %1289, %1342 : vector<8x128xf32>
    %c154 = arith.constant 154 : index
    %1344 = memref.load %arg2[%c154] : memref<384xf32, #tpu.memory_space<smem>>
    %1345 = vector.broadcast %1344 : f32 to vector<8x128xf32>
    %1346 = arith.subf %1291, %1345 : vector<8x128xf32>
    %c155 = arith.constant 155 : index
    %1347 = memref.load %arg2[%c155] : memref<384xf32, #tpu.memory_space<smem>>
    %1348 = vector.broadcast %1347 : f32 to vector<8x128xf32>
    %1349 = arith.subf %1293, %1348 : vector<8x128xf32>
    %c156 = arith.constant 156 : index
    %1350 = memref.load %arg2[%c156] : memref<384xf32, #tpu.memory_space<smem>>
    %1351 = vector.broadcast %1350 : f32 to vector<8x128xf32>
    %1352 = arith.subf %1295, %1351 : vector<8x128xf32>
    %c157 = arith.constant 157 : index
    %1353 = memref.load %arg2[%c157] : memref<384xf32, #tpu.memory_space<smem>>
    %1354 = vector.broadcast %1353 : f32 to vector<8x128xf32>
    %1355 = arith.subf %1297, %1354 : vector<8x128xf32>
    %c158 = arith.constant 158 : index
    %1356 = memref.load %arg2[%c158] : memref<384xf32, #tpu.memory_space<smem>>
    %1357 = vector.broadcast %1356 : f32 to vector<8x128xf32>
    %1358 = arith.subf %1299, %1357 : vector<8x128xf32>
    %c159 = arith.constant 159 : index
    %1359 = memref.load %arg2[%c159] : memref<384xf32, #tpu.memory_space<smem>>
    %1360 = vector.broadcast %1359 : f32 to vector<8x128xf32>
    %1361 = arith.subf %1301, %1360 : vector<8x128xf32>
    %1362 = arith.mulf %1316, %1316 : vector<8x128xf32>
    %1363 = arith.mulf %1319, %1319 : vector<8x128xf32>
    %1364 = arith.addf %1362, %1363 : vector<8x128xf32>
    %1365 = arith.mulf %1322, %1322 : vector<8x128xf32>
    %1366 = arith.addf %1364, %1365 : vector<8x128xf32>
    %1367 = arith.mulf %1325, %1325 : vector<8x128xf32>
    %1368 = arith.addf %1366, %1367 : vector<8x128xf32>
    %1369 = arith.mulf %1328, %1328 : vector<8x128xf32>
    %1370 = arith.addf %1368, %1369 : vector<8x128xf32>
    %1371 = arith.mulf %1331, %1331 : vector<8x128xf32>
    %1372 = arith.addf %1370, %1371 : vector<8x128xf32>
    %1373 = arith.mulf %1334, %1334 : vector<8x128xf32>
    %1374 = arith.addf %1372, %1373 : vector<8x128xf32>
    %1375 = arith.mulf %1337, %1337 : vector<8x128xf32>
    %1376 = arith.addf %1374, %1375 : vector<8x128xf32>
    %1377 = arith.mulf %1340, %1340 : vector<8x128xf32>
    %1378 = arith.addf %1376, %1377 : vector<8x128xf32>
    %1379 = arith.mulf %1343, %1343 : vector<8x128xf32>
    %1380 = arith.addf %1378, %1379 : vector<8x128xf32>
    %1381 = arith.mulf %1346, %1346 : vector<8x128xf32>
    %1382 = arith.addf %1380, %1381 : vector<8x128xf32>
    %1383 = arith.mulf %1349, %1349 : vector<8x128xf32>
    %1384 = arith.addf %1382, %1383 : vector<8x128xf32>
    %1385 = arith.mulf %1352, %1352 : vector<8x128xf32>
    %1386 = arith.addf %1384, %1385 : vector<8x128xf32>
    %1387 = arith.mulf %1355, %1355 : vector<8x128xf32>
    %1388 = arith.addf %1386, %1387 : vector<8x128xf32>
    %1389 = arith.mulf %1358, %1358 : vector<8x128xf32>
    %1390 = arith.addf %1388, %1389 : vector<8x128xf32>
    %1391 = arith.mulf %1361, %1361 : vector<8x128xf32>
    %1392 = arith.addf %1390, %1391 : vector<8x128xf32>
    %1393 = math.sqrt %1392 : vector<8x128xf32>
    %1394 = vector.broadcast %1312 : f32 to vector<8x128xf32>
    %1395 = arith.addf %1394, %1393 : vector<8x128xf32>
    %1396 = tpu.reciprocal %1395 {approx = true} : vector<8x128xf32> -> vector<8x128xf32>
    %1397 = arith.mulf %1395, %1396 : vector<8x128xf32>
    %cst_153 = arith.constant 2.000000e+00 : f32
    %1398 = vector.broadcast %cst_153 : f32 to vector<8x128xf32>
    %1399 = arith.subf %1398, %1397 : vector<8x128xf32>
    %1400 = arith.mulf %1396, %1399 : vector<8x128xf32>
    %1401 = vector.broadcast %1313 : f32 to vector<8x128xf32>
    %1402 = arith.mulf %1401, %1400 : vector<8x128xf32>
    %1403 = arith.mulf %1402, %1316 : vector<8x128xf32>
    %1404 = arith.addf %1271, %1403 : vector<8x128xf32>
    %1405 = arith.mulf %1402, %1319 : vector<8x128xf32>
    %1406 = arith.addf %1273, %1405 : vector<8x128xf32>
    %1407 = arith.mulf %1402, %1322 : vector<8x128xf32>
    %1408 = arith.addf %1275, %1407 : vector<8x128xf32>
    %1409 = arith.mulf %1402, %1325 : vector<8x128xf32>
    %1410 = arith.addf %1277, %1409 : vector<8x128xf32>
    %1411 = arith.mulf %1402, %1328 : vector<8x128xf32>
    %1412 = arith.addf %1279, %1411 : vector<8x128xf32>
    %1413 = arith.mulf %1402, %1331 : vector<8x128xf32>
    %1414 = arith.addf %1281, %1413 : vector<8x128xf32>
    %1415 = arith.mulf %1402, %1334 : vector<8x128xf32>
    %1416 = arith.addf %1283, %1415 : vector<8x128xf32>
    %1417 = arith.mulf %1402, %1337 : vector<8x128xf32>
    %1418 = arith.addf %1285, %1417 : vector<8x128xf32>
    %1419 = arith.mulf %1402, %1340 : vector<8x128xf32>
    %1420 = arith.addf %1287, %1419 : vector<8x128xf32>
    %1421 = arith.mulf %1402, %1343 : vector<8x128xf32>
    %1422 = arith.addf %1289, %1421 : vector<8x128xf32>
    %1423 = arith.mulf %1402, %1346 : vector<8x128xf32>
    %1424 = arith.addf %1291, %1423 : vector<8x128xf32>
    %1425 = arith.mulf %1402, %1349 : vector<8x128xf32>
    %1426 = arith.addf %1293, %1425 : vector<8x128xf32>
    %1427 = arith.mulf %1402, %1352 : vector<8x128xf32>
    %1428 = arith.addf %1295, %1427 : vector<8x128xf32>
    %1429 = arith.mulf %1402, %1355 : vector<8x128xf32>
    %1430 = arith.addf %1297, %1429 : vector<8x128xf32>
    %1431 = arith.mulf %1402, %1358 : vector<8x128xf32>
    %1432 = arith.addf %1299, %1431 : vector<8x128xf32>
    %1433 = arith.mulf %1402, %1361 : vector<8x128xf32>
    %1434 = arith.addf %1301, %1433 : vector<8x128xf32>
    %cst_154 = arith.constant 1.000000e+00 : f32
    %1435 = vector.broadcast %cst_154 : f32 to vector<8x128xf32>
    %1436 = arith.addf %1435, %1402 : vector<8x128xf32>
    %1437 = arith.mulf %1304, %1436 : vector<8x128xf32>
    %1438 = arith.mulf %1312, %1313 : f32
    %1439 = arith.mulf %1400, %1400 : vector<8x128xf32>
    %1440 = vector.broadcast %1438 : f32 to vector<8x128xf32>
    %1441 = arith.mulf %1440, %1439 : vector<8x128xf32>
    %cst_155 = arith.constant 1.000000e+00 : f32
    %1442 = vector.broadcast %cst_155 : f32 to vector<8x128xf32>
    %1443 = arith.addf %1442, %1441 : vector<8x128xf32>
    %1444 = arith.mulf %1311, %1443 : vector<8x128xf32>
    %c10_156 = arith.constant 10 : index
    %1445 = memref.load %arg3[%c10_156] : memref<24xf32, #tpu.memory_space<smem>>
    %c10_157 = arith.constant 10 : index
    %1446 = memref.load %arg4[%c10_157] : memref<24xf32, #tpu.memory_space<smem>>
    %c160 = arith.constant 160 : index
    %1447 = memref.load %arg2[%c160] : memref<384xf32, #tpu.memory_space<smem>>
    %1448 = vector.broadcast %1447 : f32 to vector<8x128xf32>
    %1449 = arith.subf %1404, %1448 : vector<8x128xf32>
    %c161 = arith.constant 161 : index
    %1450 = memref.load %arg2[%c161] : memref<384xf32, #tpu.memory_space<smem>>
    %1451 = vector.broadcast %1450 : f32 to vector<8x128xf32>
    %1452 = arith.subf %1406, %1451 : vector<8x128xf32>
    %c162 = arith.constant 162 : index
    %1453 = memref.load %arg2[%c162] : memref<384xf32, #tpu.memory_space<smem>>
    %1454 = vector.broadcast %1453 : f32 to vector<8x128xf32>
    %1455 = arith.subf %1408, %1454 : vector<8x128xf32>
    %c163 = arith.constant 163 : index
    %1456 = memref.load %arg2[%c163] : memref<384xf32, #tpu.memory_space<smem>>
    %1457 = vector.broadcast %1456 : f32 to vector<8x128xf32>
    %1458 = arith.subf %1410, %1457 : vector<8x128xf32>
    %c164 = arith.constant 164 : index
    %1459 = memref.load %arg2[%c164] : memref<384xf32, #tpu.memory_space<smem>>
    %1460 = vector.broadcast %1459 : f32 to vector<8x128xf32>
    %1461 = arith.subf %1412, %1460 : vector<8x128xf32>
    %c165 = arith.constant 165 : index
    %1462 = memref.load %arg2[%c165] : memref<384xf32, #tpu.memory_space<smem>>
    %1463 = vector.broadcast %1462 : f32 to vector<8x128xf32>
    %1464 = arith.subf %1414, %1463 : vector<8x128xf32>
    %c166 = arith.constant 166 : index
    %1465 = memref.load %arg2[%c166] : memref<384xf32, #tpu.memory_space<smem>>
    %1466 = vector.broadcast %1465 : f32 to vector<8x128xf32>
    %1467 = arith.subf %1416, %1466 : vector<8x128xf32>
    %c167 = arith.constant 167 : index
    %1468 = memref.load %arg2[%c167] : memref<384xf32, #tpu.memory_space<smem>>
    %1469 = vector.broadcast %1468 : f32 to vector<8x128xf32>
    %1470 = arith.subf %1418, %1469 : vector<8x128xf32>
    %c168 = arith.constant 168 : index
    %1471 = memref.load %arg2[%c168] : memref<384xf32, #tpu.memory_space<smem>>
    %1472 = vector.broadcast %1471 : f32 to vector<8x128xf32>
    %1473 = arith.subf %1420, %1472 : vector<8x128xf32>
    %c169 = arith.constant 169 : index
    %1474 = memref.load %arg2[%c169] : memref<384xf32, #tpu.memory_space<smem>>
    %1475 = vector.broadcast %1474 : f32 to vector<8x128xf32>
    %1476 = arith.subf %1422, %1475 : vector<8x128xf32>
    %c170 = arith.constant 170 : index
    %1477 = memref.load %arg2[%c170] : memref<384xf32, #tpu.memory_space<smem>>
    %1478 = vector.broadcast %1477 : f32 to vector<8x128xf32>
    %1479 = arith.subf %1424, %1478 : vector<8x128xf32>
    %c171 = arith.constant 171 : index
    %1480 = memref.load %arg2[%c171] : memref<384xf32, #tpu.memory_space<smem>>
    %1481 = vector.broadcast %1480 : f32 to vector<8x128xf32>
    %1482 = arith.subf %1426, %1481 : vector<8x128xf32>
    %c172 = arith.constant 172 : index
    %1483 = memref.load %arg2[%c172] : memref<384xf32, #tpu.memory_space<smem>>
    %1484 = vector.broadcast %1483 : f32 to vector<8x128xf32>
    %1485 = arith.subf %1428, %1484 : vector<8x128xf32>
    %c173 = arith.constant 173 : index
    %1486 = memref.load %arg2[%c173] : memref<384xf32, #tpu.memory_space<smem>>
    %1487 = vector.broadcast %1486 : f32 to vector<8x128xf32>
    %1488 = arith.subf %1430, %1487 : vector<8x128xf32>
    %c174 = arith.constant 174 : index
    %1489 = memref.load %arg2[%c174] : memref<384xf32, #tpu.memory_space<smem>>
    %1490 = vector.broadcast %1489 : f32 to vector<8x128xf32>
    %1491 = arith.subf %1432, %1490 : vector<8x128xf32>
    %c175 = arith.constant 175 : index
    %1492 = memref.load %arg2[%c175] : memref<384xf32, #tpu.memory_space<smem>>
    %1493 = vector.broadcast %1492 : f32 to vector<8x128xf32>
    %1494 = arith.subf %1434, %1493 : vector<8x128xf32>
    %1495 = arith.mulf %1449, %1449 : vector<8x128xf32>
    %1496 = arith.mulf %1452, %1452 : vector<8x128xf32>
    %1497 = arith.addf %1495, %1496 : vector<8x128xf32>
    %1498 = arith.mulf %1455, %1455 : vector<8x128xf32>
    %1499 = arith.addf %1497, %1498 : vector<8x128xf32>
    %1500 = arith.mulf %1458, %1458 : vector<8x128xf32>
    %1501 = arith.addf %1499, %1500 : vector<8x128xf32>
    %1502 = arith.mulf %1461, %1461 : vector<8x128xf32>
    %1503 = arith.addf %1501, %1502 : vector<8x128xf32>
    %1504 = arith.mulf %1464, %1464 : vector<8x128xf32>
    %1505 = arith.addf %1503, %1504 : vector<8x128xf32>
    %1506 = arith.mulf %1467, %1467 : vector<8x128xf32>
    %1507 = arith.addf %1505, %1506 : vector<8x128xf32>
    %1508 = arith.mulf %1470, %1470 : vector<8x128xf32>
    %1509 = arith.addf %1507, %1508 : vector<8x128xf32>
    %1510 = arith.mulf %1473, %1473 : vector<8x128xf32>
    %1511 = arith.addf %1509, %1510 : vector<8x128xf32>
    %1512 = arith.mulf %1476, %1476 : vector<8x128xf32>
    %1513 = arith.addf %1511, %1512 : vector<8x128xf32>
    %1514 = arith.mulf %1479, %1479 : vector<8x128xf32>
    %1515 = arith.addf %1513, %1514 : vector<8x128xf32>
    %1516 = arith.mulf %1482, %1482 : vector<8x128xf32>
    %1517 = arith.addf %1515, %1516 : vector<8x128xf32>
    %1518 = arith.mulf %1485, %1485 : vector<8x128xf32>
    %1519 = arith.addf %1517, %1518 : vector<8x128xf32>
    %1520 = arith.mulf %1488, %1488 : vector<8x128xf32>
    %1521 = arith.addf %1519, %1520 : vector<8x128xf32>
    %1522 = arith.mulf %1491, %1491 : vector<8x128xf32>
    %1523 = arith.addf %1521, %1522 : vector<8x128xf32>
    %1524 = arith.mulf %1494, %1494 : vector<8x128xf32>
    %1525 = arith.addf %1523, %1524 : vector<8x128xf32>
    %1526 = math.sqrt %1525 : vector<8x128xf32>
    %1527 = vector.broadcast %1445 : f32 to vector<8x128xf32>
    %1528 = arith.addf %1527, %1526 : vector<8x128xf32>
    %1529 = tpu.reciprocal %1528 {approx = true} : vector<8x128xf32> -> vector<8x128xf32>
    %1530 = arith.mulf %1528, %1529 : vector<8x128xf32>
    %cst_158 = arith.constant 2.000000e+00 : f32
    %1531 = vector.broadcast %cst_158 : f32 to vector<8x128xf32>
    %1532 = arith.subf %1531, %1530 : vector<8x128xf32>
    %1533 = arith.mulf %1529, %1532 : vector<8x128xf32>
    %1534 = vector.broadcast %1446 : f32 to vector<8x128xf32>
    %1535 = arith.mulf %1534, %1533 : vector<8x128xf32>
    %1536 = arith.mulf %1535, %1449 : vector<8x128xf32>
    %1537 = arith.addf %1404, %1536 : vector<8x128xf32>
    %1538 = arith.mulf %1535, %1452 : vector<8x128xf32>
    %1539 = arith.addf %1406, %1538 : vector<8x128xf32>
    %1540 = arith.mulf %1535, %1455 : vector<8x128xf32>
    %1541 = arith.addf %1408, %1540 : vector<8x128xf32>
    %1542 = arith.mulf %1535, %1458 : vector<8x128xf32>
    %1543 = arith.addf %1410, %1542 : vector<8x128xf32>
    %1544 = arith.mulf %1535, %1461 : vector<8x128xf32>
    %1545 = arith.addf %1412, %1544 : vector<8x128xf32>
    %1546 = arith.mulf %1535, %1464 : vector<8x128xf32>
    %1547 = arith.addf %1414, %1546 : vector<8x128xf32>
    %1548 = arith.mulf %1535, %1467 : vector<8x128xf32>
    %1549 = arith.addf %1416, %1548 : vector<8x128xf32>
    %1550 = arith.mulf %1535, %1470 : vector<8x128xf32>
    %1551 = arith.addf %1418, %1550 : vector<8x128xf32>
    %1552 = arith.mulf %1535, %1473 : vector<8x128xf32>
    %1553 = arith.addf %1420, %1552 : vector<8x128xf32>
    %1554 = arith.mulf %1535, %1476 : vector<8x128xf32>
    %1555 = arith.addf %1422, %1554 : vector<8x128xf32>
    %1556 = arith.mulf %1535, %1479 : vector<8x128xf32>
    %1557 = arith.addf %1424, %1556 : vector<8x128xf32>
    %1558 = arith.mulf %1535, %1482 : vector<8x128xf32>
    %1559 = arith.addf %1426, %1558 : vector<8x128xf32>
    %1560 = arith.mulf %1535, %1485 : vector<8x128xf32>
    %1561 = arith.addf %1428, %1560 : vector<8x128xf32>
    %1562 = arith.mulf %1535, %1488 : vector<8x128xf32>
    %1563 = arith.addf %1430, %1562 : vector<8x128xf32>
    %1564 = arith.mulf %1535, %1491 : vector<8x128xf32>
    %1565 = arith.addf %1432, %1564 : vector<8x128xf32>
    %1566 = arith.mulf %1535, %1494 : vector<8x128xf32>
    %1567 = arith.addf %1434, %1566 : vector<8x128xf32>
    %cst_159 = arith.constant 1.000000e+00 : f32
    %1568 = vector.broadcast %cst_159 : f32 to vector<8x128xf32>
    %1569 = arith.addf %1568, %1535 : vector<8x128xf32>
    %1570 = arith.mulf %1437, %1569 : vector<8x128xf32>
    %1571 = arith.mulf %1445, %1446 : f32
    %1572 = arith.mulf %1533, %1533 : vector<8x128xf32>
    %1573 = vector.broadcast %1571 : f32 to vector<8x128xf32>
    %1574 = arith.mulf %1573, %1572 : vector<8x128xf32>
    %cst_160 = arith.constant 1.000000e+00 : f32
    %1575 = vector.broadcast %cst_160 : f32 to vector<8x128xf32>
    %1576 = arith.addf %1575, %1574 : vector<8x128xf32>
    %1577 = arith.mulf %1444, %1576 : vector<8x128xf32>
    %c11_161 = arith.constant 11 : index
    %1578 = memref.load %arg3[%c11_161] : memref<24xf32, #tpu.memory_space<smem>>
    %c11_162 = arith.constant 11 : index
    %1579 = memref.load %arg4[%c11_162] : memref<24xf32, #tpu.memory_space<smem>>
    %c176 = arith.constant 176 : index
    %1580 = memref.load %arg2[%c176] : memref<384xf32, #tpu.memory_space<smem>>
    %1581 = vector.broadcast %1580 : f32 to vector<8x128xf32>
    %1582 = arith.subf %1537, %1581 : vector<8x128xf32>
    %c177 = arith.constant 177 : index
    %1583 = memref.load %arg2[%c177] : memref<384xf32, #tpu.memory_space<smem>>
    %1584 = vector.broadcast %1583 : f32 to vector<8x128xf32>
    %1585 = arith.subf %1539, %1584 : vector<8x128xf32>
    %c178 = arith.constant 178 : index
    %1586 = memref.load %arg2[%c178] : memref<384xf32, #tpu.memory_space<smem>>
    %1587 = vector.broadcast %1586 : f32 to vector<8x128xf32>
    %1588 = arith.subf %1541, %1587 : vector<8x128xf32>
    %c179 = arith.constant 179 : index
    %1589 = memref.load %arg2[%c179] : memref<384xf32, #tpu.memory_space<smem>>
    %1590 = vector.broadcast %1589 : f32 to vector<8x128xf32>
    %1591 = arith.subf %1543, %1590 : vector<8x128xf32>
    %c180 = arith.constant 180 : index
    %1592 = memref.load %arg2[%c180] : memref<384xf32, #tpu.memory_space<smem>>
    %1593 = vector.broadcast %1592 : f32 to vector<8x128xf32>
    %1594 = arith.subf %1545, %1593 : vector<8x128xf32>
    %c181 = arith.constant 181 : index
    %1595 = memref.load %arg2[%c181] : memref<384xf32, #tpu.memory_space<smem>>
    %1596 = vector.broadcast %1595 : f32 to vector<8x128xf32>
    %1597 = arith.subf %1547, %1596 : vector<8x128xf32>
    %c182 = arith.constant 182 : index
    %1598 = memref.load %arg2[%c182] : memref<384xf32, #tpu.memory_space<smem>>
    %1599 = vector.broadcast %1598 : f32 to vector<8x128xf32>
    %1600 = arith.subf %1549, %1599 : vector<8x128xf32>
    %c183 = arith.constant 183 : index
    %1601 = memref.load %arg2[%c183] : memref<384xf32, #tpu.memory_space<smem>>
    %1602 = vector.broadcast %1601 : f32 to vector<8x128xf32>
    %1603 = arith.subf %1551, %1602 : vector<8x128xf32>
    %c184 = arith.constant 184 : index
    %1604 = memref.load %arg2[%c184] : memref<384xf32, #tpu.memory_space<smem>>
    %1605 = vector.broadcast %1604 : f32 to vector<8x128xf32>
    %1606 = arith.subf %1553, %1605 : vector<8x128xf32>
    %c185 = arith.constant 185 : index
    %1607 = memref.load %arg2[%c185] : memref<384xf32, #tpu.memory_space<smem>>
    %1608 = vector.broadcast %1607 : f32 to vector<8x128xf32>
    %1609 = arith.subf %1555, %1608 : vector<8x128xf32>
    %c186 = arith.constant 186 : index
    %1610 = memref.load %arg2[%c186] : memref<384xf32, #tpu.memory_space<smem>>
    %1611 = vector.broadcast %1610 : f32 to vector<8x128xf32>
    %1612 = arith.subf %1557, %1611 : vector<8x128xf32>
    %c187 = arith.constant 187 : index
    %1613 = memref.load %arg2[%c187] : memref<384xf32, #tpu.memory_space<smem>>
    %1614 = vector.broadcast %1613 : f32 to vector<8x128xf32>
    %1615 = arith.subf %1559, %1614 : vector<8x128xf32>
    %c188 = arith.constant 188 : index
    %1616 = memref.load %arg2[%c188] : memref<384xf32, #tpu.memory_space<smem>>
    %1617 = vector.broadcast %1616 : f32 to vector<8x128xf32>
    %1618 = arith.subf %1561, %1617 : vector<8x128xf32>
    %c189 = arith.constant 189 : index
    %1619 = memref.load %arg2[%c189] : memref<384xf32, #tpu.memory_space<smem>>
    %1620 = vector.broadcast %1619 : f32 to vector<8x128xf32>
    %1621 = arith.subf %1563, %1620 : vector<8x128xf32>
    %c190 = arith.constant 190 : index
    %1622 = memref.load %arg2[%c190] : memref<384xf32, #tpu.memory_space<smem>>
    %1623 = vector.broadcast %1622 : f32 to vector<8x128xf32>
    %1624 = arith.subf %1565, %1623 : vector<8x128xf32>
    %c191 = arith.constant 191 : index
    %1625 = memref.load %arg2[%c191] : memref<384xf32, #tpu.memory_space<smem>>
    %1626 = vector.broadcast %1625 : f32 to vector<8x128xf32>
    %1627 = arith.subf %1567, %1626 : vector<8x128xf32>
    %1628 = arith.mulf %1582, %1582 : vector<8x128xf32>
    %1629 = arith.mulf %1585, %1585 : vector<8x128xf32>
    %1630 = arith.addf %1628, %1629 : vector<8x128xf32>
    %1631 = arith.mulf %1588, %1588 : vector<8x128xf32>
    %1632 = arith.addf %1630, %1631 : vector<8x128xf32>
    %1633 = arith.mulf %1591, %1591 : vector<8x128xf32>
    %1634 = arith.addf %1632, %1633 : vector<8x128xf32>
    %1635 = arith.mulf %1594, %1594 : vector<8x128xf32>
    %1636 = arith.addf %1634, %1635 : vector<8x128xf32>
    %1637 = arith.mulf %1597, %1597 : vector<8x128xf32>
    %1638 = arith.addf %1636, %1637 : vector<8x128xf32>
    %1639 = arith.mulf %1600, %1600 : vector<8x128xf32>
    %1640 = arith.addf %1638, %1639 : vector<8x128xf32>
    %1641 = arith.mulf %1603, %1603 : vector<8x128xf32>
    %1642 = arith.addf %1640, %1641 : vector<8x128xf32>
    %1643 = arith.mulf %1606, %1606 : vector<8x128xf32>
    %1644 = arith.addf %1642, %1643 : vector<8x128xf32>
    %1645 = arith.mulf %1609, %1609 : vector<8x128xf32>
    %1646 = arith.addf %1644, %1645 : vector<8x128xf32>
    %1647 = arith.mulf %1612, %1612 : vector<8x128xf32>
    %1648 = arith.addf %1646, %1647 : vector<8x128xf32>
    %1649 = arith.mulf %1615, %1615 : vector<8x128xf32>
    %1650 = arith.addf %1648, %1649 : vector<8x128xf32>
    %1651 = arith.mulf %1618, %1618 : vector<8x128xf32>
    %1652 = arith.addf %1650, %1651 : vector<8x128xf32>
    %1653 = arith.mulf %1621, %1621 : vector<8x128xf32>
    %1654 = arith.addf %1652, %1653 : vector<8x128xf32>
    %1655 = arith.mulf %1624, %1624 : vector<8x128xf32>
    %1656 = arith.addf %1654, %1655 : vector<8x128xf32>
    %1657 = arith.mulf %1627, %1627 : vector<8x128xf32>
    %1658 = arith.addf %1656, %1657 : vector<8x128xf32>
    %1659 = math.sqrt %1658 : vector<8x128xf32>
    %1660 = vector.broadcast %1578 : f32 to vector<8x128xf32>
    %1661 = arith.addf %1660, %1659 : vector<8x128xf32>
    %1662 = tpu.reciprocal %1661 {approx = true} : vector<8x128xf32> -> vector<8x128xf32>
    %1663 = arith.mulf %1661, %1662 : vector<8x128xf32>
    %cst_163 = arith.constant 2.000000e+00 : f32
    %1664 = vector.broadcast %cst_163 : f32 to vector<8x128xf32>
    %1665 = arith.subf %1664, %1663 : vector<8x128xf32>
    %1666 = arith.mulf %1662, %1665 : vector<8x128xf32>
    %1667 = vector.broadcast %1579 : f32 to vector<8x128xf32>
    %1668 = arith.mulf %1667, %1666 : vector<8x128xf32>
    %1669 = arith.mulf %1668, %1582 : vector<8x128xf32>
    %1670 = arith.addf %1537, %1669 : vector<8x128xf32>
    %1671 = arith.mulf %1668, %1585 : vector<8x128xf32>
    %1672 = arith.addf %1539, %1671 : vector<8x128xf32>
    %1673 = arith.mulf %1668, %1588 : vector<8x128xf32>
    %1674 = arith.addf %1541, %1673 : vector<8x128xf32>
    %1675 = arith.mulf %1668, %1591 : vector<8x128xf32>
    %1676 = arith.addf %1543, %1675 : vector<8x128xf32>
    %1677 = arith.mulf %1668, %1594 : vector<8x128xf32>
    %1678 = arith.addf %1545, %1677 : vector<8x128xf32>
    %1679 = arith.mulf %1668, %1597 : vector<8x128xf32>
    %1680 = arith.addf %1547, %1679 : vector<8x128xf32>
    %1681 = arith.mulf %1668, %1600 : vector<8x128xf32>
    %1682 = arith.addf %1549, %1681 : vector<8x128xf32>
    %1683 = arith.mulf %1668, %1603 : vector<8x128xf32>
    %1684 = arith.addf %1551, %1683 : vector<8x128xf32>
    %1685 = arith.mulf %1668, %1606 : vector<8x128xf32>
    %1686 = arith.addf %1553, %1685 : vector<8x128xf32>
    %1687 = arith.mulf %1668, %1609 : vector<8x128xf32>
    %1688 = arith.addf %1555, %1687 : vector<8x128xf32>
    %1689 = arith.mulf %1668, %1612 : vector<8x128xf32>
    %1690 = arith.addf %1557, %1689 : vector<8x128xf32>
    %1691 = arith.mulf %1668, %1615 : vector<8x128xf32>
    %1692 = arith.addf %1559, %1691 : vector<8x128xf32>
    %1693 = arith.mulf %1668, %1618 : vector<8x128xf32>
    %1694 = arith.addf %1561, %1693 : vector<8x128xf32>
    %1695 = arith.mulf %1668, %1621 : vector<8x128xf32>
    %1696 = arith.addf %1563, %1695 : vector<8x128xf32>
    %1697 = arith.mulf %1668, %1624 : vector<8x128xf32>
    %1698 = arith.addf %1565, %1697 : vector<8x128xf32>
    %1699 = arith.mulf %1668, %1627 : vector<8x128xf32>
    %1700 = arith.addf %1567, %1699 : vector<8x128xf32>
    %cst_164 = arith.constant 1.000000e+00 : f32
    %1701 = vector.broadcast %cst_164 : f32 to vector<8x128xf32>
    %1702 = arith.addf %1701, %1668 : vector<8x128xf32>
    %1703 = arith.mulf %1570, %1702 : vector<8x128xf32>
    %1704 = arith.mulf %1578, %1579 : f32
    %1705 = arith.mulf %1666, %1666 : vector<8x128xf32>
    %1706 = vector.broadcast %1704 : f32 to vector<8x128xf32>
    %1707 = arith.mulf %1706, %1705 : vector<8x128xf32>
    %cst_165 = arith.constant 1.000000e+00 : f32
    %1708 = vector.broadcast %cst_165 : f32 to vector<8x128xf32>
    %1709 = arith.addf %1708, %1707 : vector<8x128xf32>
    %1710 = arith.mulf %1577, %1709 : vector<8x128xf32>
    %1711 = arith.mulf %1670, %1670 : vector<8x128xf32>
    %1712 = arith.mulf %1672, %1672 : vector<8x128xf32>
    %1713 = arith.addf %1711, %1712 : vector<8x128xf32>
    %1714 = arith.mulf %1674, %1674 : vector<8x128xf32>
    %1715 = arith.addf %1713, %1714 : vector<8x128xf32>
    %1716 = arith.mulf %1676, %1676 : vector<8x128xf32>
    %1717 = arith.addf %1715, %1716 : vector<8x128xf32>
    %1718 = arith.mulf %1678, %1678 : vector<8x128xf32>
    %1719 = arith.addf %1717, %1718 : vector<8x128xf32>
    %1720 = arith.mulf %1680, %1680 : vector<8x128xf32>
    %1721 = arith.addf %1719, %1720 : vector<8x128xf32>
    %1722 = arith.mulf %1682, %1682 : vector<8x128xf32>
    %1723 = arith.addf %1721, %1722 : vector<8x128xf32>
    %1724 = arith.mulf %1684, %1684 : vector<8x128xf32>
    %1725 = arith.addf %1723, %1724 : vector<8x128xf32>
    %1726 = arith.mulf %1686, %1686 : vector<8x128xf32>
    %1727 = arith.addf %1725, %1726 : vector<8x128xf32>
    %1728 = arith.mulf %1688, %1688 : vector<8x128xf32>
    %1729 = arith.addf %1727, %1728 : vector<8x128xf32>
    %1730 = arith.mulf %1690, %1690 : vector<8x128xf32>
    %1731 = arith.addf %1729, %1730 : vector<8x128xf32>
    %1732 = arith.mulf %1692, %1692 : vector<8x128xf32>
    %1733 = arith.addf %1731, %1732 : vector<8x128xf32>
    %1734 = arith.mulf %1694, %1694 : vector<8x128xf32>
    %1735 = arith.addf %1733, %1734 : vector<8x128xf32>
    %1736 = arith.mulf %1696, %1696 : vector<8x128xf32>
    %1737 = arith.addf %1735, %1736 : vector<8x128xf32>
    %1738 = arith.mulf %1698, %1698 : vector<8x128xf32>
    %1739 = arith.addf %1737, %1738 : vector<8x128xf32>
    %1740 = arith.mulf %1700, %1700 : vector<8x128xf32>
    %1741 = arith.addf %1739, %1740 : vector<8x128xf32>
    %1742 = math.log %1703 : vector<8x128xf32>
    %cst_166 = arith.constant 1.500000e+01 : f32
    %1743 = vector.broadcast %cst_166 : f32 to vector<8x128xf32>
    %1744 = arith.mulf %1743, %1742 : vector<8x128xf32>
    %1745 = math.log %1710 : vector<8x128xf32>
    %1746 = arith.addf %1744, %1745 : vector<8x128xf32>
    %cst_167 = arith.constant 5.000000e-01 : f32
    %1747 = vector.broadcast %cst_167 : f32 to vector<8x128xf32>
    %1748 = arith.mulf %1747, %1741 : vector<8x128xf32>
    %cst_168 = arith.constant -14.7030163 : f32
    %1749 = vector.broadcast %cst_168 : f32 to vector<8x128xf32>
    %1750 = arith.subf %1749, %1748 : vector<8x128xf32>
    %1751 = arith.addf %1750, %1746 : vector<8x128xf32>
    %1752 = arith.cmpf one, %1751, %1751 : vector<8x128xf32>
    %cst_169 = arith.constant 0xFF800000 : f32
    %1753 = vector.broadcast %cst_169 : f32 to vector<8x128xf32>
    %1754 = arith.select %1752, %1753, %1751 : vector<8x128xi1>, vector<8x128xf32>
    %c1_170 = arith.constant 1 : index
    %c0_171 = arith.constant 0 : index
    %c0_172 = arith.constant 0 : index
    %1755 = vector.load %arg5[%c1_170, %c0_171, %c0_172] : memref<4x8x128xf32, #tpu.memory_space<vmem>>, vector<1x8x128xf32>
    %1756 = vector.shape_cast %1755 : vector<1x8x128xf32> to vector<8x128xf32>
    %1757 = vector.shape_cast %1754 : vector<8x128xf32> to vector<1x8x128xf32>
    tpu.vector_store %arg5[%c1_170, %c0_171, %c0_172], %1757 {strides = array<i32>} : memref<4x8x128xf32, #tpu.memory_space<vmem>>, vector<1x8x128xf32>,
    %c0_173 = arith.constant 0 : index
    %c0_174 = arith.constant 0 : index
    %c0_175 = arith.constant 0 : index
    %1758 = vector.load %arg1[%c0_173, %c0_174, %c0_175] : memref<16x8x128xf32, #tpu.memory_space<vmem>>, vector<1x8x128xf32>
    %1759 = vector.shape_cast %1758 : vector<1x8x128xf32> to vector<8x128xf32>
    %c1_176 = arith.constant 1 : index
    %c0_177 = arith.constant 0 : index
    %c0_178 = arith.constant 0 : index
    %1760 = vector.load %arg1[%c1_176, %c0_177, %c0_178] : memref<16x8x128xf32, #tpu.memory_space<vmem>>, vector<1x8x128xf32>
    %1761 = vector.shape_cast %1760 : vector<1x8x128xf32> to vector<8x128xf32>
    %c2_179 = arith.constant 2 : index
    %c0_180 = arith.constant 0 : index
    %c0_181 = arith.constant 0 : index
    %1762 = vector.load %arg1[%c2_179, %c0_180, %c0_181] : memref<16x8x128xf32, #tpu.memory_space<vmem>>, vector<1x8x128xf32>
    %1763 = vector.shape_cast %1762 : vector<1x8x128xf32> to vector<8x128xf32>
    %c3_182 = arith.constant 3 : index
    %c0_183 = arith.constant 0 : index
    %c0_184 = arith.constant 0 : index
    %1764 = vector.load %arg1[%c3_182, %c0_183, %c0_184] : memref<16x8x128xf32, #tpu.memory_space<vmem>>, vector<1x8x128xf32>
    %1765 = vector.shape_cast %1764 : vector<1x8x128xf32> to vector<8x128xf32>
    %c4_185 = arith.constant 4 : index
    %c0_186 = arith.constant 0 : index
    %c0_187 = arith.constant 0 : index
    %1766 = vector.load %arg1[%c4_185, %c0_186, %c0_187] : memref<16x8x128xf32, #tpu.memory_space<vmem>>, vector<1x8x128xf32>
    %1767 = vector.shape_cast %1766 : vector<1x8x128xf32> to vector<8x128xf32>
    %c5_188 = arith.constant 5 : index
    %c0_189 = arith.constant 0 : index
    %c0_190 = arith.constant 0 : index
    %1768 = vector.load %arg1[%c5_188, %c0_189, %c0_190] : memref<16x8x128xf32, #tpu.memory_space<vmem>>, vector<1x8x128xf32>
    %1769 = vector.shape_cast %1768 : vector<1x8x128xf32> to vector<8x128xf32>
    %c6_191 = arith.constant 6 : index
    %c0_192 = arith.constant 0 : index
    %c0_193 = arith.constant 0 : index
    %1770 = vector.load %arg1[%c6_191, %c0_192, %c0_193] : memref<16x8x128xf32, #tpu.memory_space<vmem>>, vector<1x8x128xf32>
    %1771 = vector.shape_cast %1770 : vector<1x8x128xf32> to vector<8x128xf32>
    %c7_194 = arith.constant 7 : index
    %c0_195 = arith.constant 0 : index
    %c0_196 = arith.constant 0 : index
    %1772 = vector.load %arg1[%c7_194, %c0_195, %c0_196] : memref<16x8x128xf32, #tpu.memory_space<vmem>>, vector<1x8x128xf32>
    %1773 = vector.shape_cast %1772 : vector<1x8x128xf32> to vector<8x128xf32>
    %c8_197 = arith.constant 8 : index
    %c0_198 = arith.constant 0 : index
    %c0_199 = arith.constant 0 : index
    %1774 = vector.load %arg1[%c8_197, %c0_198, %c0_199] : memref<16x8x128xf32, #tpu.memory_space<vmem>>, vector<1x8x128xf32>
    %1775 = vector.shape_cast %1774 : vector<1x8x128xf32> to vector<8x128xf32>
    %c9_200 = arith.constant 9 : index
    %c0_201 = arith.constant 0 : index
    %c0_202 = arith.constant 0 : index
    %1776 = vector.load %arg1[%c9_200, %c0_201, %c0_202] : memref<16x8x128xf32, #tpu.memory_space<vmem>>, vector<1x8x128xf32>
    %1777 = vector.shape_cast %1776 : vector<1x8x128xf32> to vector<8x128xf32>
    %c10_203 = arith.constant 10 : index
    %c0_204 = arith.constant 0 : index
    %c0_205 = arith.constant 0 : index
    %1778 = vector.load %arg1[%c10_203, %c0_204, %c0_205] : memref<16x8x128xf32, #tpu.memory_space<vmem>>, vector<1x8x128xf32>
    %1779 = vector.shape_cast %1778 : vector<1x8x128xf32> to vector<8x128xf32>
    %c11_206 = arith.constant 11 : index
    %c0_207 = arith.constant 0 : index
    %c0_208 = arith.constant 0 : index
    %1780 = vector.load %arg1[%c11_206, %c0_207, %c0_208] : memref<16x8x128xf32, #tpu.memory_space<vmem>>, vector<1x8x128xf32>
    %1781 = vector.shape_cast %1780 : vector<1x8x128xf32> to vector<8x128xf32>
    %c12_209 = arith.constant 12 : index
    %c0_210 = arith.constant 0 : index
    %c0_211 = arith.constant 0 : index
    %1782 = vector.load %arg1[%c12_209, %c0_210, %c0_211] : memref<16x8x128xf32, #tpu.memory_space<vmem>>, vector<1x8x128xf32>
    %1783 = vector.shape_cast %1782 : vector<1x8x128xf32> to vector<8x128xf32>
    %c13_212 = arith.constant 13 : index
    %c0_213 = arith.constant 0 : index
    %c0_214 = arith.constant 0 : index
    %1784 = vector.load %arg1[%c13_212, %c0_213, %c0_214] : memref<16x8x128xf32, #tpu.memory_space<vmem>>, vector<1x8x128xf32>
    %1785 = vector.shape_cast %1784 : vector<1x8x128xf32> to vector<8x128xf32>
    %c14_215 = arith.constant 14 : index
    %c0_216 = arith.constant 0 : index
    %c0_217 = arith.constant 0 : index
    %1786 = vector.load %arg1[%c14_215, %c0_216, %c0_217] : memref<16x8x128xf32, #tpu.memory_space<vmem>>, vector<1x8x128xf32>
    %1787 = vector.shape_cast %1786 : vector<1x8x128xf32> to vector<8x128xf32>
    %c15_218 = arith.constant 15 : index
    %c0_219 = arith.constant 0 : index
    %c0_220 = arith.constant 0 : index
    %1788 = vector.load %arg1[%c15_218, %c0_219, %c0_220] : memref<16x8x128xf32, #tpu.memory_space<vmem>>, vector<1x8x128xf32>
    %1789 = vector.shape_cast %1788 : vector<1x8x128xf32> to vector<8x128xf32>
    %cst_221 = arith.constant 1.000000e+00 : f32
    %1790 = vector.broadcast %cst_221 : f32 to vector<8x128xf32>
    %cst_222 = arith.constant 1.000000e+00 : f32
    %1791 = vector.broadcast %cst_222 : f32 to vector<8x128xf32>
    %c12_223 = arith.constant 12 : index
    %1792 = memref.load %arg3[%c12_223] : memref<24xf32, #tpu.memory_space<smem>>
    %c12_224 = arith.constant 12 : index
    %1793 = memref.load %arg4[%c12_224] : memref<24xf32, #tpu.memory_space<smem>>
    %c192 = arith.constant 192 : index
    %1794 = memref.load %arg2[%c192] : memref<384xf32, #tpu.memory_space<smem>>
    %1795 = vector.broadcast %1794 : f32 to vector<8x128xf32>
    %1796 = arith.subf %1759, %1795 : vector<8x128xf32>
    %c193 = arith.constant 193 : index
    %1797 = memref.load %arg2[%c193] : memref<384xf32, #tpu.memory_space<smem>>
    %1798 = vector.broadcast %1797 : f32 to vector<8x128xf32>
    %1799 = arith.subf %1761, %1798 : vector<8x128xf32>
    %c194 = arith.constant 194 : index
    %1800 = memref.load %arg2[%c194] : memref<384xf32, #tpu.memory_space<smem>>
    %1801 = vector.broadcast %1800 : f32 to vector<8x128xf32>
    %1802 = arith.subf %1763, %1801 : vector<8x128xf32>
    %c195 = arith.constant 195 : index
    %1803 = memref.load %arg2[%c195] : memref<384xf32, #tpu.memory_space<smem>>
    %1804 = vector.broadcast %1803 : f32 to vector<8x128xf32>
    %1805 = arith.subf %1765, %1804 : vector<8x128xf32>
    %c196 = arith.constant 196 : index
    %1806 = memref.load %arg2[%c196] : memref<384xf32, #tpu.memory_space<smem>>
    %1807 = vector.broadcast %1806 : f32 to vector<8x128xf32>
    %1808 = arith.subf %1767, %1807 : vector<8x128xf32>
    %c197 = arith.constant 197 : index
    %1809 = memref.load %arg2[%c197] : memref<384xf32, #tpu.memory_space<smem>>
    %1810 = vector.broadcast %1809 : f32 to vector<8x128xf32>
    %1811 = arith.subf %1769, %1810 : vector<8x128xf32>
    %c198 = arith.constant 198 : index
    %1812 = memref.load %arg2[%c198] : memref<384xf32, #tpu.memory_space<smem>>
    %1813 = vector.broadcast %1812 : f32 to vector<8x128xf32>
    %1814 = arith.subf %1771, %1813 : vector<8x128xf32>
    %c199 = arith.constant 199 : index
    %1815 = memref.load %arg2[%c199] : memref<384xf32, #tpu.memory_space<smem>>
    %1816 = vector.broadcast %1815 : f32 to vector<8x128xf32>
    %1817 = arith.subf %1773, %1816 : vector<8x128xf32>
    %c200 = arith.constant 200 : index
    %1818 = memref.load %arg2[%c200] : memref<384xf32, #tpu.memory_space<smem>>
    %1819 = vector.broadcast %1818 : f32 to vector<8x128xf32>
    %1820 = arith.subf %1775, %1819 : vector<8x128xf32>
    %c201 = arith.constant 201 : index
    %1821 = memref.load %arg2[%c201] : memref<384xf32, #tpu.memory_space<smem>>
    %1822 = vector.broadcast %1821 : f32 to vector<8x128xf32>
    %1823 = arith.subf %1777, %1822 : vector<8x128xf32>
    %c202 = arith.constant 202 : index
    %1824 = memref.load %arg2[%c202] : memref<384xf32, #tpu.memory_space<smem>>
    %1825 = vector.broadcast %1824 : f32 to vector<8x128xf32>
    %1826 = arith.subf %1779, %1825 : vector<8x128xf32>
    %c203 = arith.constant 203 : index
    %1827 = memref.load %arg2[%c203] : memref<384xf32, #tpu.memory_space<smem>>
    %1828 = vector.broadcast %1827 : f32 to vector<8x128xf32>
    %1829 = arith.subf %1781, %1828 : vector<8x128xf32>
    %c204 = arith.constant 204 : index
    %1830 = memref.load %arg2[%c204] : memref<384xf32, #tpu.memory_space<smem>>
    %1831 = vector.broadcast %1830 : f32 to vector<8x128xf32>
    %1832 = arith.subf %1783, %1831 : vector<8x128xf32>
    %c205 = arith.constant 205 : index
    %1833 = memref.load %arg2[%c205] : memref<384xf32, #tpu.memory_space<smem>>
    %1834 = vector.broadcast %1833 : f32 to vector<8x128xf32>
    %1835 = arith.subf %1785, %1834 : vector<8x128xf32>
    %c206 = arith.constant 206 : index
    %1836 = memref.load %arg2[%c206] : memref<384xf32, #tpu.memory_space<smem>>
    %1837 = vector.broadcast %1836 : f32 to vector<8x128xf32>
    %1838 = arith.subf %1787, %1837 : vector<8x128xf32>
    %c207 = arith.constant 207 : index
    %1839 = memref.load %arg2[%c207] : memref<384xf32, #tpu.memory_space<smem>>
    %1840 = vector.broadcast %1839 : f32 to vector<8x128xf32>
    %1841 = arith.subf %1789, %1840 : vector<8x128xf32>
    %1842 = arith.mulf %1796, %1796 : vector<8x128xf32>
    %1843 = arith.mulf %1799, %1799 : vector<8x128xf32>
    %1844 = arith.addf %1842, %1843 : vector<8x128xf32>
    %1845 = arith.mulf %1802, %1802 : vector<8x128xf32>
    %1846 = arith.addf %1844, %1845 : vector<8x128xf32>
    %1847 = arith.mulf %1805, %1805 : vector<8x128xf32>
    %1848 = arith.addf %1846, %1847 : vector<8x128xf32>
    %1849 = arith.mulf %1808, %1808 : vector<8x128xf32>
    %1850 = arith.addf %1848, %1849 : vector<8x128xf32>
    %1851 = arith.mulf %1811, %1811 : vector<8x128xf32>
    %1852 = arith.addf %1850, %1851 : vector<8x128xf32>
    %1853 = arith.mulf %1814, %1814 : vector<8x128xf32>
    %1854 = arith.addf %1852, %1853 : vector<8x128xf32>
    %1855 = arith.mulf %1817, %1817 : vector<8x128xf32>
    %1856 = arith.addf %1854, %1855 : vector<8x128xf32>
    %1857 = arith.mulf %1820, %1820 : vector<8x128xf32>
    %1858 = arith.addf %1856, %1857 : vector<8x128xf32>
    %1859 = arith.mulf %1823, %1823 : vector<8x128xf32>
    %1860 = arith.addf %1858, %1859 : vector<8x128xf32>
    %1861 = arith.mulf %1826, %1826 : vector<8x128xf32>
    %1862 = arith.addf %1860, %1861 : vector<8x128xf32>
    %1863 = arith.mulf %1829, %1829 : vector<8x128xf32>
    %1864 = arith.addf %1862, %1863 : vector<8x128xf32>
    %1865 = arith.mulf %1832, %1832 : vector<8x128xf32>
    %1866 = arith.addf %1864, %1865 : vector<8x128xf32>
    %1867 = arith.mulf %1835, %1835 : vector<8x128xf32>
    %1868 = arith.addf %1866, %1867 : vector<8x128xf32>
    %1869 = arith.mulf %1838, %1838 : vector<8x128xf32>
    %1870 = arith.addf %1868, %1869 : vector<8x128xf32>
    %1871 = arith.mulf %1841, %1841 : vector<8x128xf32>
    %1872 = arith.addf %1870, %1871 : vector<8x128xf32>
    %1873 = math.sqrt %1872 : vector<8x128xf32>
    %1874 = vector.broadcast %1792 : f32 to vector<8x128xf32>
    %1875 = arith.addf %1874, %1873 : vector<8x128xf32>
    %1876 = tpu.reciprocal %1875 {approx = true} : vector<8x128xf32> -> vector<8x128xf32>
    %1877 = arith.mulf %1875, %1876 : vector<8x128xf32>
    %cst_225 = arith.constant 2.000000e+00 : f32
    %1878 = vector.broadcast %cst_225 : f32 to vector<8x128xf32>
    %1879 = arith.subf %1878, %1877 : vector<8x128xf32>
    %1880 = arith.mulf %1876, %1879 : vector<8x128xf32>
    %1881 = vector.broadcast %1793 : f32 to vector<8x128xf32>
    %1882 = arith.mulf %1881, %1880 : vector<8x128xf32>
    %1883 = arith.mulf %1882, %1796 : vector<8x128xf32>
    %1884 = arith.addf %1759, %1883 : vector<8x128xf32>
    %1885 = arith.mulf %1882, %1799 : vector<8x128xf32>
    %1886 = arith.addf %1761, %1885 : vector<8x128xf32>
    %1887 = arith.mulf %1882, %1802 : vector<8x128xf32>
    %1888 = arith.addf %1763, %1887 : vector<8x128xf32>
    %1889 = arith.mulf %1882, %1805 : vector<8x128xf32>
    %1890 = arith.addf %1765, %1889 : vector<8x128xf32>
    %1891 = arith.mulf %1882, %1808 : vector<8x128xf32>
    %1892 = arith.addf %1767, %1891 : vector<8x128xf32>
    %1893 = arith.mulf %1882, %1811 : vector<8x128xf32>
    %1894 = arith.addf %1769, %1893 : vector<8x128xf32>
    %1895 = arith.mulf %1882, %1814 : vector<8x128xf32>
    %1896 = arith.addf %1771, %1895 : vector<8x128xf32>
    %1897 = arith.mulf %1882, %1817 : vector<8x128xf32>
    %1898 = arith.addf %1773, %1897 : vector<8x128xf32>
    %1899 = arith.mulf %1882, %1820 : vector<8x128xf32>
    %1900 = arith.addf %1775, %1899 : vector<8x128xf32>
    %1901 = arith.mulf %1882, %1823 : vector<8x128xf32>
    %1902 = arith.addf %1777, %1901 : vector<8x128xf32>
    %1903 = arith.mulf %1882, %1826 : vector<8x128xf32>
    %1904 = arith.addf %1779, %1903 : vector<8x128xf32>
    %1905 = arith.mulf %1882, %1829 : vector<8x128xf32>
    %1906 = arith.addf %1781, %1905 : vector<8x128xf32>
    %1907 = arith.mulf %1882, %1832 : vector<8x128xf32>
    %1908 = arith.addf %1783, %1907 : vector<8x128xf32>
    %1909 = arith.mulf %1882, %1835 : vector<8x128xf32>
    %1910 = arith.addf %1785, %1909 : vector<8x128xf32>
    %1911 = arith.mulf %1882, %1838 : vector<8x128xf32>
    %1912 = arith.addf %1787, %1911 : vector<8x128xf32>
    %1913 = arith.mulf %1882, %1841 : vector<8x128xf32>
    %1914 = arith.addf %1789, %1913 : vector<8x128xf32>
    %cst_226 = arith.constant 1.000000e+00 : f32
    %1915 = vector.broadcast %cst_226 : f32 to vector<8x128xf32>
    %1916 = arith.addf %1915, %1882 : vector<8x128xf32>
    %1917 = arith.mulf %1790, %1916 : vector<8x128xf32>
    %1918 = arith.mulf %1792, %1793 : f32
    %1919 = arith.mulf %1880, %1880 : vector<8x128xf32>
    %1920 = vector.broadcast %1918 : f32 to vector<8x128xf32>
    %1921 = arith.mulf %1920, %1919 : vector<8x128xf32>
    %cst_227 = arith.constant 1.000000e+00 : f32
    %1922 = vector.broadcast %cst_227 : f32 to vector<8x128xf32>
    %1923 = arith.addf %1922, %1921 : vector<8x128xf32>
    %1924 = arith.mulf %1791, %1923 : vector<8x128xf32>
    %c13_228 = arith.constant 13 : index
    %1925 = memref.load %arg3[%c13_228] : memref<24xf32, #tpu.memory_space<smem>>
    %c13_229 = arith.constant 13 : index
    %1926 = memref.load %arg4[%c13_229] : memref<24xf32, #tpu.memory_space<smem>>
    %c208 = arith.constant 208 : index
    %1927 = memref.load %arg2[%c208] : memref<384xf32, #tpu.memory_space<smem>>
    %1928 = vector.broadcast %1927 : f32 to vector<8x128xf32>
    %1929 = arith.subf %1884, %1928 : vector<8x128xf32>
    %c209 = arith.constant 209 : index
    %1930 = memref.load %arg2[%c209] : memref<384xf32, #tpu.memory_space<smem>>
    %1931 = vector.broadcast %1930 : f32 to vector<8x128xf32>
    %1932 = arith.subf %1886, %1931 : vector<8x128xf32>
    %c210 = arith.constant 210 : index
    %1933 = memref.load %arg2[%c210] : memref<384xf32, #tpu.memory_space<smem>>
    %1934 = vector.broadcast %1933 : f32 to vector<8x128xf32>
    %1935 = arith.subf %1888, %1934 : vector<8x128xf32>
    %c211 = arith.constant 211 : index
    %1936 = memref.load %arg2[%c211] : memref<384xf32, #tpu.memory_space<smem>>
    %1937 = vector.broadcast %1936 : f32 to vector<8x128xf32>
    %1938 = arith.subf %1890, %1937 : vector<8x128xf32>
    %c212 = arith.constant 212 : index
    %1939 = memref.load %arg2[%c212] : memref<384xf32, #tpu.memory_space<smem>>
    %1940 = vector.broadcast %1939 : f32 to vector<8x128xf32>
    %1941 = arith.subf %1892, %1940 : vector<8x128xf32>
    %c213 = arith.constant 213 : index
    %1942 = memref.load %arg2[%c213] : memref<384xf32, #tpu.memory_space<smem>>
    %1943 = vector.broadcast %1942 : f32 to vector<8x128xf32>
    %1944 = arith.subf %1894, %1943 : vector<8x128xf32>
    %c214 = arith.constant 214 : index
    %1945 = memref.load %arg2[%c214] : memref<384xf32, #tpu.memory_space<smem>>
    %1946 = vector.broadcast %1945 : f32 to vector<8x128xf32>
    %1947 = arith.subf %1896, %1946 : vector<8x128xf32>
    %c215 = arith.constant 215 : index
    %1948 = memref.load %arg2[%c215] : memref<384xf32, #tpu.memory_space<smem>>
    %1949 = vector.broadcast %1948 : f32 to vector<8x128xf32>
    %1950 = arith.subf %1898, %1949 : vector<8x128xf32>
    %c216 = arith.constant 216 : index
    %1951 = memref.load %arg2[%c216] : memref<384xf32, #tpu.memory_space<smem>>
    %1952 = vector.broadcast %1951 : f32 to vector<8x128xf32>
    %1953 = arith.subf %1900, %1952 : vector<8x128xf32>
    %c217 = arith.constant 217 : index
    %1954 = memref.load %arg2[%c217] : memref<384xf32, #tpu.memory_space<smem>>
    %1955 = vector.broadcast %1954 : f32 to vector<8x128xf32>
    %1956 = arith.subf %1902, %1955 : vector<8x128xf32>
    %c218 = arith.constant 218 : index
    %1957 = memref.load %arg2[%c218] : memref<384xf32, #tpu.memory_space<smem>>
    %1958 = vector.broadcast %1957 : f32 to vector<8x128xf32>
    %1959 = arith.subf %1904, %1958 : vector<8x128xf32>
    %c219 = arith.constant 219 : index
    %1960 = memref.load %arg2[%c219] : memref<384xf32, #tpu.memory_space<smem>>
    %1961 = vector.broadcast %1960 : f32 to vector<8x128xf32>
    %1962 = arith.subf %1906, %1961 : vector<8x128xf32>
    %c220 = arith.constant 220 : index
    %1963 = memref.load %arg2[%c220] : memref<384xf32, #tpu.memory_space<smem>>
    %1964 = vector.broadcast %1963 : f32 to vector<8x128xf32>
    %1965 = arith.subf %1908, %1964 : vector<8x128xf32>
    %c221 = arith.constant 221 : index
    %1966 = memref.load %arg2[%c221] : memref<384xf32, #tpu.memory_space<smem>>
    %1967 = vector.broadcast %1966 : f32 to vector<8x128xf32>
    %1968 = arith.subf %1910, %1967 : vector<8x128xf32>
    %c222 = arith.constant 222 : index
    %1969 = memref.load %arg2[%c222] : memref<384xf32, #tpu.memory_space<smem>>
    %1970 = vector.broadcast %1969 : f32 to vector<8x128xf32>
    %1971 = arith.subf %1912, %1970 : vector<8x128xf32>
    %c223 = arith.constant 223 : index
    %1972 = memref.load %arg2[%c223] : memref<384xf32, #tpu.memory_space<smem>>
    %1973 = vector.broadcast %1972 : f32 to vector<8x128xf32>
    %1974 = arith.subf %1914, %1973 : vector<8x128xf32>
    %1975 = arith.mulf %1929, %1929 : vector<8x128xf32>
    %1976 = arith.mulf %1932, %1932 : vector<8x128xf32>
    %1977 = arith.addf %1975, %1976 : vector<8x128xf32>
    %1978 = arith.mulf %1935, %1935 : vector<8x128xf32>
    %1979 = arith.addf %1977, %1978 : vector<8x128xf32>
    %1980 = arith.mulf %1938, %1938 : vector<8x128xf32>
    %1981 = arith.addf %1979, %1980 : vector<8x128xf32>
    %1982 = arith.mulf %1941, %1941 : vector<8x128xf32>
    %1983 = arith.addf %1981, %1982 : vector<8x128xf32>
    %1984 = arith.mulf %1944, %1944 : vector<8x128xf32>
    %1985 = arith.addf %1983, %1984 : vector<8x128xf32>
    %1986 = arith.mulf %1947, %1947 : vector<8x128xf32>
    %1987 = arith.addf %1985, %1986 : vector<8x128xf32>
    %1988 = arith.mulf %1950, %1950 : vector<8x128xf32>
    %1989 = arith.addf %1987, %1988 : vector<8x128xf32>
    %1990 = arith.mulf %1953, %1953 : vector<8x128xf32>
    %1991 = arith.addf %1989, %1990 : vector<8x128xf32>
    %1992 = arith.mulf %1956, %1956 : vector<8x128xf32>
    %1993 = arith.addf %1991, %1992 : vector<8x128xf32>
    %1994 = arith.mulf %1959, %1959 : vector<8x128xf32>
    %1995 = arith.addf %1993, %1994 : vector<8x128xf32>
    %1996 = arith.mulf %1962, %1962 : vector<8x128xf32>
    %1997 = arith.addf %1995, %1996 : vector<8x128xf32>
    %1998 = arith.mulf %1965, %1965 : vector<8x128xf32>
    %1999 = arith.addf %1997, %1998 : vector<8x128xf32>
    %2000 = arith.mulf %1968, %1968 : vector<8x128xf32>
    %2001 = arith.addf %1999, %2000 : vector<8x128xf32>
    %2002 = arith.mulf %1971, %1971 : vector<8x128xf32>
    %2003 = arith.addf %2001, %2002 : vector<8x128xf32>
    %2004 = arith.mulf %1974, %1974 : vector<8x128xf32>
    %2005 = arith.addf %2003, %2004 : vector<8x128xf32>
    %2006 = math.sqrt %2005 : vector<8x128xf32>
    %2007 = vector.broadcast %1925 : f32 to vector<8x128xf32>
    %2008 = arith.addf %2007, %2006 : vector<8x128xf32>
    %2009 = tpu.reciprocal %2008 {approx = true} : vector<8x128xf32> -> vector<8x128xf32>
    %2010 = arith.mulf %2008, %2009 : vector<8x128xf32>
    %cst_230 = arith.constant 2.000000e+00 : f32
    %2011 = vector.broadcast %cst_230 : f32 to vector<8x128xf32>
    %2012 = arith.subf %2011, %2010 : vector<8x128xf32>
    %2013 = arith.mulf %2009, %2012 : vector<8x128xf32>
    %2014 = vector.broadcast %1926 : f32 to vector<8x128xf32>
    %2015 = arith.mulf %2014, %2013 : vector<8x128xf32>
    %2016 = arith.mulf %2015, %1929 : vector<8x128xf32>
    %2017 = arith.addf %1884, %2016 : vector<8x128xf32>
    %2018 = arith.mulf %2015, %1932 : vector<8x128xf32>
    %2019 = arith.addf %1886, %2018 : vector<8x128xf32>
    %2020 = arith.mulf %2015, %1935 : vector<8x128xf32>
    %2021 = arith.addf %1888, %2020 : vector<8x128xf32>
    %2022 = arith.mulf %2015, %1938 : vector<8x128xf32>
    %2023 = arith.addf %1890, %2022 : vector<8x128xf32>
    %2024 = arith.mulf %2015, %1941 : vector<8x128xf32>
    %2025 = arith.addf %1892, %2024 : vector<8x128xf32>
    %2026 = arith.mulf %2015, %1944 : vector<8x128xf32>
    %2027 = arith.addf %1894, %2026 : vector<8x128xf32>
    %2028 = arith.mulf %2015, %1947 : vector<8x128xf32>
    %2029 = arith.addf %1896, %2028 : vector<8x128xf32>
    %2030 = arith.mulf %2015, %1950 : vector<8x128xf32>
    %2031 = arith.addf %1898, %2030 : vector<8x128xf32>
    %2032 = arith.mulf %2015, %1953 : vector<8x128xf32>
    %2033 = arith.addf %1900, %2032 : vector<8x128xf32>
    %2034 = arith.mulf %2015, %1956 : vector<8x128xf32>
    %2035 = arith.addf %1902, %2034 : vector<8x128xf32>
    %2036 = arith.mulf %2015, %1959 : vector<8x128xf32>
    %2037 = arith.addf %1904, %2036 : vector<8x128xf32>
    %2038 = arith.mulf %2015, %1962 : vector<8x128xf32>
    %2039 = arith.addf %1906, %2038 : vector<8x128xf32>
    %2040 = arith.mulf %2015, %1965 : vector<8x128xf32>
    %2041 = arith.addf %1908, %2040 : vector<8x128xf32>
    %2042 = arith.mulf %2015, %1968 : vector<8x128xf32>
    %2043 = arith.addf %1910, %2042 : vector<8x128xf32>
    %2044 = arith.mulf %2015, %1971 : vector<8x128xf32>
    %2045 = arith.addf %1912, %2044 : vector<8x128xf32>
    %2046 = arith.mulf %2015, %1974 : vector<8x128xf32>
    %2047 = arith.addf %1914, %2046 : vector<8x128xf32>
    %cst_231 = arith.constant 1.000000e+00 : f32
    %2048 = vector.broadcast %cst_231 : f32 to vector<8x128xf32>
    %2049 = arith.addf %2048, %2015 : vector<8x128xf32>
    %2050 = arith.mulf %1917, %2049 : vector<8x128xf32>
    %2051 = arith.mulf %1925, %1926 : f32
    %2052 = arith.mulf %2013, %2013 : vector<8x128xf32>
    %2053 = vector.broadcast %2051 : f32 to vector<8x128xf32>
    %2054 = arith.mulf %2053, %2052 : vector<8x128xf32>
    %cst_232 = arith.constant 1.000000e+00 : f32
    %2055 = vector.broadcast %cst_232 : f32 to vector<8x128xf32>
    %2056 = arith.addf %2055, %2054 : vector<8x128xf32>
    %2057 = arith.mulf %1924, %2056 : vector<8x128xf32>
    %c14_233 = arith.constant 14 : index
    %2058 = memref.load %arg3[%c14_233] : memref<24xf32, #tpu.memory_space<smem>>
    %c14_234 = arith.constant 14 : index
    %2059 = memref.load %arg4[%c14_234] : memref<24xf32, #tpu.memory_space<smem>>
    %c224 = arith.constant 224 : index
    %2060 = memref.load %arg2[%c224] : memref<384xf32, #tpu.memory_space<smem>>
    %2061 = vector.broadcast %2060 : f32 to vector<8x128xf32>
    %2062 = arith.subf %2017, %2061 : vector<8x128xf32>
    %c225 = arith.constant 225 : index
    %2063 = memref.load %arg2[%c225] : memref<384xf32, #tpu.memory_space<smem>>
    %2064 = vector.broadcast %2063 : f32 to vector<8x128xf32>
    %2065 = arith.subf %2019, %2064 : vector<8x128xf32>
    %c226 = arith.constant 226 : index
    %2066 = memref.load %arg2[%c226] : memref<384xf32, #tpu.memory_space<smem>>
    %2067 = vector.broadcast %2066 : f32 to vector<8x128xf32>
    %2068 = arith.subf %2021, %2067 : vector<8x128xf32>
    %c227 = arith.constant 227 : index
    %2069 = memref.load %arg2[%c227] : memref<384xf32, #tpu.memory_space<smem>>
    %2070 = vector.broadcast %2069 : f32 to vector<8x128xf32>
    %2071 = arith.subf %2023, %2070 : vector<8x128xf32>
    %c228 = arith.constant 228 : index
    %2072 = memref.load %arg2[%c228] : memref<384xf32, #tpu.memory_space<smem>>
    %2073 = vector.broadcast %2072 : f32 to vector<8x128xf32>
    %2074 = arith.subf %2025, %2073 : vector<8x128xf32>
    %c229 = arith.constant 229 : index
    %2075 = memref.load %arg2[%c229] : memref<384xf32, #tpu.memory_space<smem>>
    %2076 = vector.broadcast %2075 : f32 to vector<8x128xf32>
    %2077 = arith.subf %2027, %2076 : vector<8x128xf32>
    %c230 = arith.constant 230 : index
    %2078 = memref.load %arg2[%c230] : memref<384xf32, #tpu.memory_space<smem>>
    %2079 = vector.broadcast %2078 : f32 to vector<8x128xf32>
    %2080 = arith.subf %2029, %2079 : vector<8x128xf32>
    %c231 = arith.constant 231 : index
    %2081 = memref.load %arg2[%c231] : memref<384xf32, #tpu.memory_space<smem>>
    %2082 = vector.broadcast %2081 : f32 to vector<8x128xf32>
    %2083 = arith.subf %2031, %2082 : vector<8x128xf32>
    %c232 = arith.constant 232 : index
    %2084 = memref.load %arg2[%c232] : memref<384xf32, #tpu.memory_space<smem>>
    %2085 = vector.broadcast %2084 : f32 to vector<8x128xf32>
    %2086 = arith.subf %2033, %2085 : vector<8x128xf32>
    %c233 = arith.constant 233 : index
    %2087 = memref.load %arg2[%c233] : memref<384xf32, #tpu.memory_space<smem>>
    %2088 = vector.broadcast %2087 : f32 to vector<8x128xf32>
    %2089 = arith.subf %2035, %2088 : vector<8x128xf32>
    %c234 = arith.constant 234 : index
    %2090 = memref.load %arg2[%c234] : memref<384xf32, #tpu.memory_space<smem>>
    %2091 = vector.broadcast %2090 : f32 to vector<8x128xf32>
    %2092 = arith.subf %2037, %2091 : vector<8x128xf32>
    %c235 = arith.constant 235 : index
    %2093 = memref.load %arg2[%c235] : memref<384xf32, #tpu.memory_space<smem>>
    %2094 = vector.broadcast %2093 : f32 to vector<8x128xf32>
    %2095 = arith.subf %2039, %2094 : vector<8x128xf32>
    %c236 = arith.constant 236 : index
    %2096 = memref.load %arg2[%c236] : memref<384xf32, #tpu.memory_space<smem>>
    %2097 = vector.broadcast %2096 : f32 to vector<8x128xf32>
    %2098 = arith.subf %2041, %2097 : vector<8x128xf32>
    %c237 = arith.constant 237 : index
    %2099 = memref.load %arg2[%c237] : memref<384xf32, #tpu.memory_space<smem>>
    %2100 = vector.broadcast %2099 : f32 to vector<8x128xf32>
    %2101 = arith.subf %2043, %2100 : vector<8x128xf32>
    %c238 = arith.constant 238 : index
    %2102 = memref.load %arg2[%c238] : memref<384xf32, #tpu.memory_space<smem>>
    %2103 = vector.broadcast %2102 : f32 to vector<8x128xf32>
    %2104 = arith.subf %2045, %2103 : vector<8x128xf32>
    %c239 = arith.constant 239 : index
    %2105 = memref.load %arg2[%c239] : memref<384xf32, #tpu.memory_space<smem>>
    %2106 = vector.broadcast %2105 : f32 to vector<8x128xf32>
    %2107 = arith.subf %2047, %2106 : vector<8x128xf32>
    %2108 = arith.mulf %2062, %2062 : vector<8x128xf32>
    %2109 = arith.mulf %2065, %2065 : vector<8x128xf32>
    %2110 = arith.addf %2108, %2109 : vector<8x128xf32>
    %2111 = arith.mulf %2068, %2068 : vector<8x128xf32>
    %2112 = arith.addf %2110, %2111 : vector<8x128xf32>
    %2113 = arith.mulf %2071, %2071 : vector<8x128xf32>
    %2114 = arith.addf %2112, %2113 : vector<8x128xf32>
    %2115 = arith.mulf %2074, %2074 : vector<8x128xf32>
    %2116 = arith.addf %2114, %2115 : vector<8x128xf32>
    %2117 = arith.mulf %2077, %2077 : vector<8x128xf32>
    %2118 = arith.addf %2116, %2117 : vector<8x128xf32>
    %2119 = arith.mulf %2080, %2080 : vector<8x128xf32>
    %2120 = arith.addf %2118, %2119 : vector<8x128xf32>
    %2121 = arith.mulf %2083, %2083 : vector<8x128xf32>
    %2122 = arith.addf %2120, %2121 : vector<8x128xf32>
    %2123 = arith.mulf %2086, %2086 : vector<8x128xf32>
    %2124 = arith.addf %2122, %2123 : vector<8x128xf32>
    %2125 = arith.mulf %2089, %2089 : vector<8x128xf32>
    %2126 = arith.addf %2124, %2125 : vector<8x128xf32>
    %2127 = arith.mulf %2092, %2092 : vector<8x128xf32>
    %2128 = arith.addf %2126, %2127 : vector<8x128xf32>
    %2129 = arith.mulf %2095, %2095 : vector<8x128xf32>
    %2130 = arith.addf %2128, %2129 : vector<8x128xf32>
    %2131 = arith.mulf %2098, %2098 : vector<8x128xf32>
    %2132 = arith.addf %2130, %2131 : vector<8x128xf32>
    %2133 = arith.mulf %2101, %2101 : vector<8x128xf32>
    %2134 = arith.addf %2132, %2133 : vector<8x128xf32>
    %2135 = arith.mulf %2104, %2104 : vector<8x128xf32>
    %2136 = arith.addf %2134, %2135 : vector<8x128xf32>
    %2137 = arith.mulf %2107, %2107 : vector<8x128xf32>
    %2138 = arith.addf %2136, %2137 : vector<8x128xf32>
    %2139 = math.sqrt %2138 : vector<8x128xf32>
    %2140 = vector.broadcast %2058 : f32 to vector<8x128xf32>
    %2141 = arith.addf %2140, %2139 : vector<8x128xf32>
    %2142 = tpu.reciprocal %2141 {approx = true} : vector<8x128xf32> -> vector<8x128xf32>
    %2143 = arith.mulf %2141, %2142 : vector<8x128xf32>
    %cst_235 = arith.constant 2.000000e+00 : f32
    %2144 = vector.broadcast %cst_235 : f32 to vector<8x128xf32>
    %2145 = arith.subf %2144, %2143 : vector<8x128xf32>
    %2146 = arith.mulf %2142, %2145 : vector<8x128xf32>
    %2147 = vector.broadcast %2059 : f32 to vector<8x128xf32>
    %2148 = arith.mulf %2147, %2146 : vector<8x128xf32>
    %2149 = arith.mulf %2148, %2062 : vector<8x128xf32>
    %2150 = arith.addf %2017, %2149 : vector<8x128xf32>
    %2151 = arith.mulf %2148, %2065 : vector<8x128xf32>
    %2152 = arith.addf %2019, %2151 : vector<8x128xf32>
    %2153 = arith.mulf %2148, %2068 : vector<8x128xf32>
    %2154 = arith.addf %2021, %2153 : vector<8x128xf32>
    %2155 = arith.mulf %2148, %2071 : vector<8x128xf32>
    %2156 = arith.addf %2023, %2155 : vector<8x128xf32>
    %2157 = arith.mulf %2148, %2074 : vector<8x128xf32>
    %2158 = arith.addf %2025, %2157 : vector<8x128xf32>
    %2159 = arith.mulf %2148, %2077 : vector<8x128xf32>
    %2160 = arith.addf %2027, %2159 : vector<8x128xf32>
    %2161 = arith.mulf %2148, %2080 : vector<8x128xf32>
    %2162 = arith.addf %2029, %2161 : vector<8x128xf32>
    %2163 = arith.mulf %2148, %2083 : vector<8x128xf32>
    %2164 = arith.addf %2031, %2163 : vector<8x128xf32>
    %2165 = arith.mulf %2148, %2086 : vector<8x128xf32>
    %2166 = arith.addf %2033, %2165 : vector<8x128xf32>
    %2167 = arith.mulf %2148, %2089 : vector<8x128xf32>
    %2168 = arith.addf %2035, %2167 : vector<8x128xf32>
    %2169 = arith.mulf %2148, %2092 : vector<8x128xf32>
    %2170 = arith.addf %2037, %2169 : vector<8x128xf32>
    %2171 = arith.mulf %2148, %2095 : vector<8x128xf32>
    %2172 = arith.addf %2039, %2171 : vector<8x128xf32>
    %2173 = arith.mulf %2148, %2098 : vector<8x128xf32>
    %2174 = arith.addf %2041, %2173 : vector<8x128xf32>
    %2175 = arith.mulf %2148, %2101 : vector<8x128xf32>
    %2176 = arith.addf %2043, %2175 : vector<8x128xf32>
    %2177 = arith.mulf %2148, %2104 : vector<8x128xf32>
    %2178 = arith.addf %2045, %2177 : vector<8x128xf32>
    %2179 = arith.mulf %2148, %2107 : vector<8x128xf32>
    %2180 = arith.addf %2047, %2179 : vector<8x128xf32>
    %cst_236 = arith.constant 1.000000e+00 : f32
    %2181 = vector.broadcast %cst_236 : f32 to vector<8x128xf32>
    %2182 = arith.addf %2181, %2148 : vector<8x128xf32>
    %2183 = arith.mulf %2050, %2182 : vector<8x128xf32>
    %2184 = arith.mulf %2058, %2059 : f32
    %2185 = arith.mulf %2146, %2146 : vector<8x128xf32>
    %2186 = vector.broadcast %2184 : f32 to vector<8x128xf32>
    %2187 = arith.mulf %2186, %2185 : vector<8x128xf32>
    %cst_237 = arith.constant 1.000000e+00 : f32
    %2188 = vector.broadcast %cst_237 : f32 to vector<8x128xf32>
    %2189 = arith.addf %2188, %2187 : vector<8x128xf32>
    %2190 = arith.mulf %2057, %2189 : vector<8x128xf32>
    %c15_238 = arith.constant 15 : index
    %2191 = memref.load %arg3[%c15_238] : memref<24xf32, #tpu.memory_space<smem>>
    %c15_239 = arith.constant 15 : index
    %2192 = memref.load %arg4[%c15_239] : memref<24xf32, #tpu.memory_space<smem>>
    %c240 = arith.constant 240 : index
    %2193 = memref.load %arg2[%c240] : memref<384xf32, #tpu.memory_space<smem>>
    %2194 = vector.broadcast %2193 : f32 to vector<8x128xf32>
    %2195 = arith.subf %2150, %2194 : vector<8x128xf32>
    %c241 = arith.constant 241 : index
    %2196 = memref.load %arg2[%c241] : memref<384xf32, #tpu.memory_space<smem>>
    %2197 = vector.broadcast %2196 : f32 to vector<8x128xf32>
    %2198 = arith.subf %2152, %2197 : vector<8x128xf32>
    %c242 = arith.constant 242 : index
    %2199 = memref.load %arg2[%c242] : memref<384xf32, #tpu.memory_space<smem>>
    %2200 = vector.broadcast %2199 : f32 to vector<8x128xf32>
    %2201 = arith.subf %2154, %2200 : vector<8x128xf32>
    %c243 = arith.constant 243 : index
    %2202 = memref.load %arg2[%c243] : memref<384xf32, #tpu.memory_space<smem>>
    %2203 = vector.broadcast %2202 : f32 to vector<8x128xf32>
    %2204 = arith.subf %2156, %2203 : vector<8x128xf32>
    %c244 = arith.constant 244 : index
    %2205 = memref.load %arg2[%c244] : memref<384xf32, #tpu.memory_space<smem>>
    %2206 = vector.broadcast %2205 : f32 to vector<8x128xf32>
    %2207 = arith.subf %2158, %2206 : vector<8x128xf32>
    %c245 = arith.constant 245 : index
    %2208 = memref.load %arg2[%c245] : memref<384xf32, #tpu.memory_space<smem>>
    %2209 = vector.broadcast %2208 : f32 to vector<8x128xf32>
    %2210 = arith.subf %2160, %2209 : vector<8x128xf32>
    %c246 = arith.constant 246 : index
    %2211 = memref.load %arg2[%c246] : memref<384xf32, #tpu.memory_space<smem>>
    %2212 = vector.broadcast %2211 : f32 to vector<8x128xf32>
    %2213 = arith.subf %2162, %2212 : vector<8x128xf32>
    %c247 = arith.constant 247 : index
    %2214 = memref.load %arg2[%c247] : memref<384xf32, #tpu.memory_space<smem>>
    %2215 = vector.broadcast %2214 : f32 to vector<8x128xf32>
    %2216 = arith.subf %2164, %2215 : vector<8x128xf32>
    %c248 = arith.constant 248 : index
    %2217 = memref.load %arg2[%c248] : memref<384xf32, #tpu.memory_space<smem>>
    %2218 = vector.broadcast %2217 : f32 to vector<8x128xf32>
    %2219 = arith.subf %2166, %2218 : vector<8x128xf32>
    %c249 = arith.constant 249 : index
    %2220 = memref.load %arg2[%c249] : memref<384xf32, #tpu.memory_space<smem>>
    %2221 = vector.broadcast %2220 : f32 to vector<8x128xf32>
    %2222 = arith.subf %2168, %2221 : vector<8x128xf32>
    %c250 = arith.constant 250 : index
    %2223 = memref.load %arg2[%c250] : memref<384xf32, #tpu.memory_space<smem>>
    %2224 = vector.broadcast %2223 : f32 to vector<8x128xf32>
    %2225 = arith.subf %2170, %2224 : vector<8x128xf32>
    %c251 = arith.constant 251 : index
    %2226 = memref.load %arg2[%c251] : memref<384xf32, #tpu.memory_space<smem>>
    %2227 = vector.broadcast %2226 : f32 to vector<8x128xf32>
    %2228 = arith.subf %2172, %2227 : vector<8x128xf32>
    %c252 = arith.constant 252 : index
    %2229 = memref.load %arg2[%c252] : memref<384xf32, #tpu.memory_space<smem>>
    %2230 = vector.broadcast %2229 : f32 to vector<8x128xf32>
    %2231 = arith.subf %2174, %2230 : vector<8x128xf32>
    %c253 = arith.constant 253 : index
    %2232 = memref.load %arg2[%c253] : memref<384xf32, #tpu.memory_space<smem>>
    %2233 = vector.broadcast %2232 : f32 to vector<8x128xf32>
    %2234 = arith.subf %2176, %2233 : vector<8x128xf32>
    %c254 = arith.constant 254 : index
    %2235 = memref.load %arg2[%c254] : memref<384xf32, #tpu.memory_space<smem>>
    %2236 = vector.broadcast %2235 : f32 to vector<8x128xf32>
    %2237 = arith.subf %2178, %2236 : vector<8x128xf32>
    %c255 = arith.constant 255 : index
    %2238 = memref.load %arg2[%c255] : memref<384xf32, #tpu.memory_space<smem>>
    %2239 = vector.broadcast %2238 : f32 to vector<8x128xf32>
    %2240 = arith.subf %2180, %2239 : vector<8x128xf32>
    %2241 = arith.mulf %2195, %2195 : vector<8x128xf32>
    %2242 = arith.mulf %2198, %2198 : vector<8x128xf32>
    %2243 = arith.addf %2241, %2242 : vector<8x128xf32>
    %2244 = arith.mulf %2201, %2201 : vector<8x128xf32>
    %2245 = arith.addf %2243, %2244 : vector<8x128xf32>
    %2246 = arith.mulf %2204, %2204 : vector<8x128xf32>
    %2247 = arith.addf %2245, %2246 : vector<8x128xf32>
    %2248 = arith.mulf %2207, %2207 : vector<8x128xf32>
    %2249 = arith.addf %2247, %2248 : vector<8x128xf32>
    %2250 = arith.mulf %2210, %2210 : vector<8x128xf32>
    %2251 = arith.addf %2249, %2250 : vector<8x128xf32>
    %2252 = arith.mulf %2213, %2213 : vector<8x128xf32>
    %2253 = arith.addf %2251, %2252 : vector<8x128xf32>
    %2254 = arith.mulf %2216, %2216 : vector<8x128xf32>
    %2255 = arith.addf %2253, %2254 : vector<8x128xf32>
    %2256 = arith.mulf %2219, %2219 : vector<8x128xf32>
    %2257 = arith.addf %2255, %2256 : vector<8x128xf32>
    %2258 = arith.mulf %2222, %2222 : vector<8x128xf32>
    %2259 = arith.addf %2257, %2258 : vector<8x128xf32>
    %2260 = arith.mulf %2225, %2225 : vector<8x128xf32>
    %2261 = arith.addf %2259, %2260 : vector<8x128xf32>
    %2262 = arith.mulf %2228, %2228 : vector<8x128xf32>
    %2263 = arith.addf %2261, %2262 : vector<8x128xf32>
    %2264 = arith.mulf %2231, %2231 : vector<8x128xf32>
    %2265 = arith.addf %2263, %2264 : vector<8x128xf32>
    %2266 = arith.mulf %2234, %2234 : vector<8x128xf32>
    %2267 = arith.addf %2265, %2266 : vector<8x128xf32>
    %2268 = arith.mulf %2237, %2237 : vector<8x128xf32>
    %2269 = arith.addf %2267, %2268 : vector<8x128xf32>
    %2270 = arith.mulf %2240, %2240 : vector<8x128xf32>
    %2271 = arith.addf %2269, %2270 : vector<8x128xf32>
    %2272 = math.sqrt %2271 : vector<8x128xf32>
    %2273 = vector.broadcast %2191 : f32 to vector<8x128xf32>
    %2274 = arith.addf %2273, %2272 : vector<8x128xf32>
    %2275 = tpu.reciprocal %2274 {approx = true} : vector<8x128xf32> -> vector<8x128xf32>
    %2276 = arith.mulf %2274, %2275 : vector<8x128xf32>
    %cst_240 = arith.constant 2.000000e+00 : f32
    %2277 = vector.broadcast %cst_240 : f32 to vector<8x128xf32>
    %2278 = arith.subf %2277, %2276 : vector<8x128xf32>
    %2279 = arith.mulf %2275, %2278 : vector<8x128xf32>
    %2280 = vector.broadcast %2192 : f32 to vector<8x128xf32>
    %2281 = arith.mulf %2280, %2279 : vector<8x128xf32>
    %2282 = arith.mulf %2281, %2195 : vector<8x128xf32>
    %2283 = arith.addf %2150, %2282 : vector<8x128xf32>
    %2284 = arith.mulf %2281, %2198 : vector<8x128xf32>
    %2285 = arith.addf %2152, %2284 : vector<8x128xf32>
    %2286 = arith.mulf %2281, %2201 : vector<8x128xf32>
    %2287 = arith.addf %2154, %2286 : vector<8x128xf32>
    %2288 = arith.mulf %2281, %2204 : vector<8x128xf32>
    %2289 = arith.addf %2156, %2288 : vector<8x128xf32>
    %2290 = arith.mulf %2281, %2207 : vector<8x128xf32>
    %2291 = arith.addf %2158, %2290 : vector<8x128xf32>
    %2292 = arith.mulf %2281, %2210 : vector<8x128xf32>
    %2293 = arith.addf %2160, %2292 : vector<8x128xf32>
    %2294 = arith.mulf %2281, %2213 : vector<8x128xf32>
    %2295 = arith.addf %2162, %2294 : vector<8x128xf32>
    %2296 = arith.mulf %2281, %2216 : vector<8x128xf32>
    %2297 = arith.addf %2164, %2296 : vector<8x128xf32>
    %2298 = arith.mulf %2281, %2219 : vector<8x128xf32>
    %2299 = arith.addf %2166, %2298 : vector<8x128xf32>
    %2300 = arith.mulf %2281, %2222 : vector<8x128xf32>
    %2301 = arith.addf %2168, %2300 : vector<8x128xf32>
    %2302 = arith.mulf %2281, %2225 : vector<8x128xf32>
    %2303 = arith.addf %2170, %2302 : vector<8x128xf32>
    %2304 = arith.mulf %2281, %2228 : vector<8x128xf32>
    %2305 = arith.addf %2172, %2304 : vector<8x128xf32>
    %2306 = arith.mulf %2281, %2231 : vector<8x128xf32>
    %2307 = arith.addf %2174, %2306 : vector<8x128xf32>
    %2308 = arith.mulf %2281, %2234 : vector<8x128xf32>
    %2309 = arith.addf %2176, %2308 : vector<8x128xf32>
    %2310 = arith.mulf %2281, %2237 : vector<8x128xf32>
    %2311 = arith.addf %2178, %2310 : vector<8x128xf32>
    %2312 = arith.mulf %2281, %2240 : vector<8x128xf32>
    %2313 = arith.addf %2180, %2312 : vector<8x128xf32>
    %cst_241 = arith.constant 1.000000e+00 : f32
    %2314 = vector.broadcast %cst_241 : f32 to vector<8x128xf32>
    %2315 = arith.addf %2314, %2281 : vector<8x128xf32>
    %2316 = arith.mulf %2183, %2315 : vector<8x128xf32>
    %2317 = arith.mulf %2191, %2192 : f32
    %2318 = arith.mulf %2279, %2279 : vector<8x128xf32>
    %2319 = vector.broadcast %2317 : f32 to vector<8x128xf32>
    %2320 = arith.mulf %2319, %2318 : vector<8x128xf32>
    %cst_242 = arith.constant 1.000000e+00 : f32
    %2321 = vector.broadcast %cst_242 : f32 to vector<8x128xf32>
    %2322 = arith.addf %2321, %2320 : vector<8x128xf32>
    %2323 = arith.mulf %2190, %2322 : vector<8x128xf32>
    %c16_243 = arith.constant 16 : index
    %2324 = memref.load %arg3[%c16_243] : memref<24xf32, #tpu.memory_space<smem>>
    %c16_244 = arith.constant 16 : index
    %2325 = memref.load %arg4[%c16_244] : memref<24xf32, #tpu.memory_space<smem>>
    %c256 = arith.constant 256 : index
    %2326 = memref.load %arg2[%c256] : memref<384xf32, #tpu.memory_space<smem>>
    %2327 = vector.broadcast %2326 : f32 to vector<8x128xf32>
    %2328 = arith.subf %2283, %2327 : vector<8x128xf32>
    %c257 = arith.constant 257 : index
    %2329 = memref.load %arg2[%c257] : memref<384xf32, #tpu.memory_space<smem>>
    %2330 = vector.broadcast %2329 : f32 to vector<8x128xf32>
    %2331 = arith.subf %2285, %2330 : vector<8x128xf32>
    %c258 = arith.constant 258 : index
    %2332 = memref.load %arg2[%c258] : memref<384xf32, #tpu.memory_space<smem>>
    %2333 = vector.broadcast %2332 : f32 to vector<8x128xf32>
    %2334 = arith.subf %2287, %2333 : vector<8x128xf32>
    %c259 = arith.constant 259 : index
    %2335 = memref.load %arg2[%c259] : memref<384xf32, #tpu.memory_space<smem>>
    %2336 = vector.broadcast %2335 : f32 to vector<8x128xf32>
    %2337 = arith.subf %2289, %2336 : vector<8x128xf32>
    %c260 = arith.constant 260 : index
    %2338 = memref.load %arg2[%c260] : memref<384xf32, #tpu.memory_space<smem>>
    %2339 = vector.broadcast %2338 : f32 to vector<8x128xf32>
    %2340 = arith.subf %2291, %2339 : vector<8x128xf32>
    %c261 = arith.constant 261 : index
    %2341 = memref.load %arg2[%c261] : memref<384xf32, #tpu.memory_space<smem>>
    %2342 = vector.broadcast %2341 : f32 to vector<8x128xf32>
    %2343 = arith.subf %2293, %2342 : vector<8x128xf32>
    %c262 = arith.constant 262 : index
    %2344 = memref.load %arg2[%c262] : memref<384xf32, #tpu.memory_space<smem>>
    %2345 = vector.broadcast %2344 : f32 to vector<8x128xf32>
    %2346 = arith.subf %2295, %2345 : vector<8x128xf32>
    %c263 = arith.constant 263 : index
    %2347 = memref.load %arg2[%c263] : memref<384xf32, #tpu.memory_space<smem>>
    %2348 = vector.broadcast %2347 : f32 to vector<8x128xf32>
    %2349 = arith.subf %2297, %2348 : vector<8x128xf32>
    %c264 = arith.constant 264 : index
    %2350 = memref.load %arg2[%c264] : memref<384xf32, #tpu.memory_space<smem>>
    %2351 = vector.broadcast %2350 : f32 to vector<8x128xf32>
    %2352 = arith.subf %2299, %2351 : vector<8x128xf32>
    %c265 = arith.constant 265 : index
    %2353 = memref.load %arg2[%c265] : memref<384xf32, #tpu.memory_space<smem>>
    %2354 = vector.broadcast %2353 : f32 to vector<8x128xf32>
    %2355 = arith.subf %2301, %2354 : vector<8x128xf32>
    %c266 = arith.constant 266 : index
    %2356 = memref.load %arg2[%c266] : memref<384xf32, #tpu.memory_space<smem>>
    %2357 = vector.broadcast %2356 : f32 to vector<8x128xf32>
    %2358 = arith.subf %2303, %2357 : vector<8x128xf32>
    %c267 = arith.constant 267 : index
    %2359 = memref.load %arg2[%c267] : memref<384xf32, #tpu.memory_space<smem>>
    %2360 = vector.broadcast %2359 : f32 to vector<8x128xf32>
    %2361 = arith.subf %2305, %2360 : vector<8x128xf32>
    %c268 = arith.constant 268 : index
    %2362 = memref.load %arg2[%c268] : memref<384xf32, #tpu.memory_space<smem>>
    %2363 = vector.broadcast %2362 : f32 to vector<8x128xf32>
    %2364 = arith.subf %2307, %2363 : vector<8x128xf32>
    %c269 = arith.constant 269 : index
    %2365 = memref.load %arg2[%c269] : memref<384xf32, #tpu.memory_space<smem>>
    %2366 = vector.broadcast %2365 : f32 to vector<8x128xf32>
    %2367 = arith.subf %2309, %2366 : vector<8x128xf32>
    %c270 = arith.constant 270 : index
    %2368 = memref.load %arg2[%c270] : memref<384xf32, #tpu.memory_space<smem>>
    %2369 = vector.broadcast %2368 : f32 to vector<8x128xf32>
    %2370 = arith.subf %2311, %2369 : vector<8x128xf32>
    %c271 = arith.constant 271 : index
    %2371 = memref.load %arg2[%c271] : memref<384xf32, #tpu.memory_space<smem>>
    %2372 = vector.broadcast %2371 : f32 to vector<8x128xf32>
    %2373 = arith.subf %2313, %2372 : vector<8x128xf32>
    %2374 = arith.mulf %2328, %2328 : vector<8x128xf32>
    %2375 = arith.mulf %2331, %2331 : vector<8x128xf32>
    %2376 = arith.addf %2374, %2375 : vector<8x128xf32>
    %2377 = arith.mulf %2334, %2334 : vector<8x128xf32>
    %2378 = arith.addf %2376, %2377 : vector<8x128xf32>
    %2379 = arith.mulf %2337, %2337 : vector<8x128xf32>
    %2380 = arith.addf %2378, %2379 : vector<8x128xf32>
    %2381 = arith.mulf %2340, %2340 : vector<8x128xf32>
    %2382 = arith.addf %2380, %2381 : vector<8x128xf32>
    %2383 = arith.mulf %2343, %2343 : vector<8x128xf32>
    %2384 = arith.addf %2382, %2383 : vector<8x128xf32>
    %2385 = arith.mulf %2346, %2346 : vector<8x128xf32>
    %2386 = arith.addf %2384, %2385 : vector<8x128xf32>
    %2387 = arith.mulf %2349, %2349 : vector<8x128xf32>
    %2388 = arith.addf %2386, %2387 : vector<8x128xf32>
    %2389 = arith.mulf %2352, %2352 : vector<8x128xf32>
    %2390 = arith.addf %2388, %2389 : vector<8x128xf32>
    %2391 = arith.mulf %2355, %2355 : vector<8x128xf32>
    %2392 = arith.addf %2390, %2391 : vector<8x128xf32>
    %2393 = arith.mulf %2358, %2358 : vector<8x128xf32>
    %2394 = arith.addf %2392, %2393 : vector<8x128xf32>
    %2395 = arith.mulf %2361, %2361 : vector<8x128xf32>
    %2396 = arith.addf %2394, %2395 : vector<8x128xf32>
    %2397 = arith.mulf %2364, %2364 : vector<8x128xf32>
    %2398 = arith.addf %2396, %2397 : vector<8x128xf32>
    %2399 = arith.mulf %2367, %2367 : vector<8x128xf32>
    %2400 = arith.addf %2398, %2399 : vector<8x128xf32>
    %2401 = arith.mulf %2370, %2370 : vector<8x128xf32>
    %2402 = arith.addf %2400, %2401 : vector<8x128xf32>
    %2403 = arith.mulf %2373, %2373 : vector<8x128xf32>
    %2404 = arith.addf %2402, %2403 : vector<8x128xf32>
    %2405 = math.sqrt %2404 : vector<8x128xf32>
    %2406 = vector.broadcast %2324 : f32 to vector<8x128xf32>
    %2407 = arith.addf %2406, %2405 : vector<8x128xf32>
    %2408 = tpu.reciprocal %2407 {approx = true} : vector<8x128xf32> -> vector<8x128xf32>
    %2409 = arith.mulf %2407, %2408 : vector<8x128xf32>
    %cst_245 = arith.constant 2.000000e+00 : f32
    %2410 = vector.broadcast %cst_245 : f32 to vector<8x128xf32>
    %2411 = arith.subf %2410, %2409 : vector<8x128xf32>
    %2412 = arith.mulf %2408, %2411 : vector<8x128xf32>
    %2413 = vector.broadcast %2325 : f32 to vector<8x128xf32>
    %2414 = arith.mulf %2413, %2412 : vector<8x128xf32>
    %2415 = arith.mulf %2414, %2328 : vector<8x128xf32>
    %2416 = arith.addf %2283, %2415 : vector<8x128xf32>
    %2417 = arith.mulf %2414, %2331 : vector<8x128xf32>
    %2418 = arith.addf %2285, %2417 : vector<8x128xf32>
    %2419 = arith.mulf %2414, %2334 : vector<8x128xf32>
    %2420 = arith.addf %2287, %2419 : vector<8x128xf32>
    %2421 = arith.mulf %2414, %2337 : vector<8x128xf32>
    %2422 = arith.addf %2289, %2421 : vector<8x128xf32>
    %2423 = arith.mulf %2414, %2340 : vector<8x128xf32>
    %2424 = arith.addf %2291, %2423 : vector<8x128xf32>
    %2425 = arith.mulf %2414, %2343 : vector<8x128xf32>
    %2426 = arith.addf %2293, %2425 : vector<8x128xf32>
    %2427 = arith.mulf %2414, %2346 : vector<8x128xf32>
    %2428 = arith.addf %2295, %2427 : vector<8x128xf32>
    %2429 = arith.mulf %2414, %2349 : vector<8x128xf32>
    %2430 = arith.addf %2297, %2429 : vector<8x128xf32>
    %2431 = arith.mulf %2414, %2352 : vector<8x128xf32>
    %2432 = arith.addf %2299, %2431 : vector<8x128xf32>
    %2433 = arith.mulf %2414, %2355 : vector<8x128xf32>
    %2434 = arith.addf %2301, %2433 : vector<8x128xf32>
    %2435 = arith.mulf %2414, %2358 : vector<8x128xf32>
    %2436 = arith.addf %2303, %2435 : vector<8x128xf32>
    %2437 = arith.mulf %2414, %2361 : vector<8x128xf32>
    %2438 = arith.addf %2305, %2437 : vector<8x128xf32>
    %2439 = arith.mulf %2414, %2364 : vector<8x128xf32>
    %2440 = arith.addf %2307, %2439 : vector<8x128xf32>
    %2441 = arith.mulf %2414, %2367 : vector<8x128xf32>
    %2442 = arith.addf %2309, %2441 : vector<8x128xf32>
    %2443 = arith.mulf %2414, %2370 : vector<8x128xf32>
    %2444 = arith.addf %2311, %2443 : vector<8x128xf32>
    %2445 = arith.mulf %2414, %2373 : vector<8x128xf32>
    %2446 = arith.addf %2313, %2445 : vector<8x128xf32>
    %cst_246 = arith.constant 1.000000e+00 : f32
    %2447 = vector.broadcast %cst_246 : f32 to vector<8x128xf32>
    %2448 = arith.addf %2447, %2414 : vector<8x128xf32>
    %2449 = arith.mulf %2316, %2448 : vector<8x128xf32>
    %2450 = arith.mulf %2324, %2325 : f32
    %2451 = arith.mulf %2412, %2412 : vector<8x128xf32>
    %2452 = vector.broadcast %2450 : f32 to vector<8x128xf32>
    %2453 = arith.mulf %2452, %2451 : vector<8x128xf32>
    %cst_247 = arith.constant 1.000000e+00 : f32
    %2454 = vector.broadcast %cst_247 : f32 to vector<8x128xf32>
    %2455 = arith.addf %2454, %2453 : vector<8x128xf32>
    %2456 = arith.mulf %2323, %2455 : vector<8x128xf32>
    %c17_248 = arith.constant 17 : index
    %2457 = memref.load %arg3[%c17_248] : memref<24xf32, #tpu.memory_space<smem>>
    %c17_249 = arith.constant 17 : index
    %2458 = memref.load %arg4[%c17_249] : memref<24xf32, #tpu.memory_space<smem>>
    %c272 = arith.constant 272 : index
    %2459 = memref.load %arg2[%c272] : memref<384xf32, #tpu.memory_space<smem>>
    %2460 = vector.broadcast %2459 : f32 to vector<8x128xf32>
    %2461 = arith.subf %2416, %2460 : vector<8x128xf32>
    %c273 = arith.constant 273 : index
    %2462 = memref.load %arg2[%c273] : memref<384xf32, #tpu.memory_space<smem>>
    %2463 = vector.broadcast %2462 : f32 to vector<8x128xf32>
    %2464 = arith.subf %2418, %2463 : vector<8x128xf32>
    %c274 = arith.constant 274 : index
    %2465 = memref.load %arg2[%c274] : memref<384xf32, #tpu.memory_space<smem>>
    %2466 = vector.broadcast %2465 : f32 to vector<8x128xf32>
    %2467 = arith.subf %2420, %2466 : vector<8x128xf32>
    %c275 = arith.constant 275 : index
    %2468 = memref.load %arg2[%c275] : memref<384xf32, #tpu.memory_space<smem>>
    %2469 = vector.broadcast %2468 : f32 to vector<8x128xf32>
    %2470 = arith.subf %2422, %2469 : vector<8x128xf32>
    %c276 = arith.constant 276 : index
    %2471 = memref.load %arg2[%c276] : memref<384xf32, #tpu.memory_space<smem>>
    %2472 = vector.broadcast %2471 : f32 to vector<8x128xf32>
    %2473 = arith.subf %2424, %2472 : vector<8x128xf32>
    %c277 = arith.constant 277 : index
    %2474 = memref.load %arg2[%c277] : memref<384xf32, #tpu.memory_space<smem>>
    %2475 = vector.broadcast %2474 : f32 to vector<8x128xf32>
    %2476 = arith.subf %2426, %2475 : vector<8x128xf32>
    %c278 = arith.constant 278 : index
    %2477 = memref.load %arg2[%c278] : memref<384xf32, #tpu.memory_space<smem>>
    %2478 = vector.broadcast %2477 : f32 to vector<8x128xf32>
    %2479 = arith.subf %2428, %2478 : vector<8x128xf32>
    %c279 = arith.constant 279 : index
    %2480 = memref.load %arg2[%c279] : memref<384xf32, #tpu.memory_space<smem>>
    %2481 = vector.broadcast %2480 : f32 to vector<8x128xf32>
    %2482 = arith.subf %2430, %2481 : vector<8x128xf32>
    %c280 = arith.constant 280 : index
    %2483 = memref.load %arg2[%c280] : memref<384xf32, #tpu.memory_space<smem>>
    %2484 = vector.broadcast %2483 : f32 to vector<8x128xf32>
    %2485 = arith.subf %2432, %2484 : vector<8x128xf32>
    %c281 = arith.constant 281 : index
    %2486 = memref.load %arg2[%c281] : memref<384xf32, #tpu.memory_space<smem>>
    %2487 = vector.broadcast %2486 : f32 to vector<8x128xf32>
    %2488 = arith.subf %2434, %2487 : vector<8x128xf32>
    %c282 = arith.constant 282 : index
    %2489 = memref.load %arg2[%c282] : memref<384xf32, #tpu.memory_space<smem>>
    %2490 = vector.broadcast %2489 : f32 to vector<8x128xf32>
    %2491 = arith.subf %2436, %2490 : vector<8x128xf32>
    %c283 = arith.constant 283 : index
    %2492 = memref.load %arg2[%c283] : memref<384xf32, #tpu.memory_space<smem>>
    %2493 = vector.broadcast %2492 : f32 to vector<8x128xf32>
    %2494 = arith.subf %2438, %2493 : vector<8x128xf32>
    %c284 = arith.constant 284 : index
    %2495 = memref.load %arg2[%c284] : memref<384xf32, #tpu.memory_space<smem>>
    %2496 = vector.broadcast %2495 : f32 to vector<8x128xf32>
    %2497 = arith.subf %2440, %2496 : vector<8x128xf32>
    %c285 = arith.constant 285 : index
    %2498 = memref.load %arg2[%c285] : memref<384xf32, #tpu.memory_space<smem>>
    %2499 = vector.broadcast %2498 : f32 to vector<8x128xf32>
    %2500 = arith.subf %2442, %2499 : vector<8x128xf32>
    %c286 = arith.constant 286 : index
    %2501 = memref.load %arg2[%c286] : memref<384xf32, #tpu.memory_space<smem>>
    %2502 = vector.broadcast %2501 : f32 to vector<8x128xf32>
    %2503 = arith.subf %2444, %2502 : vector<8x128xf32>
    %c287 = arith.constant 287 : index
    %2504 = memref.load %arg2[%c287] : memref<384xf32, #tpu.memory_space<smem>>
    %2505 = vector.broadcast %2504 : f32 to vector<8x128xf32>
    %2506 = arith.subf %2446, %2505 : vector<8x128xf32>
    %2507 = arith.mulf %2461, %2461 : vector<8x128xf32>
    %2508 = arith.mulf %2464, %2464 : vector<8x128xf32>
    %2509 = arith.addf %2507, %2508 : vector<8x128xf32>
    %2510 = arith.mulf %2467, %2467 : vector<8x128xf32>
    %2511 = arith.addf %2509, %2510 : vector<8x128xf32>
    %2512 = arith.mulf %2470, %2470 : vector<8x128xf32>
    %2513 = arith.addf %2511, %2512 : vector<8x128xf32>
    %2514 = arith.mulf %2473, %2473 : vector<8x128xf32>
    %2515 = arith.addf %2513, %2514 : vector<8x128xf32>
    %2516 = arith.mulf %2476, %2476 : vector<8x128xf32>
    %2517 = arith.addf %2515, %2516 : vector<8x128xf32>
    %2518 = arith.mulf %2479, %2479 : vector<8x128xf32>
    %2519 = arith.addf %2517, %2518 : vector<8x128xf32>
    %2520 = arith.mulf %2482, %2482 : vector<8x128xf32>
    %2521 = arith.addf %2519, %2520 : vector<8x128xf32>
    %2522 = arith.mulf %2485, %2485 : vector<8x128xf32>
    %2523 = arith.addf %2521, %2522 : vector<8x128xf32>
    %2524 = arith.mulf %2488, %2488 : vector<8x128xf32>
    %2525 = arith.addf %2523, %2524 : vector<8x128xf32>
    %2526 = arith.mulf %2491, %2491 : vector<8x128xf32>
    %2527 = arith.addf %2525, %2526 : vector<8x128xf32>
    %2528 = arith.mulf %2494, %2494 : vector<8x128xf32>
    %2529 = arith.addf %2527, %2528 : vector<8x128xf32>
    %2530 = arith.mulf %2497, %2497 : vector<8x128xf32>
    %2531 = arith.addf %2529, %2530 : vector<8x128xf32>
    %2532 = arith.mulf %2500, %2500 : vector<8x128xf32>
    %2533 = arith.addf %2531, %2532 : vector<8x128xf32>
    %2534 = arith.mulf %2503, %2503 : vector<8x128xf32>
    %2535 = arith.addf %2533, %2534 : vector<8x128xf32>
    %2536 = arith.mulf %2506, %2506 : vector<8x128xf32>
    %2537 = arith.addf %2535, %2536 : vector<8x128xf32>
    %2538 = math.sqrt %2537 : vector<8x128xf32>
    %2539 = vector.broadcast %2457 : f32 to vector<8x128xf32>
    %2540 = arith.addf %2539, %2538 : vector<8x128xf32>
    %2541 = tpu.reciprocal %2540 {approx = true} : vector<8x128xf32> -> vector<8x128xf32>
    %2542 = arith.mulf %2540, %2541 : vector<8x128xf32>
    %cst_250 = arith.constant 2.000000e+00 : f32
    %2543 = vector.broadcast %cst_250 : f32 to vector<8x128xf32>
    %2544 = arith.subf %2543, %2542 : vector<8x128xf32>
    %2545 = arith.mulf %2541, %2544 : vector<8x128xf32>
    %2546 = vector.broadcast %2458 : f32 to vector<8x128xf32>
    %2547 = arith.mulf %2546, %2545 : vector<8x128xf32>
    %2548 = arith.mulf %2547, %2461 : vector<8x128xf32>
    %2549 = arith.addf %2416, %2548 : vector<8x128xf32>
    %2550 = arith.mulf %2547, %2464 : vector<8x128xf32>
    %2551 = arith.addf %2418, %2550 : vector<8x128xf32>
    %2552 = arith.mulf %2547, %2467 : vector<8x128xf32>
    %2553 = arith.addf %2420, %2552 : vector<8x128xf32>
    %2554 = arith.mulf %2547, %2470 : vector<8x128xf32>
    %2555 = arith.addf %2422, %2554 : vector<8x128xf32>
    %2556 = arith.mulf %2547, %2473 : vector<8x128xf32>
    %2557 = arith.addf %2424, %2556 : vector<8x128xf32>
    %2558 = arith.mulf %2547, %2476 : vector<8x128xf32>
    %2559 = arith.addf %2426, %2558 : vector<8x128xf32>
    %2560 = arith.mulf %2547, %2479 : vector<8x128xf32>
    %2561 = arith.addf %2428, %2560 : vector<8x128xf32>
    %2562 = arith.mulf %2547, %2482 : vector<8x128xf32>
    %2563 = arith.addf %2430, %2562 : vector<8x128xf32>
    %2564 = arith.mulf %2547, %2485 : vector<8x128xf32>
    %2565 = arith.addf %2432, %2564 : vector<8x128xf32>
    %2566 = arith.mulf %2547, %2488 : vector<8x128xf32>
    %2567 = arith.addf %2434, %2566 : vector<8x128xf32>
    %2568 = arith.mulf %2547, %2491 : vector<8x128xf32>
    %2569 = arith.addf %2436, %2568 : vector<8x128xf32>
    %2570 = arith.mulf %2547, %2494 : vector<8x128xf32>
    %2571 = arith.addf %2438, %2570 : vector<8x128xf32>
    %2572 = arith.mulf %2547, %2497 : vector<8x128xf32>
    %2573 = arith.addf %2440, %2572 : vector<8x128xf32>
    %2574 = arith.mulf %2547, %2500 : vector<8x128xf32>
    %2575 = arith.addf %2442, %2574 : vector<8x128xf32>
    %2576 = arith.mulf %2547, %2503 : vector<8x128xf32>
    %2577 = arith.addf %2444, %2576 : vector<8x128xf32>
    %2578 = arith.mulf %2547, %2506 : vector<8x128xf32>
    %2579 = arith.addf %2446, %2578 : vector<8x128xf32>
    %cst_251 = arith.constant 1.000000e+00 : f32
    %2580 = vector.broadcast %cst_251 : f32 to vector<8x128xf32>
    %2581 = arith.addf %2580, %2547 : vector<8x128xf32>
    %2582 = arith.mulf %2449, %2581 : vector<8x128xf32>
    %2583 = arith.mulf %2457, %2458 : f32
    %2584 = arith.mulf %2545, %2545 : vector<8x128xf32>
    %2585 = vector.broadcast %2583 : f32 to vector<8x128xf32>
    %2586 = arith.mulf %2585, %2584 : vector<8x128xf32>
    %cst_252 = arith.constant 1.000000e+00 : f32
    %2587 = vector.broadcast %cst_252 : f32 to vector<8x128xf32>
    %2588 = arith.addf %2587, %2586 : vector<8x128xf32>
    %2589 = arith.mulf %2456, %2588 : vector<8x128xf32>
    %2590 = arith.mulf %2549, %2549 : vector<8x128xf32>
    %2591 = arith.mulf %2551, %2551 : vector<8x128xf32>
    %2592 = arith.addf %2590, %2591 : vector<8x128xf32>
    %2593 = arith.mulf %2553, %2553 : vector<8x128xf32>
    %2594 = arith.addf %2592, %2593 : vector<8x128xf32>
    %2595 = arith.mulf %2555, %2555 : vector<8x128xf32>
    %2596 = arith.addf %2594, %2595 : vector<8x128xf32>
    %2597 = arith.mulf %2557, %2557 : vector<8x128xf32>
    %2598 = arith.addf %2596, %2597 : vector<8x128xf32>
    %2599 = arith.mulf %2559, %2559 : vector<8x128xf32>
    %2600 = arith.addf %2598, %2599 : vector<8x128xf32>
    %2601 = arith.mulf %2561, %2561 : vector<8x128xf32>
    %2602 = arith.addf %2600, %2601 : vector<8x128xf32>
    %2603 = arith.mulf %2563, %2563 : vector<8x128xf32>
    %2604 = arith.addf %2602, %2603 : vector<8x128xf32>
    %2605 = arith.mulf %2565, %2565 : vector<8x128xf32>
    %2606 = arith.addf %2604, %2605 : vector<8x128xf32>
    %2607 = arith.mulf %2567, %2567 : vector<8x128xf32>
    %2608 = arith.addf %2606, %2607 : vector<8x128xf32>
    %2609 = arith.mulf %2569, %2569 : vector<8x128xf32>
    %2610 = arith.addf %2608, %2609 : vector<8x128xf32>
    %2611 = arith.mulf %2571, %2571 : vector<8x128xf32>
    %2612 = arith.addf %2610, %2611 : vector<8x128xf32>
    %2613 = arith.mulf %2573, %2573 : vector<8x128xf32>
    %2614 = arith.addf %2612, %2613 : vector<8x128xf32>
    %2615 = arith.mulf %2575, %2575 : vector<8x128xf32>
    %2616 = arith.addf %2614, %2615 : vector<8x128xf32>
    %2617 = arith.mulf %2577, %2577 : vector<8x128xf32>
    %2618 = arith.addf %2616, %2617 : vector<8x128xf32>
    %2619 = arith.mulf %2579, %2579 : vector<8x128xf32>
    %2620 = arith.addf %2618, %2619 : vector<8x128xf32>
    %2621 = math.log %2582 : vector<8x128xf32>
    %cst_253 = arith.constant 1.500000e+01 : f32
    %2622 = vector.broadcast %cst_253 : f32 to vector<8x128xf32>
    %2623 = arith.mulf %2622, %2621 : vector<8x128xf32>
    %2624 = math.log %2589 : vector<8x128xf32>
    %2625 = arith.addf %2623, %2624 : vector<8x128xf32>
    %cst_254 = arith.constant 5.000000e-01 : f32
    %2626 = vector.broadcast %cst_254 : f32 to vector<8x128xf32>
    %2627 = arith.mulf %2626, %2620 : vector<8x128xf32>
    %cst_255 = arith.constant -14.7030163 : f32
    %2628 = vector.broadcast %cst_255 : f32 to vector<8x128xf32>
    %2629 = arith.subf %2628, %2627 : vector<8x128xf32>
    %2630 = arith.addf %2629, %2625 : vector<8x128xf32>
    %2631 = arith.cmpf one, %2630, %2630 : vector<8x128xf32>
    %cst_256 = arith.constant 0xFF800000 : f32
    %2632 = vector.broadcast %cst_256 : f32 to vector<8x128xf32>
    %2633 = arith.select %2631, %2632, %2630 : vector<8x128xi1>, vector<8x128xf32>
    %c2_257 = arith.constant 2 : index
    %c0_258 = arith.constant 0 : index
    %c0_259 = arith.constant 0 : index
    %2634 = vector.load %arg5[%c2_257, %c0_258, %c0_259] : memref<4x8x128xf32, #tpu.memory_space<vmem>>, vector<1x8x128xf32>
    %2635 = vector.shape_cast %2634 : vector<1x8x128xf32> to vector<8x128xf32>
    %2636 = vector.shape_cast %2633 : vector<8x128xf32> to vector<1x8x128xf32>
    tpu.vector_store %arg5[%c2_257, %c0_258, %c0_259], %2636 {strides = array<i32>} : memref<4x8x128xf32, #tpu.memory_space<vmem>>, vector<1x8x128xf32>,
    %c0_260 = arith.constant 0 : index
    %c0_261 = arith.constant 0 : index
    %c0_262 = arith.constant 0 : index
    %2637 = vector.load %arg1[%c0_260, %c0_261, %c0_262] : memref<16x8x128xf32, #tpu.memory_space<vmem>>, vector<1x8x128xf32>
    %2638 = vector.shape_cast %2637 : vector<1x8x128xf32> to vector<8x128xf32>
    %c1_263 = arith.constant 1 : index
    %c0_264 = arith.constant 0 : index
    %c0_265 = arith.constant 0 : index
    %2639 = vector.load %arg1[%c1_263, %c0_264, %c0_265] : memref<16x8x128xf32, #tpu.memory_space<vmem>>, vector<1x8x128xf32>
    %2640 = vector.shape_cast %2639 : vector<1x8x128xf32> to vector<8x128xf32>
    %c2_266 = arith.constant 2 : index
    %c0_267 = arith.constant 0 : index
    %c0_268 = arith.constant 0 : index
    %2641 = vector.load %arg1[%c2_266, %c0_267, %c0_268] : memref<16x8x128xf32, #tpu.memory_space<vmem>>, vector<1x8x128xf32>
    %2642 = vector.shape_cast %2641 : vector<1x8x128xf32> to vector<8x128xf32>
    %c3_269 = arith.constant 3 : index
    %c0_270 = arith.constant 0 : index
    %c0_271 = arith.constant 0 : index
    %2643 = vector.load %arg1[%c3_269, %c0_270, %c0_271] : memref<16x8x128xf32, #tpu.memory_space<vmem>>, vector<1x8x128xf32>
    %2644 = vector.shape_cast %2643 : vector<1x8x128xf32> to vector<8x128xf32>
    %c4_272 = arith.constant 4 : index
    %c0_273 = arith.constant 0 : index
    %c0_274 = arith.constant 0 : index
    %2645 = vector.load %arg1[%c4_272, %c0_273, %c0_274] : memref<16x8x128xf32, #tpu.memory_space<vmem>>, vector<1x8x128xf32>
    %2646 = vector.shape_cast %2645 : vector<1x8x128xf32> to vector<8x128xf32>
    %c5_275 = arith.constant 5 : index
    %c0_276 = arith.constant 0 : index
    %c0_277 = arith.constant 0 : index
    %2647 = vector.load %arg1[%c5_275, %c0_276, %c0_277] : memref<16x8x128xf32, #tpu.memory_space<vmem>>, vector<1x8x128xf32>
    %2648 = vector.shape_cast %2647 : vector<1x8x128xf32> to vector<8x128xf32>
    %c6_278 = arith.constant 6 : index
    %c0_279 = arith.constant 0 : index
    %c0_280 = arith.constant 0 : index
    %2649 = vector.load %arg1[%c6_278, %c0_279, %c0_280] : memref<16x8x128xf32, #tpu.memory_space<vmem>>, vector<1x8x128xf32>
    %2650 = vector.shape_cast %2649 : vector<1x8x128xf32> to vector<8x128xf32>
    %c7_281 = arith.constant 7 : index
    %c0_282 = arith.constant 0 : index
    %c0_283 = arith.constant 0 : index
    %2651 = vector.load %arg1[%c7_281, %c0_282, %c0_283] : memref<16x8x128xf32, #tpu.memory_space<vmem>>, vector<1x8x128xf32>
    %2652 = vector.shape_cast %2651 : vector<1x8x128xf32> to vector<8x128xf32>
    %c8_284 = arith.constant 8 : index
    %c0_285 = arith.constant 0 : index
    %c0_286 = arith.constant 0 : index
    %2653 = vector.load %arg1[%c8_284, %c0_285, %c0_286] : memref<16x8x128xf32, #tpu.memory_space<vmem>>, vector<1x8x128xf32>
    %2654 = vector.shape_cast %2653 : vector<1x8x128xf32> to vector<8x128xf32>
    %c9_287 = arith.constant 9 : index
    %c0_288 = arith.constant 0 : index
    %c0_289 = arith.constant 0 : index
    %2655 = vector.load %arg1[%c9_287, %c0_288, %c0_289] : memref<16x8x128xf32, #tpu.memory_space<vmem>>, vector<1x8x128xf32>
    %2656 = vector.shape_cast %2655 : vector<1x8x128xf32> to vector<8x128xf32>
    %c10_290 = arith.constant 10 : index
    %c0_291 = arith.constant 0 : index
    %c0_292 = arith.constant 0 : index
    %2657 = vector.load %arg1[%c10_290, %c0_291, %c0_292] : memref<16x8x128xf32, #tpu.memory_space<vmem>>, vector<1x8x128xf32>
    %2658 = vector.shape_cast %2657 : vector<1x8x128xf32> to vector<8x128xf32>
    %c11_293 = arith.constant 11 : index
    %c0_294 = arith.constant 0 : index
    %c0_295 = arith.constant 0 : index
    %2659 = vector.load %arg1[%c11_293, %c0_294, %c0_295] : memref<16x8x128xf32, #tpu.memory_space<vmem>>, vector<1x8x128xf32>
    %2660 = vector.shape_cast %2659 : vector<1x8x128xf32> to vector<8x128xf32>
    %c12_296 = arith.constant 12 : index
    %c0_297 = arith.constant 0 : index
    %c0_298 = arith.constant 0 : index
    %2661 = vector.load %arg1[%c12_296, %c0_297, %c0_298] : memref<16x8x128xf32, #tpu.memory_space<vmem>>, vector<1x8x128xf32>
    %2662 = vector.shape_cast %2661 : vector<1x8x128xf32> to vector<8x128xf32>
    %c13_299 = arith.constant 13 : index
    %c0_300 = arith.constant 0 : index
    %c0_301 = arith.constant 0 : index
    %2663 = vector.load %arg1[%c13_299, %c0_300, %c0_301] : memref<16x8x128xf32, #tpu.memory_space<vmem>>, vector<1x8x128xf32>
    %2664 = vector.shape_cast %2663 : vector<1x8x128xf32> to vector<8x128xf32>
    %c14_302 = arith.constant 14 : index
    %c0_303 = arith.constant 0 : index
    %c0_304 = arith.constant 0 : index
    %2665 = vector.load %arg1[%c14_302, %c0_303, %c0_304] : memref<16x8x128xf32, #tpu.memory_space<vmem>>, vector<1x8x128xf32>
    %2666 = vector.shape_cast %2665 : vector<1x8x128xf32> to vector<8x128xf32>
    %c15_305 = arith.constant 15 : index
    %c0_306 = arith.constant 0 : index
    %c0_307 = arith.constant 0 : index
    %2667 = vector.load %arg1[%c15_305, %c0_306, %c0_307] : memref<16x8x128xf32, #tpu.memory_space<vmem>>, vector<1x8x128xf32>
    %2668 = vector.shape_cast %2667 : vector<1x8x128xf32> to vector<8x128xf32>
    %cst_308 = arith.constant 1.000000e+00 : f32
    %2669 = vector.broadcast %cst_308 : f32 to vector<8x128xf32>
    %cst_309 = arith.constant 1.000000e+00 : f32
    %2670 = vector.broadcast %cst_309 : f32 to vector<8x128xf32>
    %c18_310 = arith.constant 18 : index
    %2671 = memref.load %arg3[%c18_310] : memref<24xf32, #tpu.memory_space<smem>>
    %c18_311 = arith.constant 18 : index
    %2672 = memref.load %arg4[%c18_311] : memref<24xf32, #tpu.memory_space<smem>>
    %c288 = arith.constant 288 : index
    %2673 = memref.load %arg2[%c288] : memref<384xf32, #tpu.memory_space<smem>>
    %2674 = vector.broadcast %2673 : f32 to vector<8x128xf32>
    %2675 = arith.subf %2638, %2674 : vector<8x128xf32>
    %c289 = arith.constant 289 : index
    %2676 = memref.load %arg2[%c289] : memref<384xf32, #tpu.memory_space<smem>>
    %2677 = vector.broadcast %2676 : f32 to vector<8x128xf32>
    %2678 = arith.subf %2640, %2677 : vector<8x128xf32>
    %c290 = arith.constant 290 : index
    %2679 = memref.load %arg2[%c290] : memref<384xf32, #tpu.memory_space<smem>>
    %2680 = vector.broadcast %2679 : f32 to vector<8x128xf32>
    %2681 = arith.subf %2642, %2680 : vector<8x128xf32>
    %c291 = arith.constant 291 : index
    %2682 = memref.load %arg2[%c291] : memref<384xf32, #tpu.memory_space<smem>>
    %2683 = vector.broadcast %2682 : f32 to vector<8x128xf32>
    %2684 = arith.subf %2644, %2683 : vector<8x128xf32>
    %c292 = arith.constant 292 : index
    %2685 = memref.load %arg2[%c292] : memref<384xf32, #tpu.memory_space<smem>>
    %2686 = vector.broadcast %2685 : f32 to vector<8x128xf32>
    %2687 = arith.subf %2646, %2686 : vector<8x128xf32>
    %c293 = arith.constant 293 : index
    %2688 = memref.load %arg2[%c293] : memref<384xf32, #tpu.memory_space<smem>>
    %2689 = vector.broadcast %2688 : f32 to vector<8x128xf32>
    %2690 = arith.subf %2648, %2689 : vector<8x128xf32>
    %c294 = arith.constant 294 : index
    %2691 = memref.load %arg2[%c294] : memref<384xf32, #tpu.memory_space<smem>>
    %2692 = vector.broadcast %2691 : f32 to vector<8x128xf32>
    %2693 = arith.subf %2650, %2692 : vector<8x128xf32>
    %c295 = arith.constant 295 : index
    %2694 = memref.load %arg2[%c295] : memref<384xf32, #tpu.memory_space<smem>>
    %2695 = vector.broadcast %2694 : f32 to vector<8x128xf32>
    %2696 = arith.subf %2652, %2695 : vector<8x128xf32>
    %c296 = arith.constant 296 : index
    %2697 = memref.load %arg2[%c296] : memref<384xf32, #tpu.memory_space<smem>>
    %2698 = vector.broadcast %2697 : f32 to vector<8x128xf32>
    %2699 = arith.subf %2654, %2698 : vector<8x128xf32>
    %c297 = arith.constant 297 : index
    %2700 = memref.load %arg2[%c297] : memref<384xf32, #tpu.memory_space<smem>>
    %2701 = vector.broadcast %2700 : f32 to vector<8x128xf32>
    %2702 = arith.subf %2656, %2701 : vector<8x128xf32>
    %c298 = arith.constant 298 : index
    %2703 = memref.load %arg2[%c298] : memref<384xf32, #tpu.memory_space<smem>>
    %2704 = vector.broadcast %2703 : f32 to vector<8x128xf32>
    %2705 = arith.subf %2658, %2704 : vector<8x128xf32>
    %c299 = arith.constant 299 : index
    %2706 = memref.load %arg2[%c299] : memref<384xf32, #tpu.memory_space<smem>>
    %2707 = vector.broadcast %2706 : f32 to vector<8x128xf32>
    %2708 = arith.subf %2660, %2707 : vector<8x128xf32>
    %c300 = arith.constant 300 : index
    %2709 = memref.load %arg2[%c300] : memref<384xf32, #tpu.memory_space<smem>>
    %2710 = vector.broadcast %2709 : f32 to vector<8x128xf32>
    %2711 = arith.subf %2662, %2710 : vector<8x128xf32>
    %c301 = arith.constant 301 : index
    %2712 = memref.load %arg2[%c301] : memref<384xf32, #tpu.memory_space<smem>>
    %2713 = vector.broadcast %2712 : f32 to vector<8x128xf32>
    %2714 = arith.subf %2664, %2713 : vector<8x128xf32>
    %c302 = arith.constant 302 : index
    %2715 = memref.load %arg2[%c302] : memref<384xf32, #tpu.memory_space<smem>>
    %2716 = vector.broadcast %2715 : f32 to vector<8x128xf32>
    %2717 = arith.subf %2666, %2716 : vector<8x128xf32>
    %c303 = arith.constant 303 : index
    %2718 = memref.load %arg2[%c303] : memref<384xf32, #tpu.memory_space<smem>>
    %2719 = vector.broadcast %2718 : f32 to vector<8x128xf32>
    %2720 = arith.subf %2668, %2719 : vector<8x128xf32>
    %2721 = arith.mulf %2675, %2675 : vector<8x128xf32>
    %2722 = arith.mulf %2678, %2678 : vector<8x128xf32>
    %2723 = arith.addf %2721, %2722 : vector<8x128xf32>
    %2724 = arith.mulf %2681, %2681 : vector<8x128xf32>
    %2725 = arith.addf %2723, %2724 : vector<8x128xf32>
    %2726 = arith.mulf %2684, %2684 : vector<8x128xf32>
    %2727 = arith.addf %2725, %2726 : vector<8x128xf32>
    %2728 = arith.mulf %2687, %2687 : vector<8x128xf32>
    %2729 = arith.addf %2727, %2728 : vector<8x128xf32>
    %2730 = arith.mulf %2690, %2690 : vector<8x128xf32>
    %2731 = arith.addf %2729, %2730 : vector<8x128xf32>
    %2732 = arith.mulf %2693, %2693 : vector<8x128xf32>
    %2733 = arith.addf %2731, %2732 : vector<8x128xf32>
    %2734 = arith.mulf %2696, %2696 : vector<8x128xf32>
    %2735 = arith.addf %2733, %2734 : vector<8x128xf32>
    %2736 = arith.mulf %2699, %2699 : vector<8x128xf32>
    %2737 = arith.addf %2735, %2736 : vector<8x128xf32>
    %2738 = arith.mulf %2702, %2702 : vector<8x128xf32>
    %2739 = arith.addf %2737, %2738 : vector<8x128xf32>
    %2740 = arith.mulf %2705, %2705 : vector<8x128xf32>
    %2741 = arith.addf %2739, %2740 : vector<8x128xf32>
    %2742 = arith.mulf %2708, %2708 : vector<8x128xf32>
    %2743 = arith.addf %2741, %2742 : vector<8x128xf32>
    %2744 = arith.mulf %2711, %2711 : vector<8x128xf32>
    %2745 = arith.addf %2743, %2744 : vector<8x128xf32>
    %2746 = arith.mulf %2714, %2714 : vector<8x128xf32>
    %2747 = arith.addf %2745, %2746 : vector<8x128xf32>
    %2748 = arith.mulf %2717, %2717 : vector<8x128xf32>
    %2749 = arith.addf %2747, %2748 : vector<8x128xf32>
    %2750 = arith.mulf %2720, %2720 : vector<8x128xf32>
    %2751 = arith.addf %2749, %2750 : vector<8x128xf32>
    %2752 = math.sqrt %2751 : vector<8x128xf32>
    %2753 = vector.broadcast %2671 : f32 to vector<8x128xf32>
    %2754 = arith.addf %2753, %2752 : vector<8x128xf32>
    %2755 = tpu.reciprocal %2754 {approx = true} : vector<8x128xf32> -> vector<8x128xf32>
    %2756 = arith.mulf %2754, %2755 : vector<8x128xf32>
    %cst_312 = arith.constant 2.000000e+00 : f32
    %2757 = vector.broadcast %cst_312 : f32 to vector<8x128xf32>
    %2758 = arith.subf %2757, %2756 : vector<8x128xf32>
    %2759 = arith.mulf %2755, %2758 : vector<8x128xf32>
    %2760 = vector.broadcast %2672 : f32 to vector<8x128xf32>
    %2761 = arith.mulf %2760, %2759 : vector<8x128xf32>
    %2762 = arith.mulf %2761, %2675 : vector<8x128xf32>
    %2763 = arith.addf %2638, %2762 : vector<8x128xf32>
    %2764 = arith.mulf %2761, %2678 : vector<8x128xf32>
    %2765 = arith.addf %2640, %2764 : vector<8x128xf32>
    %2766 = arith.mulf %2761, %2681 : vector<8x128xf32>
    %2767 = arith.addf %2642, %2766 : vector<8x128xf32>
    %2768 = arith.mulf %2761, %2684 : vector<8x128xf32>
    %2769 = arith.addf %2644, %2768 : vector<8x128xf32>
    %2770 = arith.mulf %2761, %2687 : vector<8x128xf32>
    %2771 = arith.addf %2646, %2770 : vector<8x128xf32>
    %2772 = arith.mulf %2761, %2690 : vector<8x128xf32>
    %2773 = arith.addf %2648, %2772 : vector<8x128xf32>
    %2774 = arith.mulf %2761, %2693 : vector<8x128xf32>
    %2775 = arith.addf %2650, %2774 : vector<8x128xf32>
    %2776 = arith.mulf %2761, %2696 : vector<8x128xf32>
    %2777 = arith.addf %2652, %2776 : vector<8x128xf32>
    %2778 = arith.mulf %2761, %2699 : vector<8x128xf32>
    %2779 = arith.addf %2654, %2778 : vector<8x128xf32>
    %2780 = arith.mulf %2761, %2702 : vector<8x128xf32>
    %2781 = arith.addf %2656, %2780 : vector<8x128xf32>
    %2782 = arith.mulf %2761, %2705 : vector<8x128xf32>
    %2783 = arith.addf %2658, %2782 : vector<8x128xf32>
    %2784 = arith.mulf %2761, %2708 : vector<8x128xf32>
    %2785 = arith.addf %2660, %2784 : vector<8x128xf32>
    %2786 = arith.mulf %2761, %2711 : vector<8x128xf32>
    %2787 = arith.addf %2662, %2786 : vector<8x128xf32>
    %2788 = arith.mulf %2761, %2714 : vector<8x128xf32>
    %2789 = arith.addf %2664, %2788 : vector<8x128xf32>
    %2790 = arith.mulf %2761, %2717 : vector<8x128xf32>
    %2791 = arith.addf %2666, %2790 : vector<8x128xf32>
    %2792 = arith.mulf %2761, %2720 : vector<8x128xf32>
    %2793 = arith.addf %2668, %2792 : vector<8x128xf32>
    %cst_313 = arith.constant 1.000000e+00 : f32
    %2794 = vector.broadcast %cst_313 : f32 to vector<8x128xf32>
    %2795 = arith.addf %2794, %2761 : vector<8x128xf32>
    %2796 = arith.mulf %2669, %2795 : vector<8x128xf32>
    %2797 = arith.mulf %2671, %2672 : f32
    %2798 = arith.mulf %2759, %2759 : vector<8x128xf32>
    %2799 = vector.broadcast %2797 : f32 to vector<8x128xf32>
    %2800 = arith.mulf %2799, %2798 : vector<8x128xf32>
    %cst_314 = arith.constant 1.000000e+00 : f32
    %2801 = vector.broadcast %cst_314 : f32 to vector<8x128xf32>
    %2802 = arith.addf %2801, %2800 : vector<8x128xf32>
    %2803 = arith.mulf %2670, %2802 : vector<8x128xf32>
    %c19_315 = arith.constant 19 : index
    %2804 = memref.load %arg3[%c19_315] : memref<24xf32, #tpu.memory_space<smem>>
    %c19_316 = arith.constant 19 : index
    %2805 = memref.load %arg4[%c19_316] : memref<24xf32, #tpu.memory_space<smem>>
    %c304 = arith.constant 304 : index
    %2806 = memref.load %arg2[%c304] : memref<384xf32, #tpu.memory_space<smem>>
    %2807 = vector.broadcast %2806 : f32 to vector<8x128xf32>
    %2808 = arith.subf %2763, %2807 : vector<8x128xf32>
    %c305 = arith.constant 305 : index
    %2809 = memref.load %arg2[%c305] : memref<384xf32, #tpu.memory_space<smem>>
    %2810 = vector.broadcast %2809 : f32 to vector<8x128xf32>
    %2811 = arith.subf %2765, %2810 : vector<8x128xf32>
    %c306 = arith.constant 306 : index
    %2812 = memref.load %arg2[%c306] : memref<384xf32, #tpu.memory_space<smem>>
    %2813 = vector.broadcast %2812 : f32 to vector<8x128xf32>
    %2814 = arith.subf %2767, %2813 : vector<8x128xf32>
    %c307 = arith.constant 307 : index
    %2815 = memref.load %arg2[%c307] : memref<384xf32, #tpu.memory_space<smem>>
    %2816 = vector.broadcast %2815 : f32 to vector<8x128xf32>
    %2817 = arith.subf %2769, %2816 : vector<8x128xf32>
    %c308 = arith.constant 308 : index
    %2818 = memref.load %arg2[%c308] : memref<384xf32, #tpu.memory_space<smem>>
    %2819 = vector.broadcast %2818 : f32 to vector<8x128xf32>
    %2820 = arith.subf %2771, %2819 : vector<8x128xf32>
    %c309 = arith.constant 309 : index
    %2821 = memref.load %arg2[%c309] : memref<384xf32, #tpu.memory_space<smem>>
    %2822 = vector.broadcast %2821 : f32 to vector<8x128xf32>
    %2823 = arith.subf %2773, %2822 : vector<8x128xf32>
    %c310 = arith.constant 310 : index
    %2824 = memref.load %arg2[%c310] : memref<384xf32, #tpu.memory_space<smem>>
    %2825 = vector.broadcast %2824 : f32 to vector<8x128xf32>
    %2826 = arith.subf %2775, %2825 : vector<8x128xf32>
    %c311 = arith.constant 311 : index
    %2827 = memref.load %arg2[%c311] : memref<384xf32, #tpu.memory_space<smem>>
    %2828 = vector.broadcast %2827 : f32 to vector<8x128xf32>
    %2829 = arith.subf %2777, %2828 : vector<8x128xf32>
    %c312 = arith.constant 312 : index
    %2830 = memref.load %arg2[%c312] : memref<384xf32, #tpu.memory_space<smem>>
    %2831 = vector.broadcast %2830 : f32 to vector<8x128xf32>
    %2832 = arith.subf %2779, %2831 : vector<8x128xf32>
    %c313 = arith.constant 313 : index
    %2833 = memref.load %arg2[%c313] : memref<384xf32, #tpu.memory_space<smem>>
    %2834 = vector.broadcast %2833 : f32 to vector<8x128xf32>
    %2835 = arith.subf %2781, %2834 : vector<8x128xf32>
    %c314 = arith.constant 314 : index
    %2836 = memref.load %arg2[%c314] : memref<384xf32, #tpu.memory_space<smem>>
    %2837 = vector.broadcast %2836 : f32 to vector<8x128xf32>
    %2838 = arith.subf %2783, %2837 : vector<8x128xf32>
    %c315 = arith.constant 315 : index
    %2839 = memref.load %arg2[%c315] : memref<384xf32, #tpu.memory_space<smem>>
    %2840 = vector.broadcast %2839 : f32 to vector<8x128xf32>
    %2841 = arith.subf %2785, %2840 : vector<8x128xf32>
    %c316 = arith.constant 316 : index
    %2842 = memref.load %arg2[%c316] : memref<384xf32, #tpu.memory_space<smem>>
    %2843 = vector.broadcast %2842 : f32 to vector<8x128xf32>
    %2844 = arith.subf %2787, %2843 : vector<8x128xf32>
    %c317 = arith.constant 317 : index
    %2845 = memref.load %arg2[%c317] : memref<384xf32, #tpu.memory_space<smem>>
    %2846 = vector.broadcast %2845 : f32 to vector<8x128xf32>
    %2847 = arith.subf %2789, %2846 : vector<8x128xf32>
    %c318 = arith.constant 318 : index
    %2848 = memref.load %arg2[%c318] : memref<384xf32, #tpu.memory_space<smem>>
    %2849 = vector.broadcast %2848 : f32 to vector<8x128xf32>
    %2850 = arith.subf %2791, %2849 : vector<8x128xf32>
    %c319 = arith.constant 319 : index
    %2851 = memref.load %arg2[%c319] : memref<384xf32, #tpu.memory_space<smem>>
    %2852 = vector.broadcast %2851 : f32 to vector<8x128xf32>
    %2853 = arith.subf %2793, %2852 : vector<8x128xf32>
    %2854 = arith.mulf %2808, %2808 : vector<8x128xf32>
    %2855 = arith.mulf %2811, %2811 : vector<8x128xf32>
    %2856 = arith.addf %2854, %2855 : vector<8x128xf32>
    %2857 = arith.mulf %2814, %2814 : vector<8x128xf32>
    %2858 = arith.addf %2856, %2857 : vector<8x128xf32>
    %2859 = arith.mulf %2817, %2817 : vector<8x128xf32>
    %2860 = arith.addf %2858, %2859 : vector<8x128xf32>
    %2861 = arith.mulf %2820, %2820 : vector<8x128xf32>
    %2862 = arith.addf %2860, %2861 : vector<8x128xf32>
    %2863 = arith.mulf %2823, %2823 : vector<8x128xf32>
    %2864 = arith.addf %2862, %2863 : vector<8x128xf32>
    %2865 = arith.mulf %2826, %2826 : vector<8x128xf32>
    %2866 = arith.addf %2864, %2865 : vector<8x128xf32>
    %2867 = arith.mulf %2829, %2829 : vector<8x128xf32>
    %2868 = arith.addf %2866, %2867 : vector<8x128xf32>
    %2869 = arith.mulf %2832, %2832 : vector<8x128xf32>
    %2870 = arith.addf %2868, %2869 : vector<8x128xf32>
    %2871 = arith.mulf %2835, %2835 : vector<8x128xf32>
    %2872 = arith.addf %2870, %2871 : vector<8x128xf32>
    %2873 = arith.mulf %2838, %2838 : vector<8x128xf32>
    %2874 = arith.addf %2872, %2873 : vector<8x128xf32>
    %2875 = arith.mulf %2841, %2841 : vector<8x128xf32>
    %2876 = arith.addf %2874, %2875 : vector<8x128xf32>
    %2877 = arith.mulf %2844, %2844 : vector<8x128xf32>
    %2878 = arith.addf %2876, %2877 : vector<8x128xf32>
    %2879 = arith.mulf %2847, %2847 : vector<8x128xf32>
    %2880 = arith.addf %2878, %2879 : vector<8x128xf32>
    %2881 = arith.mulf %2850, %2850 : vector<8x128xf32>
    %2882 = arith.addf %2880, %2881 : vector<8x128xf32>
    %2883 = arith.mulf %2853, %2853 : vector<8x128xf32>
    %2884 = arith.addf %2882, %2883 : vector<8x128xf32>
    %2885 = math.sqrt %2884 : vector<8x128xf32>
    %2886 = vector.broadcast %2804 : f32 to vector<8x128xf32>
    %2887 = arith.addf %2886, %2885 : vector<8x128xf32>
    %2888 = tpu.reciprocal %2887 {approx = true} : vector<8x128xf32> -> vector<8x128xf32>
    %2889 = arith.mulf %2887, %2888 : vector<8x128xf32>
    %cst_317 = arith.constant 2.000000e+00 : f32
    %2890 = vector.broadcast %cst_317 : f32 to vector<8x128xf32>
    %2891 = arith.subf %2890, %2889 : vector<8x128xf32>
    %2892 = arith.mulf %2888, %2891 : vector<8x128xf32>
    %2893 = vector.broadcast %2805 : f32 to vector<8x128xf32>
    %2894 = arith.mulf %2893, %2892 : vector<8x128xf32>
    %2895 = arith.mulf %2894, %2808 : vector<8x128xf32>
    %2896 = arith.addf %2763, %2895 : vector<8x128xf32>
    %2897 = arith.mulf %2894, %2811 : vector<8x128xf32>
    %2898 = arith.addf %2765, %2897 : vector<8x128xf32>
    %2899 = arith.mulf %2894, %2814 : vector<8x128xf32>
    %2900 = arith.addf %2767, %2899 : vector<8x128xf32>
    %2901 = arith.mulf %2894, %2817 : vector<8x128xf32>
    %2902 = arith.addf %2769, %2901 : vector<8x128xf32>
    %2903 = arith.mulf %2894, %2820 : vector<8x128xf32>
    %2904 = arith.addf %2771, %2903 : vector<8x128xf32>
    %2905 = arith.mulf %2894, %2823 : vector<8x128xf32>
    %2906 = arith.addf %2773, %2905 : vector<8x128xf32>
    %2907 = arith.mulf %2894, %2826 : vector<8x128xf32>
    %2908 = arith.addf %2775, %2907 : vector<8x128xf32>
    %2909 = arith.mulf %2894, %2829 : vector<8x128xf32>
    %2910 = arith.addf %2777, %2909 : vector<8x128xf32>
    %2911 = arith.mulf %2894, %2832 : vector<8x128xf32>
    %2912 = arith.addf %2779, %2911 : vector<8x128xf32>
    %2913 = arith.mulf %2894, %2835 : vector<8x128xf32>
    %2914 = arith.addf %2781, %2913 : vector<8x128xf32>
    %2915 = arith.mulf %2894, %2838 : vector<8x128xf32>
    %2916 = arith.addf %2783, %2915 : vector<8x128xf32>
    %2917 = arith.mulf %2894, %2841 : vector<8x128xf32>
    %2918 = arith.addf %2785, %2917 : vector<8x128xf32>
    %2919 = arith.mulf %2894, %2844 : vector<8x128xf32>
    %2920 = arith.addf %2787, %2919 : vector<8x128xf32>
    %2921 = arith.mulf %2894, %2847 : vector<8x128xf32>
    %2922 = arith.addf %2789, %2921 : vector<8x128xf32>
    %2923 = arith.mulf %2894, %2850 : vector<8x128xf32>
    %2924 = arith.addf %2791, %2923 : vector<8x128xf32>
    %2925 = arith.mulf %2894, %2853 : vector<8x128xf32>
    %2926 = arith.addf %2793, %2925 : vector<8x128xf32>
    %cst_318 = arith.constant 1.000000e+00 : f32
    %2927 = vector.broadcast %cst_318 : f32 to vector<8x128xf32>
    %2928 = arith.addf %2927, %2894 : vector<8x128xf32>
    %2929 = arith.mulf %2796, %2928 : vector<8x128xf32>
    %2930 = arith.mulf %2804, %2805 : f32
    %2931 = arith.mulf %2892, %2892 : vector<8x128xf32>
    %2932 = vector.broadcast %2930 : f32 to vector<8x128xf32>
    %2933 = arith.mulf %2932, %2931 : vector<8x128xf32>
    %cst_319 = arith.constant 1.000000e+00 : f32
    %2934 = vector.broadcast %cst_319 : f32 to vector<8x128xf32>
    %2935 = arith.addf %2934, %2933 : vector<8x128xf32>
    %2936 = arith.mulf %2803, %2935 : vector<8x128xf32>
    %c20_320 = arith.constant 20 : index
    %2937 = memref.load %arg3[%c20_320] : memref<24xf32, #tpu.memory_space<smem>>
    %c20_321 = arith.constant 20 : index
    %2938 = memref.load %arg4[%c20_321] : memref<24xf32, #tpu.memory_space<smem>>
    %c320 = arith.constant 320 : index
    %2939 = memref.load %arg2[%c320] : memref<384xf32, #tpu.memory_space<smem>>
    %2940 = vector.broadcast %2939 : f32 to vector<8x128xf32>
    %2941 = arith.subf %2896, %2940 : vector<8x128xf32>
    %c321 = arith.constant 321 : index
    %2942 = memref.load %arg2[%c321] : memref<384xf32, #tpu.memory_space<smem>>
    %2943 = vector.broadcast %2942 : f32 to vector<8x128xf32>
    %2944 = arith.subf %2898, %2943 : vector<8x128xf32>
    %c322 = arith.constant 322 : index
    %2945 = memref.load %arg2[%c322] : memref<384xf32, #tpu.memory_space<smem>>
    %2946 = vector.broadcast %2945 : f32 to vector<8x128xf32>
    %2947 = arith.subf %2900, %2946 : vector<8x128xf32>
    %c323 = arith.constant 323 : index
    %2948 = memref.load %arg2[%c323] : memref<384xf32, #tpu.memory_space<smem>>
    %2949 = vector.broadcast %2948 : f32 to vector<8x128xf32>
    %2950 = arith.subf %2902, %2949 : vector<8x128xf32>
    %c324 = arith.constant 324 : index
    %2951 = memref.load %arg2[%c324] : memref<384xf32, #tpu.memory_space<smem>>
    %2952 = vector.broadcast %2951 : f32 to vector<8x128xf32>
    %2953 = arith.subf %2904, %2952 : vector<8x128xf32>
    %c325 = arith.constant 325 : index
    %2954 = memref.load %arg2[%c325] : memref<384xf32, #tpu.memory_space<smem>>
    %2955 = vector.broadcast %2954 : f32 to vector<8x128xf32>
    %2956 = arith.subf %2906, %2955 : vector<8x128xf32>
    %c326 = arith.constant 326 : index
    %2957 = memref.load %arg2[%c326] : memref<384xf32, #tpu.memory_space<smem>>
    %2958 = vector.broadcast %2957 : f32 to vector<8x128xf32>
    %2959 = arith.subf %2908, %2958 : vector<8x128xf32>
    %c327 = arith.constant 327 : index
    %2960 = memref.load %arg2[%c327] : memref<384xf32, #tpu.memory_space<smem>>
    %2961 = vector.broadcast %2960 : f32 to vector<8x128xf32>
    %2962 = arith.subf %2910, %2961 : vector<8x128xf32>
    %c328 = arith.constant 328 : index
    %2963 = memref.load %arg2[%c328] : memref<384xf32, #tpu.memory_space<smem>>
    %2964 = vector.broadcast %2963 : f32 to vector<8x128xf32>
    %2965 = arith.subf %2912, %2964 : vector<8x128xf32>
    %c329 = arith.constant 329 : index
    %2966 = memref.load %arg2[%c329] : memref<384xf32, #tpu.memory_space<smem>>
    %2967 = vector.broadcast %2966 : f32 to vector<8x128xf32>
    %2968 = arith.subf %2914, %2967 : vector<8x128xf32>
    %c330 = arith.constant 330 : index
    %2969 = memref.load %arg2[%c330] : memref<384xf32, #tpu.memory_space<smem>>
    %2970 = vector.broadcast %2969 : f32 to vector<8x128xf32>
    %2971 = arith.subf %2916, %2970 : vector<8x128xf32>
    %c331 = arith.constant 331 : index
    %2972 = memref.load %arg2[%c331] : memref<384xf32, #tpu.memory_space<smem>>
    %2973 = vector.broadcast %2972 : f32 to vector<8x128xf32>
    %2974 = arith.subf %2918, %2973 : vector<8x128xf32>
    %c332 = arith.constant 332 : index
    %2975 = memref.load %arg2[%c332] : memref<384xf32, #tpu.memory_space<smem>>
    %2976 = vector.broadcast %2975 : f32 to vector<8x128xf32>
    %2977 = arith.subf %2920, %2976 : vector<8x128xf32>
    %c333 = arith.constant 333 : index
    %2978 = memref.load %arg2[%c333] : memref<384xf32, #tpu.memory_space<smem>>
    %2979 = vector.broadcast %2978 : f32 to vector<8x128xf32>
    %2980 = arith.subf %2922, %2979 : vector<8x128xf32>
    %c334 = arith.constant 334 : index
    %2981 = memref.load %arg2[%c334] : memref<384xf32, #tpu.memory_space<smem>>
    %2982 = vector.broadcast %2981 : f32 to vector<8x128xf32>
    %2983 = arith.subf %2924, %2982 : vector<8x128xf32>
    %c335 = arith.constant 335 : index
    %2984 = memref.load %arg2[%c335] : memref<384xf32, #tpu.memory_space<smem>>
    %2985 = vector.broadcast %2984 : f32 to vector<8x128xf32>
    %2986 = arith.subf %2926, %2985 : vector<8x128xf32>
    %2987 = arith.mulf %2941, %2941 : vector<8x128xf32>
    %2988 = arith.mulf %2944, %2944 : vector<8x128xf32>
    %2989 = arith.addf %2987, %2988 : vector<8x128xf32>
    %2990 = arith.mulf %2947, %2947 : vector<8x128xf32>
    %2991 = arith.addf %2989, %2990 : vector<8x128xf32>
    %2992 = arith.mulf %2950, %2950 : vector<8x128xf32>
    %2993 = arith.addf %2991, %2992 : vector<8x128xf32>
    %2994 = arith.mulf %2953, %2953 : vector<8x128xf32>
    %2995 = arith.addf %2993, %2994 : vector<8x128xf32>
    %2996 = arith.mulf %2956, %2956 : vector<8x128xf32>
    %2997 = arith.addf %2995, %2996 : vector<8x128xf32>
    %2998 = arith.mulf %2959, %2959 : vector<8x128xf32>
    %2999 = arith.addf %2997, %2998 : vector<8x128xf32>
    %3000 = arith.mulf %2962, %2962 : vector<8x128xf32>
    %3001 = arith.addf %2999, %3000 : vector<8x128xf32>
    %3002 = arith.mulf %2965, %2965 : vector<8x128xf32>
    %3003 = arith.addf %3001, %3002 : vector<8x128xf32>
    %3004 = arith.mulf %2968, %2968 : vector<8x128xf32>
    %3005 = arith.addf %3003, %3004 : vector<8x128xf32>
    %3006 = arith.mulf %2971, %2971 : vector<8x128xf32>
    %3007 = arith.addf %3005, %3006 : vector<8x128xf32>
    %3008 = arith.mulf %2974, %2974 : vector<8x128xf32>
    %3009 = arith.addf %3007, %3008 : vector<8x128xf32>
    %3010 = arith.mulf %2977, %2977 : vector<8x128xf32>
    %3011 = arith.addf %3009, %3010 : vector<8x128xf32>
    %3012 = arith.mulf %2980, %2980 : vector<8x128xf32>
    %3013 = arith.addf %3011, %3012 : vector<8x128xf32>
    %3014 = arith.mulf %2983, %2983 : vector<8x128xf32>
    %3015 = arith.addf %3013, %3014 : vector<8x128xf32>
    %3016 = arith.mulf %2986, %2986 : vector<8x128xf32>
    %3017 = arith.addf %3015, %3016 : vector<8x128xf32>
    %3018 = math.sqrt %3017 : vector<8x128xf32>
    %3019 = vector.broadcast %2937 : f32 to vector<8x128xf32>
    %3020 = arith.addf %3019, %3018 : vector<8x128xf32>
    %3021 = tpu.reciprocal %3020 {approx = true} : vector<8x128xf32> -> vector<8x128xf32>
    %3022 = arith.mulf %3020, %3021 : vector<8x128xf32>
    %cst_322 = arith.constant 2.000000e+00 : f32
    %3023 = vector.broadcast %cst_322 : f32 to vector<8x128xf32>
    %3024 = arith.subf %3023, %3022 : vector<8x128xf32>
    %3025 = arith.mulf %3021, %3024 : vector<8x128xf32>
    %3026 = vector.broadcast %2938 : f32 to vector<8x128xf32>
    %3027 = arith.mulf %3026, %3025 : vector<8x128xf32>
    %3028 = arith.mulf %3027, %2941 : vector<8x128xf32>
    %3029 = arith.addf %2896, %3028 : vector<8x128xf32>
    %3030 = arith.mulf %3027, %2944 : vector<8x128xf32>
    %3031 = arith.addf %2898, %3030 : vector<8x128xf32>
    %3032 = arith.mulf %3027, %2947 : vector<8x128xf32>
    %3033 = arith.addf %2900, %3032 : vector<8x128xf32>
    %3034 = arith.mulf %3027, %2950 : vector<8x128xf32>
    %3035 = arith.addf %2902, %3034 : vector<8x128xf32>
    %3036 = arith.mulf %3027, %2953 : vector<8x128xf32>
    %3037 = arith.addf %2904, %3036 : vector<8x128xf32>
    %3038 = arith.mulf %3027, %2956 : vector<8x128xf32>
    %3039 = arith.addf %2906, %3038 : vector<8x128xf32>
    %3040 = arith.mulf %3027, %2959 : vector<8x128xf32>
    %3041 = arith.addf %2908, %3040 : vector<8x128xf32>
    %3042 = arith.mulf %3027, %2962 : vector<8x128xf32>
    %3043 = arith.addf %2910, %3042 : vector<8x128xf32>
    %3044 = arith.mulf %3027, %2965 : vector<8x128xf32>
    %3045 = arith.addf %2912, %3044 : vector<8x128xf32>
    %3046 = arith.mulf %3027, %2968 : vector<8x128xf32>
    %3047 = arith.addf %2914, %3046 : vector<8x128xf32>
    %3048 = arith.mulf %3027, %2971 : vector<8x128xf32>
    %3049 = arith.addf %2916, %3048 : vector<8x128xf32>
    %3050 = arith.mulf %3027, %2974 : vector<8x128xf32>
    %3051 = arith.addf %2918, %3050 : vector<8x128xf32>
    %3052 = arith.mulf %3027, %2977 : vector<8x128xf32>
    %3053 = arith.addf %2920, %3052 : vector<8x128xf32>
    %3054 = arith.mulf %3027, %2980 : vector<8x128xf32>
    %3055 = arith.addf %2922, %3054 : vector<8x128xf32>
    %3056 = arith.mulf %3027, %2983 : vector<8x128xf32>
    %3057 = arith.addf %2924, %3056 : vector<8x128xf32>
    %3058 = arith.mulf %3027, %2986 : vector<8x128xf32>
    %3059 = arith.addf %2926, %3058 : vector<8x128xf32>
    %cst_323 = arith.constant 1.000000e+00 : f32
    %3060 = vector.broadcast %cst_323 : f32 to vector<8x128xf32>
    %3061 = arith.addf %3060, %3027 : vector<8x128xf32>
    %3062 = arith.mulf %2929, %3061 : vector<8x128xf32>
    %3063 = arith.mulf %2937, %2938 : f32
    %3064 = arith.mulf %3025, %3025 : vector<8x128xf32>
    %3065 = vector.broadcast %3063 : f32 to vector<8x128xf32>
    %3066 = arith.mulf %3065, %3064 : vector<8x128xf32>
    %cst_324 = arith.constant 1.000000e+00 : f32
    %3067 = vector.broadcast %cst_324 : f32 to vector<8x128xf32>
    %3068 = arith.addf %3067, %3066 : vector<8x128xf32>
    %3069 = arith.mulf %2936, %3068 : vector<8x128xf32>
    %c21_325 = arith.constant 21 : index
    %3070 = memref.load %arg3[%c21_325] : memref<24xf32, #tpu.memory_space<smem>>
    %c21_326 = arith.constant 21 : index
    %3071 = memref.load %arg4[%c21_326] : memref<24xf32, #tpu.memory_space<smem>>
    %c336 = arith.constant 336 : index
    %3072 = memref.load %arg2[%c336] : memref<384xf32, #tpu.memory_space<smem>>
    %3073 = vector.broadcast %3072 : f32 to vector<8x128xf32>
    %3074 = arith.subf %3029, %3073 : vector<8x128xf32>
    %c337 = arith.constant 337 : index
    %3075 = memref.load %arg2[%c337] : memref<384xf32, #tpu.memory_space<smem>>
    %3076 = vector.broadcast %3075 : f32 to vector<8x128xf32>
    %3077 = arith.subf %3031, %3076 : vector<8x128xf32>
    %c338 = arith.constant 338 : index
    %3078 = memref.load %arg2[%c338] : memref<384xf32, #tpu.memory_space<smem>>
    %3079 = vector.broadcast %3078 : f32 to vector<8x128xf32>
    %3080 = arith.subf %3033, %3079 : vector<8x128xf32>
    %c339 = arith.constant 339 : index
    %3081 = memref.load %arg2[%c339] : memref<384xf32, #tpu.memory_space<smem>>
    %3082 = vector.broadcast %3081 : f32 to vector<8x128xf32>
    %3083 = arith.subf %3035, %3082 : vector<8x128xf32>
    %c340 = arith.constant 340 : index
    %3084 = memref.load %arg2[%c340] : memref<384xf32, #tpu.memory_space<smem>>
    %3085 = vector.broadcast %3084 : f32 to vector<8x128xf32>
    %3086 = arith.subf %3037, %3085 : vector<8x128xf32>
    %c341 = arith.constant 341 : index
    %3087 = memref.load %arg2[%c341] : memref<384xf32, #tpu.memory_space<smem>>
    %3088 = vector.broadcast %3087 : f32 to vector<8x128xf32>
    %3089 = arith.subf %3039, %3088 : vector<8x128xf32>
    %c342 = arith.constant 342 : index
    %3090 = memref.load %arg2[%c342] : memref<384xf32, #tpu.memory_space<smem>>
    %3091 = vector.broadcast %3090 : f32 to vector<8x128xf32>
    %3092 = arith.subf %3041, %3091 : vector<8x128xf32>
    %c343 = arith.constant 343 : index
    %3093 = memref.load %arg2[%c343] : memref<384xf32, #tpu.memory_space<smem>>
    %3094 = vector.broadcast %3093 : f32 to vector<8x128xf32>
    %3095 = arith.subf %3043, %3094 : vector<8x128xf32>
    %c344 = arith.constant 344 : index
    %3096 = memref.load %arg2[%c344] : memref<384xf32, #tpu.memory_space<smem>>
    %3097 = vector.broadcast %3096 : f32 to vector<8x128xf32>
    %3098 = arith.subf %3045, %3097 : vector<8x128xf32>
    %c345 = arith.constant 345 : index
    %3099 = memref.load %arg2[%c345] : memref<384xf32, #tpu.memory_space<smem>>
    %3100 = vector.broadcast %3099 : f32 to vector<8x128xf32>
    %3101 = arith.subf %3047, %3100 : vector<8x128xf32>
    %c346 = arith.constant 346 : index
    %3102 = memref.load %arg2[%c346] : memref<384xf32, #tpu.memory_space<smem>>
    %3103 = vector.broadcast %3102 : f32 to vector<8x128xf32>
    %3104 = arith.subf %3049, %3103 : vector<8x128xf32>
    %c347 = arith.constant 347 : index
    %3105 = memref.load %arg2[%c347] : memref<384xf32, #tpu.memory_space<smem>>
    %3106 = vector.broadcast %3105 : f32 to vector<8x128xf32>
    %3107 = arith.subf %3051, %3106 : vector<8x128xf32>
    %c348 = arith.constant 348 : index
    %3108 = memref.load %arg2[%c348] : memref<384xf32, #tpu.memory_space<smem>>
    %3109 = vector.broadcast %3108 : f32 to vector<8x128xf32>
    %3110 = arith.subf %3053, %3109 : vector<8x128xf32>
    %c349 = arith.constant 349 : index
    %3111 = memref.load %arg2[%c349] : memref<384xf32, #tpu.memory_space<smem>>
    %3112 = vector.broadcast %3111 : f32 to vector<8x128xf32>
    %3113 = arith.subf %3055, %3112 : vector<8x128xf32>
    %c350 = arith.constant 350 : index
    %3114 = memref.load %arg2[%c350] : memref<384xf32, #tpu.memory_space<smem>>
    %3115 = vector.broadcast %3114 : f32 to vector<8x128xf32>
    %3116 = arith.subf %3057, %3115 : vector<8x128xf32>
    %c351 = arith.constant 351 : index
    %3117 = memref.load %arg2[%c351] : memref<384xf32, #tpu.memory_space<smem>>
    %3118 = vector.broadcast %3117 : f32 to vector<8x128xf32>
    %3119 = arith.subf %3059, %3118 : vector<8x128xf32>
    %3120 = arith.mulf %3074, %3074 : vector<8x128xf32>
    %3121 = arith.mulf %3077, %3077 : vector<8x128xf32>
    %3122 = arith.addf %3120, %3121 : vector<8x128xf32>
    %3123 = arith.mulf %3080, %3080 : vector<8x128xf32>
    %3124 = arith.addf %3122, %3123 : vector<8x128xf32>
    %3125 = arith.mulf %3083, %3083 : vector<8x128xf32>
    %3126 = arith.addf %3124, %3125 : vector<8x128xf32>
    %3127 = arith.mulf %3086, %3086 : vector<8x128xf32>
    %3128 = arith.addf %3126, %3127 : vector<8x128xf32>
    %3129 = arith.mulf %3089, %3089 : vector<8x128xf32>
    %3130 = arith.addf %3128, %3129 : vector<8x128xf32>
    %3131 = arith.mulf %3092, %3092 : vector<8x128xf32>
    %3132 = arith.addf %3130, %3131 : vector<8x128xf32>
    %3133 = arith.mulf %3095, %3095 : vector<8x128xf32>
    %3134 = arith.addf %3132, %3133 : vector<8x128xf32>
    %3135 = arith.mulf %3098, %3098 : vector<8x128xf32>
    %3136 = arith.addf %3134, %3135 : vector<8x128xf32>
    %3137 = arith.mulf %3101, %3101 : vector<8x128xf32>
    %3138 = arith.addf %3136, %3137 : vector<8x128xf32>
    %3139 = arith.mulf %3104, %3104 : vector<8x128xf32>
    %3140 = arith.addf %3138, %3139 : vector<8x128xf32>
    %3141 = arith.mulf %3107, %3107 : vector<8x128xf32>
    %3142 = arith.addf %3140, %3141 : vector<8x128xf32>
    %3143 = arith.mulf %3110, %3110 : vector<8x128xf32>
    %3144 = arith.addf %3142, %3143 : vector<8x128xf32>
    %3145 = arith.mulf %3113, %3113 : vector<8x128xf32>
    %3146 = arith.addf %3144, %3145 : vector<8x128xf32>
    %3147 = arith.mulf %3116, %3116 : vector<8x128xf32>
    %3148 = arith.addf %3146, %3147 : vector<8x128xf32>
    %3149 = arith.mulf %3119, %3119 : vector<8x128xf32>
    %3150 = arith.addf %3148, %3149 : vector<8x128xf32>
    %3151 = math.sqrt %3150 : vector<8x128xf32>
    %3152 = vector.broadcast %3070 : f32 to vector<8x128xf32>
    %3153 = arith.addf %3152, %3151 : vector<8x128xf32>
    %3154 = tpu.reciprocal %3153 {approx = true} : vector<8x128xf32> -> vector<8x128xf32>
    %3155 = arith.mulf %3153, %3154 : vector<8x128xf32>
    %cst_327 = arith.constant 2.000000e+00 : f32
    %3156 = vector.broadcast %cst_327 : f32 to vector<8x128xf32>
    %3157 = arith.subf %3156, %3155 : vector<8x128xf32>
    %3158 = arith.mulf %3154, %3157 : vector<8x128xf32>
    %3159 = vector.broadcast %3071 : f32 to vector<8x128xf32>
    %3160 = arith.mulf %3159, %3158 : vector<8x128xf32>
    %3161 = arith.mulf %3160, %3074 : vector<8x128xf32>
    %3162 = arith.addf %3029, %3161 : vector<8x128xf32>
    %3163 = arith.mulf %3160, %3077 : vector<8x128xf32>
    %3164 = arith.addf %3031, %3163 : vector<8x128xf32>
    %3165 = arith.mulf %3160, %3080 : vector<8x128xf32>
    %3166 = arith.addf %3033, %3165 : vector<8x128xf32>
    %3167 = arith.mulf %3160, %3083 : vector<8x128xf32>
    %3168 = arith.addf %3035, %3167 : vector<8x128xf32>
    %3169 = arith.mulf %3160, %3086 : vector<8x128xf32>
    %3170 = arith.addf %3037, %3169 : vector<8x128xf32>
    %3171 = arith.mulf %3160, %3089 : vector<8x128xf32>
    %3172 = arith.addf %3039, %3171 : vector<8x128xf32>
    %3173 = arith.mulf %3160, %3092 : vector<8x128xf32>
    %3174 = arith.addf %3041, %3173 : vector<8x128xf32>
    %3175 = arith.mulf %3160, %3095 : vector<8x128xf32>
    %3176 = arith.addf %3043, %3175 : vector<8x128xf32>
    %3177 = arith.mulf %3160, %3098 : vector<8x128xf32>
    %3178 = arith.addf %3045, %3177 : vector<8x128xf32>
    %3179 = arith.mulf %3160, %3101 : vector<8x128xf32>
    %3180 = arith.addf %3047, %3179 : vector<8x128xf32>
    %3181 = arith.mulf %3160, %3104 : vector<8x128xf32>
    %3182 = arith.addf %3049, %3181 : vector<8x128xf32>
    %3183 = arith.mulf %3160, %3107 : vector<8x128xf32>
    %3184 = arith.addf %3051, %3183 : vector<8x128xf32>
    %3185 = arith.mulf %3160, %3110 : vector<8x128xf32>
    %3186 = arith.addf %3053, %3185 : vector<8x128xf32>
    %3187 = arith.mulf %3160, %3113 : vector<8x128xf32>
    %3188 = arith.addf %3055, %3187 : vector<8x128xf32>
    %3189 = arith.mulf %3160, %3116 : vector<8x128xf32>
    %3190 = arith.addf %3057, %3189 : vector<8x128xf32>
    %3191 = arith.mulf %3160, %3119 : vector<8x128xf32>
    %3192 = arith.addf %3059, %3191 : vector<8x128xf32>
    %cst_328 = arith.constant 1.000000e+00 : f32
    %3193 = vector.broadcast %cst_328 : f32 to vector<8x128xf32>
    %3194 = arith.addf %3193, %3160 : vector<8x128xf32>
    %3195 = arith.mulf %3062, %3194 : vector<8x128xf32>
    %3196 = arith.mulf %3070, %3071 : f32
    %3197 = arith.mulf %3158, %3158 : vector<8x128xf32>
    %3198 = vector.broadcast %3196 : f32 to vector<8x128xf32>
    %3199 = arith.mulf %3198, %3197 : vector<8x128xf32>
    %cst_329 = arith.constant 1.000000e+00 : f32
    %3200 = vector.broadcast %cst_329 : f32 to vector<8x128xf32>
    %3201 = arith.addf %3200, %3199 : vector<8x128xf32>
    %3202 = arith.mulf %3069, %3201 : vector<8x128xf32>
    %c22_330 = arith.constant 22 : index
    %3203 = memref.load %arg3[%c22_330] : memref<24xf32, #tpu.memory_space<smem>>
    %c22_331 = arith.constant 22 : index
    %3204 = memref.load %arg4[%c22_331] : memref<24xf32, #tpu.memory_space<smem>>
    %c352 = arith.constant 352 : index
    %3205 = memref.load %arg2[%c352] : memref<384xf32, #tpu.memory_space<smem>>
    %3206 = vector.broadcast %3205 : f32 to vector<8x128xf32>
    %3207 = arith.subf %3162, %3206 : vector<8x128xf32>
    %c353 = arith.constant 353 : index
    %3208 = memref.load %arg2[%c353] : memref<384xf32, #tpu.memory_space<smem>>
    %3209 = vector.broadcast %3208 : f32 to vector<8x128xf32>
    %3210 = arith.subf %3164, %3209 : vector<8x128xf32>
    %c354 = arith.constant 354 : index
    %3211 = memref.load %arg2[%c354] : memref<384xf32, #tpu.memory_space<smem>>
    %3212 = vector.broadcast %3211 : f32 to vector<8x128xf32>
    %3213 = arith.subf %3166, %3212 : vector<8x128xf32>
    %c355 = arith.constant 355 : index
    %3214 = memref.load %arg2[%c355] : memref<384xf32, #tpu.memory_space<smem>>
    %3215 = vector.broadcast %3214 : f32 to vector<8x128xf32>
    %3216 = arith.subf %3168, %3215 : vector<8x128xf32>
    %c356 = arith.constant 356 : index
    %3217 = memref.load %arg2[%c356] : memref<384xf32, #tpu.memory_space<smem>>
    %3218 = vector.broadcast %3217 : f32 to vector<8x128xf32>
    %3219 = arith.subf %3170, %3218 : vector<8x128xf32>
    %c357 = arith.constant 357 : index
    %3220 = memref.load %arg2[%c357] : memref<384xf32, #tpu.memory_space<smem>>
    %3221 = vector.broadcast %3220 : f32 to vector<8x128xf32>
    %3222 = arith.subf %3172, %3221 : vector<8x128xf32>
    %c358 = arith.constant 358 : index
    %3223 = memref.load %arg2[%c358] : memref<384xf32, #tpu.memory_space<smem>>
    %3224 = vector.broadcast %3223 : f32 to vector<8x128xf32>
    %3225 = arith.subf %3174, %3224 : vector<8x128xf32>
    %c359 = arith.constant 359 : index
    %3226 = memref.load %arg2[%c359] : memref<384xf32, #tpu.memory_space<smem>>
    %3227 = vector.broadcast %3226 : f32 to vector<8x128xf32>
    %3228 = arith.subf %3176, %3227 : vector<8x128xf32>
    %c360 = arith.constant 360 : index
    %3229 = memref.load %arg2[%c360] : memref<384xf32, #tpu.memory_space<smem>>
    %3230 = vector.broadcast %3229 : f32 to vector<8x128xf32>
    %3231 = arith.subf %3178, %3230 : vector<8x128xf32>
    %c361 = arith.constant 361 : index
    %3232 = memref.load %arg2[%c361] : memref<384xf32, #tpu.memory_space<smem>>
    %3233 = vector.broadcast %3232 : f32 to vector<8x128xf32>
    %3234 = arith.subf %3180, %3233 : vector<8x128xf32>
    %c362 = arith.constant 362 : index
    %3235 = memref.load %arg2[%c362] : memref<384xf32, #tpu.memory_space<smem>>
    %3236 = vector.broadcast %3235 : f32 to vector<8x128xf32>
    %3237 = arith.subf %3182, %3236 : vector<8x128xf32>
    %c363 = arith.constant 363 : index
    %3238 = memref.load %arg2[%c363] : memref<384xf32, #tpu.memory_space<smem>>
    %3239 = vector.broadcast %3238 : f32 to vector<8x128xf32>
    %3240 = arith.subf %3184, %3239 : vector<8x128xf32>
    %c364 = arith.constant 364 : index
    %3241 = memref.load %arg2[%c364] : memref<384xf32, #tpu.memory_space<smem>>
    %3242 = vector.broadcast %3241 : f32 to vector<8x128xf32>
    %3243 = arith.subf %3186, %3242 : vector<8x128xf32>
    %c365 = arith.constant 365 : index
    %3244 = memref.load %arg2[%c365] : memref<384xf32, #tpu.memory_space<smem>>
    %3245 = vector.broadcast %3244 : f32 to vector<8x128xf32>
    %3246 = arith.subf %3188, %3245 : vector<8x128xf32>
    %c366 = arith.constant 366 : index
    %3247 = memref.load %arg2[%c366] : memref<384xf32, #tpu.memory_space<smem>>
    %3248 = vector.broadcast %3247 : f32 to vector<8x128xf32>
    %3249 = arith.subf %3190, %3248 : vector<8x128xf32>
    %c367 = arith.constant 367 : index
    %3250 = memref.load %arg2[%c367] : memref<384xf32, #tpu.memory_space<smem>>
    %3251 = vector.broadcast %3250 : f32 to vector<8x128xf32>
    %3252 = arith.subf %3192, %3251 : vector<8x128xf32>
    %3253 = arith.mulf %3207, %3207 : vector<8x128xf32>
    %3254 = arith.mulf %3210, %3210 : vector<8x128xf32>
    %3255 = arith.addf %3253, %3254 : vector<8x128xf32>
    %3256 = arith.mulf %3213, %3213 : vector<8x128xf32>
    %3257 = arith.addf %3255, %3256 : vector<8x128xf32>
    %3258 = arith.mulf %3216, %3216 : vector<8x128xf32>
    %3259 = arith.addf %3257, %3258 : vector<8x128xf32>
    %3260 = arith.mulf %3219, %3219 : vector<8x128xf32>
    %3261 = arith.addf %3259, %3260 : vector<8x128xf32>
    %3262 = arith.mulf %3222, %3222 : vector<8x128xf32>
    %3263 = arith.addf %3261, %3262 : vector<8x128xf32>
    %3264 = arith.mulf %3225, %3225 : vector<8x128xf32>
    %3265 = arith.addf %3263, %3264 : vector<8x128xf32>
    %3266 = arith.mulf %3228, %3228 : vector<8x128xf32>
    %3267 = arith.addf %3265, %3266 : vector<8x128xf32>
    %3268 = arith.mulf %3231, %3231 : vector<8x128xf32>
    %3269 = arith.addf %3267, %3268 : vector<8x128xf32>
    %3270 = arith.mulf %3234, %3234 : vector<8x128xf32>
    %3271 = arith.addf %3269, %3270 : vector<8x128xf32>
    %3272 = arith.mulf %3237, %3237 : vector<8x128xf32>
    %3273 = arith.addf %3271, %3272 : vector<8x128xf32>
    %3274 = arith.mulf %3240, %3240 : vector<8x128xf32>
    %3275 = arith.addf %3273, %3274 : vector<8x128xf32>
    %3276 = arith.mulf %3243, %3243 : vector<8x128xf32>
    %3277 = arith.addf %3275, %3276 : vector<8x128xf32>
    %3278 = arith.mulf %3246, %3246 : vector<8x128xf32>
    %3279 = arith.addf %3277, %3278 : vector<8x128xf32>
    %3280 = arith.mulf %3249, %3249 : vector<8x128xf32>
    %3281 = arith.addf %3279, %3280 : vector<8x128xf32>
    %3282 = arith.mulf %3252, %3252 : vector<8x128xf32>
    %3283 = arith.addf %3281, %3282 : vector<8x128xf32>
    %3284 = math.sqrt %3283 : vector<8x128xf32>
    %3285 = vector.broadcast %3203 : f32 to vector<8x128xf32>
    %3286 = arith.addf %3285, %3284 : vector<8x128xf32>
    %3287 = tpu.reciprocal %3286 {approx = true} : vector<8x128xf32> -> vector<8x128xf32>
    %3288 = arith.mulf %3286, %3287 : vector<8x128xf32>
    %cst_332 = arith.constant 2.000000e+00 : f32
    %3289 = vector.broadcast %cst_332 : f32 to vector<8x128xf32>
    %3290 = arith.subf %3289, %3288 : vector<8x128xf32>
    %3291 = arith.mulf %3287, %3290 : vector<8x128xf32>
    %3292 = vector.broadcast %3204 : f32 to vector<8x128xf32>
    %3293 = arith.mulf %3292, %3291 : vector<8x128xf32>
    %3294 = arith.mulf %3293, %3207 : vector<8x128xf32>
    %3295 = arith.addf %3162, %3294 : vector<8x128xf32>
    %3296 = arith.mulf %3293, %3210 : vector<8x128xf32>
    %3297 = arith.addf %3164, %3296 : vector<8x128xf32>
    %3298 = arith.mulf %3293, %3213 : vector<8x128xf32>
    %3299 = arith.addf %3166, %3298 : vector<8x128xf32>
    %3300 = arith.mulf %3293, %3216 : vector<8x128xf32>
    %3301 = arith.addf %3168, %3300 : vector<8x128xf32>
    %3302 = arith.mulf %3293, %3219 : vector<8x128xf32>
    %3303 = arith.addf %3170, %3302 : vector<8x128xf32>
    %3304 = arith.mulf %3293, %3222 : vector<8x128xf32>
    %3305 = arith.addf %3172, %3304 : vector<8x128xf32>
    %3306 = arith.mulf %3293, %3225 : vector<8x128xf32>
    %3307 = arith.addf %3174, %3306 : vector<8x128xf32>
    %3308 = arith.mulf %3293, %3228 : vector<8x128xf32>
    %3309 = arith.addf %3176, %3308 : vector<8x128xf32>
    %3310 = arith.mulf %3293, %3231 : vector<8x128xf32>
    %3311 = arith.addf %3178, %3310 : vector<8x128xf32>
    %3312 = arith.mulf %3293, %3234 : vector<8x128xf32>
    %3313 = arith.addf %3180, %3312 : vector<8x128xf32>
    %3314 = arith.mulf %3293, %3237 : vector<8x128xf32>
    %3315 = arith.addf %3182, %3314 : vector<8x128xf32>
    %3316 = arith.mulf %3293, %3240 : vector<8x128xf32>
    %3317 = arith.addf %3184, %3316 : vector<8x128xf32>
    %3318 = arith.mulf %3293, %3243 : vector<8x128xf32>
    %3319 = arith.addf %3186, %3318 : vector<8x128xf32>
    %3320 = arith.mulf %3293, %3246 : vector<8x128xf32>
    %3321 = arith.addf %3188, %3320 : vector<8x128xf32>
    %3322 = arith.mulf %3293, %3249 : vector<8x128xf32>
    %3323 = arith.addf %3190, %3322 : vector<8x128xf32>
    %3324 = arith.mulf %3293, %3252 : vector<8x128xf32>
    %3325 = arith.addf %3192, %3324 : vector<8x128xf32>
    %cst_333 = arith.constant 1.000000e+00 : f32
    %3326 = vector.broadcast %cst_333 : f32 to vector<8x128xf32>
    %3327 = arith.addf %3326, %3293 : vector<8x128xf32>
    %3328 = arith.mulf %3195, %3327 : vector<8x128xf32>
    %3329 = arith.mulf %3203, %3204 : f32
    %3330 = arith.mulf %3291, %3291 : vector<8x128xf32>
    %3331 = vector.broadcast %3329 : f32 to vector<8x128xf32>
    %3332 = arith.mulf %3331, %3330 : vector<8x128xf32>
    %cst_334 = arith.constant 1.000000e+00 : f32
    %3333 = vector.broadcast %cst_334 : f32 to vector<8x128xf32>
    %3334 = arith.addf %3333, %3332 : vector<8x128xf32>
    %3335 = arith.mulf %3202, %3334 : vector<8x128xf32>
    %c23_335 = arith.constant 23 : index
    %3336 = memref.load %arg3[%c23_335] : memref<24xf32, #tpu.memory_space<smem>>
    %c23_336 = arith.constant 23 : index
    %3337 = memref.load %arg4[%c23_336] : memref<24xf32, #tpu.memory_space<smem>>
    %c368 = arith.constant 368 : index
    %3338 = memref.load %arg2[%c368] : memref<384xf32, #tpu.memory_space<smem>>
    %3339 = vector.broadcast %3338 : f32 to vector<8x128xf32>
    %3340 = arith.subf %3295, %3339 : vector<8x128xf32>
    %c369 = arith.constant 369 : index
    %3341 = memref.load %arg2[%c369] : memref<384xf32, #tpu.memory_space<smem>>
    %3342 = vector.broadcast %3341 : f32 to vector<8x128xf32>
    %3343 = arith.subf %3297, %3342 : vector<8x128xf32>
    %c370 = arith.constant 370 : index
    %3344 = memref.load %arg2[%c370] : memref<384xf32, #tpu.memory_space<smem>>
    %3345 = vector.broadcast %3344 : f32 to vector<8x128xf32>
    %3346 = arith.subf %3299, %3345 : vector<8x128xf32>
    %c371 = arith.constant 371 : index
    %3347 = memref.load %arg2[%c371] : memref<384xf32, #tpu.memory_space<smem>>
    %3348 = vector.broadcast %3347 : f32 to vector<8x128xf32>
    %3349 = arith.subf %3301, %3348 : vector<8x128xf32>
    %c372 = arith.constant 372 : index
    %3350 = memref.load %arg2[%c372] : memref<384xf32, #tpu.memory_space<smem>>
    %3351 = vector.broadcast %3350 : f32 to vector<8x128xf32>
    %3352 = arith.subf %3303, %3351 : vector<8x128xf32>
    %c373 = arith.constant 373 : index
    %3353 = memref.load %arg2[%c373] : memref<384xf32, #tpu.memory_space<smem>>
    %3354 = vector.broadcast %3353 : f32 to vector<8x128xf32>
    %3355 = arith.subf %3305, %3354 : vector<8x128xf32>
    %c374 = arith.constant 374 : index
    %3356 = memref.load %arg2[%c374] : memref<384xf32, #tpu.memory_space<smem>>
    %3357 = vector.broadcast %3356 : f32 to vector<8x128xf32>
    %3358 = arith.subf %3307, %3357 : vector<8x128xf32>
    %c375 = arith.constant 375 : index
    %3359 = memref.load %arg2[%c375] : memref<384xf32, #tpu.memory_space<smem>>
    %3360 = vector.broadcast %3359 : f32 to vector<8x128xf32>
    %3361 = arith.subf %3309, %3360 : vector<8x128xf32>
    %c376 = arith.constant 376 : index
    %3362 = memref.load %arg2[%c376] : memref<384xf32, #tpu.memory_space<smem>>
    %3363 = vector.broadcast %3362 : f32 to vector<8x128xf32>
    %3364 = arith.subf %3311, %3363 : vector<8x128xf32>
    %c377 = arith.constant 377 : index
    %3365 = memref.load %arg2[%c377] : memref<384xf32, #tpu.memory_space<smem>>
    %3366 = vector.broadcast %3365 : f32 to vector<8x128xf32>
    %3367 = arith.subf %3313, %3366 : vector<8x128xf32>
    %c378 = arith.constant 378 : index
    %3368 = memref.load %arg2[%c378] : memref<384xf32, #tpu.memory_space<smem>>
    %3369 = vector.broadcast %3368 : f32 to vector<8x128xf32>
    %3370 = arith.subf %3315, %3369 : vector<8x128xf32>
    %c379 = arith.constant 379 : index
    %3371 = memref.load %arg2[%c379] : memref<384xf32, #tpu.memory_space<smem>>
    %3372 = vector.broadcast %3371 : f32 to vector<8x128xf32>
    %3373 = arith.subf %3317, %3372 : vector<8x128xf32>
    %c380 = arith.constant 380 : index
    %3374 = memref.load %arg2[%c380] : memref<384xf32, #tpu.memory_space<smem>>
    %3375 = vector.broadcast %3374 : f32 to vector<8x128xf32>
    %3376 = arith.subf %3319, %3375 : vector<8x128xf32>
    %c381 = arith.constant 381 : index
    %3377 = memref.load %arg2[%c381] : memref<384xf32, #tpu.memory_space<smem>>
    %3378 = vector.broadcast %3377 : f32 to vector<8x128xf32>
    %3379 = arith.subf %3321, %3378 : vector<8x128xf32>
    %c382 = arith.constant 382 : index
    %3380 = memref.load %arg2[%c382] : memref<384xf32, #tpu.memory_space<smem>>
    %3381 = vector.broadcast %3380 : f32 to vector<8x128xf32>
    %3382 = arith.subf %3323, %3381 : vector<8x128xf32>
    %c383 = arith.constant 383 : index
    %3383 = memref.load %arg2[%c383] : memref<384xf32, #tpu.memory_space<smem>>
    %3384 = vector.broadcast %3383 : f32 to vector<8x128xf32>
    %3385 = arith.subf %3325, %3384 : vector<8x128xf32>
    %3386 = arith.mulf %3340, %3340 : vector<8x128xf32>
    %3387 = arith.mulf %3343, %3343 : vector<8x128xf32>
    %3388 = arith.addf %3386, %3387 : vector<8x128xf32>
    %3389 = arith.mulf %3346, %3346 : vector<8x128xf32>
    %3390 = arith.addf %3388, %3389 : vector<8x128xf32>
    %3391 = arith.mulf %3349, %3349 : vector<8x128xf32>
    %3392 = arith.addf %3390, %3391 : vector<8x128xf32>
    %3393 = arith.mulf %3352, %3352 : vector<8x128xf32>
    %3394 = arith.addf %3392, %3393 : vector<8x128xf32>
    %3395 = arith.mulf %3355, %3355 : vector<8x128xf32>
    %3396 = arith.addf %3394, %3395 : vector<8x128xf32>
    %3397 = arith.mulf %3358, %3358 : vector<8x128xf32>
    %3398 = arith.addf %3396, %3397 : vector<8x128xf32>
    %3399 = arith.mulf %3361, %3361 : vector<8x128xf32>
    %3400 = arith.addf %3398, %3399 : vector<8x128xf32>
    %3401 = arith.mulf %3364, %3364 : vector<8x128xf32>
    %3402 = arith.addf %3400, %3401 : vector<8x128xf32>
    %3403 = arith.mulf %3367, %3367 : vector<8x128xf32>
    %3404 = arith.addf %3402, %3403 : vector<8x128xf32>
    %3405 = arith.mulf %3370, %3370 : vector<8x128xf32>
    %3406 = arith.addf %3404, %3405 : vector<8x128xf32>
    %3407 = arith.mulf %3373, %3373 : vector<8x128xf32>
    %3408 = arith.addf %3406, %3407 : vector<8x128xf32>
    %3409 = arith.mulf %3376, %3376 : vector<8x128xf32>
    %3410 = arith.addf %3408, %3409 : vector<8x128xf32>
    %3411 = arith.mulf %3379, %3379 : vector<8x128xf32>
    %3412 = arith.addf %3410, %3411 : vector<8x128xf32>
    %3413 = arith.mulf %3382, %3382 : vector<8x128xf32>
    %3414 = arith.addf %3412, %3413 : vector<8x128xf32>
    %3415 = arith.mulf %3385, %3385 : vector<8x128xf32>
    %3416 = arith.addf %3414, %3415 : vector<8x128xf32>
    %3417 = math.sqrt %3416 : vector<8x128xf32>
    %3418 = vector.broadcast %3336 : f32 to vector<8x128xf32>
    %3419 = arith.addf %3418, %3417 : vector<8x128xf32>
    %3420 = tpu.reciprocal %3419 {approx = true} : vector<8x128xf32> -> vector<8x128xf32>
    %3421 = arith.mulf %3419, %3420 : vector<8x128xf32>
    %cst_337 = arith.constant 2.000000e+00 : f32
    %3422 = vector.broadcast %cst_337 : f32 to vector<8x128xf32>
    %3423 = arith.subf %3422, %3421 : vector<8x128xf32>
    %3424 = arith.mulf %3420, %3423 : vector<8x128xf32>
    %3425 = vector.broadcast %3337 : f32 to vector<8x128xf32>
    %3426 = arith.mulf %3425, %3424 : vector<8x128xf32>
    %3427 = arith.mulf %3426, %3340 : vector<8x128xf32>
    %3428 = arith.addf %3295, %3427 : vector<8x128xf32>
    %3429 = arith.mulf %3426, %3343 : vector<8x128xf32>
    %3430 = arith.addf %3297, %3429 : vector<8x128xf32>
    %3431 = arith.mulf %3426, %3346 : vector<8x128xf32>
    %3432 = arith.addf %3299, %3431 : vector<8x128xf32>
    %3433 = arith.mulf %3426, %3349 : vector<8x128xf32>
    %3434 = arith.addf %3301, %3433 : vector<8x128xf32>
    %3435 = arith.mulf %3426, %3352 : vector<8x128xf32>
    %3436 = arith.addf %3303, %3435 : vector<8x128xf32>
    %3437 = arith.mulf %3426, %3355 : vector<8x128xf32>
    %3438 = arith.addf %3305, %3437 : vector<8x128xf32>
    %3439 = arith.mulf %3426, %3358 : vector<8x128xf32>
    %3440 = arith.addf %3307, %3439 : vector<8x128xf32>
    %3441 = arith.mulf %3426, %3361 : vector<8x128xf32>
    %3442 = arith.addf %3309, %3441 : vector<8x128xf32>
    %3443 = arith.mulf %3426, %3364 : vector<8x128xf32>
    %3444 = arith.addf %3311, %3443 : vector<8x128xf32>
    %3445 = arith.mulf %3426, %3367 : vector<8x128xf32>
    %3446 = arith.addf %3313, %3445 : vector<8x128xf32>
    %3447 = arith.mulf %3426, %3370 : vector<8x128xf32>
    %3448 = arith.addf %3315, %3447 : vector<8x128xf32>
    %3449 = arith.mulf %3426, %3373 : vector<8x128xf32>
    %3450 = arith.addf %3317, %3449 : vector<8x128xf32>
    %3451 = arith.mulf %3426, %3376 : vector<8x128xf32>
    %3452 = arith.addf %3319, %3451 : vector<8x128xf32>
    %3453 = arith.mulf %3426, %3379 : vector<8x128xf32>
    %3454 = arith.addf %3321, %3453 : vector<8x128xf32>
    %3455 = arith.mulf %3426, %3382 : vector<8x128xf32>
    %3456 = arith.addf %3323, %3455 : vector<8x128xf32>
    %3457 = arith.mulf %3426, %3385 : vector<8x128xf32>
    %3458 = arith.addf %3325, %3457 : vector<8x128xf32>
    %cst_338 = arith.constant 1.000000e+00 : f32
    %3459 = vector.broadcast %cst_338 : f32 to vector<8x128xf32>
    %3460 = arith.addf %3459, %3426 : vector<8x128xf32>
    %3461 = arith.mulf %3328, %3460 : vector<8x128xf32>
    %3462 = arith.mulf %3336, %3337 : f32
    %3463 = arith.mulf %3424, %3424 : vector<8x128xf32>
    %3464 = vector.broadcast %3462 : f32 to vector<8x128xf32>
    %3465 = arith.mulf %3464, %3463 : vector<8x128xf32>
    %cst_339 = arith.constant 1.000000e+00 : f32
    %3466 = vector.broadcast %cst_339 : f32 to vector<8x128xf32>
    %3467 = arith.addf %3466, %3465 : vector<8x128xf32>
    %3468 = arith.mulf %3335, %3467 : vector<8x128xf32>
    %3469 = arith.mulf %3428, %3428 : vector<8x128xf32>
    %3470 = arith.mulf %3430, %3430 : vector<8x128xf32>
    %3471 = arith.addf %3469, %3470 : vector<8x128xf32>
    %3472 = arith.mulf %3432, %3432 : vector<8x128xf32>
    %3473 = arith.addf %3471, %3472 : vector<8x128xf32>
    %3474 = arith.mulf %3434, %3434 : vector<8x128xf32>
    %3475 = arith.addf %3473, %3474 : vector<8x128xf32>
    %3476 = arith.mulf %3436, %3436 : vector<8x128xf32>
    %3477 = arith.addf %3475, %3476 : vector<8x128xf32>
    %3478 = arith.mulf %3438, %3438 : vector<8x128xf32>
    %3479 = arith.addf %3477, %3478 : vector<8x128xf32>
    %3480 = arith.mulf %3440, %3440 : vector<8x128xf32>
    %3481 = arith.addf %3479, %3480 : vector<8x128xf32>
    %3482 = arith.mulf %3442, %3442 : vector<8x128xf32>
    %3483 = arith.addf %3481, %3482 : vector<8x128xf32>
    %3484 = arith.mulf %3444, %3444 : vector<8x128xf32>
    %3485 = arith.addf %3483, %3484 : vector<8x128xf32>
    %3486 = arith.mulf %3446, %3446 : vector<8x128xf32>
    %3487 = arith.addf %3485, %3486 : vector<8x128xf32>
    %3488 = arith.mulf %3448, %3448 : vector<8x128xf32>
    %3489 = arith.addf %3487, %3488 : vector<8x128xf32>
    %3490 = arith.mulf %3450, %3450 : vector<8x128xf32>
    %3491 = arith.addf %3489, %3490 : vector<8x128xf32>
    %3492 = arith.mulf %3452, %3452 : vector<8x128xf32>
    %3493 = arith.addf %3491, %3492 : vector<8x128xf32>
    %3494 = arith.mulf %3454, %3454 : vector<8x128xf32>
    %3495 = arith.addf %3493, %3494 : vector<8x128xf32>
    %3496 = arith.mulf %3456, %3456 : vector<8x128xf32>
    %3497 = arith.addf %3495, %3496 : vector<8x128xf32>
    %3498 = arith.mulf %3458, %3458 : vector<8x128xf32>
    %3499 = arith.addf %3497, %3498 : vector<8x128xf32>
    %3500 = math.log %3461 : vector<8x128xf32>
    %cst_340 = arith.constant 1.500000e+01 : f32
    %3501 = vector.broadcast %cst_340 : f32 to vector<8x128xf32>
    %3502 = arith.mulf %3501, %3500 : vector<8x128xf32>
    %3503 = math.log %3468 : vector<8x128xf32>
    %3504 = arith.addf %3502, %3503 : vector<8x128xf32>
    %cst_341 = arith.constant 5.000000e-01 : f32
    %3505 = vector.broadcast %cst_341 : f32 to vector<8x128xf32>
    %3506 = arith.mulf %3505, %3499 : vector<8x128xf32>
    %cst_342 = arith.constant -14.7030163 : f32
    %3507 = vector.broadcast %cst_342 : f32 to vector<8x128xf32>
    %3508 = arith.subf %3507, %3506 : vector<8x128xf32>
    %3509 = arith.addf %3508, %3504 : vector<8x128xf32>
    %3510 = arith.cmpf one, %3509, %3509 : vector<8x128xf32>
    %cst_343 = arith.constant 0xFF800000 : f32
    %3511 = vector.broadcast %cst_343 : f32 to vector<8x128xf32>
    %3512 = arith.select %3510, %3511, %3509 : vector<8x128xi1>, vector<8x128xf32>
    %c3_344 = arith.constant 3 : index
    %c0_345 = arith.constant 0 : index
    %c0_346 = arith.constant 0 : index
    %3513 = vector.load %arg5[%c3_344, %c0_345, %c0_346] : memref<4x8x128xf32, #tpu.memory_space<vmem>>, vector<1x8x128xf32>
    %3514 = vector.shape_cast %3513 : vector<1x8x128xf32> to vector<8x128xf32>
    %3515 = vector.shape_cast %3512 : vector<8x128xf32> to vector<1x8x128xf32>
    tpu.vector_store %arg5[%c3_344, %c0_345, %c0_346], %3515 {strides = array<i32>} : memref<4x8x128xf32, #tpu.memory_space<vmem>>, vector<1x8x128xf32>,
    return
  }
  func.func @transform_0(%arg0: i32) -> (i32, i32, i32) {
    %c0_i32 = arith.constant 0 : i32
    %c0_i32_0 = arith.constant 0 : i32
    %c0_i32_1 = arith.constant 0 : i32
    return %c0_i32, %arg0, %c0_i32_0 : i32, i32, i32
  }
  func.func @transform_1(%arg0: i32) -> i32 {
    %c0_i32 = arith.constant 0 : i32
    %c0_i32_0 = arith.constant 0 : i32
    return %c0_i32 : i32
  }
  func.func @transform_2(%arg0: i32) -> i32 {
    %c0_i32 = arith.constant 0 : i32
    %c0_i32_0 = arith.constant 0 : i32
    return %c0_i32 : i32
  }
  func.func @transform_3(%arg0: i32) -> i32 {
    %c0_i32 = arith.constant 0 : i32
    %c0_i32_0 = arith.constant 0 : i32
    return %c0_i32 : i32
  }
  func.func @transform_4(%arg0: i32) -> (i32, i32, i32) {
    %c0_i32 = arith.constant 0 : i32
    %c0_i32_0 = arith.constant 0 : i32
    %c0_i32_1 = arith.constant 0 : i32
    return %c0_i32, %arg0, %c0_i32_0 : i32, i32, i32
  }
}

</mosaic_0001>

<llo_original>
// kernel: tpu_custom_call.1
$region0: #{tpu_custom_call.1}
  #allocation0 [shape = 'u32[]', space=smem, size = 0x4, offset = 0x4, fixed_abs, tag = 'smem constant byte address 0x4 - core index']
  #allocation1 [shape = 'u32[72,128]{1,0:T(1,128)}', space=vmem, size = 0x9000, scoped, tag = 'internal scratch']
  %s0 = inlined_call_operand.hbm [shape: f32[16,8,128], index: 0, kind: input, shape index: {}]
  %s1 = inlined_call_operand.hbm [shape: f32[384], index: 1, kind: input, shape index: {}]
  %s2 = inlined_call_operand.vmem [shape: f32[24], index: 2, kind: input, shape index: {}]
  %s3 = inlined_call_operand.vmem [shape: f32[24], index: 3, kind: input, shape index: {}]
  %s4 = inlined_call_operand.hbm [shape: f32[4,8,128], index: 4, kind: output, shape index: {}]
  %s5 = sld [smem:[#allocation0]]
  $region42: #{tpu_custom_call.1} parent=0
    _
  %s7 = ssub.s32 1, %s5
  %s8 = scalar_select 0, %s7, %s5
  $region1: #{tpu_custom_call.1} parent=0
    #allocation2 [shape = 'u8[65536]{0}', space=vmem, size = 0x10000, scoped, tag = 'input window, operand 0, single buffered']
    #allocation3 [shape = 's32[1]{0}', space=sflag, size = 0x4, scoped, tag = 'scoped memory for tpu_custom_call.1']
    #allocation4 [shape = 's32[1]{0}', space=sflag, size = 0x4, scoped, tag = 'scoped memory for tpu_custom_call.1']
    #allocation5 [shape = 's32[1]{0}', space=sflag, size = 0x4, scoped, tag = 'scoped memory for tpu_custom_call.1']
    #allocation6 [shape = 's32[1]{0}', space=sflag, size = 0x4, scoped, tag = 'scoped memory for tpu_custom_call.1']
    #allocation7 [shape = 'u8[1536]{0}', space=smem, size = 0x600, scoped, tag = 'input window, operand 1, single buffered']
    #allocation8 [shape = 'u8[512]{0}', space=smem, size = 0x200, scoped, tag = 'input window, operand 2, single buffered']
    #allocation9 [shape = 'u8[512]{0}', space=smem, size = 0x200, scoped, tag = 'input window, operand 3, single buffered']
    #allocation10 [shape = 's32[1]{0}', space=sflag, size = 0x4, scoped, tag = 'scoped memory for tpu_custom_call.1']
    #allocation11 [shape = 'u8[16384]{0}', space=vmem, size = 0x4000, scoped, tag = 'output window, operand 0, single buffered']
    %9 = vsyncpa [#allocation3], 0
    %10 = vsyncpa [#allocation5], 0
    %11 = vsyncpa [#allocation6], 0
    %12 = vsyncpa [#allocation10], 0
    %13 = vsyncpa [#allocation4], 0
    // Predicated region
    $region2: #{tpu_custom_call.1} parent=1 // pred_check
      _
    $region3: #{tpu_custom_call.1} parent=1 // pred_check_branch
      %15 = sbr.rel (0) target = $region5
    $region4: #{tpu_custom_call.1} parent=1 // pred_region
      %17 = vsyncadd [#allocation3], 0
      %s18 = sshll.u32 %s0, 4
      %s19 = int_to_ptr.hbm [resolvable:$true] %s18
      %s20 = sshll.u32 [#allocation2], 4
      %s21 = int_to_ptr.vmem [resolvable:$true] %s20
      %26 = dma.hbm_to_vmem [thread:$0]  %s19, 2048, %s21, [#allocation3], 128, 128, 8
    $region5: #{tpu_custom_call.1} parent=1 // pred_fallthru
      _
    // Predicated region
    $region6: #{tpu_custom_call.1} parent=1 // pred_check
      _
    $region7: #{tpu_custom_call.1} parent=1 // pred_check_branch
      %28 = sbr.rel (0) target = $region9
    $region8: #{tpu_custom_call.1} parent=1 // pred_region
      %30 = vsyncadd [#allocation5], 0
      %s32 = sshll.u32 %s1, 4
      %s33 = int_to_ptr.hbm [resolvable:$true] %s32
      %35 = dma.hbm_to_smem %s33, 48, [#allocation7], [#allocation5]
    $region9: #{tpu_custom_call.1} parent=1 // pred_fallthru
      _
    // Predicated region
    $region10: #{tpu_custom_call.1} parent=1 // pred_check
      _
    $region11: #{tpu_custom_call.1} parent=1 // pred_check_branch
      %37 = sbr.rel (0) target = $region13
    $region12: #{tpu_custom_call.1} parent=1 // pred_region
      %39 = vsyncadd [#allocation6], 0
      %s41 = sshll.u32 %s2, 4
      %s42 = int_to_ptr.vmem [resolvable:$true] %s41
      %44 = dma.vmem_to_smem %s42, 16, [#allocation8], [#allocation6]
    $region13: #{tpu_custom_call.1} parent=1 // pred_fallthru
      _
    // Predicated region
    $region14: #{tpu_custom_call.1} parent=1 // pred_check
      _
    $region15: #{tpu_custom_call.1} parent=1 // pred_check_branch
      %46 = sbr.rel (0) target = $region17
    $region16: #{tpu_custom_call.1} parent=1 // pred_region
      %48 = vsyncadd [#allocation10], 0
      %s50 = sshll.u32 %s3, 4
      %s51 = int_to_ptr.vmem [resolvable:$true] %s50
      %53 = dma.vmem_to_smem %s51, 16, [#allocation9], [#allocation10]
    $region17: #{tpu_custom_call.1} parent=1 // pred_fallthru
      _
    // Predicated region
    $region18: #{tpu_custom_call.1} parent=1 // pred_check
      _
    $region19: #{tpu_custom_call.1} parent=1 // pred_check_branch
      %55 = sbr.rel (0) target = $region21
    $region20: #{tpu_custom_call.1} parent=1 // pred_region
      %57 = dma.done [#allocation3], 2048
    $region21: #{tpu_custom_call.1} parent=1 // pred_fallthru
      _
    // Predicated region
    $region22: #{tpu_custom_call.1} parent=1 // pred_check
      _
    $region23: #{tpu_custom_call.1} parent=1 // pred_check_branch
      %59 = sbr.rel (0) target = $region25
    $region24: #{tpu_custom_call.1} parent=1 // pred_region
      %61 = dma.done [#allocation5], 48
    $region25: #{tpu_custom_call.1} parent=1 // pred_fallthru
      _
    // Predicated region
    $region26: #{tpu_custom_call.1} parent=1 // pred_check
      _
    $region27: #{tpu_custom_call.1} parent=1 // pred_check_branch
      %63 = sbr.rel (0) target = $region29
    $region28: #{tpu_custom_call.1} parent=1 // pred_region
      %65 = dma.done [#allocation6], 16
    $region29: #{tpu_custom_call.1} parent=1 // pred_fallthru
      _
    // Predicated region
    $region30: #{tpu_custom_call.1} parent=1 // pred_check
      _
    $region31: #{tpu_custom_call.1} parent=1 // pred_check_branch
      %67 = sbr.rel (0) target = $region33
    $region32: #{tpu_custom_call.1} parent=1 // pred_region
      %69 = dma.done [#allocation10], 16
    $region33: #{tpu_custom_call.1} parent=1 // pred_fallthru
      _
    %70 = sfence
    %v71 = vld [vmem:[#allocation2] sm:$0xff]
    %s72 = scalar_lea.vmem [#allocation2], 8
    %v73 = vld [vmem:[%s72] sm:$0xff]
    %s74 = scalar_lea.vmem [#allocation2], 16
    %v75 = vld [vmem:[%s74] sm:$0xff]
    %s76 = scalar_lea.vmem [#allocation2], 24
    %v77 = vld [vmem:[%s76] sm:$0xff]
    %s78 = scalar_lea.vmem [#allocation2], 32
    %v79 = vld [vmem:[%s78] sm:$0xff]
    %s80 = scalar_lea.vmem [#allocation2], 40
    %v81 = vld [vmem:[%s80] sm:$0xff]
    %s82 = scalar_lea.vmem [#allocation2], 48
    %v83 = vld [vmem:[%s82] sm:$0xff]
    %s84 = scalar_lea.vmem [#allocation2], 56
    %v85 = vld [vmem:[%s84] sm:$0xff]
    %s86 = scalar_lea.vmem [#allocation2], 64
    %v87 = vld [vmem:[%s86] sm:$0xff]
    %s88 = scalar_lea.vmem [#allocation2], 72
    %v89 = vld [vmem:[%s88] sm:$0xff]
    %s90 = scalar_lea.vmem [#allocation2], 80
    %v91 = vld [vmem:[%s90] sm:$0xff]
    %s92 = scalar_lea.vmem [#allocation2], 88
    %v93 = vld [vmem:[%s92] sm:$0xff]
    %s94 = scalar_lea.vmem [#allocation2], 96
    %v95 = vld [vmem:[%s94] sm:$0xff]
    %s96 = scalar_lea.vmem [#allocation2], 104
    %v97 = vld [vmem:[%s96] sm:$0xff]
    %s98 = scalar_lea.vmem [#allocation2], 112
    %v99 = vld [vmem:[%s98] sm:$0xff]
    %s100 = scalar_lea.vmem [#allocation2], 120
    %v101 = vld [vmem:[%s100] sm:$0xff]
    %s102 = sld [smem:[#allocation8]]
    %s103 = sld [smem:[#allocation9]]
    %s104 = sld [smem:[#allocation7]]
    %v105 = vstv %s104
    %v106 = vsub.f32 %v71, %v105
    %s107 = sld [smem:[#allocation7 + $0x1]]
    %v108 = vstv %s107
    %v109 = vsub.f32 %v73, %v108
    %s110 = sld [smem:[#allocation7 + $0x2]]
    %v111 = vstv %s110
    %v112 = vsub.f32 %v75, %v111
    %s113 = sld [smem:[#allocation7 + $0x3]]
    %v114 = vstv %s113
    %v115 = vsub.f32 %v77, %v114
    %s116 = sld [smem:[#allocation7 + $0x4]]
    %v117 = vstv %s116
    %v118 = vsub.f32 %v79, %v117
    %s119 = sld [smem:[#allocation7 + $0x5]]
    %v120 = vstv %s119
    %v121 = vsub.f32 %v81, %v120
    %s122 = sld [smem:[#allocation7 + $0x6]]
    %v123 = vstv %s122
    %v124 = vsub.f32 %v83, %v123
    %s125 = sld [smem:[#allocation7 + $0x7]]
    %v126 = vstv %s125
    %v127 = vsub.f32 %v85, %v126
    %s128 = sld [smem:[#allocation7 + $0x8]]
    %v129 = vstv %s128
    %v130 = vsub.f32 %v87, %v129
    %s131 = sld [smem:[#allocation7 + $0x9]]
    %v132 = vstv %s131
    %v133 = vsub.f32 %v89, %v132
    %s134 = sld [smem:[#allocation7 + $0xa]]
    %v135 = vstv %s134
    %v136 = vsub.f32 %v91, %v135
    %s137 = sld [smem:[#allocation7 + $0xb]]
    %v138 = vstv %s137
    %v139 = vsub.f32 %v93, %v138
    %s140 = sld [smem:[#allocation7 + $0xc]]
    %v141 = vstv %s140
    %v142 = vsub.f32 %v95, %v141
    %s143 = sld [smem:[#allocation7 + $0xd]]
    %v144 = vstv %s143
    %v145 = vsub.f32 %v97, %v144
    %s146 = sld [smem:[#allocation7 + $0xe]]
    %v147 = vstv %s146
    %v148 = vsub.f32 %v99, %v147
    %s149 = sld [smem:[#allocation7 + $0xf]]
    %v150 = vstv %s149
    %v151 = vsub.f32 %v101, %v150
    %v152 = vmul.f32 %v106, %v106
    %v153 = vmul.f32 %v109, %v109
    %v154 = vadd.f32 %v152, %v153
    %v155 = vmul.f32 %v112, %v112
    %v156 = vadd.f32 %v154, %v155
    %v157 = vmul.f32 %v115, %v115
    %v158 = vadd.f32 %v156, %v157
    %v159 = vmul.f32 %v118, %v118
    %v160 = vadd.f32 %v158, %v159
    %v161 = vmul.f32 %v121, %v121
    %v162 = vadd.f32 %v160, %v161
    %v163 = vmul.f32 %v124, %v124
    %v164 = vadd.f32 %v162, %v163
    %v165 = vmul.f32 %v127, %v127
    %v166 = vadd.f32 %v164, %v165
    %v167 = vmul.f32 %v130, %v130
    %v168 = vadd.f32 %v166, %v167
    %v169 = vmul.f32 %v133, %v133
    %v170 = vadd.f32 %v168, %v169
    %v171 = vmul.f32 %v136, %v136
    %v172 = vadd.f32 %v170, %v171
    %v173 = vmul.f32 %v139, %v139
    %v174 = vadd.f32 %v172, %v173
    %v175 = vmul.f32 %v142, %v142
    %v176 = vadd.f32 %v174, %v175
    %v177 = vmul.f32 %v145, %v145
    %v178 = vadd.f32 %v176, %v177
    %v179 = vmul.f32 %v148, %v148
    %v180 = vadd.f32 %v178, %v179
    %v181 = vmul.f32 %v151, %v151
    %v182 = vadd.f32 %v180, %v181
    %v183 = vrsqrt.pop %v182
    %v184 = vmul.f32 %v183, %v182
    %v185 = vmul.f32 %v184, %v183
    %v186 = vmul.f32 0.5, %v185
    %v187 = vsub.f32 1.5, %v186
    %v188 = vmul.f32 %v183, %v187
    %v189 = vmul.f32 %v182, %v188
    %vm190 = vcmp.eq.f32.partialorder %v182, inf
    %v191 = vsel %vm190, %v182, %v189
    %vm192 = vcmp.eq.f32.partialorder %v182, 0.0
    %v193 = vand.u32 %v182, 2147483648
    %v194 = vsel %vm192, %v193, %v191
    %v195 = vstv %s102
    %v196 = vadd.f32 %v195, %v194
    %v197 = vrcp.pop %v196
    %v198 = vmul.f32 %v196, %v197
    %v199 = vsub.f32 2.0, %v198
    %v200 = vmul.f32 %v197, %v199
    %v201 = vstv %s103
    %v202 = vmul.f32 %v201, %v200
    %v203 = vmul.f32 %v202, %v106
    %v204 = vadd.f32 %v71, %v203
    %v205 = vmul.f32 %v202, %v109
    %v206 = vadd.f32 %v73, %v205
    %v207 = vmul.f32 %v202, %v112
    %v208 = vadd.f32 %v75, %v207
    %v209 = vmul.f32 %v202, %v115
    %v210 = vadd.f32 %v77, %v209
    %v211 = vmul.f32 %v202, %v118
    %v212 = vadd.f32 %v79, %v211
    %v213 = vmul.f32 %v202, %v121
    %v214 = vadd.f32 %v81, %v213
    %v215 = vmul.f32 %v202, %v124
    %v216 = vadd.f32 %v83, %v215
    %v217 = vmul.f32 %v202, %v127
    %v218 = vadd.f32 %v85, %v217
    %v219 = vmul.f32 %v202, %v130
    %v220 = vadd.f32 %v87, %v219
    %v221 = vmul.f32 %v202, %v133
    %v222 = vadd.f32 %v89, %v221
    %v223 = vmul.f32 %v202, %v136
    %v224 = vadd.f32 %v91, %v223
    %v225 = vmul.f32 %v202, %v139
    %v226 = vadd.f32 %v93, %v225
    %v227 = vmul.f32 %v202, %v142
    %v228 = vadd.f32 %v95, %v227
    %v229 = vmul.f32 %v202, %v145
    %v230 = vadd.f32 %v97, %v229
    %v231 = vmul.f32 %v202, %v148
    %v232 = vadd.f32 %v99, %v231
    %v233 = vmul.f32 %v202, %v151
    %v234 = vadd.f32 %v101, %v233
    %v235 = vadd.f32 %v202, 1.0
    %s236 = smul.f32 %s102, %s103
    %v237 = vmul.f32 %v200, %v200
    %v238 = vstv %s236
    %v239 = vmul.f32 %v238, %v237
    %v240 = vadd.f32 %v239, 1.0
    %s241 = sld [smem:[#allocation8 + $0x1]]
    %s242 = sld [smem:[#allocation9 + $0x1]]
    %s243 = sld [smem:[#allocation7 + $0x10]]
    %v244 = vstv %s243
    %v245 = vsub.f32 %v204, %v244
    %s246 = sld [smem:[#allocation7 + $0x11]]
    %v247 = vstv %s246
    %v248 = vsub.f32 %v206, %v247
    %s249 = sld [smem:[#allocation7 + $0x12]]
    %v250 = vstv %s249
    %v251 = vsub.f32 %v208, %v250
    %s252 = sld [smem:[#allocation7 + $0x13]]
    %v253 = vstv %s252
    %v254 = vsub.f32 %v210, %v253
    %s255 = sld [smem:[#allocation7 + $0x14]]
    %v256 = vstv %s255
    %v257 = vsub.f32 %v212, %v256
    %s258 = sld [smem:[#allocation7 + $0x15]]
    %v259 = vstv %s258
    %v260 = vsub.f32 %v214, %v259
    %s261 = sld [smem:[#allocation7 + $0x16]]
    %v262 = vstv %s261
    %v263 = vsub.f32 %v216, %v262
    %s264 = sld [smem:[#allocation7 + $0x17]]
    %v265 = vstv %s264
    %v266 = vsub.f32 %v218, %v265
    %s267 = sld [smem:[#allocation7 + $0x18]]
    %v268 = vstv %s267
    %v269 = vsub.f32 %v220, %v268
    %s270 = sld [smem:[#allocation7 + $0x19]]
    %v271 = vstv %s270
    %v272 = vsub.f32 %v222, %v271
    %s273 = sld [smem:[#allocation7 + $0x1a]]
    %v274 = vstv %s273
    %v275 = vsub.f32 %v224, %v274
    %s276 = sld [smem:[#allocation7 + $0x1b]]
    %v277 = vstv %s276
    %v278 = vsub.f32 %v226, %v277
    %s279 = sld [smem:[#allocation7 + $0x1c]]
    %v280 = vstv %s279
    %v281 = vsub.f32 %v228, %v280
    %s282 = sld [smem:[#allocation7 + $0x1d]]
    %v283 = vstv %s282
    %v284 = vsub.f32 %v230, %v283
    %s285 = sld [smem:[#allocation7 + $0x1e]]
    %v286 = vstv %s285
    %v287 = vsub.f32 %v232, %v286
    %s288 = sld [smem:[#allocation7 + $0x1f]]
    %v289 = vstv %s288
    %v290 = vsub.f32 %v234, %v289
    %v291 = vmul.f32 %v245, %v245
    %v292 = vmul.f32 %v248, %v248
    %v293 = vadd.f32 %v291, %v292
    %v294 = vmul.f32 %v251, %v251
    %v295 = vadd.f32 %v293, %v294
    %v296 = vmul.f32 %v254, %v254
    %v297 = vadd.f32 %v295, %v296
    %v298 = vmul.f32 %v257, %v257
    %v299 = vadd.f32 %v297, %v298
    %v300 = vmul.f32 %v260, %v260
    %v301 = vadd.f32 %v299, %v300
    %v302 = vmul.f32 %v263, %v263
    %v303 = vadd.f32 %v301, %v302
    %v304 = vmul.f32 %v266, %v266
    %v305 = vadd.f32 %v303, %v304
    %v306 = vmul.f32 %v269, %v269
    %v307 = vadd.f32 %v305, %v306
    %v308 = vmul.f32 %v272, %v272
    %v309 = vadd.f32 %v307, %v308
    %v310 = vmul.f32 %v275, %v275
    %v311 = vadd.f32 %v309, %v310
    %v312 = vmul.f32 %v278, %v278
    %v313 = vadd.f32 %v311, %v312
    %v314 = vmul.f32 %v281, %v281
    %v315 = vadd.f32 %v313, %v314
    %v316 = vmul.f32 %v284, %v284
    %v317 = vadd.f32 %v315, %v316
    %v318 = vmul.f32 %v287, %v287
    %v319 = vadd.f32 %v317, %v318
    %v320 = vmul.f32 %v290, %v290
    %v321 = vadd.f32 %v319, %v320
    %v322 = vrsqrt.pop %v321
    %v323 = vmul.f32 %v322, %v321
    %v324 = vmul.f32 %v323, %v322
    %v325 = vmul.f32 0.5, %v324
    %v326 = vsub.f32 1.5, %v325
    %v327 = vmul.f32 %v322, %v326
    %v328 = vmul.f32 %v321, %v327
    %vm329 = vcmp.eq.f32.partialorder %v321, inf
    %v330 = vsel %vm329, %v321, %v328
    %vm331 = vcmp.eq.f32.partialorder %v321, 0.0
    %v332 = vand.u32 %v321, 2147483648
    %v333 = vsel %vm331, %v332, %v330
    %v334 = vstv %s241
    %v335 = vadd.f32 %v334, %v333
    %v336 = vrcp.pop %v335
    %v337 = vmul.f32 %v335, %v336
    %v338 = vsub.f32 2.0, %v337
    %v339 = vmul.f32 %v336, %v338
    %v340 = vstv %s242
    %v341 = vmul.f32 %v340, %v339
    %v342 = vmul.f32 %v341, %v245
    %v343 = vadd.f32 %v204, %v342
    %v344 = vmul.f32 %v341, %v248
    %v345 = vadd.f32 %v206, %v344
    %v346 = vmul.f32 %v341, %v251
    %v347 = vadd.f32 %v208, %v346
    %v348 = vmul.f32 %v341, %v254
    %v349 = vadd.f32 %v210, %v348
    %v350 = vmul.f32 %v341, %v257
    %v351 = vadd.f32 %v212, %v350
    %v352 = vmul.f32 %v341, %v260
    %v353 = vadd.f32 %v214, %v352
    %v354 = vmul.f32 %v341, %v263
    %v355 = vadd.f32 %v216, %v354
    %v356 = vmul.f32 %v341, %v266
    %v357 = vadd.f32 %v218, %v356
    %v358 = vmul.f32 %v341, %v269
    %v359 = vadd.f32 %v220, %v358
    %v360 = vmul.f32 %v341, %v272
    %v361 = vadd.f32 %v222, %v360
    %v362 = vmul.f32 %v341, %v275
    %v363 = vadd.f32 %v224, %v362
    %v364 = vmul.f32 %v341, %v278
    %v365 = vadd.f32 %v226, %v364
    %v366 = vmul.f32 %v341, %v281
    %v367 = vadd.f32 %v228, %v366
    %v368 = vmul.f32 %v341, %v284
    %v369 = vadd.f32 %v230, %v368
    %v370 = vmul.f32 %v341, %v287
    %v371 = vadd.f32 %v232, %v370
    %v372 = vmul.f32 %v341, %v290
    %v373 = vadd.f32 %v234, %v372
    %v374 = vadd.f32 %v341, 1.0
    %v375 = vmul.f32 %v235, %v374
    %s376 = smul.f32 %s241, %s242
    %v377 = vmul.f32 %v339, %v339
    %v378 = vstv %s376
    %v379 = vmul.f32 %v378, %v377
    %v380 = vadd.f32 %v379, 1.0
    %v381 = vmul.f32 %v240, %v380
    %s382 = sld [smem:[#allocation8 + $0x2]]
    %s383 = sld [smem:[#allocation9 + $0x2]]
    %s384 = sld [smem:[#allocation7 + $0x20]]
    %v385 = vstv %s384
    %v386 = vsub.f32 %v343, %v385
    %s387 = sld [smem:[#allocation7 + $0x21]]
    %v388 = vstv %s387
    %v389 = vsub.f32 %v345, %v388
    %s390 = sld [smem:[#allocation7 + $0x22]]
    %v391 = vstv %s390
    %v392 = vsub.f32 %v347, %v391
    %s393 = sld [smem:[#allocation7 + $0x23]]
    %v394 = vstv %s393
    %v395 = vsub.f32 %v349, %v394
    %s396 = sld [smem:[#allocation7 + $0x24]]
    %v397 = vstv %s396
    %v398 = vsub.f32 %v351, %v397
    %s399 = sld [smem:[#allocation7 + $0x25]]
    %v400 = vstv %s399
    %v401 = vsub.f32 %v353, %v400
    %s402 = sld [smem:[#allocation7 + $0x26]]
    %v403 = vstv %s402
    %v404 = vsub.f32 %v355, %v403
    %s405 = sld [smem:[#allocation7 + $0x27]]
    %v406 = vstv %s405
    %v407 = vsub.f32 %v357, %v406
    %s408 = sld [smem:[#allocation7 + $0x28]]
    %v409 = vstv %s408
    %v410 = vsub.f32 %v359, %v409
    %s411 = sld [smem:[#allocation7 + $0x29]]
    %v412 = vstv %s411
    %v413 = vsub.f32 %v361, %v412
    %s414 = sld [smem:[#allocation7 + $0x2a]]
    %v415 = vstv %s414
    %v416 = vsub.f32 %v363, %v415
    %s417 = sld [smem:[#allocation7 + $0x2b]]
    %v418 = vstv %s417
    %v419 = vsub.f32 %v365, %v418
    %s420 = sld [smem:[#allocation7 + $0x2c]]
    %v421 = vstv %s420
    %v422 = vsub.f32 %v367, %v421
    %s423 = sld [smem:[#allocation7 + $0x2d]]
    %v424 = vstv %s423
    %v425 = vsub.f32 %v369, %v424
    %s426 = sld [smem:[#allocation7 + $0x2e]]
    %v427 = vstv %s426
    %v428 = vsub.f32 %v371, %v427
    %s429 = sld [smem:[#allocation7 + $0x2f]]
    %v430 = vstv %s429
    %v431 = vsub.f32 %v373, %v430
    %v432 = vmul.f32 %v386, %v386
    %v433 = vmul.f32 %v389, %v389
    %v434 = vadd.f32 %v432, %v433
    %v435 = vmul.f32 %v392, %v392
    %v436 = vadd.f32 %v434, %v435
    %v437 = vmul.f32 %v395, %v395
    %v438 = vadd.f32 %v436, %v437
    %v439 = vmul.f32 %v398, %v398
    %v440 = vadd.f32 %v438, %v439
    %v441 = vmul.f32 %v401, %v401
    %v442 = vadd.f32 %v440, %v441
    %v443 = vmul.f32 %v404, %v404
    %v444 = vadd.f32 %v442, %v443
    %v445 = vmul.f32 %v407, %v407
    %v446 = vadd.f32 %v444, %v445
    %v447 = vmul.f32 %v410, %v410
    %v448 = vadd.f32 %v446, %v447
    %v449 = vmul.f32 %v413, %v413
    %v450 = vadd.f32 %v448, %v449
    %v451 = vmul.f32 %v416, %v416
    %v452 = vadd.f32 %v450, %v451
    %v453 = vmul.f32 %v419, %v419
    %v454 = vadd.f32 %v452, %v453
    %v455 = vmul.f32 %v422, %v422
    %v456 = vadd.f32 %v454, %v455
    %v457 = vmul.f32 %v425, %v425
    %v458 = vadd.f32 %v456, %v457
    %v459 = vmul.f32 %v428, %v428
    %v460 = vadd.f32 %v458, %v459
    %v461 = vmul.f32 %v431, %v431
    %v462 = vadd.f32 %v460, %v461
    %v463 = vrsqrt.pop %v462
    %v464 = vmul.f32 %v463, %v462
    %v465 = vmul.f32 %v464, %v463
    %v466 = vmul.f32 0.5, %v465
    %v467 = vsub.f32 1.5, %v466
    %v468 = vmul.f32 %v463, %v467
    %v469 = vmul.f32 %v462, %v468
    %vm470 = vcmp.eq.f32.partialorder %v462, inf
    %v471 = vsel %vm470, %v462, %v469
    %vm472 = vcmp.eq.f32.partialorder %v462, 0.0
    %v473 = vand.u32 %v462, 2147483648
    %v474 = vsel %vm472, %v473, %v471
    %v475 = vstv %s382
    %v476 = vadd.f32 %v475, %v474
    %v477 = vrcp.pop %v476
    %v478 = vmul.f32 %v476, %v477
    %v479 = vsub.f32 2.0, %v478
    %v480 = vmul.f32 %v477, %v479
    %v481 = vstv %s383
    %v482 = vmul.f32 %v481, %v480
    %v483 = vmul.f32 %v482, %v386
    %v484 = vadd.f32 %v343, %v483
    %v485 = vmul.f32 %v482, %v389
    %v486 = vadd.f32 %v345, %v485
    %v487 = vmul.f32 %v482, %v392
    %v488 = vadd.f32 %v347, %v487
    %v489 = vmul.f32 %v482, %v395
    %v490 = vadd.f32 %v349, %v489
    %v491 = vmul.f32 %v482, %v398
    %v492 = vadd.f32 %v351, %v491
    %v493 = vmul.f32 %v482, %v401
    %v494 = vadd.f32 %v353, %v493
    %v495 = vmul.f32 %v482, %v404
    %v496 = vadd.f32 %v355, %v495
    %v497 = vmul.f32 %v482, %v407
    %v498 = vadd.f32 %v357, %v497
    %v499 = vmul.f32 %v482, %v410
    %v500 = vadd.f32 %v359, %v499
    %v501 = vmul.f32 %v482, %v413
    %v502 = vadd.f32 %v361, %v501
    %v503 = vmul.f32 %v482, %v416
    %v504 = vadd.f32 %v363, %v503
    %v505 = vmul.f32 %v482, %v419
    %v506 = vadd.f32 %v365, %v505
    %v507 = vmul.f32 %v482, %v422
    %v508 = vadd.f32 %v367, %v507
    %v509 = vmul.f32 %v482, %v425
    %v510 = vadd.f32 %v369, %v509
    %v511 = vmul.f32 %v482, %v428
    %v512 = vadd.f32 %v371, %v511
    %v513 = vmul.f32 %v482, %v431
    %v514 = vadd.f32 %v373, %v513
    %v515 = vadd.f32 %v482, 1.0
    %v516 = vmul.f32 %v375, %v515
    %s517 = smul.f32 %s382, %s383
    %v518 = vmul.f32 %v480, %v480
    %v519 = vstv %s517
    %v520 = vmul.f32 %v519, %v518
    %v521 = vadd.f32 %v520, 1.0
    %v522 = vmul.f32 %v381, %v521
    %s523 = sld [smem:[#allocation8 + $0x3]]
    %s524 = sld [smem:[#allocation9 + $0x3]]
    %s525 = sld [smem:[#allocation7 + $0x30]]
    %v526 = vstv %s525
    %v527 = vsub.f32 %v484, %v526
    %s528 = sld [smem:[#allocation7 + $0x31]]
    %v529 = vstv %s528
    %v530 = vsub.f32 %v486, %v529
    %s531 = sld [smem:[#allocation7 + $0x32]]
    %v532 = vstv %s531
    %v533 = vsub.f32 %v488, %v532
    %s534 = sld [smem:[#allocation7 + $0x33]]
    %v535 = vstv %s534
    %v536 = vsub.f32 %v490, %v535
    %s537 = sld [smem:[#allocation7 + $0x34]]
    %v538 = vstv %s537
    %v539 = vsub.f32 %v492, %v538
    %s540 = sld [smem:[#allocation7 + $0x35]]
    %v541 = vstv %s540
    %v542 = vsub.f32 %v494, %v541
    %s543 = sld [smem:[#allocation7 + $0x36]]
    %v544 = vstv %s543
    %v545 = vsub.f32 %v496, %v544
    %s546 = sld [smem:[#allocation7 + $0x37]]
    %v547 = vstv %s546
    %v548 = vsub.f32 %v498, %v547
    %s549 = sld [smem:[#allocation7 + $0x38]]
    %v550 = vstv %s549
    %v551 = vsub.f32 %v500, %v550
    %s552 = sld [smem:[#allocation7 + $0x39]]
    %v553 = vstv %s552
    %v554 = vsub.f32 %v502, %v553
    %s555 = sld [smem:[#allocation7 + $0x3a]]
    %v556 = vstv %s555
    %v557 = vsub.f32 %v504, %v556
    %s558 = sld [smem:[#allocation7 + $0x3b]]
    %v559 = vstv %s558
    %v560 = vsub.f32 %v506, %v559
    %s561 = sld [smem:[#allocation7 + $0x3c]]
    %v562 = vstv %s561
    %v563 = vsub.f32 %v508, %v562
    %s564 = sld [smem:[#allocation7 + $0x3d]]
    %v565 = vstv %s564
    %v566 = vsub.f32 %v510, %v565
    %s567 = sld [smem:[#allocation7 + $0x3e]]
    %v568 = vstv %s567
    %v569 = vsub.f32 %v512, %v568
    %s570 = sld [smem:[#allocation7 + $0x3f]]
    %v571 = vstv %s570
    %v572 = vsub.f32 %v514, %v571
    %v573 = vmul.f32 %v527, %v527
    %v574 = vmul.f32 %v530, %v530
    %v575 = vadd.f32 %v573, %v574
    %v576 = vmul.f32 %v533, %v533
    %v577 = vadd.f32 %v575, %v576
    %v578 = vmul.f32 %v536, %v536
    %v579 = vadd.f32 %v577, %v578
    %v580 = vmul.f32 %v539, %v539
    %v581 = vadd.f32 %v579, %v580
    %v582 = vmul.f32 %v542, %v542
    %v583 = vadd.f32 %v581, %v582
    %v584 = vmul.f32 %v545, %v545
    %v585 = vadd.f32 %v583, %v584
    %v586 = vmul.f32 %v548, %v548
    %v587 = vadd.f32 %v585, %v586
    %v588 = vmul.f32 %v551, %v551
    %v589 = vadd.f32 %v587, %v588
    %v590 = vmul.f32 %v554, %v554
    %v591 = vadd.f32 %v589, %v590
    %v592 = vmul.f32 %v557, %v557
    %v593 = vadd.f32 %v591, %v592
    %v594 = vmul.f32 %v560, %v560
    %v595 = vadd.f32 %v593, %v594
    %v596 = vmul.f32 %v563, %v563
    %v597 = vadd.f32 %v595, %v596
    %v598 = vmul.f32 %v566, %v566
    %v599 = vadd.f32 %v597, %v598
    %v600 = vmul.f32 %v569, %v569
    %v601 = vadd.f32 %v599, %v600
    %v602 = vmul.f32 %v572, %v572
    %v603 = vadd.f32 %v601, %v602
    %v604 = vrsqrt.pop %v603
    %v605 = vmul.f32 %v604, %v603
    %v606 = vmul.f32 %v605, %v604
    %v607 = vmul.f32 0.5, %v606
    %v608 = vsub.f32 1.5, %v607
    %v609 = vmul.f32 %v604, %v608
    %v610 = vmul.f32 %v603, %v609
    %vm611 = vcmp.eq.f32.partialorder %v603, inf
    %v612 = vsel %vm611, %v603, %v610
    %vm613 = vcmp.eq.f32.partialorder %v603, 0.0
    %v614 = vand.u32 %v603, 2147483648
    %v615 = vsel %vm613, %v614, %v612
    %v616 = vstv %s523
    %v617 = vadd.f32 %v616, %v615
    %v618 = vrcp.pop %v617
    %v619 = vmul.f32 %v617, %v618
    %v620 = vsub.f32 2.0, %v619
    %v621 = vmul.f32 %v618, %v620
    %v622 = vstv %s524
    %v623 = vmul.f32 %v622, %v621
    %v624 = vmul.f32 %v623, %v527
    %v625 = vadd.f32 %v484, %v624
    %v626 = vmul.f32 %v623, %v530
    %v627 = vadd.f32 %v486, %v626
    %v628 = vmul.f32 %v623, %v533
    %v629 = vadd.f32 %v488, %v628
    %v630 = vmul.f32 %v623, %v536
    %v631 = vadd.f32 %v490, %v630
    %v632 = vmul.f32 %v623, %v539
    %v633 = vadd.f32 %v492, %v632
    %v634 = vmul.f32 %v623, %v542
    %v635 = vadd.f32 %v494, %v634
    %v636 = vmul.f32 %v623, %v545
    %v637 = vadd.f32 %v496, %v636
    %v638 = vmul.f32 %v623, %v548
    %v639 = vadd.f32 %v498, %v638
    %v640 = vmul.f32 %v623, %v551
    %v641 = vadd.f32 %v500, %v640
    %v642 = vmul.f32 %v623, %v554
    %v643 = vadd.f32 %v502, %v642
    %v644 = vmul.f32 %v623, %v557
    %v645 = vadd.f32 %v504, %v644
    %v646 = vmul.f32 %v623, %v560
    %v647 = vadd.f32 %v506, %v646
    %v648 = vmul.f32 %v623, %v563
    %v649 = vadd.f32 %v508, %v648
    %v650 = vmul.f32 %v623, %v566
    %v651 = vadd.f32 %v510, %v650
    %v652 = vmul.f32 %v623, %v569
    %v653 = vadd.f32 %v512, %v652
    %v654 = vmul.f32 %v623, %v572
    %v655 = vadd.f32 %v514, %v654
    %v656 = vadd.f32 %v623, 1.0
    %v657 = vmul.f32 %v516, %v656
    %s658 = smul.f32 %s523, %s524
    %v659 = vmul.f32 %v621, %v621
    %v660 = vstv %s658
    %v661 = vmul.f32 %v660, %v659
    %v662 = vadd.f32 %v661, 1.0
    %v663 = vmul.f32 %v522, %v662
    %s664 = sld [smem:[#allocation8 + $0x4]]
    %s665 = sld [smem:[#allocation9 + $0x4]]
    %s666 = sld [smem:[#allocation7 + $0x40]]
    %v667 = vstv %s666
    %v668 = vsub.f32 %v625, %v667
    %s669 = sld [smem:[#allocation7 + $0x41]]
    %v670 = vstv %s669
    %v671 = vsub.f32 %v627, %v670
    %s672 = sld [smem:[#allocation7 + $0x42]]
    %v673 = vstv %s672
    %v674 = vsub.f32 %v629, %v673
    %s675 = sld [smem:[#allocation7 + $0x43]]
    %v676 = vstv %s675
    %v677 = vsub.f32 %v631, %v676
    %s678 = sld [smem:[#allocation7 + $0x44]]
    %v679 = vstv %s678
    %v680 = vsub.f32 %v633, %v679
    %s681 = sld [smem:[#allocation7 + $0x45]]
    %v682 = vstv %s681
    %v683 = vsub.f32 %v635, %v682
    %s684 = sld [smem:[#allocation7 + $0x46]]
    %v685 = vstv %s684
    %v686 = vsub.f32 %v637, %v685
    %s687 = sld [smem:[#allocation7 + $0x47]]
    %v688 = vstv %s687
    %v689 = vsub.f32 %v639, %v688
    %s690 = sld [smem:[#allocation7 + $0x48]]
    %v691 = vstv %s690
    %v692 = vsub.f32 %v641, %v691
    %s693 = sld [smem:[#allocation7 + $0x49]]
    %v694 = vstv %s693
    %v695 = vsub.f32 %v643, %v694
    %s696 = sld [smem:[#allocation7 + $0x4a]]
    %v697 = vstv %s696
    %v698 = vsub.f32 %v645, %v697
    %s699 = sld [smem:[#allocation7 + $0x4b]]
    %v700 = vstv %s699
    %v701 = vsub.f32 %v647, %v700
    %s702 = sld [smem:[#allocation7 + $0x4c]]
    %v703 = vstv %s702
    %v704 = vsub.f32 %v649, %v703
    %s705 = sld [smem:[#allocation7 + $0x4d]]
    %v706 = vstv %s705
    %v707 = vsub.f32 %v651, %v706
    %s708 = sld [smem:[#allocation7 + $0x4e]]
    %v709 = vstv %s708
    %v710 = vsub.f32 %v653, %v709
    %s711 = sld [smem:[#allocation7 + $0x4f]]
    %v712 = vstv %s711
    %v713 = vsub.f32 %v655, %v712
    %v714 = vmul.f32 %v668, %v668
    %v715 = vmul.f32 %v671, %v671
    %v716 = vadd.f32 %v714, %v715
    %v717 = vmul.f32 %v674, %v674
    %v718 = vadd.f32 %v716, %v717
    %v719 = vmul.f32 %v677, %v677
    %v720 = vadd.f32 %v718, %v719
    %v721 = vmul.f32 %v680, %v680
    %v722 = vadd.f32 %v720, %v721
    %v723 = vmul.f32 %v683, %v683
    %v724 = vadd.f32 %v722, %v723
    %v725 = vmul.f32 %v686, %v686
    %v726 = vadd.f32 %v724, %v725
    %v727 = vmul.f32 %v689, %v689
    %v728 = vadd.f32 %v726, %v727
    %v729 = vmul.f32 %v692, %v692
    %v730 = vadd.f32 %v728, %v729
    %v731 = vmul.f32 %v695, %v695
    %v732 = vadd.f32 %v730, %v731
    %v733 = vmul.f32 %v698, %v698
    %v734 = vadd.f32 %v732, %v733
    %v735 = vmul.f32 %v701, %v701
    %v736 = vadd.f32 %v734, %v735
    %v737 = vmul.f32 %v704, %v704
    %v738 = vadd.f32 %v736, %v737
    %v739 = vmul.f32 %v707, %v707
    %v740 = vadd.f32 %v738, %v739
    %v741 = vmul.f32 %v710, %v710
    %v742 = vadd.f32 %v740, %v741
    %v743 = vmul.f32 %v713, %v713
    %v744 = vadd.f32 %v742, %v743
    %v745 = vrsqrt.pop %v744
    %v746 = vmul.f32 %v745, %v744
    %v747 = vmul.f32 %v746, %v745
    %v748 = vmul.f32 0.5, %v747
    %v749 = vsub.f32 1.5, %v748
    %v750 = vmul.f32 %v745, %v749
    %v751 = vmul.f32 %v744, %v750
    %vm752 = vcmp.eq.f32.partialorder %v744, inf
    %v753 = vsel %vm752, %v744, %v751
    %vm754 = vcmp.eq.f32.partialorder %v744, 0.0
    %v755 = vand.u32 %v744, 2147483648
    %v756 = vsel %vm754, %v755, %v753
    %v757 = vstv %s664
    %v758 = vadd.f32 %v757, %v756
    %v759 = vrcp.pop %v758
    %v760 = vmul.f32 %v758, %v759
    %v761 = vsub.f32 2.0, %v760
    %v762 = vmul.f32 %v759, %v761
    %v763 = vstv %s665
    %v764 = vmul.f32 %v763, %v762
    %v765 = vmul.f32 %v764, %v668
    %v766 = vadd.f32 %v625, %v765
    %v767 = vmul.f32 %v764, %v671
    %v768 = vadd.f32 %v627, %v767
    %v769 = vmul.f32 %v764, %v674
    %v770 = vadd.f32 %v629, %v769
    %v771 = vmul.f32 %v764, %v677
    %v772 = vadd.f32 %v631, %v771
    %v773 = vmul.f32 %v764, %v680
    %v774 = vadd.f32 %v633, %v773
    %v775 = vmul.f32 %v764, %v683
    %v776 = vadd.f32 %v635, %v775
    %v777 = vmul.f32 %v764, %v686
    %v778 = vadd.f32 %v637, %v777
    %v779 = vmul.f32 %v764, %v689
    %v780 = vadd.f32 %v639, %v779
    %v781 = vmul.f32 %v764, %v692
    %v782 = vadd.f32 %v641, %v781
    %v783 = vmul.f32 %v764, %v695
    %v784 = vadd.f32 %v643, %v783
    %v785 = vmul.f32 %v764, %v698
    %v786 = vadd.f32 %v645, %v785
    %v787 = vmul.f32 %v764, %v701
    %v788 = vadd.f32 %v647, %v787
    %v789 = vmul.f32 %v764, %v704
    %v790 = vadd.f32 %v649, %v789
    %v791 = vmul.f32 %v764, %v707
    %v792 = vadd.f32 %v651, %v791
    %v793 = vmul.f32 %v764, %v710
    %v794 = vadd.f32 %v653, %v793
    %v795 = vmul.f32 %v764, %v713
    %v796 = vadd.f32 %v655, %v795
    %v797 = vadd.f32 %v764, 1.0
    %v798 = vmul.f32 %v657, %v797
    %s799 = smul.f32 %s664, %s665
    %v800 = vmul.f32 %v762, %v762
    %v801 = vstv %s799
    %v802 = vmul.f32 %v801, %v800
    %v803 = vadd.f32 %v802, 1.0
    %v804 = vmul.f32 %v663, %v803
    %s805 = sld [smem:[#allocation8 + $0x5]]
    %s806 = sld [smem:[#allocation9 + $0x5]]
    %s807 = sld [smem:[#allocation7 + $0x50]]
    %v808 = vstv %s807
    %v809 = vsub.f32 %v766, %v808
    %s810 = sld [smem:[#allocation7 + $0x51]]
    %v811 = vstv %s810
    %v812 = vsub.f32 %v768, %v811
    %s813 = sld [smem:[#allocation7 + $0x52]]
    %v814 = vstv %s813
    %v815 = vsub.f32 %v770, %v814
    %s816 = sld [smem:[#allocation7 + $0x53]]
    %v817 = vstv %s816
    %v818 = vsub.f32 %v772, %v817
    %s819 = sld [smem:[#allocation7 + $0x54]]
    %v820 = vstv %s819
    %v821 = vsub.f32 %v774, %v820
    %s822 = sld [smem:[#allocation7 + $0x55]]
    %v823 = vstv %s822
    %v824 = vsub.f32 %v776, %v823
    %s825 = sld [smem:[#allocation7 + $0x56]]
    %v826 = vstv %s825
    %v827 = vsub.f32 %v778, %v826
    %s828 = sld [smem:[#allocation7 + $0x57]]
    %v829 = vstv %s828
    %v830 = vsub.f32 %v780, %v829
    %s831 = sld [smem:[#allocation7 + $0x58]]
    %v832 = vstv %s831
    %v833 = vsub.f32 %v782, %v832
    %s834 = sld [smem:[#allocation7 + $0x59]]
    %v835 = vstv %s834
    %v836 = vsub.f32 %v784, %v835
    %s837 = sld [smem:[#allocation7 + $0x5a]]
    %v838 = vstv %s837
    %v839 = vsub.f32 %v786, %v838
    %s840 = sld [smem:[#allocation7 + $0x5b]]
    %v841 = vstv %s840
    %v842 = vsub.f32 %v788, %v841
    %s843 = sld [smem:[#allocation7 + $0x5c]]
    %v844 = vstv %s843
    %v845 = vsub.f32 %v790, %v844
    %s846 = sld [smem:[#allocation7 + $0x5d]]
    %v847 = vstv %s846
    %v848 = vsub.f32 %v792, %v847
    %s849 = sld [smem:[#allocation7 + $0x5e]]
    %v850 = vstv %s849
    %v851 = vsub.f32 %v794, %v850
    %s852 = sld [smem:[#allocation7 + $0x5f]]
    %v853 = vstv %s852
    %v854 = vsub.f32 %v796, %v853
    %v855 = vmul.f32 %v809, %v809
    %v856 = vmul.f32 %v812, %v812
    %v857 = vadd.f32 %v855, %v856
    %v858 = vmul.f32 %v815, %v815
    %v859 = vadd.f32 %v857, %v858
    %v860 = vmul.f32 %v818, %v818
    %v861 = vadd.f32 %v859, %v860
    %v862 = vmul.f32 %v821, %v821
    %v863 = vadd.f32 %v861, %v862
    %v864 = vmul.f32 %v824, %v824
    %v865 = vadd.f32 %v863, %v864
    %v866 = vmul.f32 %v827, %v827
    %v867 = vadd.f32 %v865, %v866
    %v868 = vmul.f32 %v830, %v830
    %v869 = vadd.f32 %v867, %v868
    %v870 = vmul.f32 %v833, %v833
    %v871 = vadd.f32 %v869, %v870
    %v872 = vmul.f32 %v836, %v836
    %v873 = vadd.f32 %v871, %v872
    %v874 = vmul.f32 %v839, %v839
    %v875 = vadd.f32 %v873, %v874
    %v876 = vmul.f32 %v842, %v842
    %v877 = vadd.f32 %v875, %v876
    %v878 = vmul.f32 %v845, %v845
    %v879 = vadd.f32 %v877, %v878
    %v880 = vmul.f32 %v848, %v848
    %v881 = vadd.f32 %v879, %v880
    %v882 = vmul.f32 %v851, %v851
    %v883 = vadd.f32 %v881, %v882
    %v884 = vmul.f32 %v854, %v854
    %v885 = vadd.f32 %v883, %v884
    %v886 = vrsqrt.pop %v885
    %v887 = vmul.f32 %v886, %v885
    %v888 = vmul.f32 %v887, %v886
    %v889 = vmul.f32 0.5, %v888
    %v890 = vsub.f32 1.5, %v889
    %v891 = vmul.f32 %v886, %v890
    %v892 = vmul.f32 %v885, %v891
    %vm893 = vcmp.eq.f32.partialorder %v885, inf
    %v894 = vsel %vm893, %v885, %v892
    %vm895 = vcmp.eq.f32.partialorder %v885, 0.0
    %v896 = vand.u32 %v885, 2147483648
    %v897 = vsel %vm895, %v896, %v894
    %v898 = vstv %s805
    %v899 = vadd.f32 %v898, %v897
    %v900 = vrcp.pop %v899
    %v901 = vmul.f32 %v899, %v900
    %v902 = vsub.f32 2.0, %v901
    %v903 = vmul.f32 %v900, %v902
    %v904 = vstv %s806
    %v905 = vmul.f32 %v904, %v903
    %v906 = vmul.f32 %v905, %v809
    %v907 = vadd.f32 %v766, %v906
    %v908 = vmul.f32 %v905, %v812
    %v909 = vadd.f32 %v768, %v908
    %v910 = vmul.f32 %v905, %v815
    %v911 = vadd.f32 %v770, %v910
    %v912 = vmul.f32 %v905, %v818
    %v913 = vadd.f32 %v772, %v912
    %v914 = vmul.f32 %v905, %v821
    %v915 = vadd.f32 %v774, %v914
    %v916 = vmul.f32 %v905, %v824
    %v917 = vadd.f32 %v776, %v916
    %v918 = vmul.f32 %v905, %v827
    %v919 = vadd.f32 %v778, %v918
    %v920 = vmul.f32 %v905, %v830
    %v921 = vadd.f32 %v780, %v920
    %v922 = vmul.f32 %v905, %v833
    %v923 = vadd.f32 %v782, %v922
    %v924 = vmul.f32 %v905, %v836
    %v925 = vadd.f32 %v784, %v924
    %v926 = vmul.f32 %v905, %v839
    %v927 = vadd.f32 %v786, %v926
    %v928 = vmul.f32 %v905, %v842
    %v929 = vadd.f32 %v788, %v928
    %v930 = vmul.f32 %v905, %v845
    %v931 = vadd.f32 %v790, %v930
    %v932 = vmul.f32 %v905, %v848
    %v933 = vadd.f32 %v792, %v932
    %v934 = vmul.f32 %v905, %v851
    %v935 = vadd.f32 %v794, %v934
    %v936 = vmul.f32 %v905, %v854
    %v937 = vadd.f32 %v796, %v936
    %v938 = vadd.f32 %v905, 1.0
    %v939 = vmul.f32 %v798, %v938
    %s940 = smul.f32 %s805, %s806
    %v941 = vmul.f32 %v903, %v903
    %v942 = vstv %s940
    %v943 = vmul.f32 %v942, %v941
    %v944 = vadd.f32 %v943, 1.0
    %v945 = vmul.f32 %v804, %v944
    %v946 = vmul.f32 %v907, %v907
    %v947 = vmul.f32 %v909, %v909
    %v948 = vadd.f32 %v946, %v947
    %v949 = vmul.f32 %v911, %v911
    %v950 = vadd.f32 %v948, %v949
    %v951 = vmul.f32 %v913, %v913
    %v952 = vadd.f32 %v950, %v951
    %v953 = vmul.f32 %v915, %v915
    %v954 = vadd.f32 %v952, %v953
    %v955 = vmul.f32 %v917, %v917
    %v956 = vadd.f32 %v954, %v955
    %v957 = vmul.f32 %v919, %v919
    %v958 = vadd.f32 %v956, %v957
    %v959 = vmul.f32 %v921, %v921
    %v960 = vadd.f32 %v958, %v959
    %v961 = vmul.f32 %v923, %v923
    %v962 = vadd.f32 %v960, %v961
    %v963 = vmul.f32 %v925, %v925
    %v964 = vadd.f32 %v962, %v963
    %v965 = vmul.f32 %v927, %v927
    %v966 = vadd.f32 %v964, %v965
    %v967 = vmul.f32 %v929, %v929
    %v968 = vadd.f32 %v966, %v967
    %v969 = vmul.f32 %v931, %v931
    %v970 = vadd.f32 %v968, %v969
    %v971 = vmul.f32 %v933, %v933
    %v972 = vadd.f32 %v970, %v971
    %v973 = vmul.f32 %v935, %v935
    %v974 = vadd.f32 %v972, %v973
    %v975 = vmul.f32 %v937, %v937
    %v976 = vadd.f32 %v974, %v975
    %v977 = vlog2.pop %v939
    %v978 = vmul.f32 %v977, 0.6931472
    %v979 = vmul.f32 %v978, 15.0
    %v980 = vlog2.pop %v945
    %v981 = vmul.f32 %v980, 0.6931472
    %v982 = vadd.f32 %v979, %v981
    %v983 = vmul.f32 %v976, 0.5
    %v984 = vsub.f32 -14.703016, %v983
    %v985 = vadd.f32 %v984, %v982
    %vm986 = vcmp.ne.f32.partialorder %v985, %v985
    %v987 = vsel %vm986, -inf, %v985
    %988 = vst [vmem:[#allocation11] sm:$0xff] %v987
    %v989 = vld [vmem:[#allocation2] sm:$0xff]
    %v990 = vld [vmem:[%s72] sm:$0xff]
    %v991 = vld [vmem:[%s74] sm:$0xff]
    %v992 = vld [vmem:[%s76] sm:$0xff]
    %v993 = vld [vmem:[%s78] sm:$0xff]
    %v994 = vld [vmem:[%s80] sm:$0xff]
    %v995 = vld [vmem:[%s82] sm:$0xff]
    %v996 = vld [vmem:[%s84] sm:$0xff]
    %v997 = vld [vmem:[%s86] sm:$0xff]
    %v998 = vld [vmem:[%s88] sm:$0xff]
    %v999 = vld [vmem:[%s90] sm:$0xff]
    %v1000 = vld [vmem:[%s92] sm:$0xff]
    %v1001 = vld [vmem:[%s94] sm:$0xff]
    %v1002 = vld [vmem:[%s96] sm:$0xff]
    %v1003 = vld [vmem:[%s98] sm:$0xff]
    %v1004 = vld [vmem:[%s100] sm:$0xff]
    %s1005 = sld [smem:[#allocation8 + $0x6]]
    %s1006 = sld [smem:[#allocation9 + $0x6]]
    %s1007 = sld [smem:[#allocation7 + $0x60]]
    %v1008 = vstv %s1007
    %v1009 = vsub.f32 %v989, %v1008
    %s1010 = sld [smem:[#allocation7 + $0x61]]
    %v1011 = vstv %s1010
    %v1012 = vsub.f32 %v990, %v1011
    %s1013 = sld [smem:[#allocation7 + $0x62]]
    %v1014 = vstv %s1013
    %v1015 = vsub.f32 %v991, %v1014
    %s1016 = sld [smem:[#allocation7 + $0x63]]
    %v1017 = vstv %s1016
    %v1018 = vsub.f32 %v992, %v1017
    %s1019 = sld [smem:[#allocation7 + $0x64]]
    %v1020 = vstv %s1019
    %v1021 = vsub.f32 %v993, %v1020
    %s1022 = sld [smem:[#allocation7 + $0x65]]
    %v1023 = vstv %s1022
    %v1024 = vsub.f32 %v994, %v1023
    %s1025 = sld [smem:[#allocation7 + $0x66]]
    %v1026 = vstv %s1025
    %v1027 = vsub.f32 %v995, %v1026
    %s1028 = sld [smem:[#allocation7 + $0x67]]
    %v1029 = vstv %s1028
    %v1030 = vsub.f32 %v996, %v1029
    %s1031 = sld [smem:[#allocation7 + $0x68]]
    %v1032 = vstv %s1031
    %v1033 = vsub.f32 %v997, %v1032
    %s1034 = sld [smem:[#allocation7 + $0x69]]
    %v1035 = vstv %s1034
    %v1036 = vsub.f32 %v998, %v1035
    %s1037 = sld [smem:[#allocation7 + $0x6a]]
    %v1038 = vstv %s1037
    %v1039 = vsub.f32 %v999, %v1038
    %s1040 = sld [smem:[#allocation7 + $0x6b]]
    %v1041 = vstv %s1040
    %v1042 = vsub.f32 %v1000, %v1041
    %s1043 = sld [smem:[#allocation7 + $0x6c]]
    %v1044 = vstv %s1043
    %v1045 = vsub.f32 %v1001, %v1044
    %s1046 = sld [smem:[#allocation7 + $0x6d]]
    %v1047 = vstv %s1046
    %v1048 = vsub.f32 %v1002, %v1047
    %s1049 = sld [smem:[#allocation7 + $0x6e]]
    %v1050 = vstv %s1049
    %v1051 = vsub.f32 %v1003, %v1050
    %s1052 = sld [smem:[#allocation7 + $0x6f]]
    %v1053 = vstv %s1052
    %v1054 = vsub.f32 %v1004, %v1053
    %v1055 = vmul.f32 %v1009, %v1009
    %v1056 = vmul.f32 %v1012, %v1012
    %v1057 = vadd.f32 %v1055, %v1056
    %v1058 = vmul.f32 %v1015, %v1015
    %v1059 = vadd.f32 %v1057, %v1058
    %v1060 = vmul.f32 %v1018, %v1018
    %v1061 = vadd.f32 %v1059, %v1060
    %v1062 = vmul.f32 %v1021, %v1021
    %v1063 = vadd.f32 %v1061, %v1062
    %v1064 = vmul.f32 %v1024, %v1024
    %v1065 = vadd.f32 %v1063, %v1064
    %v1066 = vmul.f32 %v1027, %v1027
    %v1067 = vadd.f32 %v1065, %v1066
    %v1068 = vmul.f32 %v1030, %v1030
    %v1069 = vadd.f32 %v1067, %v1068
    %v1070 = vmul.f32 %v1033, %v1033
    %v1071 = vadd.f32 %v1069, %v1070
    %v1072 = vmul.f32 %v1036, %v1036
    %v1073 = vadd.f32 %v1071, %v1072
    %v1074 = vmul.f32 %v1039, %v1039
    %v1075 = vadd.f32 %v1073, %v1074
    %v1076 = vmul.f32 %v1042, %v1042
    %v1077 = vadd.f32 %v1075, %v1076
    %v1078 = vmul.f32 %v1045, %v1045
    %v1079 = vadd.f32 %v1077, %v1078
    %v1080 = vmul.f32 %v1048, %v1048
    %v1081 = vadd.f32 %v1079, %v1080
    %v1082 = vmul.f32 %v1051, %v1051
    %v1083 = vadd.f32 %v1081, %v1082
    %v1084 = vmul.f32 %v1054, %v1054
    %v1085 = vadd.f32 %v1083, %v1084
    %v1086 = vrsqrt.pop %v1085
    %v1087 = vmul.f32 %v1086, %v1085
    %v1088 = vmul.f32 %v1087, %v1086
    %v1089 = vmul.f32 0.5, %v1088
    %v1090 = vsub.f32 1.5, %v1089
    %v1091 = vmul.f32 %v1086, %v1090
    %v1092 = vmul.f32 %v1085, %v1091
    %vm1093 = vcmp.eq.f32.partialorder %v1085, inf
    %v1094 = vsel %vm1093, %v1085, %v1092
    %vm1095 = vcmp.eq.f32.partialorder %v1085, 0.0
    %v1096 = vand.u32 %v1085, 2147483648
    %v1097 = vsel %vm1095, %v1096, %v1094
    %v1098 = vstv %s1005
    %v1099 = vadd.f32 %v1098, %v1097
    %v1100 = vrcp.pop %v1099
    %v1101 = vmul.f32 %v1099, %v1100
    %v1102 = vsub.f32 2.0, %v1101
    %v1103 = vmul.f32 %v1100, %v1102
    %v1104 = vstv %s1006
    %v1105 = vmul.f32 %v1104, %v1103
    %v1106 = vmul.f32 %v1105, %v1009
    %v1107 = vadd.f32 %v989, %v1106
    %v1108 = vmul.f32 %v1105, %v1012
    %v1109 = vadd.f32 %v990, %v1108
    %v1110 = vmul.f32 %v1105, %v1015
    %v1111 = vadd.f32 %v991, %v1110
    %v1112 = vmul.f32 %v1105, %v1018
    %v1113 = vadd.f32 %v992, %v1112
    %v1114 = vmul.f32 %v1105, %v1021
    %v1115 = vadd.f32 %v993, %v1114
    %v1116 = vmul.f32 %v1105, %v1024
    %v1117 = vadd.f32 %v994, %v1116
    %v1118 = vmul.f32 %v1105, %v1027
    %v1119 = vadd.f32 %v995, %v1118
    %v1120 = vmul.f32 %v1105, %v1030
    %v1121 = vadd.f32 %v996, %v1120
    %v1122 = vmul.f32 %v1105, %v1033
    %v1123 = vadd.f32 %v997, %v1122
    %v1124 = vmul.f32 %v1105, %v1036
    %v1125 = vadd.f32 %v998, %v1124
    %v1126 = vmul.f32 %v1105, %v1039
    %v1127 = vadd.f32 %v999, %v1126
    %v1128 = vmul.f32 %v1105, %v1042
    %v1129 = vadd.f32 %v1000, %v1128
    %v1130 = vmul.f32 %v1105, %v1045
    %v1131 = vadd.f32 %v1001, %v1130
    %v1132 = vmul.f32 %v1105, %v1048
    %v1133 = vadd.f32 %v1002, %v1132
    %v1134 = vmul.f32 %v1105, %v1051
    %v1135 = vadd.f32 %v1003, %v1134
    %v1136 = vmul.f32 %v1105, %v1054
    %v1137 = vadd.f32 %v1004, %v1136
    %v1138 = vadd.f32 %v1105, 1.0
    %s1139 = smul.f32 %s1005, %s1006
    %v1140 = vmul.f32 %v1103, %v1103
    %v1141 = vstv %s1139
    %v1142 = vmul.f32 %v1141, %v1140
    %v1143 = vadd.f32 %v1142, 1.0
    %s1144 = sld [smem:[#allocation8 + $0x7]]
    %s1145 = sld [smem:[#allocation9 + $0x7]]
    %s1146 = sld [smem:[#allocation7 + $0x70]]
    %v1147 = vstv %s1146
    %v1148 = vsub.f32 %v1107, %v1147
    %s1149 = sld [smem:[#allocation7 + $0x71]]
    %v1150 = vstv %s1149
    %v1151 = vsub.f32 %v1109, %v1150
    %s1152 = sld [smem:[#allocation7 + $0x72]]
    %v1153 = vstv %s1152
    %v1154 = vsub.f32 %v1111, %v1153
    %s1155 = sld [smem:[#allocation7 + $0x73]]
    %v1156 = vstv %s1155
    %v1157 = vsub.f32 %v1113, %v1156
    %s1158 = sld [smem:[#allocation7 + $0x74]]
    %v1159 = vstv %s1158
    %v1160 = vsub.f32 %v1115, %v1159
    %s1161 = sld [smem:[#allocation7 + $0x75]]
    %v1162 = vstv %s1161
    %v1163 = vsub.f32 %v1117, %v1162
    %s1164 = sld [smem:[#allocation7 + $0x76]]
    %v1165 = vstv %s1164
    %v1166 = vsub.f32 %v1119, %v1165
    %s1167 = sld [smem:[#allocation7 + $0x77]]
    %v1168 = vstv %s1167
    %v1169 = vsub.f32 %v1121, %v1168
    %s1170 = sld [smem:[#allocation7 + $0x78]]
    %v1171 = vstv %s1170
    %v1172 = vsub.f32 %v1123, %v1171
    %s1173 = sld [smem:[#allocation7 + $0x79]]
    %v1174 = vstv %s1173
    %v1175 = vsub.f32 %v1125, %v1174
    %s1176 = sld [smem:[#allocation7 + $0x7a]]
    %v1177 = vstv %s1176
    %v1178 = vsub.f32 %v1127, %v1177
    %s1179 = sld [smem:[#allocation7 + $0x7b]]
    %v1180 = vstv %s1179
    %v1181 = vsub.f32 %v1129, %v1180
    %s1182 = sld [smem:[#allocation7 + $0x7c]]
    %v1183 = vstv %s1182
    %v1184 = vsub.f32 %v1131, %v1183
    %s1185 = sld [smem:[#allocation7 + $0x7d]]
    %v1186 = vstv %s1185
    %v1187 = vsub.f32 %v1133, %v1186
    %s1188 = sld [smem:[#allocation7 + $0x7e]]
    %v1189 = vstv %s1188
    %v1190 = vsub.f32 %v1135, %v1189
    %s1191 = sld [smem:[#allocation7 + $0x7f]]
    %v1192 = vstv %s1191
    %v1193 = vsub.f32 %v1137, %v1192
    %v1194 = vmul.f32 %v1148, %v1148
    %v1195 = vmul.f32 %v1151, %v1151
    %v1196 = vadd.f32 %v1194, %v1195
    %v1197 = vmul.f32 %v1154, %v1154
    %v1198 = vadd.f32 %v1196, %v1197
    %v1199 = vmul.f32 %v1157, %v1157
    %v1200 = vadd.f32 %v1198, %v1199
    %v1201 = vmul.f32 %v1160, %v1160
    %v1202 = vadd.f32 %v1200, %v1201
    %v1203 = vmul.f32 %v1163, %v1163
    %v1204 = vadd.f32 %v1202, %v1203
    %v1205 = vmul.f32 %v1166, %v1166
    %v1206 = vadd.f32 %v1204, %v1205
    %v1207 = vmul.f32 %v1169, %v1169
    %v1208 = vadd.f32 %v1206, %v1207
    %v1209 = vmul.f32 %v1172, %v1172
    %v1210 = vadd.f32 %v1208, %v1209
    %v1211 = vmul.f32 %v1175, %v1175
    %v1212 = vadd.f32 %v1210, %v1211
    %v1213 = vmul.f32 %v1178, %v1178
    %v1214 = vadd.f32 %v1212, %v1213
    %v1215 = vmul.f32 %v1181, %v1181
    %v1216 = vadd.f32 %v1214, %v1215
    %v1217 = vmul.f32 %v1184, %v1184
    %v1218 = vadd.f32 %v1216, %v1217
    %v1219 = vmul.f32 %v1187, %v1187
    %v1220 = vadd.f32 %v1218, %v1219
    %v1221 = vmul.f32 %v1190, %v1190
    %v1222 = vadd.f32 %v1220, %v1221
    %v1223 = vmul.f32 %v1193, %v1193
    %v1224 = vadd.f32 %v1222, %v1223
    %v1225 = vrsqrt.pop %v1224
    %v1226 = vmul.f32 %v1225, %v1224
    %v1227 = vmul.f32 %v1226, %v1225
    %v1228 = vmul.f32 0.5, %v1227
    %v1229 = vsub.f32 1.5, %v1228
    %v1230 = vmul.f32 %v1225, %v1229
    %v1231 = vmul.f32 %v1224, %v1230
    %vm1232 = vcmp.eq.f32.partialorder %v1224, inf
    %v1233 = vsel %vm1232, %v1224, %v1231
    %vm1234 = vcmp.eq.f32.partialorder %v1224, 0.0
    %v1235 = vand.u32 %v1224, 2147483648
    %v1236 = vsel %vm1234, %v1235, %v1233
    %v1237 = vstv %s1144
    %v1238 = vadd.f32 %v1237, %v1236
    %v1239 = vrcp.pop %v1238
    %v1240 = vmul.f32 %v1238, %v1239
    %v1241 = vsub.f32 2.0, %v1240
    %v1242 = vmul.f32 %v1239, %v1241
    %v1243 = vstv %s1145
    %v1244 = vmul.f32 %v1243, %v1242
    %v1245 = vmul.f32 %v1244, %v1148
    %v1246 = vadd.f32 %v1107, %v1245
    %v1247 = vmul.f32 %v1244, %v1151
    %v1248 = vadd.f32 %v1109, %v1247
    %v1249 = vmul.f32 %v1244, %v1154
    %v1250 = vadd.f32 %v1111, %v1249
    %v1251 = vmul.f32 %v1244, %v1157
    %v1252 = vadd.f32 %v1113, %v1251
    %v1253 = vmul.f32 %v1244, %v1160
    %v1254 = vadd.f32 %v1115, %v1253
    %v1255 = vmul.f32 %v1244, %v1163
    %v1256 = vadd.f32 %v1117, %v1255
    %v1257 = vmul.f32 %v1244, %v1166
    %v1258 = vadd.f32 %v1119, %v1257
    %v1259 = vmul.f32 %v1244, %v1169
    %v1260 = vadd.f32 %v1121, %v1259
    %v1261 = vmul.f32 %v1244, %v1172
    %v1262 = vadd.f32 %v1123, %v1261
    %v1263 = vmul.f32 %v1244, %v1175
    %v1264 = vadd.f32 %v1125, %v1263
    %v1265 = vmul.f32 %v1244, %v1178
    %v1266 = vadd.f32 %v1127, %v1265
    %v1267 = vmul.f32 %v1244, %v1181
    %v1268 = vadd.f32 %v1129, %v1267
    %v1269 = vmul.f32 %v1244, %v1184
    %v1270 = vadd.f32 %v1131, %v1269
    %v1271 = vmul.f32 %v1244, %v1187
    %v1272 = vadd.f32 %v1133, %v1271
    %v1273 = vmul.f32 %v1244, %v1190
    %v1274 = vadd.f32 %v1135, %v1273
    %v1275 = vmul.f32 %v1244, %v1193
    %v1276 = vadd.f32 %v1137, %v1275
    %v1277 = vadd.f32 %v1244, 1.0
    %v1278 = vmul.f32 %v1138, %v1277
    %s1279 = smul.f32 %s1144, %s1145
    %v1280 = vmul.f32 %v1242, %v1242
    %v1281 = vstv %s1279
    %v1282 = vmul.f32 %v1281, %v1280
    %v1283 = vadd.f32 %v1282, 1.0
    %v1284 = vmul.f32 %v1143, %v1283
    %s1285 = sld [smem:[#allocation8 + $0x8]]
    %s1286 = sld [smem:[#allocation9 + $0x8]]
    %s1287 = sld [smem:[#allocation7 + $0x80]]
    %v1288 = vstv %s1287
    %v1289 = vsub.f32 %v1246, %v1288
    %s1290 = sld [smem:[#allocation7 + $0x81]]
    %v1291 = vstv %s1290
    %v1292 = vsub.f32 %v1248, %v1291
    %s1293 = sld [smem:[#allocation7 + $0x82]]
    %v1294 = vstv %s1293
    %v1295 = vsub.f32 %v1250, %v1294
    %s1296 = sld [smem:[#allocation7 + $0x83]]
    %v1297 = vstv %s1296
    %v1298 = vsub.f32 %v1252, %v1297
    %s1299 = sld [smem:[#allocation7 + $0x84]]
    %v1300 = vstv %s1299
    %v1301 = vsub.f32 %v1254, %v1300
    %s1302 = sld [smem:[#allocation7 + $0x85]]
    %v1303 = vstv %s1302
    %v1304 = vsub.f32 %v1256, %v1303
    %s1305 = sld [smem:[#allocation7 + $0x86]]
    %v1306 = vstv %s1305
    %v1307 = vsub.f32 %v1258, %v1306
    %s1308 = sld [smem:[#allocation7 + $0x87]]
    %v1309 = vstv %s1308
    %v1310 = vsub.f32 %v1260, %v1309
    %s1311 = sld [smem:[#allocation7 + $0x88]]
    %v1312 = vstv %s1311
    %v1313 = vsub.f32 %v1262, %v1312
    %s1314 = sld [smem:[#allocation7 + $0x89]]
    %v1315 = vstv %s1314
    %v1316 = vsub.f32 %v1264, %v1315
    %s1317 = sld [smem:[#allocation7 + $0x8a]]
    %v1318 = vstv %s1317
    %v1319 = vsub.f32 %v1266, %v1318
    %s1320 = sld [smem:[#allocation7 + $0x8b]]
    %v1321 = vstv %s1320
    %v1322 = vsub.f32 %v1268, %v1321
    %s1323 = sld [smem:[#allocation7 + $0x8c]]
    %v1324 = vstv %s1323
    %v1325 = vsub.f32 %v1270, %v1324
    %s1326 = sld [smem:[#allocation7 + $0x8d]]
    %v1327 = vstv %s1326
    %v1328 = vsub.f32 %v1272, %v1327
    %s1329 = sld [smem:[#allocation7 + $0x8e]]
    %v1330 = vstv %s1329
    %v1331 = vsub.f32 %v1274, %v1330
    %s1332 = sld [smem:[#allocation7 + $0x8f]]
    %v1333 = vstv %s1332
    %v1334 = vsub.f32 %v1276, %v1333
    %v1335 = vmul.f32 %v1289, %v1289
    %v1336 = vmul.f32 %v1292, %v1292
    %v1337 = vadd.f32 %v1335, %v1336
    %v1338 = vmul.f32 %v1295, %v1295
    %v1339 = vadd.f32 %v1337, %v1338
    %v1340 = vmul.f32 %v1298, %v1298
    %v1341 = vadd.f32 %v1339, %v1340
    %v1342 = vmul.f32 %v1301, %v1301
    %v1343 = vadd.f32 %v1341, %v1342
    %v1344 = vmul.f32 %v1304, %v1304
    %v1345 = vadd.f32 %v1343, %v1344
    %v1346 = vmul.f32 %v1307, %v1307
    %v1347 = vadd.f32 %v1345, %v1346
    %v1348 = vmul.f32 %v1310, %v1310
    %v1349 = vadd.f32 %v1347, %v1348
    %v1350 = vmul.f32 %v1313, %v1313
    %v1351 = vadd.f32 %v1349, %v1350
    %v1352 = vmul.f32 %v1316, %v1316
    %v1353 = vadd.f32 %v1351, %v1352
    %v1354 = vmul.f32 %v1319, %v1319
    %v1355 = vadd.f32 %v1353, %v1354
    %v1356 = vmul.f32 %v1322, %v1322
    %v1357 = vadd.f32 %v1355, %v1356
    %v1358 = vmul.f32 %v1325, %v1325
    %v1359 = vadd.f32 %v1357, %v1358
    %v1360 = vmul.f32 %v1328, %v1328
    %v1361 = vadd.f32 %v1359, %v1360
    %v1362 = vmul.f32 %v1331, %v1331
    %v1363 = vadd.f32 %v1361, %v1362
    %v1364 = vmul.f32 %v1334, %v1334
    %v1365 = vadd.f32 %v1363, %v1364
    %v1366 = vrsqrt.pop %v1365
    %v1367 = vmul.f32 %v1366, %v1365
    %v1368 = vmul.f32 %v1367, %v1366
    %v1369 = vmul.f32 0.5, %v1368
    %v1370 = vsub.f32 1.5, %v1369
    %v1371 = vmul.f32 %v1366, %v1370
    %v1372 = vmul.f32 %v1365, %v1371
    %vm1373 = vcmp.eq.f32.partialorder %v1365, inf
    %v1374 = vsel %vm1373, %v1365, %v1372
    %vm1375 = vcmp.eq.f32.partialorder %v1365, 0.0
    %v1376 = vand.u32 %v1365, 2147483648
    %v1377 = vsel %vm1375, %v1376, %v1374
    %v1378 = vstv %s1285
    %v1379 = vadd.f32 %v1378, %v1377
    %v1380 = vrcp.pop %v1379
    %v1381 = vmul.f32 %v1379, %v1380
    %v1382 = vsub.f32 2.0, %v1381
    %v1383 = vmul.f32 %v1380, %v1382
    %v1384 = vstv %s1286
    %v1385 = vmul.f32 %v1384, %v1383
    %v1386 = vmul.f32 %v1385, %v1289
    %v1387 = vadd.f32 %v1246, %v1386
    %v1388 = vmul.f32 %v1385, %v1292
    %v1389 = vadd.f32 %v1248, %v1388
    %v1390 = vmul.f32 %v1385, %v1295
    %v1391 = vadd.f32 %v1250, %v1390
    %v1392 = vmul.f32 %v1385, %v1298
    %v1393 = vadd.f32 %v1252, %v1392
    %v1394 = vmul.f32 %v1385, %v1301
    %v1395 = vadd.f32 %v1254, %v1394
    %v1396 = vmul.f32 %v1385, %v1304
    %v1397 = vadd.f32 %v1256, %v1396
    %v1398 = vmul.f32 %v1385, %v1307
    %v1399 = vadd.f32 %v1258, %v1398
    %v1400 = vmul.f32 %v1385, %v1310
    %v1401 = vadd.f32 %v1260, %v1400
    %v1402 = vmul.f32 %v1385, %v1313
    %v1403 = vadd.f32 %v1262, %v1402
    %v1404 = vmul.f32 %v1385, %v1316
    %v1405 = vadd.f32 %v1264, %v1404
    %v1406 = vmul.f32 %v1385, %v1319
    %v1407 = vadd.f32 %v1266, %v1406
    %v1408 = vmul.f32 %v1385, %v1322
    %v1409 = vadd.f32 %v1268, %v1408
    %v1410 = vmul.f32 %v1385, %v1325
    %v1411 = vadd.f32 %v1270, %v1410
    %v1412 = vmul.f32 %v1385, %v1328
    %v1413 = vadd.f32 %v1272, %v1412
    %v1414 = vmul.f32 %v1385, %v1331
    %v1415 = vadd.f32 %v1274, %v1414
    %v1416 = vmul.f32 %v1385, %v1334
    %v1417 = vadd.f32 %v1276, %v1416
    %v1418 = vadd.f32 %v1385, 1.0
    %v1419 = vmul.f32 %v1278, %v1418
    %s1420 = smul.f32 %s1285, %s1286
    %v1421 = vmul.f32 %v1383, %v1383
    %v1422 = vstv %s1420
    %v1423 = vmul.f32 %v1422, %v1421
    %v1424 = vadd.f32 %v1423, 1.0
    %v1425 = vmul.f32 %v1284, %v1424
    %s1426 = sld [smem:[#allocation8 + $0x9]]
    %s1427 = sld [smem:[#allocation9 + $0x9]]
    %s1428 = sld [smem:[#allocation7 + $0x90]]
    %v1429 = vstv %s1428
    %v1430 = vsub.f32 %v1387, %v1429
    %s1431 = sld [smem:[#allocation7 + $0x91]]
    %v1432 = vstv %s1431
    %v1433 = vsub.f32 %v1389, %v1432
    %s1434 = sld [smem:[#allocation7 + $0x92]]
    %v1435 = vstv %s1434
    %v1436 = vsub.f32 %v1391, %v1435
    %s1437 = sld [smem:[#allocation7 + $0x93]]
    %v1438 = vstv %s1437
    %v1439 = vsub.f32 %v1393, %v1438
    %s1440 = sld [smem:[#allocation7 + $0x94]]
    %v1441 = vstv %s1440
    %v1442 = vsub.f32 %v1395, %v1441
    %s1443 = sld [smem:[#allocation7 + $0x95]]
    %v1444 = vstv %s1443
    %v1445 = vsub.f32 %v1397, %v1444
    %s1446 = sld [smem:[#allocation7 + $0x96]]
    %v1447 = vstv %s1446
    %v1448 = vsub.f32 %v1399, %v1447
    %s1449 = sld [smem:[#allocation7 + $0x97]]
    %v1450 = vstv %s1449
    %v1451 = vsub.f32 %v1401, %v1450
    %s1452 = sld [smem:[#allocation7 + $0x98]]
    %v1453 = vstv %s1452
    %v1454 = vsub.f32 %v1403, %v1453
    %s1455 = sld [smem:[#allocation7 + $0x99]]
    %v1456 = vstv %s1455
    %v1457 = vsub.f32 %v1405, %v1456
    %s1458 = sld [smem:[#allocation7 + $0x9a]]
    %v1459 = vstv %s1458
    %v1460 = vsub.f32 %v1407, %v1459
    %s1461 = sld [smem:[#allocation7 + $0x9b]]
    %v1462 = vstv %s1461
    %v1463 = vsub.f32 %v1409, %v1462
    %s1464 = sld [smem:[#allocation7 + $0x9c]]
    %v1465 = vstv %s1464
    %v1466 = vsub.f32 %v1411, %v1465
    %s1467 = sld [smem:[#allocation7 + $0x9d]]
    %v1468 = vstv %s1467
    %v1469 = vsub.f32 %v1413, %v1468
    %s1470 = sld [smem:[#allocation7 + $0x9e]]
    %v1471 = vstv %s1470
    %v1472 = vsub.f32 %v1415, %v1471
    %s1473 = sld [smem:[#allocation7 + $0x9f]]
    %v1474 = vstv %s1473
    %v1475 = vsub.f32 %v1417, %v1474
    %v1476 = vmul.f32 %v1430, %v1430
    %v1477 = vmul.f32 %v1433, %v1433
    %v1478 = vadd.f32 %v1476, %v1477
    %v1479 = vmul.f32 %v1436, %v1436
    %v1480 = vadd.f32 %v1478, %v1479
    %v1481 = vmul.f32 %v1439, %v1439
    %v1482 = vadd.f32 %v1480, %v1481
    %v1483 = vmul.f32 %v1442, %v1442
    %v1484 = vadd.f32 %v1482, %v1483
    %v1485 = vmul.f32 %v1445, %v1445
    %v1486 = vadd.f32 %v1484, %v1485
    %v1487 = vmul.f32 %v1448, %v1448
    %v1488 = vadd.f32 %v1486, %v1487
    %v1489 = vmul.f32 %v1451, %v1451
    %v1490 = vadd.f32 %v1488, %v1489
    %v1491 = vmul.f32 %v1454, %v1454
    %v1492 = vadd.f32 %v1490, %v1491
    %v1493 = vmul.f32 %v1457, %v1457
    %v1494 = vadd.f32 %v1492, %v1493
    %v1495 = vmul.f32 %v1460, %v1460
    %v1496 = vadd.f32 %v1494, %v1495
    %v1497 = vmul.f32 %v1463, %v1463
    %v1498 = vadd.f32 %v1496, %v1497
    %v1499 = vmul.f32 %v1466, %v1466
    %v1500 = vadd.f32 %v1498, %v1499
    %v1501 = vmul.f32 %v1469, %v1469
    %v1502 = vadd.f32 %v1500, %v1501
    %v1503 = vmul.f32 %v1472, %v1472
    %v1504 = vadd.f32 %v1502, %v1503
    %v1505 = vmul.f32 %v1475, %v1475
    %v1506 = vadd.f32 %v1504, %v1505
    %v1507 = vrsqrt.pop %v1506
    %v1508 = vmul.f32 %v1507, %v1506
    %v1509 = vmul.f32 %v1508, %v1507
    %v1510 = vmul.f32 0.5, %v1509
    %v1511 = vsub.f32 1.5, %v1510
    %v1512 = vmul.f32 %v1507, %v1511
    %v1513 = vmul.f32 %v1506, %v1512
    %vm1514 = vcmp.eq.f32.partialorder %v1506, inf
    %v1515 = vsel %vm1514, %v1506, %v1513
    %vm1516 = vcmp.eq.f32.partialorder %v1506, 0.0
    %v1517 = vand.u32 %v1506, 2147483648
    %v1518 = vsel %vm1516, %v1517, %v1515
    %v1519 = vstv %s1426
    %v1520 = vadd.f32 %v1519, %v1518
    %v1521 = vrcp.pop %v1520
    %v1522 = vmul.f32 %v1520, %v1521
    %v1523 = vsub.f32 2.0, %v1522
    %v1524 = vmul.f32 %v1521, %v1523
    %v1525 = vstv %s1427
    %v1526 = vmul.f32 %v1525, %v1524
    %v1527 = vmul.f32 %v1526, %v1430
    %v1528 = vadd.f32 %v1387, %v1527
    %v1529 = vmul.f32 %v1526, %v1433
    %v1530 = vadd.f32 %v1389, %v1529
    %v1531 = vmul.f32 %v1526, %v1436
    %v1532 = vadd.f32 %v1391, %v1531
    %v1533 = vmul.f32 %v1526, %v1439
    %v1534 = vadd.f32 %v1393, %v1533
    %v1535 = vmul.f32 %v1526, %v1442
    %v1536 = vadd.f32 %v1395, %v1535
    %v1537 = vmul.f32 %v1526, %v1445
    %v1538 = vadd.f32 %v1397, %v1537
    %v1539 = vmul.f32 %v1526, %v1448
    %v1540 = vadd.f32 %v1399, %v1539
    %v1541 = vmul.f32 %v1526, %v1451
    %v1542 = vadd.f32 %v1401, %v1541
    %v1543 = vmul.f32 %v1526, %v1454
    %v1544 = vadd.f32 %v1403, %v1543
    %v1545 = vmul.f32 %v1526, %v1457
    %v1546 = vadd.f32 %v1405, %v1545
    %v1547 = vmul.f32 %v1526, %v1460
    %v1548 = vadd.f32 %v1407, %v1547
    %v1549 = vmul.f32 %v1526, %v1463
    %v1550 = vadd.f32 %v1409, %v1549
    %v1551 = vmul.f32 %v1526, %v1466
    %v1552 = vadd.f32 %v1411, %v1551
    %v1553 = vmul.f32 %v1526, %v1469
    %v1554 = vadd.f32 %v1413, %v1553
    %v1555 = vmul.f32 %v1526, %v1472
    %v1556 = vadd.f32 %v1415, %v1555
    %v1557 = vmul.f32 %v1526, %v1475
    %v1558 = vadd.f32 %v1417, %v1557
    %v1559 = vadd.f32 %v1526, 1.0
    %v1560 = vmul.f32 %v1419, %v1559
    %s1561 = smul.f32 %s1426, %s1427
    %v1562 = vmul.f32 %v1524, %v1524
    %v1563 = vstv %s1561
    %v1564 = vmul.f32 %v1563, %v1562
    %v1565 = vadd.f32 %v1564, 1.0
    %v1566 = vmul.f32 %v1425, %v1565
    %s1567 = sld [smem:[#allocation8 + $0xa]]
    %s1568 = sld [smem:[#allocation9 + $0xa]]
    %s1569 = sld [smem:[#allocation7 + $0xa0]]
    %v1570 = vstv %s1569
    %v1571 = vsub.f32 %v1528, %v1570
    %s1572 = sld [smem:[#allocation7 + $0xa1]]
    %v1573 = vstv %s1572
    %v1574 = vsub.f32 %v1530, %v1573
    %s1575 = sld [smem:[#allocation7 + $0xa2]]
    %v1576 = vstv %s1575
    %v1577 = vsub.f32 %v1532, %v1576
    %s1578 = sld [smem:[#allocation7 + $0xa3]]
    %v1579 = vstv %s1578
    %v1580 = vsub.f32 %v1534, %v1579
    %s1581 = sld [smem:[#allocation7 + $0xa4]]
    %v1582 = vstv %s1581
    %v1583 = vsub.f32 %v1536, %v1582
    %s1584 = sld [smem:[#allocation7 + $0xa5]]
    %v1585 = vstv %s1584
    %v1586 = vsub.f32 %v1538, %v1585
    %s1587 = sld [smem:[#allocation7 + $0xa6]]
    %v1588 = vstv %s1587
    %v1589 = vsub.f32 %v1540, %v1588
    %s1590 = sld [smem:[#allocation7 + $0xa7]]
    %v1591 = vstv %s1590
    %v1592 = vsub.f32 %v1542, %v1591
    %s1593 = sld [smem:[#allocation7 + $0xa8]]
    %v1594 = vstv %s1593
    %v1595 = vsub.f32 %v1544, %v1594
    %s1596 = sld [smem:[#allocation7 + $0xa9]]
    %v1597 = vstv %s1596
    %v1598 = vsub.f32 %v1546, %v1597
    %s1599 = sld [smem:[#allocation7 + $0xaa]]
    %v1600 = vstv %s1599
    %v1601 = vsub.f32 %v1548, %v1600
    %s1602 = sld [smem:[#allocation7 + $0xab]]
    %v1603 = vstv %s1602
    %v1604 = vsub.f32 %v1550, %v1603
    %s1605 = sld [smem:[#allocation7 + $0xac]]
    %v1606 = vstv %s1605
    %v1607 = vsub.f32 %v1552, %v1606
    %s1608 = sld [smem:[#allocation7 + $0xad]]
    %v1609 = vstv %s1608
    %v1610 = vsub.f32 %v1554, %v1609
    %s1611 = sld [smem:[#allocation7 + $0xae]]
    %v1612 = vstv %s1611
    %v1613 = vsub.f32 %v1556, %v1612
    %s1614 = sld [smem:[#allocation7 + $0xaf]]
    %v1615 = vstv %s1614
    %v1616 = vsub.f32 %v1558, %v1615
    %v1617 = vmul.f32 %v1571, %v1571
    %v1618 = vmul.f32 %v1574, %v1574
    %v1619 = vadd.f32 %v1617, %v1618
    %v1620 = vmul.f32 %v1577, %v1577
    %v1621 = vadd.f32 %v1619, %v1620
    %v1622 = vmul.f32 %v1580, %v1580
    %v1623 = vadd.f32 %v1621, %v1622
    %v1624 = vmul.f32 %v1583, %v1583
    %v1625 = vadd.f32 %v1623, %v1624
    %v1626 = vmul.f32 %v1586, %v1586
    %v1627 = vadd.f32 %v1625, %v1626
    %v1628 = vmul.f32 %v1589, %v1589
    %v1629 = vadd.f32 %v1627, %v1628
    %v1630 = vmul.f32 %v1592, %v1592
    %v1631 = vadd.f32 %v1629, %v1630
    %v1632 = vmul.f32 %v1595, %v1595
    %v1633 = vadd.f32 %v1631, %v1632
    %v1634 = vmul.f32 %v1598, %v1598
    %v1635 = vadd.f32 %v1633, %v1634
    %v1636 = vmul.f32 %v1601, %v1601
    %v1637 = vadd.f32 %v1635, %v1636
    %v1638 = vmul.f32 %v1604, %v1604
    %v1639 = vadd.f32 %v1637, %v1638
    %v1640 = vmul.f32 %v1607, %v1607
    %v1641 = vadd.f32 %v1639, %v1640
    %v1642 = vmul.f32 %v1610, %v1610
    %v1643 = vadd.f32 %v1641, %v1642
    %v1644 = vmul.f32 %v1613, %v1613
    %v1645 = vadd.f32 %v1643, %v1644
    %v1646 = vmul.f32 %v1616, %v1616
    %v1647 = vadd.f32 %v1645, %v1646
    %v1648 = vrsqrt.pop %v1647
    %v1649 = vmul.f32 %v1648, %v1647
    %v1650 = vmul.f32 %v1649, %v1648
    %v1651 = vmul.f32 0.5, %v1650
    %v1652 = vsub.f32 1.5, %v1651
    %v1653 = vmul.f32 %v1648, %v1652
    %v1654 = vmul.f32 %v1647, %v1653
    %vm1655 = vcmp.eq.f32.partialorder %v1647, inf
    %v1656 = vsel %vm1655, %v1647, %v1654
    %vm1657 = vcmp.eq.f32.partialorder %v1647, 0.0
    %v1658 = vand.u32 %v1647, 2147483648
    %v1659 = vsel %vm1657, %v1658, %v1656
    %v1660 = vstv %s1567
    %v1661 = vadd.f32 %v1660, %v1659
    %v1662 = vrcp.pop %v1661
    %v1663 = vmul.f32 %v1661, %v1662
    %v1664 = vsub.f32 2.0, %v1663
    %v1665 = vmul.f32 %v1662, %v1664
    %v1666 = vstv %s1568
    %v1667 = vmul.f32 %v1666, %v1665
    %v1668 = vmul.f32 %v1667, %v1571
    %v1669 = vadd.f32 %v1528, %v1668
    %v1670 = vmul.f32 %v1667, %v1574
    %v1671 = vadd.f32 %v1530, %v1670
    %v1672 = vmul.f32 %v1667, %v1577
    %v1673 = vadd.f32 %v1532, %v1672
    %v1674 = vmul.f32 %v1667, %v1580
    %v1675 = vadd.f32 %v1534, %v1674
    %v1676 = vmul.f32 %v1667, %v1583
    %v1677 = vadd.f32 %v1536, %v1676
    %v1678 = vmul.f32 %v1667, %v1586
    %v1679 = vadd.f32 %v1538, %v1678
    %v1680 = vmul.f32 %v1667, %v1589
    %v1681 = vadd.f32 %v1540, %v1680
    %v1682 = vmul.f32 %v1667, %v1592
    %v1683 = vadd.f32 %v1542, %v1682
    %v1684 = vmul.f32 %v1667, %v1595
    %v1685 = vadd.f32 %v1544, %v1684
    %v1686 = vmul.f32 %v1667, %v1598
    %v1687 = vadd.f32 %v1546, %v1686
    %v1688 = vmul.f32 %v1667, %v1601
    %v1689 = vadd.f32 %v1548, %v1688
    %v1690 = vmul.f32 %v1667, %v1604
    %v1691 = vadd.f32 %v1550, %v1690
    %v1692 = vmul.f32 %v1667, %v1607
    %v1693 = vadd.f32 %v1552, %v1692
    %v1694 = vmul.f32 %v1667, %v1610
    %v1695 = vadd.f32 %v1554, %v1694
    %v1696 = vmul.f32 %v1667, %v1613
    %v1697 = vadd.f32 %v1556, %v1696
    %v1698 = vmul.f32 %v1667, %v1616
    %v1699 = vadd.f32 %v1558, %v1698
    %v1700 = vadd.f32 %v1667, 1.0
    %v1701 = vmul.f32 %v1560, %v1700
    %s1702 = smul.f32 %s1567, %s1568
    %v1703 = vmul.f32 %v1665, %v1665
    %v1704 = vstv %s1702
    %v1705 = vmul.f32 %v1704, %v1703
    %v1706 = vadd.f32 %v1705, 1.0
    %v1707 = vmul.f32 %v1566, %v1706
    %s1708 = sld [smem:[#allocation8 + $0xb]]
    %s1709 = sld [smem:[#allocation9 + $0xb]]
    %s1710 = sld [smem:[#allocation7 + $0xb0]]
    %v1711 = vstv %s1710
    %v1712 = vsub.f32 %v1669, %v1711
    %s1713 = sld [smem:[#allocation7 + $0xb1]]
    %v1714 = vstv %s1713
    %v1715 = vsub.f32 %v1671, %v1714
    %s1716 = sld [smem:[#allocation7 + $0xb2]]
    %v1717 = vstv %s1716
    %v1718 = vsub.f32 %v1673, %v1717
    %s1719 = sld [smem:[#allocation7 + $0xb3]]
    %v1720 = vstv %s1719
    %v1721 = vsub.f32 %v1675, %v1720
    %s1722 = sld [smem:[#allocation7 + $0xb4]]
    %v1723 = vstv %s1722
    %v1724 = vsub.f32 %v1677, %v1723
    %s1725 = sld [smem:[#allocation7 + $0xb5]]
    %v1726 = vstv %s1725
    %v1727 = vsub.f32 %v1679, %v1726
    %s1728 = sld [smem:[#allocation7 + $0xb6]]
    %v1729 = vstv %s1728
    %v1730 = vsub.f32 %v1681, %v1729
    %s1731 = sld [smem:[#allocation7 + $0xb7]]
    %v1732 = vstv %s1731
    %v1733 = vsub.f32 %v1683, %v1732
    %s1734 = sld [smem:[#allocation7 + $0xb8]]
    %v1735 = vstv %s1734
    %v1736 = vsub.f32 %v1685, %v1735
    %s1737 = sld [smem:[#allocation7 + $0xb9]]
    %v1738 = vstv %s1737
    %v1739 = vsub.f32 %v1687, %v1738
    %s1740 = sld [smem:[#allocation7 + $0xba]]
    %v1741 = vstv %s1740
    %v1742 = vsub.f32 %v1689, %v1741
    %s1743 = sld [smem:[#allocation7 + $0xbb]]
    %v1744 = vstv %s1743
    %v1745 = vsub.f32 %v1691, %v1744
    %s1746 = sld [smem:[#allocation7 + $0xbc]]
    %v1747 = vstv %s1746
    %v1748 = vsub.f32 %v1693, %v1747
    %s1749 = sld [smem:[#allocation7 + $0xbd]]
    %v1750 = vstv %s1749
    %v1751 = vsub.f32 %v1695, %v1750
    %s1752 = sld [smem:[#allocation7 + $0xbe]]
    %v1753 = vstv %s1752
    %v1754 = vsub.f32 %v1697, %v1753
    %s1755 = sld [smem:[#allocation7 + $0xbf]]
    %v1756 = vstv %s1755
    %v1757 = vsub.f32 %v1699, %v1756
    %v1758 = vmul.f32 %v1712, %v1712
    %v1759 = vmul.f32 %v1715, %v1715
    %v1760 = vadd.f32 %v1758, %v1759
    %v1761 = vmul.f32 %v1718, %v1718
    %v1762 = vadd.f32 %v1760, %v1761
    %v1763 = vmul.f32 %v1721, %v1721
    %v1764 = vadd.f32 %v1762, %v1763
    %v1765 = vmul.f32 %v1724, %v1724
    %v1766 = vadd.f32 %v1764, %v1765
    %v1767 = vmul.f32 %v1727, %v1727
    %v1768 = vadd.f32 %v1766, %v1767
    %v1769 = vmul.f32 %v1730, %v1730
    %v1770 = vadd.f32 %v1768, %v1769
    %v1771 = vmul.f32 %v1733, %v1733
    %v1772 = vadd.f32 %v1770, %v1771
    %v1773 = vmul.f32 %v1736, %v1736
    %v1774 = vadd.f32 %v1772, %v1773
    %v1775 = vmul.f32 %v1739, %v1739
    %v1776 = vadd.f32 %v1774, %v1775
    %v1777 = vmul.f32 %v1742, %v1742
    %v1778 = vadd.f32 %v1776, %v1777
    %v1779 = vmul.f32 %v1745, %v1745
    %v1780 = vadd.f32 %v1778, %v1779
    %v1781 = vmul.f32 %v1748, %v1748
    %v1782 = vadd.f32 %v1780, %v1781
    %v1783 = vmul.f32 %v1751, %v1751
    %v1784 = vadd.f32 %v1782, %v1783
    %v1785 = vmul.f32 %v1754, %v1754
    %v1786 = vadd.f32 %v1784, %v1785
    %v1787 = vmul.f32 %v1757, %v1757
    %v1788 = vadd.f32 %v1786, %v1787
    %v1789 = vrsqrt.pop %v1788
    %v1790 = vmul.f32 %v1789, %v1788
    %v1791 = vmul.f32 %v1790, %v1789
    %v1792 = vmul.f32 0.5, %v1791
    %v1793 = vsub.f32 1.5, %v1792
    %v1794 = vmul.f32 %v1789, %v1793
    %v1795 = vmul.f32 %v1788, %v1794
    %vm1796 = vcmp.eq.f32.partialorder %v1788, inf
    %v1797 = vsel %vm1796, %v1788, %v1795
    %vm1798 = vcmp.eq.f32.partialorder %v1788, 0.0
    %v1799 = vand.u32 %v1788, 2147483648
    %v1800 = vsel %vm1798, %v1799, %v1797
    %v1801 = vstv %s1708
    %v1802 = vadd.f32 %v1801, %v1800
    %v1803 = vrcp.pop %v1802
    %v1804 = vmul.f32 %v1802, %v1803
    %v1805 = vsub.f32 2.0, %v1804
    %v1806 = vmul.f32 %v1803, %v1805
    %v1807 = vstv %s1709
    %v1808 = vmul.f32 %v1807, %v1806
    %v1809 = vmul.f32 %v1808, %v1712
    %v1810 = vadd.f32 %v1669, %v1809
    %v1811 = vmul.f32 %v1808, %v1715
    %v1812 = vadd.f32 %v1671, %v1811
    %v1813 = vmul.f32 %v1808, %v1718
    %v1814 = vadd.f32 %v1673, %v1813
    %v1815 = vmul.f32 %v1808, %v1721
    %v1816 = vadd.f32 %v1675, %v1815
    %v1817 = vmul.f32 %v1808, %v1724
    %v1818 = vadd.f32 %v1677, %v1817
    %v1819 = vmul.f32 %v1808, %v1727
    %v1820 = vadd.f32 %v1679, %v1819
    %v1821 = vmul.f32 %v1808, %v1730
    %v1822 = vadd.f32 %v1681, %v1821
    %v1823 = vmul.f32 %v1808, %v1733
    %v1824 = vadd.f32 %v1683, %v1823
    %v1825 = vmul.f32 %v1808, %v1736
    %v1826 = vadd.f32 %v1685, %v1825
    %v1827 = vmul.f32 %v1808, %v1739
    %v1828 = vadd.f32 %v1687, %v1827
    %v1829 = vmul.f32 %v1808, %v1742
    %v1830 = vadd.f32 %v1689, %v1829
    %v1831 = vmul.f32 %v1808, %v1745
    %v1832 = vadd.f32 %v1691, %v1831
    %v1833 = vmul.f32 %v1808, %v1748
    %v1834 = vadd.f32 %v1693, %v1833
    %v1835 = vmul.f32 %v1808, %v1751
    %v1836 = vadd.f32 %v1695, %v1835
    %v1837 = vmul.f32 %v1808, %v1754
    %v1838 = vadd.f32 %v1697, %v1837
    %v1839 = vmul.f32 %v1808, %v1757
    %v1840 = vadd.f32 %v1699, %v1839
    %v1841 = vadd.f32 %v1808, 1.0
    %v1842 = vmul.f32 %v1701, %v1841
    %s1843 = smul.f32 %s1708, %s1709
    %v1844 = vmul.f32 %v1806, %v1806
    %v1845 = vstv %s1843
    %v1846 = vmul.f32 %v1845, %v1844
    %v1847 = vadd.f32 %v1846, 1.0
    %v1848 = vmul.f32 %v1707, %v1847
    %v1849 = vmul.f32 %v1810, %v1810
    %v1850 = vmul.f32 %v1812, %v1812
    %v1851 = vadd.f32 %v1849, %v1850
    %v1852 = vmul.f32 %v1814, %v1814
    %v1853 = vadd.f32 %v1851, %v1852
    %v1854 = vmul.f32 %v1816, %v1816
    %v1855 = vadd.f32 %v1853, %v1854
    %v1856 = vmul.f32 %v1818, %v1818
    %v1857 = vadd.f32 %v1855, %v1856
    %v1858 = vmul.f32 %v1820, %v1820
    %v1859 = vadd.f32 %v1857, %v1858
    %v1860 = vmul.f32 %v1822, %v1822
    %v1861 = vadd.f32 %v1859, %v1860
    %v1862 = vmul.f32 %v1824, %v1824
    %v1863 = vadd.f32 %v1861, %v1862
    %v1864 = vmul.f32 %v1826, %v1826
    %v1865 = vadd.f32 %v1863, %v1864
    %v1866 = vmul.f32 %v1828, %v1828
    %v1867 = vadd.f32 %v1865, %v1866
    %v1868 = vmul.f32 %v1830, %v1830
    %v1869 = vadd.f32 %v1867, %v1868
    %v1870 = vmul.f32 %v1832, %v1832
    %v1871 = vadd.f32 %v1869, %v1870
    %v1872 = vmul.f32 %v1834, %v1834
    %v1873 = vadd.f32 %v1871, %v1872
    %v1874 = vmul.f32 %v1836, %v1836
    %v1875 = vadd.f32 %v1873, %v1874
    %v1876 = vmul.f32 %v1838, %v1838
    %v1877 = vadd.f32 %v1875, %v1876
    %v1878 = vmul.f32 %v1840, %v1840
    %v1879 = vadd.f32 %v1877, %v1878
    %v1880 = vlog2.pop %v1842
    %v1881 = vmul.f32 %v1880, 0.6931472
    %v1882 = vmul.f32 %v1881, 15.0
    %v1883 = vlog2.pop %v1848
    %v1884 = vmul.f32 %v1883, 0.6931472
    %v1885 = vadd.f32 %v1882, %v1884
    %v1886 = vmul.f32 %v1879, 0.5
    %v1887 = vsub.f32 -14.703016, %v1886
    %v1888 = vadd.f32 %v1887, %v1885
    %vm1889 = vcmp.ne.f32.partialorder %v1888, %v1888
    %v1890 = vsel %vm1889, -inf, %v1888
    %s1891 = scalar_lea.vmem [#allocation11], 8
    %1892 = vst [vmem:[%s1891] sm:$0xff] %v1890
    %v1893 = vld [vmem:[#allocation2] sm:$0xff]
    %v1894 = vld [vmem:[%s72] sm:$0xff]
    %v1895 = vld [vmem:[%s74] sm:$0xff]
    %v1896 = vld [vmem:[%s76] sm:$0xff]
    %v1897 = vld [vmem:[%s78] sm:$0xff]
    %v1898 = vld [vmem:[%s80] sm:$0xff]
    %v1899 = vld [vmem:[%s82] sm:$0xff]
    %v1900 = vld [vmem:[%s84] sm:$0xff]
    %v1901 = vld [vmem:[%s86] sm:$0xff]
    %v1902 = vld [vmem:[%s88] sm:$0xff]
    %v1903 = vld [vmem:[%s90] sm:$0xff]
    %v1904 = vld [vmem:[%s92] sm:$0xff]
    %v1905 = vld [vmem:[%s94] sm:$0xff]
    %v1906 = vld [vmem:[%s96] sm:$0xff]
    %v1907 = vld [vmem:[%s98] sm:$0xff]
    %v1908 = vld [vmem:[%s100] sm:$0xff]
    %s1909 = sld [smem:[#allocation8 + $0xc]]
    %s1910 = sld [smem:[#allocation9 + $0xc]]
    %s1911 = sld [smem:[#allocation7 + $0xc0]]
    %v1912 = vstv %s1911
    %v1913 = vsub.f32 %v1893, %v1912
    %s1914 = sld [smem:[#allocation7 + $0xc1]]
    %v1915 = vstv %s1914
    %v1916 = vsub.f32 %v1894, %v1915
    %s1917 = sld [smem:[#allocation7 + $0xc2]]
    %v1918 = vstv %s1917
    %v1919 = vsub.f32 %v1895, %v1918
    %s1920 = sld [smem:[#allocation7 + $0xc3]]
    %v1921 = vstv %s1920
    %v1922 = vsub.f32 %v1896, %v1921
    %s1923 = sld [smem:[#allocation7 + $0xc4]]
    %v1924 = vstv %s1923
    %v1925 = vsub.f32 %v1897, %v1924
    %s1926 = sld [smem:[#allocation7 + $0xc5]]
    %v1927 = vstv %s1926
    %v1928 = vsub.f32 %v1898, %v1927
    %s1929 = sld [smem:[#allocation7 + $0xc6]]
    %v1930 = vstv %s1929
    %v1931 = vsub.f32 %v1899, %v1930
    %s1932 = sld [smem:[#allocation7 + $0xc7]]
    %v1933 = vstv %s1932
    %v1934 = vsub.f32 %v1900, %v1933
    %s1935 = sld [smem:[#allocation7 + $0xc8]]
    %v1936 = vstv %s1935
    %v1937 = vsub.f32 %v1901, %v1936
    %s1938 = sld [smem:[#allocation7 + $0xc9]]
    %v1939 = vstv %s1938
    %v1940 = vsub.f32 %v1902, %v1939
    %s1941 = sld [smem:[#allocation7 + $0xca]]
    %v1942 = vstv %s1941
    %v1943 = vsub.f32 %v1903, %v1942
    %s1944 = sld [smem:[#allocation7 + $0xcb]]
    %v1945 = vstv %s1944
    %v1946 = vsub.f32 %v1904, %v1945
    %s1947 = sld [smem:[#allocation7 + $0xcc]]
    %v1948 = vstv %s1947
    %v1949 = vsub.f32 %v1905, %v1948
    %s1950 = sld [smem:[#allocation7 + $0xcd]]
    %v1951 = vstv %s1950
    %v1952 = vsub.f32 %v1906, %v1951
    %s1953 = sld [smem:[#allocation7 + $0xce]]
    %v1954 = vstv %s1953
    %v1955 = vsub.f32 %v1907, %v1954
    %s1956 = sld [smem:[#allocation7 + $0xcf]]
    %v1957 = vstv %s1956
    %v1958 = vsub.f32 %v1908, %v1957
    %v1959 = vmul.f32 %v1913, %v1913
    %v1960 = vmul.f32 %v1916, %v1916
    %v1961 = vadd.f32 %v1959, %v1960
    %v1962 = vmul.f32 %v1919, %v1919
    %v1963 = vadd.f32 %v1961, %v1962
    %v1964 = vmul.f32 %v1922, %v1922
    %v1965 = vadd.f32 %v1963, %v1964
    %v1966 = vmul.f32 %v1925, %v1925
    %v1967 = vadd.f32 %v1965, %v1966
    %v1968 = vmul.f32 %v1928, %v1928
    %v1969 = vadd.f32 %v1967, %v1968
    %v1970 = vmul.f32 %v1931, %v1931
    %v1971 = vadd.f32 %v1969, %v1970
    %v1972 = vmul.f32 %v1934, %v1934
    %v1973 = vadd.f32 %v1971, %v1972
    %v1974 = vmul.f32 %v1937, %v1937
    %v1975 = vadd.f32 %v1973, %v1974
    %v1976 = vmul.f32 %v1940, %v1940
    %v1977 = vadd.f32 %v1975, %v1976
    %v1978 = vmul.f32 %v1943, %v1943
    %v1979 = vadd.f32 %v1977, %v1978
    %v1980 = vmul.f32 %v1946, %v1946
    %v1981 = vadd.f32 %v1979, %v1980
    %v1982 = vmul.f32 %v1949, %v1949
    %v1983 = vadd.f32 %v1981, %v1982
    %v1984 = vmul.f32 %v1952, %v1952
    %v1985 = vadd.f32 %v1983, %v1984
    %v1986 = vmul.f32 %v1955, %v1955
    %v1987 = vadd.f32 %v1985, %v1986
    %v1988 = vmul.f32 %v1958, %v1958
    %v1989 = vadd.f32 %v1987, %v1988
    %v1990 = vrsqrt.pop %v1989
    %v1991 = vmul.f32 %v1990, %v1989
    %v1992 = vmul.f32 %v1991, %v1990
    %v1993 = vmul.f32 0.5, %v1992
    %v1994 = vsub.f32 1.5, %v1993
    %v1995 = vmul.f32 %v1990, %v1994
    %v1996 = vmul.f32 %v1989, %v1995
    %vm1997 = vcmp.eq.f32.partialorder %v1989, inf
    %v1998 = vsel %vm1997, %v1989, %v1996
    %vm1999 = vcmp.eq.f32.partialorder %v1989, 0.0
    %v2000 = vand.u32 %v1989, 2147483648
    %v2001 = vsel %vm1999, %v2000, %v1998
    %v2002 = vstv %s1909
    %v2003 = vadd.f32 %v2002, %v2001
    %v2004 = vrcp.pop %v2003
    %v2005 = vmul.f32 %v2003, %v2004
    %v2006 = vsub.f32 2.0, %v2005
    %v2007 = vmul.f32 %v2004, %v2006
    %v2008 = vstv %s1910
    %v2009 = vmul.f32 %v2008, %v2007
    %v2010 = vmul.f32 %v2009, %v1913
    %v2011 = vadd.f32 %v1893, %v2010
    %v2012 = vmul.f32 %v2009, %v1916
    %v2013 = vadd.f32 %v1894, %v2012
    %v2014 = vmul.f32 %v2009, %v1919
    %v2015 = vadd.f32 %v1895, %v2014
    %v2016 = vmul.f32 %v2009, %v1922
    %v2017 = vadd.f32 %v1896, %v2016
    %v2018 = vmul.f32 %v2009, %v1925
    %v2019 = vadd.f32 %v1897, %v2018
    %v2020 = vmul.f32 %v2009, %v1928
    %v2021 = vadd.f32 %v1898, %v2020
    %v2022 = vmul.f32 %v2009, %v1931
    %v2023 = vadd.f32 %v1899, %v2022
    %v2024 = vmul.f32 %v2009, %v1934
    %v2025 = vadd.f32 %v1900, %v2024
    %v2026 = vmul.f32 %v2009, %v1937
    %v2027 = vadd.f32 %v1901, %v2026
    %v2028 = vmul.f32 %v2009, %v1940
    %v2029 = vadd.f32 %v1902, %v2028
    %v2030 = vmul.f32 %v2009, %v1943
    %v2031 = vadd.f32 %v1903, %v2030
    %v2032 = vmul.f32 %v2009, %v1946
    %v2033 = vadd.f32 %v1904, %v2032
    %v2034 = vmul.f32 %v2009, %v1949
    %v2035 = vadd.f32 %v1905, %v2034
    %v2036 = vmul.f32 %v2009, %v1952
    %v2037 = vadd.f32 %v1906, %v2036
    %v2038 = vmul.f32 %v2009, %v1955
    %v2039 = vadd.f32 %v1907, %v2038
    %v2040 = vmul.f32 %v2009, %v1958
    %v2041 = vadd.f32 %v1908, %v2040
    %v2042 = vadd.f32 %v2009, 1.0
    %s2043 = smul.f32 %s1909, %s1910
    %v2044 = vmul.f32 %v2007, %v2007
    %v2045 = vstv %s2043
    %v2046 = vmul.f32 %v2045, %v2044
    %v2047 = vadd.f32 %v2046, 1.0
    %s2048 = sld [smem:[#allocation8 + $0xd]]
    %s2049 = sld [smem:[#allocation9 + $0xd]]
    %s2050 = sld [smem:[#allocation7 + $0xd0]]
    %v2051 = vstv %s2050
    %v2052 = vsub.f32 %v2011, %v2051
    %s2053 = sld [smem:[#allocation7 + $0xd1]]
    %v2054 = vstv %s2053
    %v2055 = vsub.f32 %v2013, %v2054
    %s2056 = sld [smem:[#allocation7 + $0xd2]]
    %v2057 = vstv %s2056
    %v2058 = vsub.f32 %v2015, %v2057
    %s2059 = sld [smem:[#allocation7 + $0xd3]]
    %v2060 = vstv %s2059
    %v2061 = vsub.f32 %v2017, %v2060
    %s2062 = sld [smem:[#allocation7 + $0xd4]]
    %v2063 = vstv %s2062
    %v2064 = vsub.f32 %v2019, %v2063
    %s2065 = sld [smem:[#allocation7 + $0xd5]]
    %v2066 = vstv %s2065
    %v2067 = vsub.f32 %v2021, %v2066
    %s2068 = sld [smem:[#allocation7 + $0xd6]]
    %v2069 = vstv %s2068
    %v2070 = vsub.f32 %v2023, %v2069
    %s2071 = sld [smem:[#allocation7 + $0xd7]]
    %v2072 = vstv %s2071
    %v2073 = vsub.f32 %v2025, %v2072
    %s2074 = sld [smem:[#allocation7 + $0xd8]]
    %v2075 = vstv %s2074
    %v2076 = vsub.f32 %v2027, %v2075
    %s2077 = sld [smem:[#allocation7 + $0xd9]]
    %v2078 = vstv %s2077
    %v2079 = vsub.f32 %v2029, %v2078
    %s2080 = sld [smem:[#allocation7 + $0xda]]
    %v2081 = vstv %s2080
    %v2082 = vsub.f32 %v2031, %v2081
    %s2083 = sld [smem:[#allocation7 + $0xdb]]
    %v2084 = vstv %s2083
    %v2085 = vsub.f32 %v2033, %v2084
    %s2086 = sld [smem:[#allocation7 + $0xdc]]
    %v2087 = vstv %s2086
    %v2088 = vsub.f32 %v2035, %v2087
    %s2089 = sld [smem:[#allocation7 + $0xdd]]
    %v2090 = vstv %s2089
    %v2091 = vsub.f32 %v2037, %v2090
    %s2092 = sld [smem:[#allocation7 + $0xde]]
    %v2093 = vstv %s2092
    %v2094 = vsub.f32 %v2039, %v2093
    %s2095 = sld [smem:[#allocation7 + $0xdf]]
    %v2096 = vstv %s2095
    %v2097 = vsub.f32 %v2041, %v2096
    %v2098 = vmul.f32 %v2052, %v2052
    %v2099 = vmul.f32 %v2055, %v2055
    %v2100 = vadd.f32 %v2098, %v2099
    %v2101 = vmul.f32 %v2058, %v2058
    %v2102 = vadd.f32 %v2100, %v2101
    %v2103 = vmul.f32 %v2061, %v2061
    %v2104 = vadd.f32 %v2102, %v2103
    %v2105 = vmul.f32 %v2064, %v2064
    %v2106 = vadd.f32 %v2104, %v2105
    %v2107 = vmul.f32 %v2067, %v2067
    %v2108 = vadd.f32 %v2106, %v2107
    %v2109 = vmul.f32 %v2070, %v2070
    %v2110 = vadd.f32 %v2108, %v2109
    %v2111 = vmul.f32 %v2073, %v2073
    %v2112 = vadd.f32 %v2110, %v2111
    %v2113 = vmul.f32 %v2076, %v2076
    %v2114 = vadd.f32 %v2112, %v2113
    %v2115 = vmul.f32 %v2079, %v2079
    %v2116 = vadd.f32 %v2114, %v2115
    %v2117 = vmul.f32 %v2082, %v2082
    %v2118 = vadd.f32 %v2116, %v2117
    %v2119 = vmul.f32 %v2085, %v2085
    %v2120 = vadd.f32 %v2118, %v2119
    %v2121 = vmul.f32 %v2088, %v2088
    %v2122 = vadd.f32 %v2120, %v2121
    %v2123 = vmul.f32 %v2091, %v2091
    %v2124 = vadd.f32 %v2122, %v2123
    %v2125 = vmul.f32 %v2094, %v2094
    %v2126 = vadd.f32 %v2124, %v2125
    %v2127 = vmul.f32 %v2097, %v2097
    %v2128 = vadd.f32 %v2126, %v2127
    %v2129 = vrsqrt.pop %v2128
    %v2130 = vmul.f32 %v2129, %v2128
    %v2131 = vmul.f32 %v2130, %v2129
    %v2132 = vmul.f32 0.5, %v2131
    %v2133 = vsub.f32 1.5, %v2132
    %v2134 = vmul.f32 %v2129, %v2133
    %v2135 = vmul.f32 %v2128, %v2134
    %vm2136 = vcmp.eq.f32.partialorder %v2128, inf
    %v2137 = vsel %vm2136, %v2128, %v2135
    %vm2138 = vcmp.eq.f32.partialorder %v2128, 0.0
    %v2139 = vand.u32 %v2128, 2147483648
    %v2140 = vsel %vm2138, %v2139, %v2137
    %v2141 = vstv %s2048
    %v2142 = vadd.f32 %v2141, %v2140
    %v2143 = vrcp.pop %v2142
    %v2144 = vmul.f32 %v2142, %v2143
    %v2145 = vsub.f32 2.0, %v2144
    %v2146 = vmul.f32 %v2143, %v2145
    %v2147 = vstv %s2049
    %v2148 = vmul.f32 %v2147, %v2146
    %v2149 = vmul.f32 %v2148, %v2052
    %v2150 = vadd.f32 %v2011, %v2149
    %v2151 = vmul.f32 %v2148, %v2055
    %v2152 = vadd.f32 %v2013, %v2151
    %v2153 = vmul.f32 %v2148, %v2058
    %v2154 = vadd.f32 %v2015, %v2153
    %v2155 = vmul.f32 %v2148, %v2061
    %v2156 = vadd.f32 %v2017, %v2155
    %v2157 = vmul.f32 %v2148, %v2064
    %v2158 = vadd.f32 %v2019, %v2157
    %v2159 = vmul.f32 %v2148, %v2067
    %v2160 = vadd.f32 %v2021, %v2159
    %v2161 = vmul.f32 %v2148, %v2070
    %v2162 = vadd.f32 %v2023, %v2161
    %v2163 = vmul.f32 %v2148, %v2073
    %v2164 = vadd.f32 %v2025, %v2163
    %v2165 = vmul.f32 %v2148, %v2076
    %v2166 = vadd.f32 %v2027, %v2165
    %v2167 = vmul.f32 %v2148, %v2079
    %v2168 = vadd.f32 %v2029, %v2167
    %v2169 = vmul.f32 %v2148, %v2082
    %v2170 = vadd.f32 %v2031, %v2169
    %v2171 = vmul.f32 %v2148, %v2085
    %v2172 = vadd.f32 %v2033, %v2171
    %v2173 = vmul.f32 %v2148, %v2088
    %v2174 = vadd.f32 %v2035, %v2173
    %v2175 = vmul.f32 %v2148, %v2091
    %v2176 = vadd.f32 %v2037, %v2175
    %v2177 = vmul.f32 %v2148, %v2094
    %v2178 = vadd.f32 %v2039, %v2177
    %v2179 = vmul.f32 %v2148, %v2097
    %v2180 = vadd.f32 %v2041, %v2179
    %v2181 = vadd.f32 %v2148, 1.0
    %v2182 = vmul.f32 %v2042, %v2181
    %s2183 = smul.f32 %s2048, %s2049
    %v2184 = vmul.f32 %v2146, %v2146
    %v2185 = vstv %s2183
    %v2186 = vmul.f32 %v2185, %v2184
    %v2187 = vadd.f32 %v2186, 1.0
    %v2188 = vmul.f32 %v2047, %v2187
    %s2189 = sld [smem:[#allocation8 + $0xe]]
    %s2190 = sld [smem:[#allocation9 + $0xe]]
    %s2191 = sld [smem:[#allocation7 + $0xe0]]
    %v2192 = vstv %s2191
    %v2193 = vsub.f32 %v2150, %v2192
    %s2194 = sld [smem:[#allocation7 + $0xe1]]
    %v2195 = vstv %s2194
    %v2196 = vsub.f32 %v2152, %v2195
    %s2197 = sld [smem:[#allocation7 + $0xe2]]
    %v2198 = vstv %s2197
    %v2199 = vsub.f32 %v2154, %v2198
    %s2200 = sld [smem:[#allocation7 + $0xe3]]
    %v2201 = vstv %s2200
    %v2202 = vsub.f32 %v2156, %v2201
    %s2203 = sld [smem:[#allocation7 + $0xe4]]
    %v2204 = vstv %s2203
    %v2205 = vsub.f32 %v2158, %v2204
    %s2206 = sld [smem:[#allocation7 + $0xe5]]
    %v2207 = vstv %s2206
    %v2208 = vsub.f32 %v2160, %v2207
    %s2209 = sld [smem:[#allocation7 + $0xe6]]
    %v2210 = vstv %s2209
    %v2211 = vsub.f32 %v2162, %v2210
    %s2212 = sld [smem:[#allocation7 + $0xe7]]
    %v2213 = vstv %s2212
    %v2214 = vsub.f32 %v2164, %v2213
    %s2215 = sld [smem:[#allocation7 + $0xe8]]
    %v2216 = vstv %s2215
    %v2217 = vsub.f32 %v2166, %v2216
    %s2218 = sld [smem:[#allocation7 + $0xe9]]
    %v2219 = vstv %s2218
    %v2220 = vsub.f32 %v2168, %v2219
    %s2221 = sld [smem:[#allocation7 + $0xea]]
    %v2222 = vstv %s2221
    %v2223 = vsub.f32 %v2170, %v2222
    %s2224 = sld [smem:[#allocation7 + $0xeb]]
    %v2225 = vstv %s2224
    %v2226 = vsub.f32 %v2172, %v2225
    %s2227 = sld [smem:[#allocation7 + $0xec]]
    %v2228 = vstv %s2227
    %v2229 = vsub.f32 %v2174, %v2228
    %s2230 = sld [smem:[#allocation7 + $0xed]]
    %v2231 = vstv %s2230
    %v2232 = vsub.f32 %v2176, %v2231
    %s2233 = sld [smem:[#allocation7 + $0xee]]
    %v2234 = vstv %s2233
    %v2235 = vsub.f32 %v2178, %v2234
    %s2236 = sld [smem:[#allocation7 + $0xef]]
    %v2237 = vstv %s2236
    %v2238 = vsub.f32 %v2180, %v2237
    %v2239 = vmul.f32 %v2193, %v2193
    %v2240 = vmul.f32 %v2196, %v2196
    %v2241 = vadd.f32 %v2239, %v2240
    %v2242 = vmul.f32 %v2199, %v2199
    %v2243 = vadd.f32 %v2241, %v2242
    %v2244 = vmul.f32 %v2202, %v2202
    %v2245 = vadd.f32 %v2243, %v2244
    %v2246 = vmul.f32 %v2205, %v2205
    %v2247 = vadd.f32 %v2245, %v2246
    %v2248 = vmul.f32 %v2208, %v2208
    %v2249 = vadd.f32 %v2247, %v2248
    %v2250 = vmul.f32 %v2211, %v2211
    %v2251 = vadd.f32 %v2249, %v2250
    %v2252 = vmul.f32 %v2214, %v2214
    %v2253 = vadd.f32 %v2251, %v2252
    %v2254 = vmul.f32 %v2217, %v2217
    %v2255 = vadd.f32 %v2253, %v2254
    %v2256 = vmul.f32 %v2220, %v2220
    %v2257 = vadd.f32 %v2255, %v2256
    %v2258 = vmul.f32 %v2223, %v2223
    %v2259 = vadd.f32 %v2257, %v2258
    %v2260 = vmul.f32 %v2226, %v2226
    %v2261 = vadd.f32 %v2259, %v2260
    %v2262 = vmul.f32 %v2229, %v2229
    %v2263 = vadd.f32 %v2261, %v2262
    %v2264 = vmul.f32 %v2232, %v2232
    %v2265 = vadd.f32 %v2263, %v2264
    %v2266 = vmul.f32 %v2235, %v2235
    %v2267 = vadd.f32 %v2265, %v2266
    %v2268 = vmul.f32 %v2238, %v2238
    %v2269 = vadd.f32 %v2267, %v2268
    %v2270 = vrsqrt.pop %v2269
    %v2271 = vmul.f32 %v2270, %v2269
    %v2272 = vmul.f32 %v2271, %v2270
    %v2273 = vmul.f32 0.5, %v2272
    %v2274 = vsub.f32 1.5, %v2273
    %v2275 = vmul.f32 %v2270, %v2274
    %v2276 = vmul.f32 %v2269, %v2275
    %vm2277 = vcmp.eq.f32.partialorder %v2269, inf
    %v2278 = vsel %vm2277, %v2269, %v2276
    %vm2279 = vcmp.eq.f32.partialorder %v2269, 0.0
    %v2280 = vand.u32 %v2269, 2147483648
    %v2281 = vsel %vm2279, %v2280, %v2278
    %v2282 = vstv %s2189
    %v2283 = vadd.f32 %v2282, %v2281
    %v2284 = vrcp.pop %v2283
    %v2285 = vmul.f32 %v2283, %v2284
    %v2286 = vsub.f32 2.0, %v2285
    %v2287 = vmul.f32 %v2284, %v2286
    %v2288 = vstv %s2190
    %v2289 = vmul.f32 %v2288, %v2287
    %v2290 = vmul.f32 %v2289, %v2193
    %v2291 = vadd.f32 %v2150, %v2290
    %v2292 = vmul.f32 %v2289, %v2196
    %v2293 = vadd.f32 %v2152, %v2292
    %v2294 = vmul.f32 %v2289, %v2199
    %v2295 = vadd.f32 %v2154, %v2294
    %v2296 = vmul.f32 %v2289, %v2202
    %v2297 = vadd.f32 %v2156, %v2296
    %v2298 = vmul.f32 %v2289, %v2205
    %v2299 = vadd.f32 %v2158, %v2298
    %v2300 = vmul.f32 %v2289, %v2208
    %v2301 = vadd.f32 %v2160, %v2300
    %v2302 = vmul.f32 %v2289, %v2211
    %v2303 = vadd.f32 %v2162, %v2302
    %v2304 = vmul.f32 %v2289, %v2214
    %v2305 = vadd.f32 %v2164, %v2304
    %v2306 = vmul.f32 %v2289, %v2217
    %v2307 = vadd.f32 %v2166, %v2306
    %v2308 = vmul.f32 %v2289, %v2220
    %v2309 = vadd.f32 %v2168, %v2308
    %v2310 = vmul.f32 %v2289, %v2223
    %v2311 = vadd.f32 %v2170, %v2310
    %v2312 = vmul.f32 %v2289, %v2226
    %v2313 = vadd.f32 %v2172, %v2312
    %v2314 = vmul.f32 %v2289, %v2229
    %v2315 = vadd.f32 %v2174, %v2314
    %v2316 = vmul.f32 %v2289, %v2232
    %v2317 = vadd.f32 %v2176, %v2316
    %v2318 = vmul.f32 %v2289, %v2235
    %v2319 = vadd.f32 %v2178, %v2318
    %v2320 = vmul.f32 %v2289, %v2238
    %v2321 = vadd.f32 %v2180, %v2320
    %v2322 = vadd.f32 %v2289, 1.0
    %v2323 = vmul.f32 %v2182, %v2322
    %s2324 = smul.f32 %s2189, %s2190
    %v2325 = vmul.f32 %v2287, %v2287
    %v2326 = vstv %s2324
    %v2327 = vmul.f32 %v2326, %v2325
    %v2328 = vadd.f32 %v2327, 1.0
    %v2329 = vmul.f32 %v2188, %v2328
    %s2330 = sld [smem:[#allocation8 + $0xf]]
    %s2331 = sld [smem:[#allocation9 + $0xf]]
    %s2332 = sld [smem:[#allocation7 + $0xf0]]
    %v2333 = vstv %s2332
    %v2334 = vsub.f32 %v2291, %v2333
    %s2335 = sld [smem:[#allocation7 + $0xf1]]
    %v2336 = vstv %s2335
    %v2337 = vsub.f32 %v2293, %v2336
    %s2338 = sld [smem:[#allocation7 + $0xf2]]
    %v2339 = vstv %s2338
    %v2340 = vsub.f32 %v2295, %v2339
    %s2341 = sld [smem:[#allocation7 + $0xf3]]
    %v2342 = vstv %s2341
    %v2343 = vsub.f32 %v2297, %v2342
    %s2344 = sld [smem:[#allocation7 + $0xf4]]
    %v2345 = vstv %s2344
    %v2346 = vsub.f32 %v2299, %v2345
    %s2347 = sld [smem:[#allocation7 + $0xf5]]
    %v2348 = vstv %s2347
    %v2349 = vsub.f32 %v2301, %v2348
    %s2350 = sld [smem:[#allocation7 + $0xf6]]
    %v2351 = vstv %s2350
    %v2352 = vsub.f32 %v2303, %v2351
    %s2353 = sld [smem:[#allocation7 + $0xf7]]
    %v2354 = vstv %s2353
    %v2355 = vsub.f32 %v2305, %v2354
    %s2356 = sld [smem:[#allocation7 + $0xf8]]
    %v2357 = vstv %s2356
    %v2358 = vsub.f32 %v2307, %v2357
    %s2359 = sld [smem:[#allocation7 + $0xf9]]
    %v2360 = vstv %s2359
    %v2361 = vsub.f32 %v2309, %v2360
    %s2362 = sld [smem:[#allocation7 + $0xfa]]
    %v2363 = vstv %s2362
    %v2364 = vsub.f32 %v2311, %v2363
    %s2365 = sld [smem:[#allocation7 + $0xfb]]
    %v2366 = vstv %s2365
    %v2367 = vsub.f32 %v2313, %v2366
    %s2368 = sld [smem:[#allocation7 + $0xfc]]
    %v2369 = vstv %s2368
    %v2370 = vsub.f32 %v2315, %v2369
    %s2371 = sld [smem:[#allocation7 + $0xfd]]
    %v2372 = vstv %s2371
    %v2373 = vsub.f32 %v2317, %v2372
    %s2374 = sld [smem:[#allocation7 + $0xfe]]
    %v2375 = vstv %s2374
    %v2376 = vsub.f32 %v2319, %v2375
    %s2377 = sld [smem:[#allocation7 + $0xff]]
    %v2378 = vstv %s2377
    %v2379 = vsub.f32 %v2321, %v2378
    %v2380 = vmul.f32 %v2334, %v2334
    %v2381 = vmul.f32 %v2337, %v2337
    %v2382 = vadd.f32 %v2380, %v2381
    %v2383 = vmul.f32 %v2340, %v2340
    %v2384 = vadd.f32 %v2382, %v2383
    %v2385 = vmul.f32 %v2343, %v2343
    %v2386 = vadd.f32 %v2384, %v2385
    %v2387 = vmul.f32 %v2346, %v2346
    %v2388 = vadd.f32 %v2386, %v2387
    %v2389 = vmul.f32 %v2349, %v2349
    %v2390 = vadd.f32 %v2388, %v2389
    %v2391 = vmul.f32 %v2352, %v2352
    %v2392 = vadd.f32 %v2390, %v2391
    %v2393 = vmul.f32 %v2355, %v2355
    %v2394 = vadd.f32 %v2392, %v2393
    %v2395 = vmul.f32 %v2358, %v2358
    %v2396 = vadd.f32 %v2394, %v2395
    %v2397 = vmul.f32 %v2361, %v2361
    %v2398 = vadd.f32 %v2396, %v2397
    %v2399 = vmul.f32 %v2364, %v2364
    %v2400 = vadd.f32 %v2398, %v2399
    %v2401 = vmul.f32 %v2367, %v2367
    %v2402 = vadd.f32 %v2400, %v2401
    %v2403 = vmul.f32 %v2370, %v2370
    %v2404 = vadd.f32 %v2402, %v2403
    %v2405 = vmul.f32 %v2373, %v2373
    %v2406 = vadd.f32 %v2404, %v2405
    %v2407 = vmul.f32 %v2376, %v2376
    %v2408 = vadd.f32 %v2406, %v2407
    %v2409 = vmul.f32 %v2379, %v2379
    %v2410 = vadd.f32 %v2408, %v2409
    %v2411 = vrsqrt.pop %v2410
    %v2412 = vmul.f32 %v2411, %v2410
    %v2413 = vmul.f32 %v2412, %v2411
    %v2414 = vmul.f32 0.5, %v2413
    %v2415 = vsub.f32 1.5, %v2414
    %v2416 = vmul.f32 %v2411, %v2415
    %v2417 = vmul.f32 %v2410, %v2416
    %vm2418 = vcmp.eq.f32.partialorder %v2410, inf
    %v2419 = vsel %vm2418, %v2410, %v2417
    %vm2420 = vcmp.eq.f32.partialorder %v2410, 0.0
    %v2421 = vand.u32 %v2410, 2147483648
    %v2422 = vsel %vm2420, %v2421, %v2419
    %v2423 = vstv %s2330
    %v2424 = vadd.f32 %v2423, %v2422
    %v2425 = vrcp.pop %v2424
    %v2426 = vmul.f32 %v2424, %v2425
    %v2427 = vsub.f32 2.0, %v2426
    %v2428 = vmul.f32 %v2425, %v2427
    %v2429 = vstv %s2331
    %v2430 = vmul.f32 %v2429, %v2428
    %v2431 = vmul.f32 %v2430, %v2334
    %v2432 = vadd.f32 %v2291, %v2431
    %v2433 = vmul.f32 %v2430, %v2337
    %v2434 = vadd.f32 %v2293, %v2433
    %v2435 = vmul.f32 %v2430, %v2340
    %v2436 = vadd.f32 %v2295, %v2435
    %v2437 = vmul.f32 %v2430, %v2343
    %v2438 = vadd.f32 %v2297, %v2437
    %v2439 = vmul.f32 %v2430, %v2346
    %v2440 = vadd.f32 %v2299, %v2439
    %v2441 = vmul.f32 %v2430, %v2349
    %v2442 = vadd.f32 %v2301, %v2441
    %v2443 = vmul.f32 %v2430, %v2352
    %v2444 = vadd.f32 %v2303, %v2443
    %v2445 = vmul.f32 %v2430, %v2355
    %v2446 = vadd.f32 %v2305, %v2445
    %v2447 = vmul.f32 %v2430, %v2358
    %v2448 = vadd.f32 %v2307, %v2447
    %v2449 = vmul.f32 %v2430, %v2361
    %v2450 = vadd.f32 %v2309, %v2449
    %v2451 = vmul.f32 %v2430, %v2364
    %v2452 = vadd.f32 %v2311, %v2451
    %v2453 = vmul.f32 %v2430, %v2367
    %v2454 = vadd.f32 %v2313, %v2453
    %v2455 = vmul.f32 %v2430, %v2370
    %v2456 = vadd.f32 %v2315, %v2455
    %v2457 = vmul.f32 %v2430, %v2373
    %v2458 = vadd.f32 %v2317, %v2457
    %v2459 = vmul.f32 %v2430, %v2376
    %v2460 = vadd.f32 %v2319, %v2459
    %v2461 = vmul.f32 %v2430, %v2379
    %v2462 = vadd.f32 %v2321, %v2461
    %v2463 = vadd.f32 %v2430, 1.0
    %v2464 = vmul.f32 %v2323, %v2463
    %s2465 = smul.f32 %s2330, %s2331
    %v2466 = vmul.f32 %v2428, %v2428
    %v2467 = vstv %s2465
    %v2468 = vmul.f32 %v2467, %v2466
    %v2469 = vadd.f32 %v2468, 1.0
    %v2470 = vmul.f32 %v2329, %v2469
    %s2471 = sld [smem:[#allocation8 + $0x10]]
    %s2472 = sld [smem:[#allocation9 + $0x10]]
    %s2473 = sld [smem:[#allocation7 + $0x100]]
    %v2474 = vstv %s2473
    %v2475 = vsub.f32 %v2432, %v2474
    %s2476 = sld [smem:[#allocation7 + $0x101]]
    %v2477 = vstv %s2476
    %v2478 = vsub.f32 %v2434, %v2477
    %s2479 = sld [smem:[#allocation7 + $0x102]]
    %v2480 = vstv %s2479
    %v2481 = vsub.f32 %v2436, %v2480
    %s2482 = sld [smem:[#allocation7 + $0x103]]
    %v2483 = vstv %s2482
    %v2484 = vsub.f32 %v2438, %v2483
    %s2485 = sld [smem:[#allocation7 + $0x104]]
    %v2486 = vstv %s2485
    %v2487 = vsub.f32 %v2440, %v2486
    %s2488 = sld [smem:[#allocation7 + $0x105]]
    %v2489 = vstv %s2488
    %v2490 = vsub.f32 %v2442, %v2489
    %s2491 = sld [smem:[#allocation7 + $0x106]]
    %v2492 = vstv %s2491
    %v2493 = vsub.f32 %v2444, %v2492
    %s2494 = sld [smem:[#allocation7 + $0x107]]
    %v2495 = vstv %s2494
    %v2496 = vsub.f32 %v2446, %v2495
    %s2497 = sld [smem:[#allocation7 + $0x108]]
    %v2498 = vstv %s2497
    %v2499 = vsub.f32 %v2448, %v2498
    %s2500 = sld [smem:[#allocation7 + $0x109]]
    %v2501 = vstv %s2500
    %v2502 = vsub.f32 %v2450, %v2501
    %s2503 = sld [smem:[#allocation7 + $0x10a]]
    %v2504 = vstv %s2503
    %v2505 = vsub.f32 %v2452, %v2504
    %s2506 = sld [smem:[#allocation7 + $0x10b]]
    %v2507 = vstv %s2506
    %v2508 = vsub.f32 %v2454, %v2507
    %s2509 = sld [smem:[#allocation7 + $0x10c]]
    %v2510 = vstv %s2509
    %v2511 = vsub.f32 %v2456, %v2510
    %s2512 = sld [smem:[#allocation7 + $0x10d]]
    %v2513 = vstv %s2512
    %v2514 = vsub.f32 %v2458, %v2513
    %s2515 = sld [smem:[#allocation7 + $0x10e]]
    %v2516 = vstv %s2515
    %v2517 = vsub.f32 %v2460, %v2516
    %s2518 = sld [smem:[#allocation7 + $0x10f]]
    %v2519 = vstv %s2518
    %v2520 = vsub.f32 %v2462, %v2519
    %v2521 = vmul.f32 %v2475, %v2475
    %v2522 = vmul.f32 %v2478, %v2478
    %v2523 = vadd.f32 %v2521, %v2522
    %v2524 = vmul.f32 %v2481, %v2481
    %v2525 = vadd.f32 %v2523, %v2524
    %v2526 = vmul.f32 %v2484, %v2484
    %v2527 = vadd.f32 %v2525, %v2526
    %v2528 = vmul.f32 %v2487, %v2487
    %v2529 = vadd.f32 %v2527, %v2528
    %v2530 = vmul.f32 %v2490, %v2490
    %v2531 = vadd.f32 %v2529, %v2530
    %v2532 = vmul.f32 %v2493, %v2493
    %v2533 = vadd.f32 %v2531, %v2532
    %v2534 = vmul.f32 %v2496, %v2496
    %v2535 = vadd.f32 %v2533, %v2534
    %v2536 = vmul.f32 %v2499, %v2499
    %v2537 = vadd.f32 %v2535, %v2536
    %v2538 = vmul.f32 %v2502, %v2502
    %v2539 = vadd.f32 %v2537, %v2538
    %v2540 = vmul.f32 %v2505, %v2505
    %v2541 = vadd.f32 %v2539, %v2540
    %v2542 = vmul.f32 %v2508, %v2508
    %v2543 = vadd.f32 %v2541, %v2542
    %v2544 = vmul.f32 %v2511, %v2511
    %v2545 = vadd.f32 %v2543, %v2544
    %v2546 = vmul.f32 %v2514, %v2514
    %v2547 = vadd.f32 %v2545, %v2546
    %v2548 = vmul.f32 %v2517, %v2517
    %v2549 = vadd.f32 %v2547, %v2548
    %v2550 = vmul.f32 %v2520, %v2520
    %v2551 = vadd.f32 %v2549, %v2550
    %v2552 = vrsqrt.pop %v2551
    %v2553 = vmul.f32 %v2552, %v2551
    %v2554 = vmul.f32 %v2553, %v2552
    %v2555 = vmul.f32 0.5, %v2554
    %v2556 = vsub.f32 1.5, %v2555
    %v2557 = vmul.f32 %v2552, %v2556
    %v2558 = vmul.f32 %v2551, %v2557
    %vm2559 = vcmp.eq.f32.partialorder %v2551, inf
    %v2560 = vsel %vm2559, %v2551, %v2558
    %vm2561 = vcmp.eq.f32.partialorder %v2551, 0.0
    %v2562 = vand.u32 %v2551, 2147483648
    %v2563 = vsel %vm2561, %v2562, %v2560
    %v2564 = vstv %s2471
    %v2565 = vadd.f32 %v2564, %v2563
    %v2566 = vrcp.pop %v2565
    %v2567 = vmul.f32 %v2565, %v2566
    %v2568 = vsub.f32 2.0, %v2567
    %v2569 = vmul.f32 %v2566, %v2568
    %v2570 = vstv %s2472
    %v2571 = vmul.f32 %v2570, %v2569
    %v2572 = vmul.f32 %v2571, %v2475
    %v2573 = vadd.f32 %v2432, %v2572
    %v2574 = vmul.f32 %v2571, %v2478
    %v2575 = vadd.f32 %v2434, %v2574
    %v2576 = vmul.f32 %v2571, %v2481
    %v2577 = vadd.f32 %v2436, %v2576
    %v2578 = vmul.f32 %v2571, %v2484
    %v2579 = vadd.f32 %v2438, %v2578
    %v2580 = vmul.f32 %v2571, %v2487
    %v2581 = vadd.f32 %v2440, %v2580
    %v2582 = vmul.f32 %v2571, %v2490
    %v2583 = vadd.f32 %v2442, %v2582
    %v2584 = vmul.f32 %v2571, %v2493
    %v2585 = vadd.f32 %v2444, %v2584
    %v2586 = vmul.f32 %v2571, %v2496
    %v2587 = vadd.f32 %v2446, %v2586
    %v2588 = vmul.f32 %v2571, %v2499
    %v2589 = vadd.f32 %v2448, %v2588
    %v2590 = vmul.f32 %v2571, %v2502
    %v2591 = vadd.f32 %v2450, %v2590
    %v2592 = vmul.f32 %v2571, %v2505
    %v2593 = vadd.f32 %v2452, %v2592
    %v2594 = vmul.f32 %v2571, %v2508
    %v2595 = vadd.f32 %v2454, %v2594
    %v2596 = vmul.f32 %v2571, %v2511
    %v2597 = vadd.f32 %v2456, %v2596
    %v2598 = vmul.f32 %v2571, %v2514
    %v2599 = vadd.f32 %v2458, %v2598
    %v2600 = vmul.f32 %v2571, %v2517
    %v2601 = vadd.f32 %v2460, %v2600
    %v2602 = vmul.f32 %v2571, %v2520
    %v2603 = vadd.f32 %v2462, %v2602
    %v2604 = vadd.f32 %v2571, 1.0
    %v2605 = vmul.f32 %v2464, %v2604
    %s2606 = smul.f32 %s2471, %s2472
    %v2607 = vmul.f32 %v2569, %v2569
    %v2608 = vstv %s2606
    %v2609 = vmul.f32 %v2608, %v2607
    %v2610 = vadd.f32 %v2609, 1.0
    %v2611 = vmul.f32 %v2470, %v2610
    %s2612 = sld [smem:[#allocation8 + $0x11]]
    %s2613 = sld [smem:[#allocation9 + $0x11]]
    %s2614 = sld [smem:[#allocation7 + $0x110]]
    %v2615 = vstv %s2614
    %v2616 = vsub.f32 %v2573, %v2615
    %s2617 = sld [smem:[#allocation7 + $0x111]]
    %v2618 = vstv %s2617
    %v2619 = vsub.f32 %v2575, %v2618
    %s2620 = sld [smem:[#allocation7 + $0x112]]
    %v2621 = vstv %s2620
    %v2622 = vsub.f32 %v2577, %v2621
    %s2623 = sld [smem:[#allocation7 + $0x113]]
    %v2624 = vstv %s2623
    %v2625 = vsub.f32 %v2579, %v2624
    %s2626 = sld [smem:[#allocation7 + $0x114]]
    %v2627 = vstv %s2626
    %v2628 = vsub.f32 %v2581, %v2627
    %s2629 = sld [smem:[#allocation7 + $0x115]]
    %v2630 = vstv %s2629
    %v2631 = vsub.f32 %v2583, %v2630
    %s2632 = sld [smem:[#allocation7 + $0x116]]
    %v2633 = vstv %s2632
    %v2634 = vsub.f32 %v2585, %v2633
    %s2635 = sld [smem:[#allocation7 + $0x117]]
    %v2636 = vstv %s2635
    %v2637 = vsub.f32 %v2587, %v2636
    %s2638 = sld [smem:[#allocation7 + $0x118]]
    %v2639 = vstv %s2638
    %v2640 = vsub.f32 %v2589, %v2639
    %s2641 = sld [smem:[#allocation7 + $0x119]]
    %v2642 = vstv %s2641
    %v2643 = vsub.f32 %v2591, %v2642
    %s2644 = sld [smem:[#allocation7 + $0x11a]]
    %v2645 = vstv %s2644
    %v2646 = vsub.f32 %v2593, %v2645
    %s2647 = sld [smem:[#allocation7 + $0x11b]]
    %v2648 = vstv %s2647
    %v2649 = vsub.f32 %v2595, %v2648
    %s2650 = sld [smem:[#allocation7 + $0x11c]]
    %v2651 = vstv %s2650
    %v2652 = vsub.f32 %v2597, %v2651
    %s2653 = sld [smem:[#allocation7 + $0x11d]]
    %v2654 = vstv %s2653
    %v2655 = vsub.f32 %v2599, %v2654
    %s2656 = sld [smem:[#allocation7 + $0x11e]]
    %v2657 = vstv %s2656
    %v2658 = vsub.f32 %v2601, %v2657
    %s2659 = sld [smem:[#allocation7 + $0x11f]]
    %v2660 = vstv %s2659
    %v2661 = vsub.f32 %v2603, %v2660
    %v2662 = vmul.f32 %v2616, %v2616
    %v2663 = vmul.f32 %v2619, %v2619
    %v2664 = vadd.f32 %v2662, %v2663
    %v2665 = vmul.f32 %v2622, %v2622
    %v2666 = vadd.f32 %v2664, %v2665
    %v2667 = vmul.f32 %v2625, %v2625
    %v2668 = vadd.f32 %v2666, %v2667
    %v2669 = vmul.f32 %v2628, %v2628
    %v2670 = vadd.f32 %v2668, %v2669
    %v2671 = vmul.f32 %v2631, %v2631
    %v2672 = vadd.f32 %v2670, %v2671
    %v2673 = vmul.f32 %v2634, %v2634
    %v2674 = vadd.f32 %v2672, %v2673
    %v2675 = vmul.f32 %v2637, %v2637
    %v2676 = vadd.f32 %v2674, %v2675
    %v2677 = vmul.f32 %v2640, %v2640
    %v2678 = vadd.f32 %v2676, %v2677
    %v2679 = vmul.f32 %v2643, %v2643
    %v2680 = vadd.f32 %v2678, %v2679
    %v2681 = vmul.f32 %v2646, %v2646
    %v2682 = vadd.f32 %v2680, %v2681
    %v2683 = vmul.f32 %v2649, %v2649
    %v2684 = vadd.f32 %v2682, %v2683
    %v2685 = vmul.f32 %v2652, %v2652
    %v2686 = vadd.f32 %v2684, %v2685
    %v2687 = vmul.f32 %v2655, %v2655
    %v2688 = vadd.f32 %v2686, %v2687
    %v2689 = vmul.f32 %v2658, %v2658
    %v2690 = vadd.f32 %v2688, %v2689
    %v2691 = vmul.f32 %v2661, %v2661
    %v2692 = vadd.f32 %v2690, %v2691
    %v2693 = vrsqrt.pop %v2692
    %v2694 = vmul.f32 %v2693, %v2692
    %v2695 = vmul.f32 %v2694, %v2693
    %v2696 = vmul.f32 0.5, %v2695
    %v2697 = vsub.f32 1.5, %v2696
    %v2698 = vmul.f32 %v2693, %v2697
    %v2699 = vmul.f32 %v2692, %v2698
    %vm2700 = vcmp.eq.f32.partialorder %v2692, inf
    %v2701 = vsel %vm2700, %v2692, %v2699
    %vm2702 = vcmp.eq.f32.partialorder %v2692, 0.0
    %v2703 = vand.u32 %v2692, 2147483648
    %v2704 = vsel %vm2702, %v2703, %v2701
    %v2705 = vstv %s2612
    %v2706 = vadd.f32 %v2705, %v2704
    %v2707 = vrcp.pop %v2706
    %v2708 = vmul.f32 %v2706, %v2707
    %v2709 = vsub.f32 2.0, %v2708
    %v2710 = vmul.f32 %v2707, %v2709
    %v2711 = vstv %s2613
    %v2712 = vmul.f32 %v2711, %v2710
    %v2713 = vmul.f32 %v2712, %v2616
    %v2714 = vadd.f32 %v2573, %v2713
    %v2715 = vmul.f32 %v2712, %v2619
    %v2716 = vadd.f32 %v2575, %v2715
    %v2717 = vmul.f32 %v2712, %v2622
    %v2718 = vadd.f32 %v2577, %v2717
    %v2719 = vmul.f32 %v2712, %v2625
    %v2720 = vadd.f32 %v2579, %v2719
    %v2721 = vmul.f32 %v2712, %v2628
    %v2722 = vadd.f32 %v2581, %v2721
    %v2723 = vmul.f32 %v2712, %v2631
    %v2724 = vadd.f32 %v2583, %v2723
    %v2725 = vmul.f32 %v2712, %v2634
    %v2726 = vadd.f32 %v2585, %v2725
    %v2727 = vmul.f32 %v2712, %v2637
    %v2728 = vadd.f32 %v2587, %v2727
    %v2729 = vmul.f32 %v2712, %v2640
    %v2730 = vadd.f32 %v2589, %v2729
    %v2731 = vmul.f32 %v2712, %v2643
    %v2732 = vadd.f32 %v2591, %v2731
    %v2733 = vmul.f32 %v2712, %v2646
    %v2734 = vadd.f32 %v2593, %v2733
    %v2735 = vmul.f32 %v2712, %v2649
    %v2736 = vadd.f32 %v2595, %v2735
    %v2737 = vmul.f32 %v2712, %v2652
    %v2738 = vadd.f32 %v2597, %v2737
    %v2739 = vmul.f32 %v2712, %v2655
    %v2740 = vadd.f32 %v2599, %v2739
    %v2741 = vmul.f32 %v2712, %v2658
    %v2742 = vadd.f32 %v2601, %v2741
    %v2743 = vmul.f32 %v2712, %v2661
    %v2744 = vadd.f32 %v2603, %v2743
    %v2745 = vadd.f32 %v2712, 1.0
    %v2746 = vmul.f32 %v2605, %v2745
    %s2747 = smul.f32 %s2612, %s2613
    %v2748 = vmul.f32 %v2710, %v2710
    %v2749 = vstv %s2747
    %v2750 = vmul.f32 %v2749, %v2748
    %v2751 = vadd.f32 %v2750, 1.0
    %v2752 = vmul.f32 %v2611, %v2751
    %v2753 = vmul.f32 %v2714, %v2714
    %v2754 = vmul.f32 %v2716, %v2716
    %v2755 = vadd.f32 %v2753, %v2754
    %v2756 = vmul.f32 %v2718, %v2718
    %v2757 = vadd.f32 %v2755, %v2756
    %v2758 = vmul.f32 %v2720, %v2720
    %v2759 = vadd.f32 %v2757, %v2758
    %v2760 = vmul.f32 %v2722, %v2722
    %v2761 = vadd.f32 %v2759, %v2760
    %v2762 = vmul.f32 %v2724, %v2724
    %v2763 = vadd.f32 %v2761, %v2762
    %v2764 = vmul.f32 %v2726, %v2726
    %v2765 = vadd.f32 %v2763, %v2764
    %v2766 = vmul.f32 %v2728, %v2728
    %v2767 = vadd.f32 %v2765, %v2766
    %v2768 = vmul.f32 %v2730, %v2730
    %v2769 = vadd.f32 %v2767, %v2768
    %v2770 = vmul.f32 %v2732, %v2732
    %v2771 = vadd.f32 %v2769, %v2770
    %v2772 = vmul.f32 %v2734, %v2734
    %v2773 = vadd.f32 %v2771, %v2772
    %v2774 = vmul.f32 %v2736, %v2736
    %v2775 = vadd.f32 %v2773, %v2774
    %v2776 = vmul.f32 %v2738, %v2738
    %v2777 = vadd.f32 %v2775, %v2776
    %v2778 = vmul.f32 %v2740, %v2740
    %v2779 = vadd.f32 %v2777, %v2778
    %v2780 = vmul.f32 %v2742, %v2742
    %v2781 = vadd.f32 %v2779, %v2780
    %v2782 = vmul.f32 %v2744, %v2744
    %v2783 = vadd.f32 %v2781, %v2782
    %v2784 = vlog2.pop %v2746
    %v2785 = vmul.f32 %v2784, 0.6931472
    %v2786 = vmul.f32 %v2785, 15.0
    %v2787 = vlog2.pop %v2752
    %v2788 = vmul.f32 %v2787, 0.6931472
    %v2789 = vadd.f32 %v2786, %v2788
    %v2790 = vmul.f32 %v2783, 0.5
    %v2791 = vsub.f32 -14.703016, %v2790
    %v2792 = vadd.f32 %v2791, %v2789
    %vm2793 = vcmp.ne.f32.partialorder %v2792, %v2792
    %v2794 = vsel %vm2793, -inf, %v2792
    %s2795 = scalar_lea.vmem [#allocation11], 16
    %2796 = vst [vmem:[%s2795] sm:$0xff] %v2794
    %v2797 = vld [vmem:[#allocation2] sm:$0xff]
    %v2798 = vld [vmem:[%s72] sm:$0xff]
    %v2799 = vld [vmem:[%s74] sm:$0xff]
    %v2800 = vld [vmem:[%s76] sm:$0xff]
    %v2801 = vld [vmem:[%s78] sm:$0xff]
    %v2802 = vld [vmem:[%s80] sm:$0xff]
    %v2803 = vld [vmem:[%s82] sm:$0xff]
    %v2804 = vld [vmem:[%s84] sm:$0xff]
    %v2805 = vld [vmem:[%s86] sm:$0xff]
    %v2806 = vld [vmem:[%s88] sm:$0xff]
    %v2807 = vld [vmem:[%s90] sm:$0xff]
    %v2808 = vld [vmem:[%s92] sm:$0xff]
    %v2809 = vld [vmem:[%s94] sm:$0xff]
    %v2810 = vld [vmem:[%s96] sm:$0xff]
    %v2811 = vld [vmem:[%s98] sm:$0xff]
    %v2812 = vld [vmem:[%s100] sm:$0xff]
    %s2813 = sld [smem:[#allocation8 + $0x12]]
    %s2814 = sld [smem:[#allocation9 + $0x12]]
    %s2815 = sld [smem:[#allocation7 + $0x120]]
    %v2816 = vstv %s2815
    %v2817 = vsub.f32 %v2797, %v2816
    %s2818 = sld [smem:[#allocation7 + $0x121]]
    %v2819 = vstv %s2818
    %v2820 = vsub.f32 %v2798, %v2819
    %s2821 = sld [smem:[#allocation7 + $0x122]]
    %v2822 = vstv %s2821
    %v2823 = vsub.f32 %v2799, %v2822
    %s2824 = sld [smem:[#allocation7 + $0x123]]
    %v2825 = vstv %s2824
    %v2826 = vsub.f32 %v2800, %v2825
    %s2827 = sld [smem:[#allocation7 + $0x124]]
    %v2828 = vstv %s2827
    %v2829 = vsub.f32 %v2801, %v2828
    %s2830 = sld [smem:[#allocation7 + $0x125]]
    %v2831 = vstv %s2830
    %v2832 = vsub.f32 %v2802, %v2831
    %s2833 = sld [smem:[#allocation7 + $0x126]]
    %v2834 = vstv %s2833
    %v2835 = vsub.f32 %v2803, %v2834
    %s2836 = sld [smem:[#allocation7 + $0x127]]
    %v2837 = vstv %s2836
    %v2838 = vsub.f32 %v2804, %v2837
    %s2839 = sld [smem:[#allocation7 + $0x128]]
    %v2840 = vstv %s2839
    %v2841 = vsub.f32 %v2805, %v2840
    %s2842 = sld [smem:[#allocation7 + $0x129]]
    %v2843 = vstv %s2842
    %v2844 = vsub.f32 %v2806, %v2843
    %s2845 = sld [smem:[#allocation7 + $0x12a]]
    %v2846 = vstv %s2845
    %v2847 = vsub.f32 %v2807, %v2846
    %s2848 = sld [smem:[#allocation7 + $0x12b]]
    %v2849 = vstv %s2848
    %v2850 = vsub.f32 %v2808, %v2849
    %s2851 = sld [smem:[#allocation7 + $0x12c]]
    %v2852 = vstv %s2851
    %v2853 = vsub.f32 %v2809, %v2852
    %s2854 = sld [smem:[#allocation7 + $0x12d]]
    %v2855 = vstv %s2854
    %v2856 = vsub.f32 %v2810, %v2855
    %s2857 = sld [smem:[#allocation7 + $0x12e]]
    %v2858 = vstv %s2857
    %v2859 = vsub.f32 %v2811, %v2858
    %s2860 = sld [smem:[#allocation7 + $0x12f]]
    %v2861 = vstv %s2860
    %v2862 = vsub.f32 %v2812, %v2861
    %v2863 = vmul.f32 %v2817, %v2817
    %v2864 = vmul.f32 %v2820, %v2820
    %v2865 = vadd.f32 %v2863, %v2864
    %v2866 = vmul.f32 %v2823, %v2823
    %v2867 = vadd.f32 %v2865, %v2866
    %v2868 = vmul.f32 %v2826, %v2826
    %v2869 = vadd.f32 %v2867, %v2868
    %v2870 = vmul.f32 %v2829, %v2829
    %v2871 = vadd.f32 %v2869, %v2870
    %v2872 = vmul.f32 %v2832, %v2832
    %v2873 = vadd.f32 %v2871, %v2872
    %v2874 = vmul.f32 %v2835, %v2835
    %v2875 = vadd.f32 %v2873, %v2874
    %v2876 = vmul.f32 %v2838, %v2838
    %v2877 = vadd.f32 %v2875, %v2876
    %v2878 = vmul.f32 %v2841, %v2841
    %v2879 = vadd.f32 %v2877, %v2878
    %v2880 = vmul.f32 %v2844, %v2844
    %v2881 = vadd.f32 %v2879, %v2880
    %v2882 = vmul.f32 %v2847, %v2847
    %v2883 = vadd.f32 %v2881, %v2882
    %v2884 = vmul.f32 %v2850, %v2850
    %v2885 = vadd.f32 %v2883, %v2884
    %v2886 = vmul.f32 %v2853, %v2853
    %v2887 = vadd.f32 %v2885, %v2886
    %v2888 = vmul.f32 %v2856, %v2856
    %v2889 = vadd.f32 %v2887, %v2888
    %v2890 = vmul.f32 %v2859, %v2859
    %v2891 = vadd.f32 %v2889, %v2890
    %v2892 = vmul.f32 %v2862, %v2862
    %v2893 = vadd.f32 %v2891, %v2892
    %v2894 = vrsqrt.pop %v2893
    %v2895 = vmul.f32 %v2894, %v2893
    %v2896 = vmul.f32 %v2895, %v2894
    %v2897 = vmul.f32 0.5, %v2896
    %v2898 = vsub.f32 1.5, %v2897
    %v2899 = vmul.f32 %v2894, %v2898
    %v2900 = vmul.f32 %v2893, %v2899
    %vm2901 = vcmp.eq.f32.partialorder %v2893, inf
    %v2902 = vsel %vm2901, %v2893, %v2900
    %vm2903 = vcmp.eq.f32.partialorder %v2893, 0.0
    %v2904 = vand.u32 %v2893, 2147483648
    %v2905 = vsel %vm2903, %v2904, %v2902
    %v2906 = vstv %s2813
    %v2907 = vadd.f32 %v2906, %v2905
    %v2908 = vrcp.pop %v2907
    %v2909 = vmul.f32 %v2907, %v2908
    %v2910 = vsub.f32 2.0, %v2909
    %v2911 = vmul.f32 %v2908, %v2910
    %v2912 = vstv %s2814
    %v2913 = vmul.f32 %v2912, %v2911
    %v2914 = vmul.f32 %v2913, %v2817
    %v2915 = vadd.f32 %v2797, %v2914
    %v2916 = vmul.f32 %v2913, %v2820
    %v2917 = vadd.f32 %v2798, %v2916
    %v2918 = vmul.f32 %v2913, %v2823
    %v2919 = vadd.f32 %v2799, %v2918
    %v2920 = vmul.f32 %v2913, %v2826
    %v2921 = vadd.f32 %v2800, %v2920
    %v2922 = vmul.f32 %v2913, %v2829
    %v2923 = vadd.f32 %v2801, %v2922
    %v2924 = vmul.f32 %v2913, %v2832
    %v2925 = vadd.f32 %v2802, %v2924
    %v2926 = vmul.f32 %v2913, %v2835
    %v2927 = vadd.f32 %v2803, %v2926
    %v2928 = vmul.f32 %v2913, %v2838
    %v2929 = vadd.f32 %v2804, %v2928
    %v2930 = vmul.f32 %v2913, %v2841
    %v2931 = vadd.f32 %v2805, %v2930
    %v2932 = vmul.f32 %v2913, %v2844
    %v2933 = vadd.f32 %v2806, %v2932
    %v2934 = vmul.f32 %v2913, %v2847
    %v2935 = vadd.f32 %v2807, %v2934
    %v2936 = vmul.f32 %v2913, %v2850
    %v2937 = vadd.f32 %v2808, %v2936
    %v2938 = vmul.f32 %v2913, %v2853
    %v2939 = vadd.f32 %v2809, %v2938
    %v2940 = vmul.f32 %v2913, %v2856
    %v2941 = vadd.f32 %v2810, %v2940
    %v2942 = vmul.f32 %v2913, %v2859
    %v2943 = vadd.f32 %v2811, %v2942
    %v2944 = vmul.f32 %v2913, %v2862
    %v2945 = vadd.f32 %v2812, %v2944
    %v2946 = vadd.f32 %v2913, 1.0
    %s2947 = smul.f32 %s2813, %s2814
    %v2948 = vmul.f32 %v2911, %v2911
    %v2949 = vstv %s2947
    %v2950 = vmul.f32 %v2949, %v2948
    %v2951 = vadd.f32 %v2950, 1.0
    %s2952 = sld [smem:[#allocation8 + $0x13]]
    %s2953 = sld [smem:[#allocation9 + $0x13]]
    %s2954 = sld [smem:[#allocation7 + $0x130]]
    %v2955 = vstv %s2954
    %v2956 = vsub.f32 %v2915, %v2955
    %s2957 = sld [smem:[#allocation7 + $0x131]]
    %v2958 = vstv %s2957
    %v2959 = vsub.f32 %v2917, %v2958
    %s2960 = sld [smem:[#allocation7 + $0x132]]
    %v2961 = vstv %s2960
    %v2962 = vsub.f32 %v2919, %v2961
    %s2963 = sld [smem:[#allocation7 + $0x133]]
    %v2964 = vstv %s2963
    %v2965 = vsub.f32 %v2921, %v2964
    %s2966 = sld [smem:[#allocation7 + $0x134]]
    %v2967 = vstv %s2966
    %v2968 = vsub.f32 %v2923, %v2967
    %s2969 = sld [smem:[#allocation7 + $0x135]]
    %v2970 = vstv %s2969
    %v2971 = vsub.f32 %v2925, %v2970
    %s2972 = sld [smem:[#allocation7 + $0x136]]
    %v2973 = vstv %s2972
    %v2974 = vsub.f32 %v2927, %v2973
    %s2975 = sld [smem:[#allocation7 + $0x137]]
    %v2976 = vstv %s2975
    %v2977 = vsub.f32 %v2929, %v2976
    %s2978 = sld [smem:[#allocation7 + $0x138]]
    %v2979 = vstv %s2978
    %v2980 = vsub.f32 %v2931, %v2979
    %s2981 = sld [smem:[#allocation7 + $0x139]]
    %v2982 = vstv %s2981
    %v2983 = vsub.f32 %v2933, %v2982
    %s2984 = sld [smem:[#allocation7 + $0x13a]]
    %v2985 = vstv %s2984
    %v2986 = vsub.f32 %v2935, %v2985
    %s2987 = sld [smem:[#allocation7 + $0x13b]]
    %v2988 = vstv %s2987
    %v2989 = vsub.f32 %v2937, %v2988
    %s2990 = sld [smem:[#allocation7 + $0x13c]]
    %v2991 = vstv %s2990
    %v2992 = vsub.f32 %v2939, %v2991
    %s2993 = sld [smem:[#allocation7 + $0x13d]]
    %v2994 = vstv %s2993
    %v2995 = vsub.f32 %v2941, %v2994
    %s2996 = sld [smem:[#allocation7 + $0x13e]]
    %v2997 = vstv %s2996
    %v2998 = vsub.f32 %v2943, %v2997
    %s2999 = sld [smem:[#allocation7 + $0x13f]]
    %v3000 = vstv %s2999
    %v3001 = vsub.f32 %v2945, %v3000
    %v3002 = vmul.f32 %v2956, %v2956
    %v3003 = vmul.f32 %v2959, %v2959
    %v3004 = vadd.f32 %v3002, %v3003
    %v3005 = vmul.f32 %v2962, %v2962
    %v3006 = vadd.f32 %v3004, %v3005
    %v3007 = vmul.f32 %v2965, %v2965
    %v3008 = vadd.f32 %v3006, %v3007
    %v3009 = vmul.f32 %v2968, %v2968
    %v3010 = vadd.f32 %v3008, %v3009
    %v3011 = vmul.f32 %v2971, %v2971
    %v3012 = vadd.f32 %v3010, %v3011
    %v3013 = vmul.f32 %v2974, %v2974
    %v3014 = vadd.f32 %v3012, %v3013
    %v3015 = vmul.f32 %v2977, %v2977
    %v3016 = vadd.f32 %v3014, %v3015
    %v3017 = vmul.f32 %v2980, %v2980
    %v3018 = vadd.f32 %v3016, %v3017
    %v3019 = vmul.f32 %v2983, %v2983
    %v3020 = vadd.f32 %v3018, %v3019
    %v3021 = vmul.f32 %v2986, %v2986
    %v3022 = vadd.f32 %v3020, %v3021
    %v3023 = vmul.f32 %v2989, %v2989
    %v3024 = vadd.f32 %v3022, %v3023
    %v3025 = vmul.f32 %v2992, %v2992
    %v3026 = vadd.f32 %v3024, %v3025
    %v3027 = vmul.f32 %v2995, %v2995
    %v3028 = vadd.f32 %v3026, %v3027
    %v3029 = vmul.f32 %v2998, %v2998
    %v3030 = vadd.f32 %v3028, %v3029
    %v3031 = vmul.f32 %v3001, %v3001
    %v3032 = vadd.f32 %v3030, %v3031
    %v3033 = vrsqrt.pop %v3032
    %v3034 = vmul.f32 %v3033, %v3032
    %v3035 = vmul.f32 %v3034, %v3033
    %v3036 = vmul.f32 0.5, %v3035
    %v3037 = vsub.f32 1.5, %v3036
    %v3038 = vmul.f32 %v3033, %v3037
    %v3039 = vmul.f32 %v3032, %v3038
    %vm3040 = vcmp.eq.f32.partialorder %v3032, inf
    %v3041 = vsel %vm3040, %v3032, %v3039
    %vm3042 = vcmp.eq.f32.partialorder %v3032, 0.0
    %v3043 = vand.u32 %v3032, 2147483648
    %v3044 = vsel %vm3042, %v3043, %v3041
    %v3045 = vstv %s2952
    %v3046 = vadd.f32 %v3045, %v3044
    %v3047 = vrcp.pop %v3046
    %v3048 = vmul.f32 %v3046, %v3047
    %v3049 = vsub.f32 2.0, %v3048
    %v3050 = vmul.f32 %v3047, %v3049
    %v3051 = vstv %s2953
    %v3052 = vmul.f32 %v3051, %v3050
    %v3053 = vmul.f32 %v3052, %v2956
    %v3054 = vadd.f32 %v2915, %v3053
    %v3055 = vmul.f32 %v3052, %v2959
    %v3056 = vadd.f32 %v2917, %v3055
    %v3057 = vmul.f32 %v3052, %v2962
    %v3058 = vadd.f32 %v2919, %v3057
    %v3059 = vmul.f32 %v3052, %v2965
    %v3060 = vadd.f32 %v2921, %v3059
    %v3061 = vmul.f32 %v3052, %v2968
    %v3062 = vadd.f32 %v2923, %v3061
    %v3063 = vmul.f32 %v3052, %v2971
    %v3064 = vadd.f32 %v2925, %v3063
    %v3065 = vmul.f32 %v3052, %v2974
    %v3066 = vadd.f32 %v2927, %v3065
    %v3067 = vmul.f32 %v3052, %v2977
    %v3068 = vadd.f32 %v2929, %v3067
    %v3069 = vmul.f32 %v3052, %v2980
    %v3070 = vadd.f32 %v2931, %v3069
    %v3071 = vmul.f32 %v3052, %v2983
    %v3072 = vadd.f32 %v2933, %v3071
    %v3073 = vmul.f32 %v3052, %v2986
    %v3074 = vadd.f32 %v2935, %v3073
    %v3075 = vmul.f32 %v3052, %v2989
    %v3076 = vadd.f32 %v2937, %v3075
    %v3077 = vmul.f32 %v3052, %v2992
    %v3078 = vadd.f32 %v2939, %v3077
    %v3079 = vmul.f32 %v3052, %v2995
    %v3080 = vadd.f32 %v2941, %v3079
    %v3081 = vmul.f32 %v3052, %v2998
    %v3082 = vadd.f32 %v2943, %v3081
    %v3083 = vmul.f32 %v3052, %v3001
    %v3084 = vadd.f32 %v2945, %v3083
    %v3085 = vadd.f32 %v3052, 1.0
    %v3086 = vmul.f32 %v2946, %v3085
    %s3087 = smul.f32 %s2952, %s2953
    %v3088 = vmul.f32 %v3050, %v3050
    %v3089 = vstv %s3087
    %v3090 = vmul.f32 %v3089, %v3088
    %v3091 = vadd.f32 %v3090, 1.0
    %v3092 = vmul.f32 %v2951, %v3091
    %s3093 = sld [smem:[#allocation8 + $0x14]]
    %s3094 = sld [smem:[#allocation9 + $0x14]]
    %s3095 = sld [smem:[#allocation7 + $0x140]]
    %v3096 = vstv %s3095
    %v3097 = vsub.f32 %v3054, %v3096
    %s3098 = sld [smem:[#allocation7 + $0x141]]
    %v3099 = vstv %s3098
    %v3100 = vsub.f32 %v3056, %v3099
    %s3101 = sld [smem:[#allocation7 + $0x142]]
    %v3102 = vstv %s3101
    %v3103 = vsub.f32 %v3058, %v3102
    %s3104 = sld [smem:[#allocation7 + $0x143]]
    %v3105 = vstv %s3104
    %v3106 = vsub.f32 %v3060, %v3105
    %s3107 = sld [smem:[#allocation7 + $0x144]]
    %v3108 = vstv %s3107
    %v3109 = vsub.f32 %v3062, %v3108
    %s3110 = sld [smem:[#allocation7 + $0x145]]
    %v3111 = vstv %s3110
    %v3112 = vsub.f32 %v3064, %v3111
    %s3113 = sld [smem:[#allocation7 + $0x146]]
    %v3114 = vstv %s3113
    %v3115 = vsub.f32 %v3066, %v3114
    %s3116 = sld [smem:[#allocation7 + $0x147]]
    %v3117 = vstv %s3116
    %v3118 = vsub.f32 %v3068, %v3117
    %s3119 = sld [smem:[#allocation7 + $0x148]]
    %v3120 = vstv %s3119
    %v3121 = vsub.f32 %v3070, %v3120
    %s3122 = sld [smem:[#allocation7 + $0x149]]
    %v3123 = vstv %s3122
    %v3124 = vsub.f32 %v3072, %v3123
    %s3125 = sld [smem:[#allocation7 + $0x14a]]
    %v3126 = vstv %s3125
    %v3127 = vsub.f32 %v3074, %v3126
    %s3128 = sld [smem:[#allocation7 + $0x14b]]
    %v3129 = vstv %s3128
    %v3130 = vsub.f32 %v3076, %v3129
    %s3131 = sld [smem:[#allocation7 + $0x14c]]
    %v3132 = vstv %s3131
    %v3133 = vsub.f32 %v3078, %v3132
    %s3134 = sld [smem:[#allocation7 + $0x14d]]
    %v3135 = vstv %s3134
    %v3136 = vsub.f32 %v3080, %v3135
    %s3137 = sld [smem:[#allocation7 + $0x14e]]
    %v3138 = vstv %s3137
    %v3139 = vsub.f32 %v3082, %v3138
    %s3140 = sld [smem:[#allocation7 + $0x14f]]
    %v3141 = vstv %s3140
    %v3142 = vsub.f32 %v3084, %v3141
    %v3143 = vmul.f32 %v3097, %v3097
    %v3144 = vmul.f32 %v3100, %v3100
    %v3145 = vadd.f32 %v3143, %v3144
    %v3146 = vmul.f32 %v3103, %v3103
    %v3147 = vadd.f32 %v3145, %v3146
    %v3148 = vmul.f32 %v3106, %v3106
    %v3149 = vadd.f32 %v3147, %v3148
    %v3150 = vmul.f32 %v3109, %v3109
    %v3151 = vadd.f32 %v3149, %v3150
    %v3152 = vmul.f32 %v3112, %v3112
    %v3153 = vadd.f32 %v3151, %v3152
    %v3154 = vmul.f32 %v3115, %v3115
    %v3155 = vadd.f32 %v3153, %v3154
    %v3156 = vmul.f32 %v3118, %v3118
    %v3157 = vadd.f32 %v3155, %v3156
    %v3158 = vmul.f32 %v3121, %v3121
    %v3159 = vadd.f32 %v3157, %v3158
    %v3160 = vmul.f32 %v3124, %v3124
    %v3161 = vadd.f32 %v3159, %v3160
    %v3162 = vmul.f32 %v3127, %v3127
    %v3163 = vadd.f32 %v3161, %v3162
    %v3164 = vmul.f32 %v3130, %v3130
    %v3165 = vadd.f32 %v3163, %v3164
    %v3166 = vmul.f32 %v3133, %v3133
    %v3167 = vadd.f32 %v3165, %v3166
    %v3168 = vmul.f32 %v3136, %v3136
    %v3169 = vadd.f32 %v3167, %v3168
    %v3170 = vmul.f32 %v3139, %v3139
    %v3171 = vadd.f32 %v3169, %v3170
    %v3172 = vmul.f32 %v3142, %v3142
    %v3173 = vadd.f32 %v3171, %v3172
    %v3174 = vrsqrt.pop %v3173
    %v3175 = vmul.f32 %v3174, %v3173
    %v3176 = vmul.f32 %v3175, %v3174
    %v3177 = vmul.f32 0.5, %v3176
    %v3178 = vsub.f32 1.5, %v3177
    %v3179 = vmul.f32 %v3174, %v3178
    %v3180 = vmul.f32 %v3173, %v3179
    %vm3181 = vcmp.eq.f32.partialorder %v3173, inf
    %v3182 = vsel %vm3181, %v3173, %v3180
    %vm3183 = vcmp.eq.f32.partialorder %v3173, 0.0
    %v3184 = vand.u32 %v3173, 2147483648
    %v3185 = vsel %vm3183, %v3184, %v3182
    %v3186 = vstv %s3093
    %v3187 = vadd.f32 %v3186, %v3185
    %v3188 = vrcp.pop %v3187
    %v3189 = vmul.f32 %v3187, %v3188
    %v3190 = vsub.f32 2.0, %v3189
    %v3191 = vmul.f32 %v3188, %v3190
    %v3192 = vstv %s3094
    %v3193 = vmul.f32 %v3192, %v3191
    %v3194 = vmul.f32 %v3193, %v3097
    %v3195 = vadd.f32 %v3054, %v3194
    %v3196 = vmul.f32 %v3193, %v3100
    %v3197 = vadd.f32 %v3056, %v3196
    %v3198 = vmul.f32 %v3193, %v3103
    %v3199 = vadd.f32 %v3058, %v3198
    %v3200 = vmul.f32 %v3193, %v3106
    %v3201 = vadd.f32 %v3060, %v3200
    %v3202 = vmul.f32 %v3193, %v3109
    %v3203 = vadd.f32 %v3062, %v3202
    %v3204 = vmul.f32 %v3193, %v3112
    %v3205 = vadd.f32 %v3064, %v3204
    %v3206 = vmul.f32 %v3193, %v3115
    %v3207 = vadd.f32 %v3066, %v3206
    %v3208 = vmul.f32 %v3193, %v3118
    %v3209 = vadd.f32 %v3068, %v3208
    %v3210 = vmul.f32 %v3193, %v3121
    %v3211 = vadd.f32 %v3070, %v3210
    %v3212 = vmul.f32 %v3193, %v3124
    %v3213 = vadd.f32 %v3072, %v3212
    %v3214 = vmul.f32 %v3193, %v3127
    %v3215 = vadd.f32 %v3074, %v3214
    %v3216 = vmul.f32 %v3193, %v3130
    %v3217 = vadd.f32 %v3076, %v3216
    %v3218 = vmul.f32 %v3193, %v3133
    %v3219 = vadd.f32 %v3078, %v3218
    %v3220 = vmul.f32 %v3193, %v3136
    %v3221 = vadd.f32 %v3080, %v3220
    %v3222 = vmul.f32 %v3193, %v3139
    %v3223 = vadd.f32 %v3082, %v3222
    %v3224 = vmul.f32 %v3193, %v3142
    %v3225 = vadd.f32 %v3084, %v3224
    %v3226 = vadd.f32 %v3193, 1.0
    %v3227 = vmul.f32 %v3086, %v3226
    %s3228 = smul.f32 %s3093, %s3094
    %v3229 = vmul.f32 %v3191, %v3191
    %v3230 = vstv %s3228
    %v3231 = vmul.f32 %v3230, %v3229
    %v3232 = vadd.f32 %v3231, 1.0
    %v3233 = vmul.f32 %v3092, %v3232
    %s3234 = sld [smem:[#allocation8 + $0x15]]
    %s3235 = sld [smem:[#allocation9 + $0x15]]
    %s3236 = sld [smem:[#allocation7 + $0x150]]
    %v3237 = vstv %s3236
    %v3238 = vsub.f32 %v3195, %v3237
    %s3239 = sld [smem:[#allocation7 + $0x151]]
    %v3240 = vstv %s3239
    %v3241 = vsub.f32 %v3197, %v3240
    %s3242 = sld [smem:[#allocation7 + $0x152]]
    %v3243 = vstv %s3242
    %v3244 = vsub.f32 %v3199, %v3243
    %s3245 = sld [smem:[#allocation7 + $0x153]]
    %v3246 = vstv %s3245
    %v3247 = vsub.f32 %v3201, %v3246
    %s3248 = sld [smem:[#allocation7 + $0x154]]
    %v3249 = vstv %s3248
    %v3250 = vsub.f32 %v3203, %v3249
    %s3251 = sld [smem:[#allocation7 + $0x155]]
    %v3252 = vstv %s3251
    %v3253 = vsub.f32 %v3205, %v3252
    %s3254 = sld [smem:[#allocation7 + $0x156]]
    %v3255 = vstv %s3254
    %v3256 = vsub.f32 %v3207, %v3255
    %s3257 = sld [smem:[#allocation7 + $0x157]]
    %v3258 = vstv %s3257
    %v3259 = vsub.f32 %v3209, %v3258
    %s3260 = sld [smem:[#allocation7 + $0x158]]
    %v3261 = vstv %s3260
    %v3262 = vsub.f32 %v3211, %v3261
    %s3263 = sld [smem:[#allocation7 + $0x159]]
    %v3264 = vstv %s3263
    %v3265 = vsub.f32 %v3213, %v3264
    %s3266 = sld [smem:[#allocation7 + $0x15a]]
    %v3267 = vstv %s3266
    %v3268 = vsub.f32 %v3215, %v3267
    %s3269 = sld [smem:[#allocation7 + $0x15b]]
    %v3270 = vstv %s3269
    %v3271 = vsub.f32 %v3217, %v3270
    %s3272 = sld [smem:[#allocation7 + $0x15c]]
    %v3273 = vstv %s3272
    %v3274 = vsub.f32 %v3219, %v3273
    %s3275 = sld [smem:[#allocation7 + $0x15d]]
    %v3276 = vstv %s3275
    %v3277 = vsub.f32 %v3221, %v3276
    %s3278 = sld [smem:[#allocation7 + $0x15e]]
    %v3279 = vstv %s3278
    %v3280 = vsub.f32 %v3223, %v3279
    %s3281 = sld [smem:[#allocation7 + $0x15f]]
    %v3282 = vstv %s3281
    %v3283 = vsub.f32 %v3225, %v3282
    %v3284 = vmul.f32 %v3238, %v3238
    %v3285 = vmul.f32 %v3241, %v3241
    %v3286 = vadd.f32 %v3284, %v3285
    %v3287 = vmul.f32 %v3244, %v3244
    %v3288 = vadd.f32 %v3286, %v3287
    %v3289 = vmul.f32 %v3247, %v3247
    %v3290 = vadd.f32 %v3288, %v3289
    %v3291 = vmul.f32 %v3250, %v3250
    %v3292 = vadd.f32 %v3290, %v3291
    %v3293 = vmul.f32 %v3253, %v3253
    %v3294 = vadd.f32 %v3292, %v3293
    %v3295 = vmul.f32 %v3256, %v3256
    %v3296 = vadd.f32 %v3294, %v3295
    %v3297 = vmul.f32 %v3259, %v3259
    %v3298 = vadd.f32 %v3296, %v3297
    %v3299 = vmul.f32 %v3262, %v3262
    %v3300 = vadd.f32 %v3298, %v3299
    %v3301 = vmul.f32 %v3265, %v3265
    %v3302 = vadd.f32 %v3300, %v3301
    %v3303 = vmul.f32 %v3268, %v3268
    %v3304 = vadd.f32 %v3302, %v3303
    %v3305 = vmul.f32 %v3271, %v3271
    %v3306 = vadd.f32 %v3304, %v3305
    %v3307 = vmul.f32 %v3274, %v3274
    %v3308 = vadd.f32 %v3306, %v3307
    %v3309 = vmul.f32 %v3277, %v3277
    %v3310 = vadd.f32 %v3308, %v3309
    %v3311 = vmul.f32 %v3280, %v3280
    %v3312 = vadd.f32 %v3310, %v3311
    %v3313 = vmul.f32 %v3283, %v3283
    %v3314 = vadd.f32 %v3312, %v3313
    %v3315 = vrsqrt.pop %v3314
    %v3316 = vmul.f32 %v3315, %v3314
    %v3317 = vmul.f32 %v3316, %v3315
    %v3318 = vmul.f32 0.5, %v3317
    %v3319 = vsub.f32 1.5, %v3318
    %v3320 = vmul.f32 %v3315, %v3319
    %v3321 = vmul.f32 %v3314, %v3320
    %vm3322 = vcmp.eq.f32.partialorder %v3314, inf
    %v3323 = vsel %vm3322, %v3314, %v3321
    %vm3324 = vcmp.eq.f32.partialorder %v3314, 0.0
    %v3325 = vand.u32 %v3314, 2147483648
    %v3326 = vsel %vm3324, %v3325, %v3323
    %v3327 = vstv %s3234
    %v3328 = vadd.f32 %v3327, %v3326
    %v3329 = vrcp.pop %v3328
    %v3330 = vmul.f32 %v3328, %v3329
    %v3331 = vsub.f32 2.0, %v3330
    %v3332 = vmul.f32 %v3329, %v3331
    %v3333 = vstv %s3235
    %v3334 = vmul.f32 %v3333, %v3332
    %v3335 = vmul.f32 %v3334, %v3238
    %v3336 = vadd.f32 %v3195, %v3335
    %v3337 = vmul.f32 %v3334, %v3241
    %v3338 = vadd.f32 %v3197, %v3337
    %v3339 = vmul.f32 %v3334, %v3244
    %v3340 = vadd.f32 %v3199, %v3339
    %v3341 = vmul.f32 %v3334, %v3247
    %v3342 = vadd.f32 %v3201, %v3341
    %v3343 = vmul.f32 %v3334, %v3250
    %v3344 = vadd.f32 %v3203, %v3343
    %v3345 = vmul.f32 %v3334, %v3253
    %v3346 = vadd.f32 %v3205, %v3345
    %v3347 = vmul.f32 %v3334, %v3256
    %v3348 = vadd.f32 %v3207, %v3347
    %v3349 = vmul.f32 %v3334, %v3259
    %v3350 = vadd.f32 %v3209, %v3349
    %v3351 = vmul.f32 %v3334, %v3262
    %v3352 = vadd.f32 %v3211, %v3351
    %v3353 = vmul.f32 %v3334, %v3265
    %v3354 = vadd.f32 %v3213, %v3353
    %v3355 = vmul.f32 %v3334, %v3268
    %v3356 = vadd.f32 %v3215, %v3355
    %v3357 = vmul.f32 %v3334, %v3271
    %v3358 = vadd.f32 %v3217, %v3357
    %v3359 = vmul.f32 %v3334, %v3274
    %v3360 = vadd.f32 %v3219, %v3359
    %v3361 = vmul.f32 %v3334, %v3277
    %v3362 = vadd.f32 %v3221, %v3361
    %v3363 = vmul.f32 %v3334, %v3280
    %v3364 = vadd.f32 %v3223, %v3363
    %v3365 = vmul.f32 %v3334, %v3283
    %v3366 = vadd.f32 %v3225, %v3365
    %v3367 = vadd.f32 %v3334, 1.0
    %v3368 = vmul.f32 %v3227, %v3367
    %s3369 = smul.f32 %s3234, %s3235
    %v3370 = vmul.f32 %v3332, %v3332
    %v3371 = vstv %s3369
    %v3372 = vmul.f32 %v3371, %v3370
    %v3373 = vadd.f32 %v3372, 1.0
    %v3374 = vmul.f32 %v3233, %v3373
    %s3375 = sld [smem:[#allocation8 + $0x16]]
    %s3376 = sld [smem:[#allocation9 + $0x16]]
    %s3377 = sld [smem:[#allocation7 + $0x160]]
    %v3378 = vstv %s3377
    %v3379 = vsub.f32 %v3336, %v3378
    %s3380 = sld [smem:[#allocation7 + $0x161]]
    %v3381 = vstv %s3380
    %v3382 = vsub.f32 %v3338, %v3381
    %s3383 = sld [smem:[#allocation7 + $0x162]]
    %v3384 = vstv %s3383
    %v3385 = vsub.f32 %v3340, %v3384
    %s3386 = sld [smem:[#allocation7 + $0x163]]
    %v3387 = vstv %s3386
    %v3388 = vsub.f32 %v3342, %v3387
    %s3389 = sld [smem:[#allocation7 + $0x164]]
    %v3390 = vstv %s3389
    %v3391 = vsub.f32 %v3344, %v3390
    %s3392 = sld [smem:[#allocation7 + $0x165]]
    %v3393 = vstv %s3392
    %v3394 = vsub.f32 %v3346, %v3393
    %s3395 = sld [smem:[#allocation7 + $0x166]]
    %v3396 = vstv %s3395
    %v3397 = vsub.f32 %v3348, %v3396
    %s3398 = sld [smem:[#allocation7 + $0x167]]
    %v3399 = vstv %s3398
    %v3400 = vsub.f32 %v3350, %v3399
    %s3401 = sld [smem:[#allocation7 + $0x168]]
    %v3402 = vstv %s3401
    %v3403 = vsub.f32 %v3352, %v3402
    %s3404 = sld [smem:[#allocation7 + $0x169]]
    %v3405 = vstv %s3404
    %v3406 = vsub.f32 %v3354, %v3405
    %s3407 = sld [smem:[#allocation7 + $0x16a]]
    %v3408 = vstv %s3407
    %v3409 = vsub.f32 %v3356, %v3408
    %s3410 = sld [smem:[#allocation7 + $0x16b]]
    %v3411 = vstv %s3410
    %v3412 = vsub.f32 %v3358, %v3411
    %s3413 = sld [smem:[#allocation7 + $0x16c]]
    %v3414 = vstv %s3413
    %v3415 = vsub.f32 %v3360, %v3414
    %s3416 = sld [smem:[#allocation7 + $0x16d]]
    %v3417 = vstv %s3416
    %v3418 = vsub.f32 %v3362, %v3417
    %s3419 = sld [smem:[#allocation7 + $0x16e]]
    %v3420 = vstv %s3419
    %v3421 = vsub.f32 %v3364, %v3420
    %s3422 = sld [smem:[#allocation7 + $0x16f]]
    %v3423 = vstv %s3422
    %v3424 = vsub.f32 %v3366, %v3423
    %v3425 = vmul.f32 %v3379, %v3379
    %v3426 = vmul.f32 %v3382, %v3382
    %v3427 = vadd.f32 %v3425, %v3426
    %v3428 = vmul.f32 %v3385, %v3385
    %v3429 = vadd.f32 %v3427, %v3428
    %v3430 = vmul.f32 %v3388, %v3388
    %v3431 = vadd.f32 %v3429, %v3430
    %v3432 = vmul.f32 %v3391, %v3391
    %v3433 = vadd.f32 %v3431, %v3432
    %v3434 = vmul.f32 %v3394, %v3394
    %v3435 = vadd.f32 %v3433, %v3434
    %v3436 = vmul.f32 %v3397, %v3397
    %v3437 = vadd.f32 %v3435, %v3436
    %v3438 = vmul.f32 %v3400, %v3400
    %v3439 = vadd.f32 %v3437, %v3438
    %v3440 = vmul.f32 %v3403, %v3403
    %v3441 = vadd.f32 %v3439, %v3440
    %v3442 = vmul.f32 %v3406, %v3406
    %v3443 = vadd.f32 %v3441, %v3442
    %v3444 = vmul.f32 %v3409, %v3409
    %v3445 = vadd.f32 %v3443, %v3444
    %v3446 = vmul.f32 %v3412, %v3412
    %v3447 = vadd.f32 %v3445, %v3446
    %v3448 = vmul.f32 %v3415, %v3415
    %v3449 = vadd.f32 %v3447, %v3448
    %v3450 = vmul.f32 %v3418, %v3418
    %v3451 = vadd.f32 %v3449, %v3450
    %v3452 = vmul.f32 %v3421, %v3421
    %v3453 = vadd.f32 %v3451, %v3452
    %v3454 = vmul.f32 %v3424, %v3424
    %v3455 = vadd.f32 %v3453, %v3454
    %v3456 = vrsqrt.pop %v3455
    %v3457 = vmul.f32 %v3456, %v3455
    %v3458 = vmul.f32 %v3457, %v3456
    %v3459 = vmul.f32 0.5, %v3458
    %v3460 = vsub.f32 1.5, %v3459
    %v3461 = vmul.f32 %v3456, %v3460
    %v3462 = vmul.f32 %v3455, %v3461
    %vm3463 = vcmp.eq.f32.partialorder %v3455, inf
    %v3464 = vsel %vm3463, %v3455, %v3462
    %vm3465 = vcmp.eq.f32.partialorder %v3455, 0.0
    %v3466 = vand.u32 %v3455, 2147483648
    %v3467 = vsel %vm3465, %v3466, %v3464
    %v3468 = vstv %s3375
    %v3469 = vadd.f32 %v3468, %v3467
    %v3470 = vrcp.pop %v3469
    %v3471 = vmul.f32 %v3469, %v3470
    %v3472 = vsub.f32 2.0, %v3471
    %v3473 = vmul.f32 %v3470, %v3472
    %v3474 = vstv %s3376
    %v3475 = vmul.f32 %v3474, %v3473
    %v3476 = vmul.f32 %v3475, %v3379
    %v3477 = vadd.f32 %v3336, %v3476
    %v3478 = vmul.f32 %v3475, %v3382
    %v3479 = vadd.f32 %v3338, %v3478
    %v3480 = vmul.f32 %v3475, %v3385
    %v3481 = vadd.f32 %v3340, %v3480
    %v3482 = vmul.f32 %v3475, %v3388
    %v3483 = vadd.f32 %v3342, %v3482
    %v3484 = vmul.f32 %v3475, %v3391
    %v3485 = vadd.f32 %v3344, %v3484
    %v3486 = vmul.f32 %v3475, %v3394
    %v3487 = vadd.f32 %v3346, %v3486
    %v3488 = vmul.f32 %v3475, %v3397
    %v3489 = vadd.f32 %v3348, %v3488
    %v3490 = vmul.f32 %v3475, %v3400
    %v3491 = vadd.f32 %v3350, %v3490
    %v3492 = vmul.f32 %v3475, %v3403
    %v3493 = vadd.f32 %v3352, %v3492
    %v3494 = vmul.f32 %v3475, %v3406
    %v3495 = vadd.f32 %v3354, %v3494
    %v3496 = vmul.f32 %v3475, %v3409
    %v3497 = vadd.f32 %v3356, %v3496
    %v3498 = vmul.f32 %v3475, %v3412
    %v3499 = vadd.f32 %v3358, %v3498
    %v3500 = vmul.f32 %v3475, %v3415
    %v3501 = vadd.f32 %v3360, %v3500
    %v3502 = vmul.f32 %v3475, %v3418
    %v3503 = vadd.f32 %v3362, %v3502
    %v3504 = vmul.f32 %v3475, %v3421
    %v3505 = vadd.f32 %v3364, %v3504
    %v3506 = vmul.f32 %v3475, %v3424
    %v3507 = vadd.f32 %v3366, %v3506
    %v3508 = vadd.f32 %v3475, 1.0
    %v3509 = vmul.f32 %v3368, %v3508
    %s3510 = smul.f32 %s3375, %s3376
    %v3511 = vmul.f32 %v3473, %v3473
    %v3512 = vstv %s3510
    %v3513 = vmul.f32 %v3512, %v3511
    %v3514 = vadd.f32 %v3513, 1.0
    %v3515 = vmul.f32 %v3374, %v3514
    %s3516 = sld [smem:[#allocation8 + $0x17]]
    %s3517 = sld [smem:[#allocation9 + $0x17]]
    %s3518 = sld [smem:[#allocation7 + $0x170]]
    %v3519 = vstv %s3518
    %v3520 = vsub.f32 %v3477, %v3519
    %s3521 = sld [smem:[#allocation7 + $0x171]]
    %v3522 = vstv %s3521
    %v3523 = vsub.f32 %v3479, %v3522
    %s3524 = sld [smem:[#allocation7 + $0x172]]
    %v3525 = vstv %s3524
    %v3526 = vsub.f32 %v3481, %v3525
    %s3527 = sld [smem:[#allocation7 + $0x173]]
    %v3528 = vstv %s3527
    %v3529 = vsub.f32 %v3483, %v3528
    %s3530 = sld [smem:[#allocation7 + $0x174]]
    %v3531 = vstv %s3530
    %v3532 = vsub.f32 %v3485, %v3531
    %s3533 = sld [smem:[#allocation7 + $0x175]]
    %v3534 = vstv %s3533
    %v3535 = vsub.f32 %v3487, %v3534
    %s3536 = sld [smem:[#allocation7 + $0x176]]
    %v3537 = vstv %s3536
    %v3538 = vsub.f32 %v3489, %v3537
    %s3539 = sld [smem:[#allocation7 + $0x177]]
    %v3540 = vstv %s3539
    %v3541 = vsub.f32 %v3491, %v3540
    %s3542 = sld [smem:[#allocation7 + $0x178]]
    %v3543 = vstv %s3542
    %v3544 = vsub.f32 %v3493, %v3543
    %s3545 = sld [smem:[#allocation7 + $0x179]]
    %v3546 = vstv %s3545
    %v3547 = vsub.f32 %v3495, %v3546
    %s3548 = sld [smem:[#allocation7 + $0x17a]]
    %v3549 = vstv %s3548
    %v3550 = vsub.f32 %v3497, %v3549
    %s3551 = sld [smem:[#allocation7 + $0x17b]]
    %v3552 = vstv %s3551
    %v3553 = vsub.f32 %v3499, %v3552
    %s3554 = sld [smem:[#allocation7 + $0x17c]]
    %v3555 = vstv %s3554
    %v3556 = vsub.f32 %v3501, %v3555
    %s3557 = sld [smem:[#allocation7 + $0x17d]]
    %v3558 = vstv %s3557
    %v3559 = vsub.f32 %v3503, %v3558
    %s3560 = sld [smem:[#allocation7 + $0x17e]]
    %v3561 = vstv %s3560
    %v3562 = vsub.f32 %v3505, %v3561
    %s3563 = sld [smem:[#allocation7 + $0x17f]]
    %v3564 = vstv %s3563
    %v3565 = vsub.f32 %v3507, %v3564
    %v3566 = vmul.f32 %v3520, %v3520
    %v3567 = vmul.f32 %v3523, %v3523
    %v3568 = vadd.f32 %v3566, %v3567
    %v3569 = vmul.f32 %v3526, %v3526
    %v3570 = vadd.f32 %v3568, %v3569
    %v3571 = vmul.f32 %v3529, %v3529
    %v3572 = vadd.f32 %v3570, %v3571
    %v3573 = vmul.f32 %v3532, %v3532
    %v3574 = vadd.f32 %v3572, %v3573
    %v3575 = vmul.f32 %v3535, %v3535
    %v3576 = vadd.f32 %v3574, %v3575
    %v3577 = vmul.f32 %v3538, %v3538
    %v3578 = vadd.f32 %v3576, %v3577
    %v3579 = vmul.f32 %v3541, %v3541
    %v3580 = vadd.f32 %v3578, %v3579
    %v3581 = vmul.f32 %v3544, %v3544
    %v3582 = vadd.f32 %v3580, %v3581
    %v3583 = vmul.f32 %v3547, %v3547
    %v3584 = vadd.f32 %v3582, %v3583
    %v3585 = vmul.f32 %v3550, %v3550
    %v3586 = vadd.f32 %v3584, %v3585
    %v3587 = vmul.f32 %v3553, %v3553
    %v3588 = vadd.f32 %v3586, %v3587
    %v3589 = vmul.f32 %v3556, %v3556
    %v3590 = vadd.f32 %v3588, %v3589
    %v3591 = vmul.f32 %v3559, %v3559
    %v3592 = vadd.f32 %v3590, %v3591
    %v3593 = vmul.f32 %v3562, %v3562
    %v3594 = vadd.f32 %v3592, %v3593
    %v3595 = vmul.f32 %v3565, %v3565
    %v3596 = vadd.f32 %v3594, %v3595
    %v3597 = vrsqrt.pop %v3596
    %v3598 = vmul.f32 %v3597, %v3596
    %v3599 = vmul.f32 %v3598, %v3597
    %v3600 = vmul.f32 0.5, %v3599
    %v3601 = vsub.f32 1.5, %v3600
    %v3602 = vmul.f32 %v3597, %v3601
    %v3603 = vmul.f32 %v3596, %v3602
    %vm3604 = vcmp.eq.f32.partialorder %v3596, inf
    %v3605 = vsel %vm3604, %v3596, %v3603
    %vm3606 = vcmp.eq.f32.partialorder %v3596, 0.0
    %v3607 = vand.u32 %v3596, 2147483648
    %v3608 = vsel %vm3606, %v3607, %v3605
    %v3609 = vstv %s3516
    %v3610 = vadd.f32 %v3609, %v3608
    %v3611 = vrcp.pop %v3610
    %v3612 = vmul.f32 %v3610, %v3611
    %v3613 = vsub.f32 2.0, %v3612
    %v3614 = vmul.f32 %v3611, %v3613
    %v3615 = vstv %s3517
    %v3616 = vmul.f32 %v3615, %v3614
    %v3617 = vmul.f32 %v3616, %v3520
    %v3618 = vadd.f32 %v3477, %v3617
    %v3619 = vmul.f32 %v3616, %v3523
    %v3620 = vadd.f32 %v3479, %v3619
    %v3621 = vmul.f32 %v3616, %v3526
    %v3622 = vadd.f32 %v3481, %v3621
    %v3623 = vmul.f32 %v3616, %v3529
    %v3624 = vadd.f32 %v3483, %v3623
    %v3625 = vmul.f32 %v3616, %v3532
    %v3626 = vadd.f32 %v3485, %v3625
    %v3627 = vmul.f32 %v3616, %v3535
    %v3628 = vadd.f32 %v3487, %v3627
    %v3629 = vmul.f32 %v3616, %v3538
    %v3630 = vadd.f32 %v3489, %v3629
    %v3631 = vmul.f32 %v3616, %v3541
    %v3632 = vadd.f32 %v3491, %v3631
    %v3633 = vmul.f32 %v3616, %v3544
    %v3634 = vadd.f32 %v3493, %v3633
    %v3635 = vmul.f32 %v3616, %v3547
    %v3636 = vadd.f32 %v3495, %v3635
    %v3637 = vmul.f32 %v3616, %v3550
    %v3638 = vadd.f32 %v3497, %v3637
    %v3639 = vmul.f32 %v3616, %v3553
    %v3640 = vadd.f32 %v3499, %v3639
    %v3641 = vmul.f32 %v3616, %v3556
    %v3642 = vadd.f32 %v3501, %v3641
    %v3643 = vmul.f32 %v3616, %v3559
    %v3644 = vadd.f32 %v3503, %v3643
    %v3645 = vmul.f32 %v3616, %v3562
    %v3646 = vadd.f32 %v3505, %v3645
    %v3647 = vmul.f32 %v3616, %v3565
    %v3648 = vadd.f32 %v3507, %v3647
    %v3649 = vadd.f32 %v3616, 1.0
    %v3650 = vmul.f32 %v3509, %v3649
    %s3651 = smul.f32 %s3516, %s3517
    %v3652 = vmul.f32 %v3614, %v3614
    %v3653 = vstv %s3651
    %v3654 = vmul.f32 %v3653, %v3652
    %v3655 = vadd.f32 %v3654, 1.0
    %v3656 = vmul.f32 %v3515, %v3655
    %v3657 = vmul.f32 %v3618, %v3618
    %v3658 = vmul.f32 %v3620, %v3620
    %v3659 = vadd.f32 %v3657, %v3658
    %v3660 = vmul.f32 %v3622, %v3622
    %v3661 = vadd.f32 %v3659, %v3660
    %v3662 = vmul.f32 %v3624, %v3624
    %v3663 = vadd.f32 %v3661, %v3662
    %v3664 = vmul.f32 %v3626, %v3626
    %v3665 = vadd.f32 %v3663, %v3664
    %v3666 = vmul.f32 %v3628, %v3628
    %v3667 = vadd.f32 %v3665, %v3666
    %v3668 = vmul.f32 %v3630, %v3630
    %v3669 = vadd.f32 %v3667, %v3668
    %v3670 = vmul.f32 %v3632, %v3632
    %v3671 = vadd.f32 %v3669, %v3670
    %v3672 = vmul.f32 %v3634, %v3634
    %v3673 = vadd.f32 %v3671, %v3672
    %v3674 = vmul.f32 %v3636, %v3636
    %v3675 = vadd.f32 %v3673, %v3674
    %v3676 = vmul.f32 %v3638, %v3638
    %v3677 = vadd.f32 %v3675, %v3676
    %v3678 = vmul.f32 %v3640, %v3640
    %v3679 = vadd.f32 %v3677, %v3678
    %v3680 = vmul.f32 %v3642, %v3642
    %v3681 = vadd.f32 %v3679, %v3680
    %v3682 = vmul.f32 %v3644, %v3644
    %v3683 = vadd.f32 %v3681, %v3682
    %v3684 = vmul.f32 %v3646, %v3646
    %v3685 = vadd.f32 %v3683, %v3684
    %v3686 = vmul.f32 %v3648, %v3648
    %v3687 = vadd.f32 %v3685, %v3686
    %v3688 = vlog2.pop %v3650
    %v3689 = vmul.f32 %v3688, 0.6931472
    %v3690 = vmul.f32 %v3689, 15.0
    %v3691 = vlog2.pop %v3656
    %v3692 = vmul.f32 %v3691, 0.6931472
    %v3693 = vadd.f32 %v3690, %v3692
    %v3694 = vmul.f32 %v3687, 0.5
    %v3695 = vsub.f32 -14.703016, %v3694
    %v3696 = vadd.f32 %v3695, %v3693
    %vm3697 = vcmp.ne.f32.partialorder %v3696, %v3696
    %v3698 = vsel %vm3697, -inf, %v3696
    %s3699 = scalar_lea.vmem [#allocation11], 24
    %3700 = vst [vmem:[%s3699] sm:$0xff] %v3698
    // Predicated region
    $region34: #{tpu_custom_call.1} parent=1 // pred_check
      _
    $region35: #{tpu_custom_call.1} parent=1 // pred_check_branch
      %3702 = sbr.rel (0) target = $region37
    $region36: #{tpu_custom_call.1} parent=1 // pred_region
      %3704 = vsyncadd [#allocation4], 0
      %s3705 = sshll.u32 [#allocation11], 4
      %s3706 = int_to_ptr.vmem [resolvable:$true] %s3705
      %s3707 = sshll.u32 %s4, 4
      %s3708 = int_to_ptr.hbm [resolvable:$true] %s3707
      %3713 = dma.vmem_to_hbm [thread:$0]  %s3706, 512, %s3708, [#allocation4], 128, 128, 8
    $region37: #{tpu_custom_call.1} parent=1 // pred_fallthru
      _
    // Predicated region
    $region38: #{tpu_custom_call.1} parent=1 // pred_check
      _
    $region39: #{tpu_custom_call.1} parent=1 // pred_check_branch
      %3715 = sbr.rel (0) target = $region41
    $region40: #{tpu_custom_call.1} parent=1 // pred_region
      %3717 = dma.done [#allocation4], 512
    $region41: #{tpu_custom_call.1} parent=1 // pred_fallthru
      _
    %3718 = vsyncpa [#allocation3], 1
    %3719 = vsyncpa [#allocation4], 1
    %3720 = vsyncpa [#allocation5], 1
    %3721 = vsyncpa [#allocation6], 1
    %3722 = vsyncpa [#allocation10], 1

</llo_original>
